<compile_context>
chip_gen: v7x
topology: tpu7x:2x2x1
jax: 0.10.0
libtpu: 0.0.40
codegen_flags: <defaults>
</compile_context>

<pallas_src>
import functools
import math

import jax
import jax.numpy as jnp
from jax import lax
from jax.experimental import pallas as pl
from jax.experimental.pallas import tpu as pltpu


_KERNEL_WEIGHT_ORDER = ("bias", "enc_w", "wqkv", "wo", "w1", "w2",
                        "cw0", "cw1", "cw2")


# -----------------------------------------------------------------------------
# Fused kernel (TB batch elements per grid step)
# -----------------------------------------------------------------------------
def _layernorm(x, gamma, beta, eps=1e-5):
    # two-pass (centred) variance: avoids ms - mu*mu cancellation / negative var
    mu = jnp.mean(x, axis=-1, keepdims=True)
    xc = x - mu
    var = jnp.mean(xc * xc, axis=-1, keepdims=True)
    return xc * lax.rsqrt(var + eps) * gamma + beta


def _siglab_fused_kernel(sig_ref, bias_ref,
                         enc_w_ref, wqkv_ref, wo_ref, w1_ref, w2_ref,
                         cw0_ref, cw1_ref, cw2_ref,
                         o_ref, *, num_heads):
    TB, N, T = sig_ref.shape
    M = TB * N
    L = wqkv_ref.shape[0]
    D = enc_w_ref.shape[1]
    F = w1_ref.shape[2]
    H0 = cw0_ref.shape[1]
    H1 = cw1_ref.shape[1]
    CPAD = cw2_ref.shape[1]
    hd = D // num_heads

    bias = bias_ref[...]                                    # (R, W) f32

    def brow(r, w):                                         # static row / lane slice
        return bias[r:r + 1, :w]                            # (1, w) f32

    # ---------------- encoder: Linear(T -> D) + ReLU, (TB,N) folded into M ----
    x = sig_ref[...].reshape(M, T)                          # bf16
    h = jnp.dot(x, enc_w_ref[...], preferred_element_type=jnp.float32)
    h = jnp.maximum(h + brow(0, D), 0.0)                    # (M, D) f32

    # ---------------- SetAttentionBlocks (static unrolled) --------------------
    for blk in range(L):
        r0 = 1 + 8 * blk

        # fused Q|K|V projection: one (M, D) @ (D, 3D) matmul
        qkv = jnp.dot(h.astype(jnp.bfloat16), wqkv_ref[blk],
                      preferred_element_type=jnp.float32) + brow(r0 + 0, 3 * D)
        qkv = qkv.reshape(TB, N, 3 * D)
        q = qkv[:, :, 0:D]                 # 1/sqrt(hd) pre-folded into Wq / bq
        k = qkv[:, :, D:2 * D]
        v = qkv[:, :, 2 * D:3 * D]

        # per-head score/context: static lane slices, TB-batched contractions
        ctx_heads = []
        for hh in range(num_heads):
            sl = slice(hh * hd, (hh + 1) * hd)
            qh, kh, vh = q[:, :, sl], k[:, :, sl], v[:, :, sl]   # (TB, N, hd)
            s = lax.dot_general(qh, kh, (((2,), (2,)), ((0,), (0,))),
                                preferred_element_type=jnp.float32)  # (TB,N,N)
            s = s - jnp.max(s, axis=-1, keepdims=True)
            p = jnp.exp(s)
            p = p * pl.reciprocal(jnp.sum(p, axis=-1, keepdims=True), approx=True)
            ctx_heads.append(
                lax.dot_general(p, vh, (((2,), (1,)), ((0,), (0,))),
                                preferred_element_type=jnp.float32))  # (TB,N,hd)
        ctx = jnp.concatenate(ctx_heads, axis=-1).reshape(M, D)        # (M, D)

        # output projection over lane-concatenated heads: single (M,D)@(D,D)
        attn = jnp.dot(ctx.astype(jnp.bfloat16), wo_ref[blk],
                       preferred_element_type=jnp.float32) + brow(r0 + 1, D)

        # residual + LayerNorm 1
        h1 = _layernorm(h + attn, brow(r0 + 2, D), brow(r0 + 3, D))

        # FFN
        f = jnp.dot(h1.astype(jnp.bfloat16), w1_ref[blk],
                    preferred_element_type=jnp.float32) + brow(r0 + 4, F)
        f = jnp.maximum(f, 0.0)
        f = jnp.dot(f.astype(jnp.bfloat16), w2_ref[blk],
                    preferred_element_type=jnp.float32) + brow(r0 + 5, D)

        # residual + LayerNorm 2
        h = _layernorm(h1 + f, brow(r0 + 6, D), brow(r0 + 7, D))

    # ---------------- classifier: Linear -> ReLU -> Linear -> ReLU -> Linear ---
    rc = 1 + 8 * L
    c = jnp.dot(h.astype(jnp.bfloat16), cw0_ref[...],
                preferred_element_type=jnp.float32) + brow(rc + 0, H0)
    c = jnp.maximum(c, 0.0)
    c = jnp.dot(c.astype(jnp.bfloat16), cw1_ref[...],
                preferred_element_type=jnp.float32) + brow(rc + 1, H1)
    c = jnp.maximum(c, 0.0)
    y = jnp.dot(c.astype(jnp.bfloat16), cw2_ref[...],
                preferred_element_type=jnp.float32) + brow(rc + 2, CPAD)  # (M, CPAD)

    o_ref[...] = y.reshape(TB, N, CPAD).astype(o_ref.dtype)


# -----------------------------------------------------------------------------
# Wrapper
# -----------------------------------------------------------------------------
def _choose_batch_tile(B, N):
    """Rows per grid step ~128 (fills MXU sublanes), keep >= 2 grid steps when
    B allows (v7x megacore), and require TB | B."""
    target = max(1, -(-128 // max(N, 1)))          # ceil(128 / N)
    if B >= 2:
        target = min(target, B // 2)               # >= 2 grid steps for 2 TCs
    target = max(1, min(target, B))
    tb = 1
    for d in range(1, target + 1):
        if B % d == 0:
            tb = d
    return tb


def siglabv2_forward(signals, kparams, *, num_heads, num_classes,
                     batch_tile=None):
    B, N, T = signals.shape
    c_pad = kparams["cw2"].shape[1]
    D = kparams["enc_w"].shape[1]
    F = kparams["w1"].shape[2]
    TB = batch_tile if batch_tile is not None else _choose_batch_tile(B, N)
    assert B % TB == 0, (B, TB)

    sig = signals.astype(jnp.bfloat16)             # half the input DMA bytes
    weights = [kparams[k] for k in _KERNEL_WEIGHT_ORDER]
    kernel = functools.partial(_siglab_fused_kernel, num_heads=num_heads)

    # VMEM budget estimate (advisory); capped below v7x's 64 MiB physical VMEM.
    nbytes = lambda a: a.size * a.dtype.itemsize
    w_bytes = sum(nbytes(w) for w in weights)
    io_bytes = TB * N * (T * 2 + c_pad * 4)
    act_bytes = TB * N * 4 * (T + 12 * D + 2 * F + c_pad)
    vmem_limit = int(min(48 << 20,
                         max(24 << 20, 2 * w_bytes + 2 * io_bytes + 2 * act_bytes)))

    def run(single_buffer_weights):
        def wspec(arr):
            nd = arr.ndim
            idx = lambda b, _nd=nd: (0,) * _nd
            if single_buffer_weights:
                # constant-index (VMEM-resident) weights don't need 2 buffers
                return pl.BlockSpec(arr.shape, idx, pipeline_mode=pl.Buffered(1))
            return pl.BlockSpec(arr.shape, idx)

        return pl.pallas_call(
            kernel,
            out_shape=jax.ShapeDtypeStruct((B, N, c_pad), jnp.float32),
            grid=(B // TB,),
            in_specs=[pl.BlockSpec((TB, N, T), lambda b: (b, 0, 0))]
                     + [wspec(w) for w in weights],
            out_specs=pl.BlockSpec((TB, N, c_pad), lambda b: (b, 0, 0)),
            compiler_params=pltpu.CompilerParams(
                dimension_semantics=("parallel",),
                vmem_limit_bytes=vmem_limit),
        )(sig, *weights)

    # Fall back to default double-buffered weight specs if this jax/libtpu build
    # rejects pipeline_mode (kernel math is identical either way).
    try:
        out = run(True)
    except Exception:
        out = run(False)

    return out[..., :num_classes]


# -----------------------------------------------------------------------------
# Parameters: f32 "model" params + packed kernel params
# -----------------------------------------------------------------------------
def init_params(key, *, T, D, ffn_expansion, num_blocks, cls_h0, cls_h1,
                num_classes):
    F = D * ffn_expansion
    L = num_blocks
    keys = iter(jax.random.split(key, 128))

    def nrm(shape, scale=0.05):
        return jax.random.normal(next(keys), shape, jnp.float32) * scale

    return {
        "enc_w": nrm((T, D)),      "enc_b": nrm((1, D), 0.02),
        "wq": nrm((L, D, D)),      "bq": nrm((L, 1, D), 0.02),
        "wk": nrm((L, D, D)),      "bk": nrm((L, 1, D), 0.02),
        "wv": nrm((L, D, D)),      "bv": nrm((L, 1, D), 0.02),
        "wo": nrm((L, D, D)),      "bo": nrm((L, 1, D), 0.02),
        "g1": 1.0 + nrm((L, 1, D), 0.02), "be1": nrm((L, 1, D), 0.02),
        "w1": nrm((L, D, F)),      "bf1": nrm((L, 1, F), 0.02),
        "w2": nrm((L, F, D)),      "bf2": nrm((L, 1, D), 0.02),
        "g2": 1.0 + nrm((L, 1, D), 0.02), "be2": nrm((L, 1, D), 0.02),
        "cw0": nrm((D, cls_h0)),   "cb0": nrm((1, cls_h0), 0.02),
        "cw1": nrm((cls_h0, cls_h1)), "cb1": nrm((1, cls_h1), 0.02),
        "cw2": nrm((cls_h1, num_classes)), "cb2": nrm((1, num_classes), 0.02),
    }


def pack_kernel_params(p, *, num_heads, num_classes, lane=128):
    """Pack model params into the kernel layout:
       * [Wq|Wk|Wv] fused into one (L, D, 3D) bf16 weight, softmax scale folded
         into the Wq / bq slices (kernel never multiplies by 1/sqrt(hd));
       * all matmul weights bf16; classifier output zero-padded to 128 lanes;
       * every bias / LayerNorm vector packed into ONE (R, W) f32 array."""
    L, D, _ = p["wq"].shape
    F = p["w1"].shape[2]
    H0 = p["cw0"].shape[1]
    H1 = p["cw1"].shape[1]
    assert D % num_heads == 0
    hd = D // num_heads
    scale = 1.0 / math.sqrt(hd)
    c_pad = ((num_classes + lane - 1) // lane) * lane
    bf = jnp.bfloat16

    wqkv = jnp.concatenate([p["wq"] * scale, p["wk"], p["wv"]], axis=-1)  # (L,D,3D)

    W = max(D, 3 * D, F, H0, H1, c_pad)

    def row(vec):
        vec = jnp.asarray(vec, jnp.float32).reshape(-1)
        return jnp.pad(vec, (0, W - vec.shape[0]))

    rows = [row(p["enc_b"])]
    for blk in range(L):
        bqkv = jnp.concatenate([p["bq"][blk].reshape(-1) * scale,
                                p["bk"][blk].reshape(-1),
                                p["bv"][blk].reshape(-1)])
        rows += [row(bqkv), row(p["bo"][blk]),
                 row(p["g1"][blk]), row(p["be1"][blk]),
                 row(p["bf1"][blk]), row(p["bf2"][blk]),
                 row(p["g2"][blk]), row(p["be2"][blk])]
    rows += [row(p["cb0"]), row(p["cb1"]),
             row(jnp.pad(p["cb2"].reshape(-1), (0, c_pad - num_classes)))]

    return {
        "bias": jnp.stack(rows),                               # (4 + 8L, W) f32
        "enc_w": p["enc_w"].astype(bf),
        "wqkv": wqkv.astype(bf),
        "wo": p["wo"].astype(bf),
        "w1": p["w1"].astype(bf),
        "w2": p["w2"].astype(bf),
        "cw0": p["cw0"].astype(bf),
        "cw1": p["cw1"].astype(bf),
        "cw2": jnp.pad(p["cw2"], ((0, 0), (0, c_pad - num_classes))).astype(bf),
    }


# -----------------------------------------------------------------------------
# Pure-JAX reference (f32) for a numerical sanity check
# -----------------------------------------------------------------------------
def _ref_layernorm(x, g, b, eps=1e-5):
    mu = x.mean(-1, keepdims=True)
    var = jnp.mean((x - mu) ** 2, -1, keepdims=True)
    return (x - mu) / jnp.sqrt(var + eps) * g + b


def reference_forward(signals, p, *, num_heads):
    B, N, T = signals.shape
    D = p["enc_w"].shape[1]
    H = num_heads
    hd = D // H
    x = jnp.maximum(jnp.einsum("bnt,td->bnd", signals, p["enc_w"]) + p["enc_b"], 0.0)
    L = p["wq"].shape[0]
    for i in range(L):
        q = x @ p["wq"][i] + p["bq"][i]
        k = x @ p["wk"][i] + p["bk"][i]
        v = x @ p["wv"][i] + p["bv"][i]
        qh = q.reshape(B, N, H, hd)
        kh = k.reshape(B, N, H, hd)
        vh = v.reshape(B, N, H, hd)
        s = jnp.einsum("bqhd,bkhd->bhqk", qh, kh) / math.sqrt(hd)
        a = jax.nn.softmax(s, axis=-1)
        ctx = jnp.einsum("bhqk,bkhd->bqhd", a, vh).reshape(B, N, D)
        attn = ctx @ p["wo"][i] + p["bo"][i]
        h1 = _ref_layernorm(x + attn, p["g1"][i], p["be1"][i])
        f = jnp.maximum(h1 @ p["w1"][i] + p["bf1"][i], 0.0)
        f = f @ p["w2"][i] + p["bf2"][i]
        x = _ref_layernorm(h1 + f, p["g2"][i], p["be2"][i])
    h = jnp.maximum(x @ p["cw0"] + p["cb0"], 0.0)
    h = jnp.maximum(h @ p["cw1"] + p["cb1"], 0.0)
    return h @ p["cw2"] + p["cb2"]


# -----------------------------------------------------------------------------
if __name__ == "__main__":
    # small config consistent with the module's forward
    B, N, T = 2, 8, 64          # batch, leads, signal length
    D = 32                      # cfg.feature_dim
    NUM_HEADS = 4               # cfg.sab.num_heads
    FFN_EXP = 2                 # cfg.sab.ffn_expansion
    NUM_BLOCKS = 2              # cfg.num_belief_updates
    CLS_H0, CLS_H1 = 32, 16     # classifier hidden sizes
    NUM_CLASSES = 5             # cfg.num_classes

    key = jax.random.PRNGKey(0)
    k_sig, k_par = jax.random.split(key)

    signals = jax.random.normal(k_sig, (B, N, T), jnp.float32)
    params = init_params(k_par, T=T, D=D, ffn_expansion=FFN_EXP,
                         num_blocks=NUM_BLOCKS, cls_h0=CLS_H0, cls_h1=CLS_H1,
                         num_classes=NUM_CLASSES)
    kparams = pack_kernel_params(params, num_heads=NUM_HEADS,
                                 num_classes=NUM_CLASSES)

    logits = siglabv2_forward(signals, kparams, num_heads=NUM_HEADS,
                              num_classes=NUM_CLASSES)
    logits = jax.block_until_ready(logits)

    assert logits.shape == (B, N, NUM_CLASSES), logits.shape
    assert bool(jnp.all(jnp.isfinite(logits)))

    ref = reference_forward(signals, params, num_heads=NUM_HEADS)
    err = float(jnp.max(jnp.abs(logits - ref)))
    assert err < 5e-2, f"max abs err vs reference: {err}"

    print("KERNEL_OK")
</pallas_src>

<mosaic_0001>
module attributes {stable_mosaic.version = 11 : i64} {
  func.func @_siglab_fused_kernel(%arg0: i32, %arg1: memref<1x8x64xbf16, #tpu.memory_space<vmem>>, %arg2: memref<20x128xf32, #tpu.memory_space<vmem>>, %arg3: memref<64x32xbf16, #tpu.memory_space<vmem>>, %arg4: memref<2x32x96xbf16, #tpu.memory_space<vmem>>, %arg5: memref<2x32x32xbf16, #tpu.memory_space<vmem>>, %arg6: memref<2x32x64xbf16, #tpu.memory_space<vmem>>, %arg7: memref<2x64x32xbf16, #tpu.memory_space<vmem>>, %arg8: memref<32x32xbf16, #tpu.memory_space<vmem>>, %arg9: memref<32x16xbf16, #tpu.memory_space<vmem>>, %arg10: memref<16x128xbf16, #tpu.memory_space<vmem>>, %arg11: memref<1x8x128xf32, #tpu.memory_space<vmem>>) attributes {dimension_semantics = [#tpu.dimension_semantics<parallel>], iteration_bounds = array<i64: 2>, scalar_prefetch = 0 : i64, scratch_operands = 0 : i64, tpu.core_type = #tpu.core_type<tc>, window_params = [{transform_indices = @transform_0, window_bounds = array<i64: 1, 8, 64>}, {pipeline_mode = #tpu.pipeline_mode<synchronous>, transform_indices = @transform_1, window_bounds = array<i64: 20, 128>}, {pipeline_mode = #tpu.pipeline_mode<synchronous>, transform_indices = @transform_2, window_bounds = array<i64: 64, 32>}, {pipeline_mode = #tpu.pipeline_mode<synchronous>, transform_indices = @transform_3, window_bounds = array<i64: 2, 32, 96>}, {pipeline_mode = #tpu.pipeline_mode<synchronous>, transform_indices = @transform_4, window_bounds = array<i64: 2, 32, 32>}, {pipeline_mode = #tpu.pipeline_mode<synchronous>, transform_indices = @transform_5, window_bounds = array<i64: 2, 32, 64>}, {pipeline_mode = #tpu.pipeline_mode<synchronous>, transform_indices = @transform_6, window_bounds = array<i64: 2, 64, 32>}, {pipeline_mode = #tpu.pipeline_mode<synchronous>, transform_indices = @transform_7, window_bounds = array<i64: 32, 32>}, {pipeline_mode = #tpu.pipeline_mode<synchronous>, transform_indices = @transform_8, window_bounds = array<i64: 32, 16>}, {pipeline_mode = #tpu.pipeline_mode<synchronous>, transform_indices = @transform_9, window_bounds = array<i64: 16, 128>}, {transform_indices = @transform_10, window_bounds = array<i64: 1, 8, 128>}]} {
    %c0 = arith.constant 0 : index
    %c0_0 = arith.constant 0 : index
    %0 = vector.load %arg2[%c0, %c0_0] : memref<20x128xf32, #tpu.memory_space<vmem>>, vector<20x128xf32>
    %c0_1 = arith.constant 0 : index
    %c0_2 = arith.constant 0 : index
    %c0_3 = arith.constant 0 : index
    %1 = vector.load %arg1[%c0_1, %c0_2, %c0_3] : memref<1x8x64xbf16, #tpu.memory_space<vmem>>, vector<1x8x64xbf16>
    %2 = vector.shape_cast %1 : vector<1x8x64xbf16> to vector<8x64xbf16>
    %c0_4 = arith.constant 0 : index
    %c0_5 = arith.constant 0 : index
    %3 = vector.load %arg3[%c0_4, %c0_5] : memref<64x32xbf16, #tpu.memory_space<vmem>>, vector<64x32xbf16>
    %cst = arith.constant dense<0.000000e+00> : vector<8x32xf32>
    %4 = tpu.matmul %2, %3, %cst {dimension_numbers = #tpu.dot_dimension_numbers<[1], [0], [0], [1], [0, 0, 1, 1], [], []>} : vector<8x64xbf16>, vector<64x32xbf16>, vector<8x32xf32> -> vector<8x32xf32>
    %5 = vector.extract_strided_slice %0 {offsets = [0, 0], sizes = [1, 32], strides = [1, 1]} : vector<20x128xf32> to vector<1x32xf32>
    %6 = vector.broadcast %5 : vector<1x32xf32> to vector<8x32xf32>
    %7 = arith.addf %4, %6 : vector<8x32xf32>
    %cst_6 = arith.constant 0.000000e+00 : f32
    %8 = vector.broadcast %cst_6 : f32 to vector<8x32xf32>
    %9 = arith.maximumf %7, %8 : vector<8x32xf32>
    %10 = arith.truncf %9 : vector<8x32xf32> to vector<8x32xbf16>
    %c0_7 = arith.constant 0 : index
    %c0_8 = arith.constant 0 : index
    %c0_9 = arith.constant 0 : index
    %11 = vector.load %arg4[%c0_7, %c0_8, %c0_9] : memref<2x32x96xbf16, #tpu.memory_space<vmem>>, vector<1x32x96xbf16>
    %12 = vector.shape_cast %11 : vector<1x32x96xbf16> to vector<32x96xbf16>
    %cst_10 = arith.constant dense<0.000000e+00> : vector<8x96xf32>
    %13 = tpu.matmul %10, %12, %cst_10 {dimension_numbers = #tpu.dot_dimension_numbers<[1], [0], [0], [1], [0, 0, 1, 1], [], []>} : vector<8x32xbf16>, vector<32x96xbf16>, vector<8x96xf32> -> vector<8x96xf32>
    %14 = vector.extract_strided_slice %0 {offsets = [1, 0], sizes = [1, 96], strides = [1, 1]} : vector<20x128xf32> to vector<1x96xf32>
    %15 = vector.broadcast %14 : vector<1x96xf32> to vector<8x96xf32>
    %16 = arith.addf %13, %15 : vector<8x96xf32>
    %17 = vector.shape_cast %16 : vector<8x96xf32> to vector<1x8x96xf32>
    %18 = vector.extract_strided_slice %17 {offsets = [0, 0, 0], sizes = [1, 8, 32], strides = [1, 1, 1]} : vector<1x8x96xf32> to vector<1x8x32xf32>
    %19 = vector.extract_strided_slice %17 {offsets = [0, 0, 32], sizes = [1, 8, 32], strides = [1, 1, 1]} : vector<1x8x96xf32> to vector<1x8x32xf32>
    %20 = vector.extract_strided_slice %17 {offsets = [0, 0, 64], sizes = [1, 8, 32], strides = [1, 1, 1]} : vector<1x8x96xf32> to vector<1x8x32xf32>
    %21 = vector.extract_strided_slice %18 {offsets = [0, 0, 0], sizes = [1, 8, 8], strides = [1, 1, 1]} : vector<1x8x32xf32> to vector<1x8x8xf32>
    %22 = vector.extract_strided_slice %19 {offsets = [0, 0, 0], sizes = [1, 8, 8], strides = [1, 1, 1]} : vector<1x8x32xf32> to vector<1x8x8xf32>
    %23 = vector.extract_strided_slice %20 {offsets = [0, 0, 0], sizes = [1, 8, 8], strides = [1, 1, 1]} : vector<1x8x32xf32> to vector<1x8x8xf32>
    %cst_11 = arith.constant dense<0.000000e+00> : vector<1x8x8xf32>
    %24 = tpu.matmul %21, %22, %cst_11 {dimension_numbers = #tpu.dot_dimension_numbers<[2], [2], [1], [1], [0, 0, 0, 1, 1, 1], [0], [0]>} : vector<1x8x8xf32>, vector<1x8x8xf32>, vector<1x8x8xf32> -> vector<1x8x8xf32>
    %cst_12 = arith.constant dense<0xFF800000> : vector<1x8xf32>
    %25 = vector.multi_reduction <maximumf>, %24, %cst_12 [2] : vector<1x8x8xf32> to vector<1x8xf32>
    %26 = vector.shape_cast %25 : vector<1x8xf32> to vector<1x8x1xf32>
    %27 = vector.broadcast %26 : vector<1x8x1xf32> to vector<1x8x8xf32>
    %28 = arith.subf %24, %27 : vector<1x8x8xf32>
    %29 = math.exp %28 : vector<1x8x8xf32>
    %cst_13 = arith.constant dense<0.000000e+00> : vector<1x8xf32>
    %30 = vector.multi_reduction <add>, %29, %cst_13 [2] : vector<1x8x8xf32> to vector<1x8xf32>
    %31 = vector.shape_cast %30 : vector<1x8xf32> to vector<1x8x1xf32>
    %32 = tpu.reciprocal %31 {approx = true} : vector<1x8x1xf32> -> vector<1x8x1xf32>
    %33 = vector.broadcast %32 : vector<1x8x1xf32> to vector<1x8x8xf32>
    %34 = arith.mulf %29, %33 : vector<1x8x8xf32>
    %cst_14 = arith.constant dense<0.000000e+00> : vector<1x8x8xf32>
    %35 = tpu.matmul %34, %23, %cst_14 {dimension_numbers = #tpu.dot_dimension_numbers<[2], [1], [1], [2], [0, 0, 0, 1, 1, 2], [0], [0]>} : vector<1x8x8xf32>, vector<1x8x8xf32>, vector<1x8x8xf32> -> vector<1x8x8xf32>
    %36 = vector.extract_strided_slice %18 {offsets = [0, 0, 8], sizes = [1, 8, 8], strides = [1, 1, 1]} : vector<1x8x32xf32> to vector<1x8x8xf32>
    %37 = vector.extract_strided_slice %19 {offsets = [0, 0, 8], sizes = [1, 8, 8], strides = [1, 1, 1]} : vector<1x8x32xf32> to vector<1x8x8xf32>
    %38 = vector.extract_strided_slice %20 {offsets = [0, 0, 8], sizes = [1, 8, 8], strides = [1, 1, 1]} : vector<1x8x32xf32> to vector<1x8x8xf32>
    %cst_15 = arith.constant dense<0.000000e+00> : vector<1x8x8xf32>
    %39 = tpu.matmul %36, %37, %cst_15 {dimension_numbers = #tpu.dot_dimension_numbers<[2], [2], [1], [1], [0, 0, 0, 1, 1, 1], [0], [0]>} : vector<1x8x8xf32>, vector<1x8x8xf32>, vector<1x8x8xf32> -> vector<1x8x8xf32>
    %cst_16 = arith.constant dense<0xFF800000> : vector<1x8xf32>
    %40 = vector.multi_reduction <maximumf>, %39, %cst_16 [2] : vector<1x8x8xf32> to vector<1x8xf32>
    %41 = vector.shape_cast %40 : vector<1x8xf32> to vector<1x8x1xf32>
    %42 = vector.broadcast %41 : vector<1x8x1xf32> to vector<1x8x8xf32>
    %43 = arith.subf %39, %42 : vector<1x8x8xf32>
    %44 = math.exp %43 : vector<1x8x8xf32>
    %cst_17 = arith.constant dense<0.000000e+00> : vector<1x8xf32>
    %45 = vector.multi_reduction <add>, %44, %cst_17 [2] : vector<1x8x8xf32> to vector<1x8xf32>
    %46 = vector.shape_cast %45 : vector<1x8xf32> to vector<1x8x1xf32>
    %47 = tpu.reciprocal %46 {approx = true} : vector<1x8x1xf32> -> vector<1x8x1xf32>
    %48 = vector.broadcast %47 : vector<1x8x1xf32> to vector<1x8x8xf32>
    %49 = arith.mulf %44, %48 : vector<1x8x8xf32>
    %cst_18 = arith.constant dense<0.000000e+00> : vector<1x8x8xf32>
    %50 = tpu.matmul %49, %38, %cst_18 {dimension_numbers = #tpu.dot_dimension_numbers<[2], [1], [1], [2], [0, 0, 0, 1, 1, 2], [0], [0]>} : vector<1x8x8xf32>, vector<1x8x8xf32>, vector<1x8x8xf32> -> vector<1x8x8xf32>
    %51 = vector.extract_strided_slice %18 {offsets = [0, 0, 16], sizes = [1, 8, 8], strides = [1, 1, 1]} : vector<1x8x32xf32> to vector<1x8x8xf32>
    %52 = vector.extract_strided_slice %19 {offsets = [0, 0, 16], sizes = [1, 8, 8], strides = [1, 1, 1]} : vector<1x8x32xf32> to vector<1x8x8xf32>
    %53 = vector.extract_strided_slice %20 {offsets = [0, 0, 16], sizes = [1, 8, 8], strides = [1, 1, 1]} : vector<1x8x32xf32> to vector<1x8x8xf32>
    %cst_19 = arith.constant dense<0.000000e+00> : vector<1x8x8xf32>
    %54 = tpu.matmul %51, %52, %cst_19 {dimension_numbers = #tpu.dot_dimension_numbers<[2], [2], [1], [1], [0, 0, 0, 1, 1, 1], [0], [0]>} : vector<1x8x8xf32>, vector<1x8x8xf32>, vector<1x8x8xf32> -> vector<1x8x8xf32>
    %cst_20 = arith.constant dense<0xFF800000> : vector<1x8xf32>
    %55 = vector.multi_reduction <maximumf>, %54, %cst_20 [2] : vector<1x8x8xf32> to vector<1x8xf32>
    %56 = vector.shape_cast %55 : vector<1x8xf32> to vector<1x8x1xf32>
    %57 = vector.broadcast %56 : vector<1x8x1xf32> to vector<1x8x8xf32>
    %58 = arith.subf %54, %57 : vector<1x8x8xf32>
    %59 = math.exp %58 : vector<1x8x8xf32>
    %cst_21 = arith.constant dense<0.000000e+00> : vector<1x8xf32>
    %60 = vector.multi_reduction <add>, %59, %cst_21 [2] : vector<1x8x8xf32> to vector<1x8xf32>
    %61 = vector.shape_cast %60 : vector<1x8xf32> to vector<1x8x1xf32>
    %62 = tpu.reciprocal %61 {approx = true} : vector<1x8x1xf32> -> vector<1x8x1xf32>
    %63 = vector.broadcast %62 : vector<1x8x1xf32> to vector<1x8x8xf32>
    %64 = arith.mulf %59, %63 : vector<1x8x8xf32>
    %cst_22 = arith.constant dense<0.000000e+00> : vector<1x8x8xf32>
    %65 = tpu.matmul %64, %53, %cst_22 {dimension_numbers = #tpu.dot_dimension_numbers<[2], [1], [1], [2], [0, 0, 0, 1, 1, 2], [0], [0]>} : vector<1x8x8xf32>, vector<1x8x8xf32>, vector<1x8x8xf32> -> vector<1x8x8xf32>
    %66 = vector.extract_strided_slice %18 {offsets = [0, 0, 24], sizes = [1, 8, 8], strides = [1, 1, 1]} : vector<1x8x32xf32> to vector<1x8x8xf32>
    %67 = vector.extract_strided_slice %19 {offsets = [0, 0, 24], sizes = [1, 8, 8], strides = [1, 1, 1]} : vector<1x8x32xf32> to vector<1x8x8xf32>
    %68 = vector.extract_strided_slice %20 {offsets = [0, 0, 24], sizes = [1, 8, 8], strides = [1, 1, 1]} : vector<1x8x32xf32> to vector<1x8x8xf32>
    %cst_23 = arith.constant dense<0.000000e+00> : vector<1x8x8xf32>
    %69 = tpu.matmul %66, %67, %cst_23 {dimension_numbers = #tpu.dot_dimension_numbers<[2], [2], [1], [1], [0, 0, 0, 1, 1, 1], [0], [0]>} : vector<1x8x8xf32>, vector<1x8x8xf32>, vector<1x8x8xf32> -> vector<1x8x8xf32>
    %cst_24 = arith.constant dense<0xFF800000> : vector<1x8xf32>
    %70 = vector.multi_reduction <maximumf>, %69, %cst_24 [2] : vector<1x8x8xf32> to vector<1x8xf32>
    %71 = vector.shape_cast %70 : vector<1x8xf32> to vector<1x8x1xf32>
    %72 = vector.broadcast %71 : vector<1x8x1xf32> to vector<1x8x8xf32>
    %73 = arith.subf %69, %72 : vector<1x8x8xf32>
    %74 = math.exp %73 : vector<1x8x8xf32>
    %cst_25 = arith.constant dense<0.000000e+00> : vector<1x8xf32>
    %75 = vector.multi_reduction <add>, %74, %cst_25 [2] : vector<1x8x8xf32> to vector<1x8xf32>
    %76 = vector.shape_cast %75 : vector<1x8xf32> to vector<1x8x1xf32>
    %77 = tpu.reciprocal %76 {approx = true} : vector<1x8x1xf32> -> vector<1x8x1xf32>
    %78 = vector.broadcast %77 : vector<1x8x1xf32> to vector<1x8x8xf32>
    %79 = arith.mulf %74, %78 : vector<1x8x8xf32>
    %cst_26 = arith.constant dense<0.000000e+00> : vector<1x8x8xf32>
    %80 = tpu.matmul %79, %68, %cst_26 {dimension_numbers = #tpu.dot_dimension_numbers<[2], [1], [1], [2], [0, 0, 0, 1, 1, 2], [0], [0]>} : vector<1x8x8xf32>, vector<1x8x8xf32>, vector<1x8x8xf32> -> vector<1x8x8xf32>
    %81 = tpu.concatenate %35, %50, %65, %80 in 2 : vector<1x8x8xf32>, vector<1x8x8xf32>, vector<1x8x8xf32>, vector<1x8x8xf32> -> vector<1x8x32xf32>
    %82 = vector.shape_cast %81 : vector<1x8x32xf32> to vector<8x32xf32>
    %83 = arith.truncf %82 : vector<8x32xf32> to vector<8x32xbf16>
    %c0_27 = arith.constant 0 : index
    %c0_28 = arith.constant 0 : index
    %c0_29 = arith.constant 0 : index
    %84 = vector.load %arg5[%c0_27, %c0_28, %c0_29] : memref<2x32x32xbf16, #tpu.memory_space<vmem>>, vector<1x32x32xbf16>
    %85 = vector.shape_cast %84 : vector<1x32x32xbf16> to vector<32x32xbf16>
    %cst_30 = arith.constant dense<0.000000e+00> : vector<8x32xf32>
    %86 = tpu.matmul %83, %85, %cst_30 {dimension_numbers = #tpu.dot_dimension_numbers<[1], [0], [0], [1], [0, 0, 1, 1], [], []>} : vector<8x32xbf16>, vector<32x32xbf16>, vector<8x32xf32> -> vector<8x32xf32>
    %87 = vector.extract_strided_slice %0 {offsets = [2, 0], sizes = [1, 32], strides = [1, 1]} : vector<20x128xf32> to vector<1x32xf32>
    %88 = vector.broadcast %87 : vector<1x32xf32> to vector<8x32xf32>
    %89 = arith.addf %86, %88 : vector<8x32xf32>
    %90 = arith.addf %9, %89 : vector<8x32xf32>
    %91 = vector.extract_strided_slice %0 {offsets = [3, 0], sizes = [1, 32], strides = [1, 1]} : vector<20x128xf32> to vector<1x32xf32>
    %92 = vector.extract_strided_slice %0 {offsets = [4, 0], sizes = [1, 32], strides = [1, 1]} : vector<20x128xf32> to vector<1x32xf32>
    %cst_31 = arith.constant dense<0.000000e+00> : vector<8xf32>
    %93 = vector.multi_reduction <add>, %90, %cst_31 [1] : vector<8x32xf32> to vector<8xf32>
    %94 = vector.shape_cast %93 : vector<8xf32> to vector<8x1xf32>
    %cst_32 = arith.constant 3.200000e+01 : f32
    %95 = vector.broadcast %cst_32 : f32 to vector<8x1xf32>
    %96 = arith.divf %94, %95 : vector<8x1xf32>
    %97 = vector.broadcast %96 : vector<8x1xf32> to vector<8x32xf32>
    %98 = arith.subf %90, %97 : vector<8x32xf32>
    %99 = arith.mulf %98, %98 : vector<8x32xf32>
    %cst_33 = arith.constant dense<0.000000e+00> : vector<8xf32>
    %100 = vector.multi_reduction <add>, %99, %cst_33 [1] : vector<8x32xf32> to vector<8xf32>
    %101 = vector.shape_cast %100 : vector<8xf32> to vector<8x1xf32>
    %cst_34 = arith.constant 3.200000e+01 : f32
    %102 = vector.broadcast %cst_34 : f32 to vector<8x1xf32>
    %103 = arith.divf %101, %102 : vector<8x1xf32>
    %cst_35 = arith.constant 9.99999974E-6 : f32
    %104 = vector.broadcast %cst_35 : f32 to vector<8x1xf32>
    %105 = arith.addf %103, %104 : vector<8x1xf32>
    %106 = math.rsqrt %105 : vector<8x1xf32>
    %107 = vector.broadcast %106 : vector<8x1xf32> to vector<8x32xf32>
    %108 = arith.mulf %98, %107 : vector<8x32xf32>
    %109 = vector.broadcast %91 : vector<1x32xf32> to vector<8x32xf32>
    %110 = arith.mulf %108, %109 : vector<8x32xf32>
    %111 = vector.broadcast %92 : vector<1x32xf32> to vector<8x32xf32>
    %112 = arith.addf %110, %111 : vector<8x32xf32>
    %113 = arith.truncf %112 : vector<8x32xf32> to vector<8x32xbf16>
    %c0_36 = arith.constant 0 : index
    %c0_37 = arith.constant 0 : index
    %c0_38 = arith.constant 0 : index
    %114 = vector.load %arg6[%c0_36, %c0_37, %c0_38] : memref<2x32x64xbf16, #tpu.memory_space<vmem>>, vector<1x32x64xbf16>
    %115 = vector.shape_cast %114 : vector<1x32x64xbf16> to vector<32x64xbf16>
    %cst_39 = arith.constant dense<0.000000e+00> : vector<8x64xf32>
    %116 = tpu.matmul %113, %115, %cst_39 {dimension_numbers = #tpu.dot_dimension_numbers<[1], [0], [0], [1], [0, 0, 1, 1], [], []>} : vector<8x32xbf16>, vector<32x64xbf16>, vector<8x64xf32> -> vector<8x64xf32>
    %117 = vector.extract_strided_slice %0 {offsets = [5, 0], sizes = [1, 64], strides = [1, 1]} : vector<20x128xf32> to vector<1x64xf32>
    %118 = vector.broadcast %117 : vector<1x64xf32> to vector<8x64xf32>
    %119 = arith.addf %116, %118 : vector<8x64xf32>
    %cst_40 = arith.constant 0.000000e+00 : f32
    %120 = vector.broadcast %cst_40 : f32 to vector<8x64xf32>
    %121 = arith.maximumf %119, %120 : vector<8x64xf32>
    %122 = arith.truncf %121 : vector<8x64xf32> to vector<8x64xbf16>
    %c0_41 = arith.constant 0 : index
    %c0_42 = arith.constant 0 : index
    %c0_43 = arith.constant 0 : index
    %123 = vector.load %arg7[%c0_41, %c0_42, %c0_43] : memref<2x64x32xbf16, #tpu.memory_space<vmem>>, vector<1x64x32xbf16>
    %124 = vector.shape_cast %123 : vector<1x64x32xbf16> to vector<64x32xbf16>
    %cst_44 = arith.constant dense<0.000000e+00> : vector<8x32xf32>
    %125 = tpu.matmul %122, %124, %cst_44 {dimension_numbers = #tpu.dot_dimension_numbers<[1], [0], [0], [1], [0, 0, 1, 1], [], []>} : vector<8x64xbf16>, vector<64x32xbf16>, vector<8x32xf32> -> vector<8x32xf32>
    %126 = vector.extract_strided_slice %0 {offsets = [6, 0], sizes = [1, 32], strides = [1, 1]} : vector<20x128xf32> to vector<1x32xf32>
    %127 = vector.broadcast %126 : vector<1x32xf32> to vector<8x32xf32>
    %128 = arith.addf %125, %127 : vector<8x32xf32>
    %129 = arith.addf %112, %128 : vector<8x32xf32>
    %130 = vector.extract_strided_slice %0 {offsets = [7, 0], sizes = [1, 32], strides = [1, 1]} : vector<20x128xf32> to vector<1x32xf32>
    %131 = vector.extract_strided_slice %0 {offsets = [8, 0], sizes = [1, 32], strides = [1, 1]} : vector<20x128xf32> to vector<1x32xf32>
    %cst_45 = arith.constant dense<0.000000e+00> : vector<8xf32>
    %132 = vector.multi_reduction <add>, %129, %cst_45 [1] : vector<8x32xf32> to vector<8xf32>
    %133 = vector.shape_cast %132 : vector<8xf32> to vector<8x1xf32>
    %cst_46 = arith.constant 3.200000e+01 : f32
    %134 = vector.broadcast %cst_46 : f32 to vector<8x1xf32>
    %135 = arith.divf %133, %134 : vector<8x1xf32>
    %136 = vector.broadcast %135 : vector<8x1xf32> to vector<8x32xf32>
    %137 = arith.subf %129, %136 : vector<8x32xf32>
    %138 = arith.mulf %137, %137 : vector<8x32xf32>
    %cst_47 = arith.constant dense<0.000000e+00> : vector<8xf32>
    %139 = vector.multi_reduction <add>, %138, %cst_47 [1] : vector<8x32xf32> to vector<8xf32>
    %140 = vector.shape_cast %139 : vector<8xf32> to vector<8x1xf32>
    %cst_48 = arith.constant 3.200000e+01 : f32
    %141 = vector.broadcast %cst_48 : f32 to vector<8x1xf32>
    %142 = arith.divf %140, %141 : vector<8x1xf32>
    %cst_49 = arith.constant 9.99999974E-6 : f32
    %143 = vector.broadcast %cst_49 : f32 to vector<8x1xf32>
    %144 = arith.addf %142, %143 : vector<8x1xf32>
    %145 = math.rsqrt %144 : vector<8x1xf32>
    %146 = vector.broadcast %145 : vector<8x1xf32> to vector<8x32xf32>
    %147 = arith.mulf %137, %146 : vector<8x32xf32>
    %148 = vector.broadcast %130 : vector<1x32xf32> to vector<8x32xf32>
    %149 = arith.mulf %147, %148 : vector<8x32xf32>
    %150 = vector.broadcast %131 : vector<1x32xf32> to vector<8x32xf32>
    %151 = arith.addf %149, %150 : vector<8x32xf32>
    %152 = arith.truncf %151 : vector<8x32xf32> to vector<8x32xbf16>
    %c1 = arith.constant 1 : index
    %c0_50 = arith.constant 0 : index
    %c0_51 = arith.constant 0 : index
    %153 = vector.load %arg4[%c1, %c0_50, %c0_51] : memref<2x32x96xbf16, #tpu.memory_space<vmem>>, vector<1x32x96xbf16>
    %154 = vector.shape_cast %153 : vector<1x32x96xbf16> to vector<32x96xbf16>
    %cst_52 = arith.constant dense<0.000000e+00> : vector<8x96xf32>
    %155 = tpu.matmul %152, %154, %cst_52 {dimension_numbers = #tpu.dot_dimension_numbers<[1], [0], [0], [1], [0, 0, 1, 1], [], []>} : vector<8x32xbf16>, vector<32x96xbf16>, vector<8x96xf32> -> vector<8x96xf32>
    %156 = vector.extract_strided_slice %0 {offsets = [9, 0], sizes = [1, 96], strides = [1, 1]} : vector<20x128xf32> to vector<1x96xf32>
    %157 = vector.broadcast %156 : vector<1x96xf32> to vector<8x96xf32>
    %158 = arith.addf %155, %157 : vector<8x96xf32>
    %159 = vector.shape_cast %158 : vector<8x96xf32> to vector<1x8x96xf32>
    %160 = vector.extract_strided_slice %159 {offsets = [0, 0, 0], sizes = [1, 8, 32], strides = [1, 1, 1]} : vector<1x8x96xf32> to vector<1x8x32xf32>
    %161 = vector.extract_strided_slice %159 {offsets = [0, 0, 32], sizes = [1, 8, 32], strides = [1, 1, 1]} : vector<1x8x96xf32> to vector<1x8x32xf32>
    %162 = vector.extract_strided_slice %159 {offsets = [0, 0, 64], sizes = [1, 8, 32], strides = [1, 1, 1]} : vector<1x8x96xf32> to vector<1x8x32xf32>
    %163 = vector.extract_strided_slice %160 {offsets = [0, 0, 0], sizes = [1, 8, 8], strides = [1, 1, 1]} : vector<1x8x32xf32> to vector<1x8x8xf32>
    %164 = vector.extract_strided_slice %161 {offsets = [0, 0, 0], sizes = [1, 8, 8], strides = [1, 1, 1]} : vector<1x8x32xf32> to vector<1x8x8xf32>
    %165 = vector.extract_strided_slice %162 {offsets = [0, 0, 0], sizes = [1, 8, 8], strides = [1, 1, 1]} : vector<1x8x32xf32> to vector<1x8x8xf32>
    %cst_53 = arith.constant dense<0.000000e+00> : vector<1x8x8xf32>
    %166 = tpu.matmul %163, %164, %cst_53 {dimension_numbers = #tpu.dot_dimension_numbers<[2], [2], [1], [1], [0, 0, 0, 1, 1, 1], [0], [0]>} : vector<1x8x8xf32>, vector<1x8x8xf32>, vector<1x8x8xf32> -> vector<1x8x8xf32>
    %cst_54 = arith.constant dense<0xFF800000> : vector<1x8xf32>
    %167 = vector.multi_reduction <maximumf>, %166, %cst_54 [2] : vector<1x8x8xf32> to vector<1x8xf32>
    %168 = vector.shape_cast %167 : vector<1x8xf32> to vector<1x8x1xf32>
    %169 = vector.broadcast %168 : vector<1x8x1xf32> to vector<1x8x8xf32>
    %170 = arith.subf %166, %169 : vector<1x8x8xf32>
    %171 = math.exp %170 : vector<1x8x8xf32>
    %cst_55 = arith.constant dense<0.000000e+00> : vector<1x8xf32>
    %172 = vector.multi_reduction <add>, %171, %cst_55 [2] : vector<1x8x8xf32> to vector<1x8xf32>
    %173 = vector.shape_cast %172 : vector<1x8xf32> to vector<1x8x1xf32>
    %174 = tpu.reciprocal %173 {approx = true} : vector<1x8x1xf32> -> vector<1x8x1xf32>
    %175 = vector.broadcast %174 : vector<1x8x1xf32> to vector<1x8x8xf32>
    %176 = arith.mulf %171, %175 : vector<1x8x8xf32>
    %cst_56 = arith.constant dense<0.000000e+00> : vector<1x8x8xf32>
    %177 = tpu.matmul %176, %165, %cst_56 {dimension_numbers = #tpu.dot_dimension_numbers<[2], [1], [1], [2], [0, 0, 0, 1, 1, 2], [0], [0]>} : vector<1x8x8xf32>, vector<1x8x8xf32>, vector<1x8x8xf32> -> vector<1x8x8xf32>
    %178 = vector.extract_strided_slice %160 {offsets = [0, 0, 8], sizes = [1, 8, 8], strides = [1, 1, 1]} : vector<1x8x32xf32> to vector<1x8x8xf32>
    %179 = vector.extract_strided_slice %161 {offsets = [0, 0, 8], sizes = [1, 8, 8], strides = [1, 1, 1]} : vector<1x8x32xf32> to vector<1x8x8xf32>
    %180 = vector.extract_strided_slice %162 {offsets = [0, 0, 8], sizes = [1, 8, 8], strides = [1, 1, 1]} : vector<1x8x32xf32> to vector<1x8x8xf32>
    %cst_57 = arith.constant dense<0.000000e+00> : vector<1x8x8xf32>
    %181 = tpu.matmul %178, %179, %cst_57 {dimension_numbers = #tpu.dot_dimension_numbers<[2], [2], [1], [1], [0, 0, 0, 1, 1, 1], [0], [0]>} : vector<1x8x8xf32>, vector<1x8x8xf32>, vector<1x8x8xf32> -> vector<1x8x8xf32>
    %cst_58 = arith.constant dense<0xFF800000> : vector<1x8xf32>
    %182 = vector.multi_reduction <maximumf>, %181, %cst_58 [2] : vector<1x8x8xf32> to vector<1x8xf32>
    %183 = vector.shape_cast %182 : vector<1x8xf32> to vector<1x8x1xf32>
    %184 = vector.broadcast %183 : vector<1x8x1xf32> to vector<1x8x8xf32>
    %185 = arith.subf %181, %184 : vector<1x8x8xf32>
    %186 = math.exp %185 : vector<1x8x8xf32>
    %cst_59 = arith.constant dense<0.000000e+00> : vector<1x8xf32>
    %187 = vector.multi_reduction <add>, %186, %cst_59 [2] : vector<1x8x8xf32> to vector<1x8xf32>
    %188 = vector.shape_cast %187 : vector<1x8xf32> to vector<1x8x1xf32>
    %189 = tpu.reciprocal %188 {approx = true} : vector<1x8x1xf32> -> vector<1x8x1xf32>
    %190 = vector.broadcast %189 : vector<1x8x1xf32> to vector<1x8x8xf32>
    %191 = arith.mulf %186, %190 : vector<1x8x8xf32>
    %cst_60 = arith.constant dense<0.000000e+00> : vector<1x8x8xf32>
    %192 = tpu.matmul %191, %180, %cst_60 {dimension_numbers = #tpu.dot_dimension_numbers<[2], [1], [1], [2], [0, 0, 0, 1, 1, 2], [0], [0]>} : vector<1x8x8xf32>, vector<1x8x8xf32>, vector<1x8x8xf32> -> vector<1x8x8xf32>
    %193 = vector.extract_strided_slice %160 {offsets = [0, 0, 16], sizes = [1, 8, 8], strides = [1, 1, 1]} : vector<1x8x32xf32> to vector<1x8x8xf32>
    %194 = vector.extract_strided_slice %161 {offsets = [0, 0, 16], sizes = [1, 8, 8], strides = [1, 1, 1]} : vector<1x8x32xf32> to vector<1x8x8xf32>
    %195 = vector.extract_strided_slice %162 {offsets = [0, 0, 16], sizes = [1, 8, 8], strides = [1, 1, 1]} : vector<1x8x32xf32> to vector<1x8x8xf32>
    %cst_61 = arith.constant dense<0.000000e+00> : vector<1x8x8xf32>
    %196 = tpu.matmul %193, %194, %cst_61 {dimension_numbers = #tpu.dot_dimension_numbers<[2], [2], [1], [1], [0, 0, 0, 1, 1, 1], [0], [0]>} : vector<1x8x8xf32>, vector<1x8x8xf32>, vector<1x8x8xf32> -> vector<1x8x8xf32>
    %cst_62 = arith.constant dense<0xFF800000> : vector<1x8xf32>
    %197 = vector.multi_reduction <maximumf>, %196, %cst_62 [2] : vector<1x8x8xf32> to vector<1x8xf32>
    %198 = vector.shape_cast %197 : vector<1x8xf32> to vector<1x8x1xf32>
    %199 = vector.broadcast %198 : vector<1x8x1xf32> to vector<1x8x8xf32>
    %200 = arith.subf %196, %199 : vector<1x8x8xf32>
    %201 = math.exp %200 : vector<1x8x8xf32>
    %cst_63 = arith.constant dense<0.000000e+00> : vector<1x8xf32>
    %202 = vector.multi_reduction <add>, %201, %cst_63 [2] : vector<1x8x8xf32> to vector<1x8xf32>
    %203 = vector.shape_cast %202 : vector<1x8xf32> to vector<1x8x1xf32>
    %204 = tpu.reciprocal %203 {approx = true} : vector<1x8x1xf32> -> vector<1x8x1xf32>
    %205 = vector.broadcast %204 : vector<1x8x1xf32> to vector<1x8x8xf32>
    %206 = arith.mulf %201, %205 : vector<1x8x8xf32>
    %cst_64 = arith.constant dense<0.000000e+00> : vector<1x8x8xf32>
    %207 = tpu.matmul %206, %195, %cst_64 {dimension_numbers = #tpu.dot_dimension_numbers<[2], [1], [1], [2], [0, 0, 0, 1, 1, 2], [0], [0]>} : vector<1x8x8xf32>, vector<1x8x8xf32>, vector<1x8x8xf32> -> vector<1x8x8xf32>
    %208 = vector.extract_strided_slice %160 {offsets = [0, 0, 24], sizes = [1, 8, 8], strides = [1, 1, 1]} : vector<1x8x32xf32> to vector<1x8x8xf32>
    %209 = vector.extract_strided_slice %161 {offsets = [0, 0, 24], sizes = [1, 8, 8], strides = [1, 1, 1]} : vector<1x8x32xf32> to vector<1x8x8xf32>
    %210 = vector.extract_strided_slice %162 {offsets = [0, 0, 24], sizes = [1, 8, 8], strides = [1, 1, 1]} : vector<1x8x32xf32> to vector<1x8x8xf32>
    %cst_65 = arith.constant dense<0.000000e+00> : vector<1x8x8xf32>
    %211 = tpu.matmul %208, %209, %cst_65 {dimension_numbers = #tpu.dot_dimension_numbers<[2], [2], [1], [1], [0, 0, 0, 1, 1, 1], [0], [0]>} : vector<1x8x8xf32>, vector<1x8x8xf32>, vector<1x8x8xf32> -> vector<1x8x8xf32>
    %cst_66 = arith.constant dense<0xFF800000> : vector<1x8xf32>
    %212 = vector.multi_reduction <maximumf>, %211, %cst_66 [2] : vector<1x8x8xf32> to vector<1x8xf32>
    %213 = vector.shape_cast %212 : vector<1x8xf32> to vector<1x8x1xf32>
    %214 = vector.broadcast %213 : vector<1x8x1xf32> to vector<1x8x8xf32>
    %215 = arith.subf %211, %214 : vector<1x8x8xf32>
    %216 = math.exp %215 : vector<1x8x8xf32>
    %cst_67 = arith.constant dense<0.000000e+00> : vector<1x8xf32>
    %217 = vector.multi_reduction <add>, %216, %cst_67 [2] : vector<1x8x8xf32> to vector<1x8xf32>
    %218 = vector.shape_cast %217 : vector<1x8xf32> to vector<1x8x1xf32>
    %219 = tpu.reciprocal %218 {approx = true} : vector<1x8x1xf32> -> vector<1x8x1xf32>
    %220 = vector.broadcast %219 : vector<1x8x1xf32> to vector<1x8x8xf32>
    %221 = arith.mulf %216, %220 : vector<1x8x8xf32>
    %cst_68 = arith.constant dense<0.000000e+00> : vector<1x8x8xf32>
    %222 = tpu.matmul %221, %210, %cst_68 {dimension_numbers = #tpu.dot_dimension_numbers<[2], [1], [1], [2], [0, 0, 0, 1, 1, 2], [0], [0]>} : vector<1x8x8xf32>, vector<1x8x8xf32>, vector<1x8x8xf32> -> vector<1x8x8xf32>
    %223 = tpu.concatenate %177, %192, %207, %222 in 2 : vector<1x8x8xf32>, vector<1x8x8xf32>, vector<1x8x8xf32>, vector<1x8x8xf32> -> vector<1x8x32xf32>
    %224 = vector.shape_cast %223 : vector<1x8x32xf32> to vector<8x32xf32>
    %225 = arith.truncf %224 : vector<8x32xf32> to vector<8x32xbf16>
    %c1_69 = arith.constant 1 : index
    %c0_70 = arith.constant 0 : index
    %c0_71 = arith.constant 0 : index
    %226 = vector.load %arg5[%c1_69, %c0_70, %c0_71] : memref<2x32x32xbf16, #tpu.memory_space<vmem>>, vector<1x32x32xbf16>
    %227 = vector.shape_cast %226 : vector<1x32x32xbf16> to vector<32x32xbf16>
    %cst_72 = arith.constant dense<0.000000e+00> : vector<8x32xf32>
    %228 = tpu.matmul %225, %227, %cst_72 {dimension_numbers = #tpu.dot_dimension_numbers<[1], [0], [0], [1], [0, 0, 1, 1], [], []>} : vector<8x32xbf16>, vector<32x32xbf16>, vector<8x32xf32> -> vector<8x32xf32>
    %229 = vector.extract_strided_slice %0 {offsets = [10, 0], sizes = [1, 32], strides = [1, 1]} : vector<20x128xf32> to vector<1x32xf32>
    %230 = vector.broadcast %229 : vector<1x32xf32> to vector<8x32xf32>
    %231 = arith.addf %228, %230 : vector<8x32xf32>
    %232 = arith.addf %151, %231 : vector<8x32xf32>
    %233 = vector.extract_strided_slice %0 {offsets = [11, 0], sizes = [1, 32], strides = [1, 1]} : vector<20x128xf32> to vector<1x32xf32>
    %234 = vector.extract_strided_slice %0 {offsets = [12, 0], sizes = [1, 32], strides = [1, 1]} : vector<20x128xf32> to vector<1x32xf32>
    %cst_73 = arith.constant dense<0.000000e+00> : vector<8xf32>
    %235 = vector.multi_reduction <add>, %232, %cst_73 [1] : vector<8x32xf32> to vector<8xf32>
    %236 = vector.shape_cast %235 : vector<8xf32> to vector<8x1xf32>
    %cst_74 = arith.constant 3.200000e+01 : f32
    %237 = vector.broadcast %cst_74 : f32 to vector<8x1xf32>
    %238 = arith.divf %236, %237 : vector<8x1xf32>
    %239 = vector.broadcast %238 : vector<8x1xf32> to vector<8x32xf32>
    %240 = arith.subf %232, %239 : vector<8x32xf32>
    %241 = arith.mulf %240, %240 : vector<8x32xf32>
    %cst_75 = arith.constant dense<0.000000e+00> : vector<8xf32>
    %242 = vector.multi_reduction <add>, %241, %cst_75 [1] : vector<8x32xf32> to vector<8xf32>
    %243 = vector.shape_cast %242 : vector<8xf32> to vector<8x1xf32>
    %cst_76 = arith.constant 3.200000e+01 : f32
    %244 = vector.broadcast %cst_76 : f32 to vector<8x1xf32>
    %245 = arith.divf %243, %244 : vector<8x1xf32>
    %cst_77 = arith.constant 9.99999974E-6 : f32
    %246 = vector.broadcast %cst_77 : f32 to vector<8x1xf32>
    %247 = arith.addf %245, %246 : vector<8x1xf32>
    %248 = math.rsqrt %247 : vector<8x1xf32>
    %249 = vector.broadcast %248 : vector<8x1xf32> to vector<8x32xf32>
    %250 = arith.mulf %240, %249 : vector<8x32xf32>
    %251 = vector.broadcast %233 : vector<1x32xf32> to vector<8x32xf32>
    %252 = arith.mulf %250, %251 : vector<8x32xf32>
    %253 = vector.broadcast %234 : vector<1x32xf32> to vector<8x32xf32>
    %254 = arith.addf %252, %253 : vector<8x32xf32>
    %255 = arith.truncf %254 : vector<8x32xf32> to vector<8x32xbf16>
    %c1_78 = arith.constant 1 : index
    %c0_79 = arith.constant 0 : index
    %c0_80 = arith.constant 0 : index
    %256 = vector.load %arg6[%c1_78, %c0_79, %c0_80] : memref<2x32x64xbf16, #tpu.memory_space<vmem>>, vector<1x32x64xbf16>
    %257 = vector.shape_cast %256 : vector<1x32x64xbf16> to vector<32x64xbf16>
    %cst_81 = arith.constant dense<0.000000e+00> : vector<8x64xf32>
    %258 = tpu.matmul %255, %257, %cst_81 {dimension_numbers = #tpu.dot_dimension_numbers<[1], [0], [0], [1], [0, 0, 1, 1], [], []>} : vector<8x32xbf16>, vector<32x64xbf16>, vector<8x64xf32> -> vector<8x64xf32>
    %259 = vector.extract_strided_slice %0 {offsets = [13, 0], sizes = [1, 64], strides = [1, 1]} : vector<20x128xf32> to vector<1x64xf32>
    %260 = vector.broadcast %259 : vector<1x64xf32> to vector<8x64xf32>
    %261 = arith.addf %258, %260 : vector<8x64xf32>
    %cst_82 = arith.constant 0.000000e+00 : f32
    %262 = vector.broadcast %cst_82 : f32 to vector<8x64xf32>
    %263 = arith.maximumf %261, %262 : vector<8x64xf32>
    %264 = arith.truncf %263 : vector<8x64xf32> to vector<8x64xbf16>
    %c1_83 = arith.constant 1 : index
    %c0_84 = arith.constant 0 : index
    %c0_85 = arith.constant 0 : index
    %265 = vector.load %arg7[%c1_83, %c0_84, %c0_85] : memref<2x64x32xbf16, #tpu.memory_space<vmem>>, vector<1x64x32xbf16>
    %266 = vector.shape_cast %265 : vector<1x64x32xbf16> to vector<64x32xbf16>
    %cst_86 = arith.constant dense<0.000000e+00> : vector<8x32xf32>
    %267 = tpu.matmul %264, %266, %cst_86 {dimension_numbers = #tpu.dot_dimension_numbers<[1], [0], [0], [1], [0, 0, 1, 1], [], []>} : vector<8x64xbf16>, vector<64x32xbf16>, vector<8x32xf32> -> vector<8x32xf32>
    %268 = vector.extract_strided_slice %0 {offsets = [14, 0], sizes = [1, 32], strides = [1, 1]} : vector<20x128xf32> to vector<1x32xf32>
    %269 = vector.broadcast %268 : vector<1x32xf32> to vector<8x32xf32>
    %270 = arith.addf %267, %269 : vector<8x32xf32>
    %271 = arith.addf %254, %270 : vector<8x32xf32>
    %272 = vector.extract_strided_slice %0 {offsets = [15, 0], sizes = [1, 32], strides = [1, 1]} : vector<20x128xf32> to vector<1x32xf32>
    %273 = vector.extract_strided_slice %0 {offsets = [16, 0], sizes = [1, 32], strides = [1, 1]} : vector<20x128xf32> to vector<1x32xf32>
    %cst_87 = arith.constant dense<0.000000e+00> : vector<8xf32>
    %274 = vector.multi_reduction <add>, %271, %cst_87 [1] : vector<8x32xf32> to vector<8xf32>
    %275 = vector.shape_cast %274 : vector<8xf32> to vector<8x1xf32>
    %cst_88 = arith.constant 3.200000e+01 : f32
    %276 = vector.broadcast %cst_88 : f32 to vector<8x1xf32>
    %277 = arith.divf %275, %276 : vector<8x1xf32>
    %278 = vector.broadcast %277 : vector<8x1xf32> to vector<8x32xf32>
    %279 = arith.subf %271, %278 : vector<8x32xf32>
    %280 = arith.mulf %279, %279 : vector<8x32xf32>
    %cst_89 = arith.constant dense<0.000000e+00> : vector<8xf32>
    %281 = vector.multi_reduction <add>, %280, %cst_89 [1] : vector<8x32xf32> to vector<8xf32>
    %282 = vector.shape_cast %281 : vector<8xf32> to vector<8x1xf32>
    %cst_90 = arith.constant 3.200000e+01 : f32
    %283 = vector.broadcast %cst_90 : f32 to vector<8x1xf32>
    %284 = arith.divf %282, %283 : vector<8x1xf32>
    %cst_91 = arith.constant 9.99999974E-6 : f32
    %285 = vector.broadcast %cst_91 : f32 to vector<8x1xf32>
    %286 = arith.addf %284, %285 : vector<8x1xf32>
    %287 = math.rsqrt %286 : vector<8x1xf32>
    %288 = vector.broadcast %287 : vector<8x1xf32> to vector<8x32xf32>
    %289 = arith.mulf %279, %288 : vector<8x32xf32>
    %290 = vector.broadcast %272 : vector<1x32xf32> to vector<8x32xf32>
    %291 = arith.mulf %289, %290 : vector<8x32xf32>
    %292 = vector.broadcast %273 : vector<1x32xf32> to vector<8x32xf32>
    %293 = arith.addf %291, %292 : vector<8x32xf32>
    %294 = arith.truncf %293 : vector<8x32xf32> to vector<8x32xbf16>
    %c0_92 = arith.constant 0 : index
    %c0_93 = arith.constant 0 : index
    %295 = vector.load %arg8[%c0_92, %c0_93] : memref<32x32xbf16, #tpu.memory_space<vmem>>, vector<32x32xbf16>
    %cst_94 = arith.constant dense<0.000000e+00> : vector<8x32xf32>
    %296 = tpu.matmul %294, %295, %cst_94 {dimension_numbers = #tpu.dot_dimension_numbers<[1], [0], [0], [1], [0, 0, 1, 1], [], []>} : vector<8x32xbf16>, vector<32x32xbf16>, vector<8x32xf32> -> vector<8x32xf32>
    %297 = vector.extract_strided_slice %0 {offsets = [17, 0], sizes = [1, 32], strides = [1, 1]} : vector<20x128xf32> to vector<1x32xf32>
    %298 = vector.broadcast %297 : vector<1x32xf32> to vector<8x32xf32>
    %299 = arith.addf %296, %298 : vector<8x32xf32>
    %cst_95 = arith.constant 0.000000e+00 : f32
    %300 = vector.broadcast %cst_95 : f32 to vector<8x32xf32>
    %301 = arith.maximumf %299, %300 : vector<8x32xf32>
    %302 = arith.truncf %301 : vector<8x32xf32> to vector<8x32xbf16>
    %c0_96 = arith.constant 0 : index
    %c0_97 = arith.constant 0 : index
    %303 = vector.load %arg9[%c0_96, %c0_97] : memref<32x16xbf16, #tpu.memory_space<vmem>>, vector<32x16xbf16>
    %cst_98 = arith.constant dense<0.000000e+00> : vector<8x16xf32>
    %304 = tpu.matmul %302, %303, %cst_98 {dimension_numbers = #tpu.dot_dimension_numbers<[1], [0], [0], [1], [0, 0, 1, 1], [], []>} : vector<8x32xbf16>, vector<32x16xbf16>, vector<8x16xf32> -> vector<8x16xf32>
    %305 = vector.extract_strided_slice %0 {offsets = [18, 0], sizes = [1, 16], strides = [1, 1]} : vector<20x128xf32> to vector<1x16xf32>
    %306 = vector.broadcast %305 : vector<1x16xf32> to vector<8x16xf32>
    %307 = arith.addf %304, %306 : vector<8x16xf32>
    %cst_99 = arith.constant 0.000000e+00 : f32
    %308 = vector.broadcast %cst_99 : f32 to vector<8x16xf32>
    %309 = arith.maximumf %307, %308 : vector<8x16xf32>
    %310 = arith.truncf %309 : vector<8x16xf32> to vector<8x16xbf16>
    %c0_100 = arith.constant 0 : index
    %c0_101 = arith.constant 0 : index
    %311 = vector.load %arg10[%c0_100, %c0_101] : memref<16x128xbf16, #tpu.memory_space<vmem>>, vector<16x128xbf16>
    %cst_102 = arith.constant dense<0.000000e+00> : vector<8x128xf32>
    %312 = tpu.matmul %310, %311, %cst_102 {dimension_numbers = #tpu.dot_dimension_numbers<[1], [0], [0], [1], [0, 0, 1, 1], [], []>} : vector<8x16xbf16>, vector<16x128xbf16>, vector<8x128xf32> -> vector<8x128xf32>
    %313 = vector.extract_strided_slice %0 {offsets = [19, 0], sizes = [1, 128], strides = [1, 1]} : vector<20x128xf32> to vector<1x128xf32>
    %314 = vector.broadcast %313 : vector<1x128xf32> to vector<8x128xf32>
    %315 = arith.addf %312, %314 : vector<8x128xf32>
    %316 = vector.shape_cast %315 : vector<8x128xf32> to vector<1x8x128xf32>
    %c0_103 = arith.constant 0 : index
    %c0_104 = arith.constant 0 : index
    %c0_105 = arith.constant 0 : index
    %317 = vector.load %arg11[%c0_103, %c0_104, %c0_105] : memref<1x8x128xf32, #tpu.memory_space<vmem>>, vector<1x8x128xf32>
    tpu.vector_store %arg11[%c0_103, %c0_104, %c0_105], %316 {strides = array<i32>} : memref<1x8x128xf32, #tpu.memory_space<vmem>>, vector<1x8x128xf32>,
    return
  }
  func.func @transform_0(%arg0: i32) -> (i32, i32, i32) {
    %c0_i32 = arith.constant 0 : i32
    %c0_i32_0 = arith.constant 0 : i32
    %c0_i32_1 = arith.constant 0 : i32
    return %arg0, %c0_i32, %c0_i32_0 : i32, i32, i32
  }
  func.func @transform_1(%arg0: i32) -> (i32, i32) {
    %c0_i32 = arith.constant 0 : i32
    %c0_i32_0 = arith.constant 0 : i32
    %c0_i32_1 = arith.constant 0 : i32
    return %c0_i32, %c0_i32_0 : i32, i32
  }
  func.func @transform_2(%arg0: i32) -> (i32, i32) {
    %c0_i32 = arith.constant 0 : i32
    %c0_i32_0 = arith.constant 0 : i32
    %c0_i32_1 = arith.constant 0 : i32
    return %c0_i32, %c0_i32_0 : i32, i32
  }
  func.func @transform_3(%arg0: i32) -> (i32, i32, i32) {
    %c0_i32 = arith.constant 0 : i32
    %c0_i32_0 = arith.constant 0 : i32
    %c0_i32_1 = arith.constant 0 : i32
    %c0_i32_2 = arith.constant 0 : i32
    return %c0_i32, %c0_i32_0, %c0_i32_1 : i32, i32, i32
  }
  func.func @transform_4(%arg0: i32) -> (i32, i32, i32) {
    %c0_i32 = arith.constant 0 : i32
    %c0_i32_0 = arith.constant 0 : i32
    %c0_i32_1 = arith.constant 0 : i32
    %c0_i32_2 = arith.constant 0 : i32
    return %c0_i32, %c0_i32_0, %c0_i32_1 : i32, i32, i32
  }
  func.func @transform_5(%arg0: i32) -> (i32, i32, i32) {
    %c0_i32 = arith.constant 0 : i32
    %c0_i32_0 = arith.constant 0 : i32
    %c0_i32_1 = arith.constant 0 : i32
    %c0_i32_2 = arith.constant 0 : i32
    return %c0_i32, %c0_i32_0, %c0_i32_1 : i32, i32, i32
  }
  func.func @transform_6(%arg0: i32) -> (i32, i32, i32) {
    %c0_i32 = arith.constant 0 : i32
    %c0_i32_0 = arith.constant 0 : i32
    %c0_i32_1 = arith.constant 0 : i32
    %c0_i32_2 = arith.constant 0 : i32
    return %c0_i32, %c0_i32_0, %c0_i32_1 : i32, i32, i32
  }
  func.func @transform_7(%arg0: i32) -> (i32, i32) {
    %c0_i32 = arith.constant 0 : i32
    %c0_i32_0 = arith.constant 0 : i32
    %c0_i32_1 = arith.constant 0 : i32
    return %c0_i32, %c0_i32_0 : i32, i32
  }
  func.func @transform_8(%arg0: i32) -> (i32, i32) {
    %c0_i32 = arith.constant 0 : i32
    %c0_i32_0 = arith.constant 0 : i32
    %c0_i32_1 = arith.constant 0 : i32
    return %c0_i32, %c0_i32_0 : i32, i32
  }
  func.func @transform_9(%arg0: i32) -> (i32, i32) {
    %c0_i32 = arith.constant 0 : i32
    %c0_i32_0 = arith.constant 0 : i32
    %c0_i32_1 = arith.constant 0 : i32
    return %c0_i32, %c0_i32_0 : i32, i32
  }
  func.func @transform_10(%arg0: i32) -> (i32, i32, i32) {
    %c0_i32 = arith.constant 0 : i32
    %c0_i32_0 = arith.constant 0 : i32
    %c0_i32_1 = arith.constant 0 : i32
    return %arg0, %c0_i32, %c0_i32_0 : i32, i32, i32
  }
}

module attributes {stable_mosaic.version = 11 : i64} {
  func.func @_siglab_fused_kernel(%arg0: i32, %arg1: memref<1x8x64xbf16, #tpu.memory_space<vmem>>, %arg2: memref<20x128xf32, #tpu.memory_space<vmem>>, %arg3: memref<64x32xbf16, #tpu.memory_space<vmem>>, %arg4: memref<2x32x96xbf16, #tpu.memory_space<vmem>>, %arg5: memref<2x32x32xbf16, #tpu.memory_space<vmem>>, %arg6: memref<2x32x64xbf16, #tpu.memory_space<vmem>>, %arg7: memref<2x64x32xbf16, #tpu.memory_space<vmem>>, %arg8: memref<32x32xbf16, #tpu.memory_space<vmem>>, %arg9: memref<32x16xbf16, #tpu.memory_space<vmem>>, %arg10: memref<16x128xbf16, #tpu.memory_space<vmem>>, %arg11: memref<1x8x128xf32, #tpu.memory_space<vmem>>) attributes {dimension_semantics = [#tpu.dimension_semantics<parallel>], iteration_bounds = array<i64: 2>, scalar_prefetch = 0 : i64, scratch_operands = 0 : i64, tpu.core_type = #tpu.core_type<tc>, window_params = [{transform_indices = @transform_0, window_bounds = array<i64: 1, 8, 64>}, {pipeline_mode = #tpu.pipeline_mode<synchronous>, transform_indices = @transform_1, window_bounds = array<i64: 20, 128>}, {pipeline_mode = #tpu.pipeline_mode<synchronous>, transform_indices = @transform_2, window_bounds = array<i64: 64, 32>}, {pipeline_mode = #tpu.pipeline_mode<synchronous>, transform_indices = @transform_3, window_bounds = array<i64: 2, 32, 96>}, {pipeline_mode = #tpu.pipeline_mode<synchronous>, transform_indices = @transform_4, window_bounds = array<i64: 2, 32, 32>}, {pipeline_mode = #tpu.pipeline_mode<synchronous>, transform_indices = @transform_5, window_bounds = array<i64: 2, 32, 64>}, {pipeline_mode = #tpu.pipeline_mode<synchronous>, transform_indices = @transform_6, window_bounds = array<i64: 2, 64, 32>}, {pipeline_mode = #tpu.pipeline_mode<synchronous>, transform_indices = @transform_7, window_bounds = array<i64: 32, 32>}, {pipeline_mode = #tpu.pipeline_mode<synchronous>, transform_indices = @transform_8, window_bounds = array<i64: 32, 16>}, {pipeline_mode = #tpu.pipeline_mode<synchronous>, transform_indices = @transform_9, window_bounds = array<i64: 16, 128>}, {transform_indices = @transform_10, window_bounds = array<i64: 1, 8, 128>}]} {
    %c0 = arith.constant 0 : index
    %c0_0 = arith.constant 0 : index
    %0 = vector.load %arg2[%c0, %c0_0] : memref<20x128xf32, #tpu.memory_space<vmem>>, vector<20x128xf32>
    %c0_1 = arith.constant 0 : index
    %c0_2 = arith.constant 0 : index
    %c0_3 = arith.constant 0 : index
    %1 = vector.load %arg1[%c0_1, %c0_2, %c0_3] : memref<1x8x64xbf16, #tpu.memory_space<vmem>>, vector<1x8x64xbf16>
    %2 = vector.shape_cast %1 : vector<1x8x64xbf16> to vector<8x64xbf16>
    %c0_4 = arith.constant 0 : index
    %c0_5 = arith.constant 0 : index
    %3 = vector.load %arg3[%c0_4, %c0_5] : memref<64x32xbf16, #tpu.memory_space<vmem>>, vector<64x32xbf16>
    %cst = arith.constant dense<0.000000e+00> : vector<8x32xf32>
    %4 = tpu.matmul %2, %3, %cst {dimension_numbers = #tpu.dot_dimension_numbers<[1], [0], [0], [1], [0, 0, 1, 1], [], []>} : vector<8x64xbf16>, vector<64x32xbf16>, vector<8x32xf32> -> vector<8x32xf32>
    %5 = vector.extract_strided_slice %0 {offsets = [0, 0], sizes = [1, 32], strides = [1, 1]} : vector<20x128xf32> to vector<1x32xf32>
    %6 = vector.broadcast %5 : vector<1x32xf32> to vector<8x32xf32>
    %7 = arith.addf %4, %6 : vector<8x32xf32>
    %cst_6 = arith.constant 0.000000e+00 : f32
    %8 = vector.broadcast %cst_6 : f32 to vector<8x32xf32>
    %9 = arith.maximumf %7, %8 : vector<8x32xf32>
    %10 = arith.truncf %9 : vector<8x32xf32> to vector<8x32xbf16>
    %c0_7 = arith.constant 0 : index
    %c0_8 = arith.constant 0 : index
    %c0_9 = arith.constant 0 : index
    %11 = vector.load %arg4[%c0_7, %c0_8, %c0_9] : memref<2x32x96xbf16, #tpu.memory_space<vmem>>, vector<1x32x96xbf16>
    %12 = vector.shape_cast %11 : vector<1x32x96xbf16> to vector<32x96xbf16>
    %cst_10 = arith.constant dense<0.000000e+00> : vector<8x96xf32>
    %13 = tpu.matmul %10, %12, %cst_10 {dimension_numbers = #tpu.dot_dimension_numbers<[1], [0], [0], [1], [0, 0, 1, 1], [], []>} : vector<8x32xbf16>, vector<32x96xbf16>, vector<8x96xf32> -> vector<8x96xf32>
    %14 = vector.extract_strided_slice %0 {offsets = [1, 0], sizes = [1, 96], strides = [1, 1]} : vector<20x128xf32> to vector<1x96xf32>
    %15 = vector.broadcast %14 : vector<1x96xf32> to vector<8x96xf32>
    %16 = arith.addf %13, %15 : vector<8x96xf32>
    %17 = vector.shape_cast %16 : vector<8x96xf32> to vector<1x8x96xf32>
    %18 = vector.extract_strided_slice %17 {offsets = [0, 0, 0], sizes = [1, 8, 32], strides = [1, 1, 1]} : vector<1x8x96xf32> to vector<1x8x32xf32>
    %19 = vector.extract_strided_slice %17 {offsets = [0, 0, 32], sizes = [1, 8, 32], strides = [1, 1, 1]} : vector<1x8x96xf32> to vector<1x8x32xf32>
    %20 = vector.extract_strided_slice %17 {offsets = [0, 0, 64], sizes = [1, 8, 32], strides = [1, 1, 1]} : vector<1x8x96xf32> to vector<1x8x32xf32>
    %21 = vector.extract_strided_slice %18 {offsets = [0, 0, 0], sizes = [1, 8, 8], strides = [1, 1, 1]} : vector<1x8x32xf32> to vector<1x8x8xf32>
    %22 = vector.extract_strided_slice %19 {offsets = [0, 0, 0], sizes = [1, 8, 8], strides = [1, 1, 1]} : vector<1x8x32xf32> to vector<1x8x8xf32>
    %23 = vector.extract_strided_slice %20 {offsets = [0, 0, 0], sizes = [1, 8, 8], strides = [1, 1, 1]} : vector<1x8x32xf32> to vector<1x8x8xf32>
    %cst_11 = arith.constant dense<0.000000e+00> : vector<1x8x8xf32>
    %24 = tpu.matmul %21, %22, %cst_11 {dimension_numbers = #tpu.dot_dimension_numbers<[2], [2], [1], [1], [0, 0, 0, 1, 1, 1], [0], [0]>} : vector<1x8x8xf32>, vector<1x8x8xf32>, vector<1x8x8xf32> -> vector<1x8x8xf32>
    %cst_12 = arith.constant dense<0xFF800000> : vector<1x8xf32>
    %25 = vector.multi_reduction <maximumf>, %24, %cst_12 [2] : vector<1x8x8xf32> to vector<1x8xf32>
    %26 = vector.shape_cast %25 : vector<1x8xf32> to vector<1x8x1xf32>
    %27 = vector.broadcast %26 : vector<1x8x1xf32> to vector<1x8x8xf32>
    %28 = arith.subf %24, %27 : vector<1x8x8xf32>
    %29 = math.exp %28 : vector<1x8x8xf32>
    %cst_13 = arith.constant dense<0.000000e+00> : vector<1x8xf32>
    %30 = vector.multi_reduction <add>, %29, %cst_13 [2] : vector<1x8x8xf32> to vector<1x8xf32>
    %31 = vector.shape_cast %30 : vector<1x8xf32> to vector<1x8x1xf32>
    %32 = tpu.reciprocal %31 {approx = true} : vector<1x8x1xf32> -> vector<1x8x1xf32>
    %33 = vector.broadcast %32 : vector<1x8x1xf32> to vector<1x8x8xf32>
    %34 = arith.mulf %29, %33 : vector<1x8x8xf32>
    %cst_14 = arith.constant dense<0.000000e+00> : vector<1x8x8xf32>
    %35 = tpu.matmul %34, %23, %cst_14 {dimension_numbers = #tpu.dot_dimension_numbers<[2], [1], [1], [2], [0, 0, 0, 1, 1, 2], [0], [0]>} : vector<1x8x8xf32>, vector<1x8x8xf32>, vector<1x8x8xf32> -> vector<1x8x8xf32>
    %36 = vector.extract_strided_slice %18 {offsets = [0, 0, 8], sizes = [1, 8, 8], strides = [1, 1, 1]} : vector<1x8x32xf32> to vector<1x8x8xf32>
    %37 = vector.extract_strided_slice %19 {offsets = [0, 0, 8], sizes = [1, 8, 8], strides = [1, 1, 1]} : vector<1x8x32xf32> to vector<1x8x8xf32>
    %38 = vector.extract_strided_slice %20 {offsets = [0, 0, 8], sizes = [1, 8, 8], strides = [1, 1, 1]} : vector<1x8x32xf32> to vector<1x8x8xf32>
    %cst_15 = arith.constant dense<0.000000e+00> : vector<1x8x8xf32>
    %39 = tpu.matmul %36, %37, %cst_15 {dimension_numbers = #tpu.dot_dimension_numbers<[2], [2], [1], [1], [0, 0, 0, 1, 1, 1], [0], [0]>} : vector<1x8x8xf32>, vector<1x8x8xf32>, vector<1x8x8xf32> -> vector<1x8x8xf32>
    %cst_16 = arith.constant dense<0xFF800000> : vector<1x8xf32>
    %40 = vector.multi_reduction <maximumf>, %39, %cst_16 [2] : vector<1x8x8xf32> to vector<1x8xf32>
    %41 = vector.shape_cast %40 : vector<1x8xf32> to vector<1x8x1xf32>
    %42 = vector.broadcast %41 : vector<1x8x1xf32> to vector<1x8x8xf32>
    %43 = arith.subf %39, %42 : vector<1x8x8xf32>
    %44 = math.exp %43 : vector<1x8x8xf32>
    %cst_17 = arith.constant dense<0.000000e+00> : vector<1x8xf32>
    %45 = vector.multi_reduction <add>, %44, %cst_17 [2] : vector<1x8x8xf32> to vector<1x8xf32>
    %46 = vector.shape_cast %45 : vector<1x8xf32> to vector<1x8x1xf32>
    %47 = tpu.reciprocal %46 {approx = true} : vector<1x8x1xf32> -> vector<1x8x1xf32>
    %48 = vector.broadcast %47 : vector<1x8x1xf32> to vector<1x8x8xf32>
    %49 = arith.mulf %44, %48 : vector<1x8x8xf32>
    %cst_18 = arith.constant dense<0.000000e+00> : vector<1x8x8xf32>
    %50 = tpu.matmul %49, %38, %cst_18 {dimension_numbers = #tpu.dot_dimension_numbers<[2], [1], [1], [2], [0, 0, 0, 1, 1, 2], [0], [0]>} : vector<1x8x8xf32>, vector<1x8x8xf32>, vector<1x8x8xf32> -> vector<1x8x8xf32>
    %51 = vector.extract_strided_slice %18 {offsets = [0, 0, 16], sizes = [1, 8, 8], strides = [1, 1, 1]} : vector<1x8x32xf32> to vector<1x8x8xf32>
    %52 = vector.extract_strided_slice %19 {offsets = [0, 0, 16], sizes = [1, 8, 8], strides = [1, 1, 1]} : vector<1x8x32xf32> to vector<1x8x8xf32>
    %53 = vector.extract_strided_slice %20 {offsets = [0, 0, 16], sizes = [1, 8, 8], strides = [1, 1, 1]} : vector<1x8x32xf32> to vector<1x8x8xf32>
    %cst_19 = arith.constant dense<0.000000e+00> : vector<1x8x8xf32>
    %54 = tpu.matmul %51, %52, %cst_19 {dimension_numbers = #tpu.dot_dimension_numbers<[2], [2], [1], [1], [0, 0, 0, 1, 1, 1], [0], [0]>} : vector<1x8x8xf32>, vector<1x8x8xf32>, vector<1x8x8xf32> -> vector<1x8x8xf32>
    %cst_20 = arith.constant dense<0xFF800000> : vector<1x8xf32>
    %55 = vector.multi_reduction <maximumf>, %54, %cst_20 [2] : vector<1x8x8xf32> to vector<1x8xf32>
    %56 = vector.shape_cast %55 : vector<1x8xf32> to vector<1x8x1xf32>
    %57 = vector.broadcast %56 : vector<1x8x1xf32> to vector<1x8x8xf32>
    %58 = arith.subf %54, %57 : vector<1x8x8xf32>
    %59 = math.exp %58 : vector<1x8x8xf32>
    %cst_21 = arith.constant dense<0.000000e+00> : vector<1x8xf32>
    %60 = vector.multi_reduction <add>, %59, %cst_21 [2] : vector<1x8x8xf32> to vector<1x8xf32>
    %61 = vector.shape_cast %60 : vector<1x8xf32> to vector<1x8x1xf32>
    %62 = tpu.reciprocal %61 {approx = true} : vector<1x8x1xf32> -> vector<1x8x1xf32>
    %63 = vector.broadcast %62 : vector<1x8x1xf32> to vector<1x8x8xf32>
    %64 = arith.mulf %59, %63 : vector<1x8x8xf32>
    %cst_22 = arith.constant dense<0.000000e+00> : vector<1x8x8xf32>
    %65 = tpu.matmul %64, %53, %cst_22 {dimension_numbers = #tpu.dot_dimension_numbers<[2], [1], [1], [2], [0, 0, 0, 1, 1, 2], [0], [0]>} : vector<1x8x8xf32>, vector<1x8x8xf32>, vector<1x8x8xf32> -> vector<1x8x8xf32>
    %66 = vector.extract_strided_slice %18 {offsets = [0, 0, 24], sizes = [1, 8, 8], strides = [1, 1, 1]} : vector<1x8x32xf32> to vector<1x8x8xf32>
    %67 = vector.extract_strided_slice %19 {offsets = [0, 0, 24], sizes = [1, 8, 8], strides = [1, 1, 1]} : vector<1x8x32xf32> to vector<1x8x8xf32>
    %68 = vector.extract_strided_slice %20 {offsets = [0, 0, 24], sizes = [1, 8, 8], strides = [1, 1, 1]} : vector<1x8x32xf32> to vector<1x8x8xf32>
    %cst_23 = arith.constant dense<0.000000e+00> : vector<1x8x8xf32>
    %69 = tpu.matmul %66, %67, %cst_23 {dimension_numbers = #tpu.dot_dimension_numbers<[2], [2], [1], [1], [0, 0, 0, 1, 1, 1], [0], [0]>} : vector<1x8x8xf32>, vector<1x8x8xf32>, vector<1x8x8xf32> -> vector<1x8x8xf32>
    %cst_24 = arith.constant dense<0xFF800000> : vector<1x8xf32>
    %70 = vector.multi_reduction <maximumf>, %69, %cst_24 [2] : vector<1x8x8xf32> to vector<1x8xf32>
    %71 = vector.shape_cast %70 : vector<1x8xf32> to vector<1x8x1xf32>
    %72 = vector.broadcast %71 : vector<1x8x1xf32> to vector<1x8x8xf32>
    %73 = arith.subf %69, %72 : vector<1x8x8xf32>
    %74 = math.exp %73 : vector<1x8x8xf32>
    %cst_25 = arith.constant dense<0.000000e+00> : vector<1x8xf32>
    %75 = vector.multi_reduction <add>, %74, %cst_25 [2] : vector<1x8x8xf32> to vector<1x8xf32>
    %76 = vector.shape_cast %75 : vector<1x8xf32> to vector<1x8x1xf32>
    %77 = tpu.reciprocal %76 {approx = true} : vector<1x8x1xf32> -> vector<1x8x1xf32>
    %78 = vector.broadcast %77 : vector<1x8x1xf32> to vector<1x8x8xf32>
    %79 = arith.mulf %74, %78 : vector<1x8x8xf32>
    %cst_26 = arith.constant dense<0.000000e+00> : vector<1x8x8xf32>
    %80 = tpu.matmul %79, %68, %cst_26 {dimension_numbers = #tpu.dot_dimension_numbers<[2], [1], [1], [2], [0, 0, 0, 1, 1, 2], [0], [0]>} : vector<1x8x8xf32>, vector<1x8x8xf32>, vector<1x8x8xf32> -> vector<1x8x8xf32>
    %81 = tpu.concatenate %35, %50, %65, %80 in 2 : vector<1x8x8xf32>, vector<1x8x8xf32>, vector<1x8x8xf32>, vector<1x8x8xf32> -> vector<1x8x32xf32>
    %82 = vector.shape_cast %81 : vector<1x8x32xf32> to vector<8x32xf32>
    %83 = arith.truncf %82 : vector<8x32xf32> to vector<8x32xbf16>
    %c0_27 = arith.constant 0 : index
    %c0_28 = arith.constant 0 : index
    %c0_29 = arith.constant 0 : index
    %84 = vector.load %arg5[%c0_27, %c0_28, %c0_29] : memref<2x32x32xbf16, #tpu.memory_space<vmem>>, vector<1x32x32xbf16>
    %85 = vector.shape_cast %84 : vector<1x32x32xbf16> to vector<32x32xbf16>
    %cst_30 = arith.constant dense<0.000000e+00> : vector<8x32xf32>
    %86 = tpu.matmul %83, %85, %cst_30 {dimension_numbers = #tpu.dot_dimension_numbers<[1], [0], [0], [1], [0, 0, 1, 1], [], []>} : vector<8x32xbf16>, vector<32x32xbf16>, vector<8x32xf32> -> vector<8x32xf32>
    %87 = vector.extract_strided_slice %0 {offsets = [2, 0], sizes = [1, 32], strides = [1, 1]} : vector<20x128xf32> to vector<1x32xf32>
    %88 = vector.broadcast %87 : vector<1x32xf32> to vector<8x32xf32>
    %89 = arith.addf %86, %88 : vector<8x32xf32>
    %90 = arith.addf %9, %89 : vector<8x32xf32>
    %91 = vector.extract_strided_slice %0 {offsets = [3, 0], sizes = [1, 32], strides = [1, 1]} : vector<20x128xf32> to vector<1x32xf32>
    %92 = vector.extract_strided_slice %0 {offsets = [4, 0], sizes = [1, 32], strides = [1, 1]} : vector<20x128xf32> to vector<1x32xf32>
    %cst_31 = arith.constant dense<0.000000e+00> : vector<8xf32>
    %93 = vector.multi_reduction <add>, %90, %cst_31 [1] : vector<8x32xf32> to vector<8xf32>
    %94 = vector.shape_cast %93 : vector<8xf32> to vector<8x1xf32>
    %cst_32 = arith.constant 3.200000e+01 : f32
    %95 = vector.broadcast %cst_32 : f32 to vector<8x1xf32>
    %96 = arith.divf %94, %95 : vector<8x1xf32>
    %97 = vector.broadcast %96 : vector<8x1xf32> to vector<8x32xf32>
    %98 = arith.subf %90, %97 : vector<8x32xf32>
    %99 = arith.mulf %98, %98 : vector<8x32xf32>
    %cst_33 = arith.constant dense<0.000000e+00> : vector<8xf32>
    %100 = vector.multi_reduction <add>, %99, %cst_33 [1] : vector<8x32xf32> to vector<8xf32>
    %101 = vector.shape_cast %100 : vector<8xf32> to vector<8x1xf32>
    %cst_34 = arith.constant 3.200000e+01 : f32
    %102 = vector.broadcast %cst_34 : f32 to vector<8x1xf32>
    %103 = arith.divf %101, %102 : vector<8x1xf32>
    %cst_35 = arith.constant 9.99999974E-6 : f32
    %104 = vector.broadcast %cst_35 : f32 to vector<8x1xf32>
    %105 = arith.addf %103, %104 : vector<8x1xf32>
    %106 = math.rsqrt %105 : vector<8x1xf32>
    %107 = vector.broadcast %106 : vector<8x1xf32> to vector<8x32xf32>
    %108 = arith.mulf %98, %107 : vector<8x32xf32>
    %109 = vector.broadcast %91 : vector<1x32xf32> to vector<8x32xf32>
    %110 = arith.mulf %108, %109 : vector<8x32xf32>
    %111 = vector.broadcast %92 : vector<1x32xf32> to vector<8x32xf32>
    %112 = arith.addf %110, %111 : vector<8x32xf32>
    %113 = arith.truncf %112 : vector<8x32xf32> to vector<8x32xbf16>
    %c0_36 = arith.constant 0 : index
    %c0_37 = arith.constant 0 : index
    %c0_38 = arith.constant 0 : index
    %114 = vector.load %arg6[%c0_36, %c0_37, %c0_38] : memref<2x32x64xbf16, #tpu.memory_space<vmem>>, vector<1x32x64xbf16>
    %115 = vector.shape_cast %114 : vector<1x32x64xbf16> to vector<32x64xbf16>
    %cst_39 = arith.constant dense<0.000000e+00> : vector<8x64xf32>
    %116 = tpu.matmul %113, %115, %cst_39 {dimension_numbers = #tpu.dot_dimension_numbers<[1], [0], [0], [1], [0, 0, 1, 1], [], []>} : vector<8x32xbf16>, vector<32x64xbf16>, vector<8x64xf32> -> vector<8x64xf32>
    %117 = vector.extract_strided_slice %0 {offsets = [5, 0], sizes = [1, 64], strides = [1, 1]} : vector<20x128xf32> to vector<1x64xf32>
    %118 = vector.broadcast %117 : vector<1x64xf32> to vector<8x64xf32>
    %119 = arith.addf %116, %118 : vector<8x64xf32>
    %cst_40 = arith.constant 0.000000e+00 : f32
    %120 = vector.broadcast %cst_40 : f32 to vector<8x64xf32>
    %121 = arith.maximumf %119, %120 : vector<8x64xf32>
    %122 = arith.truncf %121 : vector<8x64xf32> to vector<8x64xbf16>
    %c0_41 = arith.constant 0 : index
    %c0_42 = arith.constant 0 : index
    %c0_43 = arith.constant 0 : index
    %123 = vector.load %arg7[%c0_41, %c0_42, %c0_43] : memref<2x64x32xbf16, #tpu.memory_space<vmem>>, vector<1x64x32xbf16>
    %124 = vector.shape_cast %123 : vector<1x64x32xbf16> to vector<64x32xbf16>
    %cst_44 = arith.constant dense<0.000000e+00> : vector<8x32xf32>
    %125 = tpu.matmul %122, %124, %cst_44 {dimension_numbers = #tpu.dot_dimension_numbers<[1], [0], [0], [1], [0, 0, 1, 1], [], []>} : vector<8x64xbf16>, vector<64x32xbf16>, vector<8x32xf32> -> vector<8x32xf32>
    %126 = vector.extract_strided_slice %0 {offsets = [6, 0], sizes = [1, 32], strides = [1, 1]} : vector<20x128xf32> to vector<1x32xf32>
    %127 = vector.broadcast %126 : vector<1x32xf32> to vector<8x32xf32>
    %128 = arith.addf %125, %127 : vector<8x32xf32>
    %129 = arith.addf %112, %128 : vector<8x32xf32>
    %130 = vector.extract_strided_slice %0 {offsets = [7, 0], sizes = [1, 32], strides = [1, 1]} : vector<20x128xf32> to vector<1x32xf32>
    %131 = vector.extract_strided_slice %0 {offsets = [8, 0], sizes = [1, 32], strides = [1, 1]} : vector<20x128xf32> to vector<1x32xf32>
    %cst_45 = arith.constant dense<0.000000e+00> : vector<8xf32>
    %132 = vector.multi_reduction <add>, %129, %cst_45 [1] : vector<8x32xf32> to vector<8xf32>
    %133 = vector.shape_cast %132 : vector<8xf32> to vector<8x1xf32>
    %cst_46 = arith.constant 3.200000e+01 : f32
    %134 = vector.broadcast %cst_46 : f32 to vector<8x1xf32>
    %135 = arith.divf %133, %134 : vector<8x1xf32>
    %136 = vector.broadcast %135 : vector<8x1xf32> to vector<8x32xf32>
    %137 = arith.subf %129, %136 : vector<8x32xf32>
    %138 = arith.mulf %137, %137 : vector<8x32xf32>
    %cst_47 = arith.constant dense<0.000000e+00> : vector<8xf32>
    %139 = vector.multi_reduction <add>, %138, %cst_47 [1] : vector<8x32xf32> to vector<8xf32>
    %140 = vector.shape_cast %139 : vector<8xf32> to vector<8x1xf32>
    %cst_48 = arith.constant 3.200000e+01 : f32
    %141 = vector.broadcast %cst_48 : f32 to vector<8x1xf32>
    %142 = arith.divf %140, %141 : vector<8x1xf32>
    %cst_49 = arith.constant 9.99999974E-6 : f32
    %143 = vector.broadcast %cst_49 : f32 to vector<8x1xf32>
    %144 = arith.addf %142, %143 : vector<8x1xf32>
    %145 = math.rsqrt %144 : vector<8x1xf32>
    %146 = vector.broadcast %145 : vector<8x1xf32> to vector<8x32xf32>
    %147 = arith.mulf %137, %146 : vector<8x32xf32>
    %148 = vector.broadcast %130 : vector<1x32xf32> to vector<8x32xf32>
    %149 = arith.mulf %147, %148 : vector<8x32xf32>
    %150 = vector.broadcast %131 : vector<1x32xf32> to vector<8x32xf32>
    %151 = arith.addf %149, %150 : vector<8x32xf32>
    %152 = arith.truncf %151 : vector<8x32xf32> to vector<8x32xbf16>
    %c1 = arith.constant 1 : index
    %c0_50 = arith.constant 0 : index
    %c0_51 = arith.constant 0 : index
    %153 = vector.load %arg4[%c1, %c0_50, %c0_51] : memref<2x32x96xbf16, #tpu.memory_space<vmem>>, vector<1x32x96xbf16>
    %154 = vector.shape_cast %153 : vector<1x32x96xbf16> to vector<32x96xbf16>
    %cst_52 = arith.constant dense<0.000000e+00> : vector<8x96xf32>
    %155 = tpu.matmul %152, %154, %cst_52 {dimension_numbers = #tpu.dot_dimension_numbers<[1], [0], [0], [1], [0, 0, 1, 1], [], []>} : vector<8x32xbf16>, vector<32x96xbf16>, vector<8x96xf32> -> vector<8x96xf32>
    %156 = vector.extract_strided_slice %0 {offsets = [9, 0], sizes = [1, 96], strides = [1, 1]} : vector<20x128xf32> to vector<1x96xf32>
    %157 = vector.broadcast %156 : vector<1x96xf32> to vector<8x96xf32>
    %158 = arith.addf %155, %157 : vector<8x96xf32>
    %159 = vector.shape_cast %158 : vector<8x96xf32> to vector<1x8x96xf32>
    %160 = vector.extract_strided_slice %159 {offsets = [0, 0, 0], sizes = [1, 8, 32], strides = [1, 1, 1]} : vector<1x8x96xf32> to vector<1x8x32xf32>
    %161 = vector.extract_strided_slice %159 {offsets = [0, 0, 32], sizes = [1, 8, 32], strides = [1, 1, 1]} : vector<1x8x96xf32> to vector<1x8x32xf32>
    %162 = vector.extract_strided_slice %159 {offsets = [0, 0, 64], sizes = [1, 8, 32], strides = [1, 1, 1]} : vector<1x8x96xf32> to vector<1x8x32xf32>
    %163 = vector.extract_strided_slice %160 {offsets = [0, 0, 0], sizes = [1, 8, 8], strides = [1, 1, 1]} : vector<1x8x32xf32> to vector<1x8x8xf32>
    %164 = vector.extract_strided_slice %161 {offsets = [0, 0, 0], sizes = [1, 8, 8], strides = [1, 1, 1]} : vector<1x8x32xf32> to vector<1x8x8xf32>
    %165 = vector.extract_strided_slice %162 {offsets = [0, 0, 0], sizes = [1, 8, 8], strides = [1, 1, 1]} : vector<1x8x32xf32> to vector<1x8x8xf32>
    %cst_53 = arith.constant dense<0.000000e+00> : vector<1x8x8xf32>
    %166 = tpu.matmul %163, %164, %cst_53 {dimension_numbers = #tpu.dot_dimension_numbers<[2], [2], [1], [1], [0, 0, 0, 1, 1, 1], [0], [0]>} : vector<1x8x8xf32>, vector<1x8x8xf32>, vector<1x8x8xf32> -> vector<1x8x8xf32>
    %cst_54 = arith.constant dense<0xFF800000> : vector<1x8xf32>
    %167 = vector.multi_reduction <maximumf>, %166, %cst_54 [2] : vector<1x8x8xf32> to vector<1x8xf32>
    %168 = vector.shape_cast %167 : vector<1x8xf32> to vector<1x8x1xf32>
    %169 = vector.broadcast %168 : vector<1x8x1xf32> to vector<1x8x8xf32>
    %170 = arith.subf %166, %169 : vector<1x8x8xf32>
    %171 = math.exp %170 : vector<1x8x8xf32>
    %cst_55 = arith.constant dense<0.000000e+00> : vector<1x8xf32>
    %172 = vector.multi_reduction <add>, %171, %cst_55 [2] : vector<1x8x8xf32> to vector<1x8xf32>
    %173 = vector.shape_cast %172 : vector<1x8xf32> to vector<1x8x1xf32>
    %174 = tpu.reciprocal %173 {approx = true} : vector<1x8x1xf32> -> vector<1x8x1xf32>
    %175 = vector.broadcast %174 : vector<1x8x1xf32> to vector<1x8x8xf32>
    %176 = arith.mulf %171, %175 : vector<1x8x8xf32>
    %cst_56 = arith.constant dense<0.000000e+00> : vector<1x8x8xf32>
    %177 = tpu.matmul %176, %165, %cst_56 {dimension_numbers = #tpu.dot_dimension_numbers<[2], [1], [1], [2], [0, 0, 0, 1, 1, 2], [0], [0]>} : vector<1x8x8xf32>, vector<1x8x8xf32>, vector<1x8x8xf32> -> vector<1x8x8xf32>
    %178 = vector.extract_strided_slice %160 {offsets = [0, 0, 8], sizes = [1, 8, 8], strides = [1, 1, 1]} : vector<1x8x32xf32> to vector<1x8x8xf32>
    %179 = vector.extract_strided_slice %161 {offsets = [0, 0, 8], sizes = [1, 8, 8], strides = [1, 1, 1]} : vector<1x8x32xf32> to vector<1x8x8xf32>
    %180 = vector.extract_strided_slice %162 {offsets = [0, 0, 8], sizes = [1, 8, 8], strides = [1, 1, 1]} : vector<1x8x32xf32> to vector<1x8x8xf32>
    %cst_57 = arith.constant dense<0.000000e+00> : vector<1x8x8xf32>
    %181 = tpu.matmul %178, %179, %cst_57 {dimension_numbers = #tpu.dot_dimension_numbers<[2], [2], [1], [1], [0, 0, 0, 1, 1, 1], [0], [0]>} : vector<1x8x8xf32>, vector<1x8x8xf32>, vector<1x8x8xf32> -> vector<1x8x8xf32>
    %cst_58 = arith.constant dense<0xFF800000> : vector<1x8xf32>
    %182 = vector.multi_reduction <maximumf>, %181, %cst_58 [2] : vector<1x8x8xf32> to vector<1x8xf32>
    %183 = vector.shape_cast %182 : vector<1x8xf32> to vector<1x8x1xf32>
    %184 = vector.broadcast %183 : vector<1x8x1xf32> to vector<1x8x8xf32>
    %185 = arith.subf %181, %184 : vector<1x8x8xf32>
    %186 = math.exp %185 : vector<1x8x8xf32>
    %cst_59 = arith.constant dense<0.000000e+00> : vector<1x8xf32>
    %187 = vector.multi_reduction <add>, %186, %cst_59 [2] : vector<1x8x8xf32> to vector<1x8xf32>
    %188 = vector.shape_cast %187 : vector<1x8xf32> to vector<1x8x1xf32>
    %189 = tpu.reciprocal %188 {approx = true} : vector<1x8x1xf32> -> vector<1x8x1xf32>
    %190 = vector.broadcast %189 : vector<1x8x1xf32> to vector<1x8x8xf32>
    %191 = arith.mulf %186, %190 : vector<1x8x8xf32>
    %cst_60 = arith.constant dense<0.000000e+00> : vector<1x8x8xf32>
    %192 = tpu.matmul %191, %180, %cst_60 {dimension_numbers = #tpu.dot_dimension_numbers<[2], [1], [1], [2], [0, 0, 0, 1, 1, 2], [0], [0]>} : vector<1x8x8xf32>, vector<1x8x8xf32>, vector<1x8x8xf32> -> vector<1x8x8xf32>
    %193 = vector.extract_strided_slice %160 {offsets = [0, 0, 16], sizes = [1, 8, 8], strides = [1, 1, 1]} : vector<1x8x32xf32> to vector<1x8x8xf32>
    %194 = vector.extract_strided_slice %161 {offsets = [0, 0, 16], sizes = [1, 8, 8], strides = [1, 1, 1]} : vector<1x8x32xf32> to vector<1x8x8xf32>
    %195 = vector.extract_strided_slice %162 {offsets = [0, 0, 16], sizes = [1, 8, 8], strides = [1, 1, 1]} : vector<1x8x32xf32> to vector<1x8x8xf32>
    %cst_61 = arith.constant dense<0.000000e+00> : vector<1x8x8xf32>
    %196 = tpu.matmul %193, %194, %cst_61 {dimension_numbers = #tpu.dot_dimension_numbers<[2], [2], [1], [1], [0, 0, 0, 1, 1, 1], [0], [0]>} : vector<1x8x8xf32>, vector<1x8x8xf32>, vector<1x8x8xf32> -> vector<1x8x8xf32>
    %cst_62 = arith.constant dense<0xFF800000> : vector<1x8xf32>
    %197 = vector.multi_reduction <maximumf>, %196, %cst_62 [2] : vector<1x8x8xf32> to vector<1x8xf32>
    %198 = vector.shape_cast %197 : vector<1x8xf32> to vector<1x8x1xf32>
    %199 = vector.broadcast %198 : vector<1x8x1xf32> to vector<1x8x8xf32>
    %200 = arith.subf %196, %199 : vector<1x8x8xf32>
    %201 = math.exp %200 : vector<1x8x8xf32>
    %cst_63 = arith.constant dense<0.000000e+00> : vector<1x8xf32>
    %202 = vector.multi_reduction <add>, %201, %cst_63 [2] : vector<1x8x8xf32> to vector<1x8xf32>
    %203 = vector.shape_cast %202 : vector<1x8xf32> to vector<1x8x1xf32>
    %204 = tpu.reciprocal %203 {approx = true} : vector<1x8x1xf32> -> vector<1x8x1xf32>
    %205 = vector.broadcast %204 : vector<1x8x1xf32> to vector<1x8x8xf32>
    %206 = arith.mulf %201, %205 : vector<1x8x8xf32>
    %cst_64 = arith.constant dense<0.000000e+00> : vector<1x8x8xf32>
    %207 = tpu.matmul %206, %195, %cst_64 {dimension_numbers = #tpu.dot_dimension_numbers<[2], [1], [1], [2], [0, 0, 0, 1, 1, 2], [0], [0]>} : vector<1x8x8xf32>, vector<1x8x8xf32>, vector<1x8x8xf32> -> vector<1x8x8xf32>
    %208 = vector.extract_strided_slice %160 {offsets = [0, 0, 24], sizes = [1, 8, 8], strides = [1, 1, 1]} : vector<1x8x32xf32> to vector<1x8x8xf32>
    %209 = vector.extract_strided_slice %161 {offsets = [0, 0, 24], sizes = [1, 8, 8], strides = [1, 1, 1]} : vector<1x8x32xf32> to vector<1x8x8xf32>
    %210 = vector.extract_strided_slice %162 {offsets = [0, 0, 24], sizes = [1, 8, 8], strides = [1, 1, 1]} : vector<1x8x32xf32> to vector<1x8x8xf32>
    %cst_65 = arith.constant dense<0.000000e+00> : vector<1x8x8xf32>
    %211 = tpu.matmul %208, %209, %cst_65 {dimension_numbers = #tpu.dot_dimension_numbers<[2], [2], [1], [1], [0, 0, 0, 1, 1, 1], [0], [0]>} : vector<1x8x8xf32>, vector<1x8x8xf32>, vector<1x8x8xf32> -> vector<1x8x8xf32>
    %cst_66 = arith.constant dense<0xFF800000> : vector<1x8xf32>
    %212 = vector.multi_reduction <maximumf>, %211, %cst_66 [2] : vector<1x8x8xf32> to vector<1x8xf32>
    %213 = vector.shape_cast %212 : vector<1x8xf32> to vector<1x8x1xf32>
    %214 = vector.broadcast %213 : vector<1x8x1xf32> to vector<1x8x8xf32>
    %215 = arith.subf %211, %214 : vector<1x8x8xf32>
    %216 = math.exp %215 : vector<1x8x8xf32>
    %cst_67 = arith.constant dense<0.000000e+00> : vector<1x8xf32>
    %217 = vector.multi_reduction <add>, %216, %cst_67 [2] : vector<1x8x8xf32> to vector<1x8xf32>
    %218 = vector.shape_cast %217 : vector<1x8xf32> to vector<1x8x1xf32>
    %219 = tpu.reciprocal %218 {approx = true} : vector<1x8x1xf32> -> vector<1x8x1xf32>
    %220 = vector.broadcast %219 : vector<1x8x1xf32> to vector<1x8x8xf32>
    %221 = arith.mulf %216, %220 : vector<1x8x8xf32>
    %cst_68 = arith.constant dense<0.000000e+00> : vector<1x8x8xf32>
    %222 = tpu.matmul %221, %210, %cst_68 {dimension_numbers = #tpu.dot_dimension_numbers<[2], [1], [1], [2], [0, 0, 0, 1, 1, 2], [0], [0]>} : vector<1x8x8xf32>, vector<1x8x8xf32>, vector<1x8x8xf32> -> vector<1x8x8xf32>
    %223 = tpu.concatenate %177, %192, %207, %222 in 2 : vector<1x8x8xf32>, vector<1x8x8xf32>, vector<1x8x8xf32>, vector<1x8x8xf32> -> vector<1x8x32xf32>
    %224 = vector.shape_cast %223 : vector<1x8x32xf32> to vector<8x32xf32>
    %225 = arith.truncf %224 : vector<8x32xf32> to vector<8x32xbf16>
    %c1_69 = arith.constant 1 : index
    %c0_70 = arith.constant 0 : index
    %c0_71 = arith.constant 0 : index
    %226 = vector.load %arg5[%c1_69, %c0_70, %c0_71] : memref<2x32x32xbf16, #tpu.memory_space<vmem>>, vector<1x32x32xbf16>
    %227 = vector.shape_cast %226 : vector<1x32x32xbf16> to vector<32x32xbf16>
    %cst_72 = arith.constant dense<0.000000e+00> : vector<8x32xf32>
    %228 = tpu.matmul %225, %227, %cst_72 {dimension_numbers = #tpu.dot_dimension_numbers<[1], [0], [0], [1], [0, 0, 1, 1], [], []>} : vector<8x32xbf16>, vector<32x32xbf16>, vector<8x32xf32> -> vector<8x32xf32>
    %229 = vector.extract_strided_slice %0 {offsets = [10, 0], sizes = [1, 32], strides = [1, 1]} : vector<20x128xf32> to vector<1x32xf32>
    %230 = vector.broadcast %229 : vector<1x32xf32> to vector<8x32xf32>
    %231 = arith.addf %228, %230 : vector<8x32xf32>
    %232 = arith.addf %151, %231 : vector<8x32xf32>
    %233 = vector.extract_strided_slice %0 {offsets = [11, 0], sizes = [1, 32], strides = [1, 1]} : vector<20x128xf32> to vector<1x32xf32>
    %234 = vector.extract_strided_slice %0 {offsets = [12, 0], sizes = [1, 32], strides = [1, 1]} : vector<20x128xf32> to vector<1x32xf32>
    %cst_73 = arith.constant dense<0.000000e+00> : vector<8xf32>
    %235 = vector.multi_reduction <add>, %232, %cst_73 [1] : vector<8x32xf32> to vector<8xf32>
    %236 = vector.shape_cast %235 : vector<8xf32> to vector<8x1xf32>
    %cst_74 = arith.constant 3.200000e+01 : f32
    %237 = vector.broadcast %cst_74 : f32 to vector<8x1xf32>
    %238 = arith.divf %236, %237 : vector<8x1xf32>
    %239 = vector.broadcast %238 : vector<8x1xf32> to vector<8x32xf32>
    %240 = arith.subf %232, %239 : vector<8x32xf32>
    %241 = arith.mulf %240, %240 : vector<8x32xf32>
    %cst_75 = arith.constant dense<0.000000e+00> : vector<8xf32>
    %242 = vector.multi_reduction <add>, %241, %cst_75 [1] : vector<8x32xf32> to vector<8xf32>
    %243 = vector.shape_cast %242 : vector<8xf32> to vector<8x1xf32>
    %cst_76 = arith.constant 3.200000e+01 : f32
    %244 = vector.broadcast %cst_76 : f32 to vector<8x1xf32>
    %245 = arith.divf %243, %244 : vector<8x1xf32>
    %cst_77 = arith.constant 9.99999974E-6 : f32
    %246 = vector.broadcast %cst_77 : f32 to vector<8x1xf32>
    %247 = arith.addf %245, %246 : vector<8x1xf32>
    %248 = math.rsqrt %247 : vector<8x1xf32>
    %249 = vector.broadcast %248 : vector<8x1xf32> to vector<8x32xf32>
    %250 = arith.mulf %240, %249 : vector<8x32xf32>
    %251 = vector.broadcast %233 : vector<1x32xf32> to vector<8x32xf32>
    %252 = arith.mulf %250, %251 : vector<8x32xf32>
    %253 = vector.broadcast %234 : vector<1x32xf32> to vector<8x32xf32>
    %254 = arith.addf %252, %253 : vector<8x32xf32>
    %255 = arith.truncf %254 : vector<8x32xf32> to vector<8x32xbf16>
    %c1_78 = arith.constant 1 : index
    %c0_79 = arith.constant 0 : index
    %c0_80 = arith.constant 0 : index
    %256 = vector.load %arg6[%c1_78, %c0_79, %c0_80] : memref<2x32x64xbf16, #tpu.memory_space<vmem>>, vector<1x32x64xbf16>
    %257 = vector.shape_cast %256 : vector<1x32x64xbf16> to vector<32x64xbf16>
    %cst_81 = arith.constant dense<0.000000e+00> : vector<8x64xf32>
    %258 = tpu.matmul %255, %257, %cst_81 {dimension_numbers = #tpu.dot_dimension_numbers<[1], [0], [0], [1], [0, 0, 1, 1], [], []>} : vector<8x32xbf16>, vector<32x64xbf16>, vector<8x64xf32> -> vector<8x64xf32>
    %259 = vector.extract_strided_slice %0 {offsets = [13, 0], sizes = [1, 64], strides = [1, 1]} : vector<20x128xf32> to vector<1x64xf32>
    %260 = vector.broadcast %259 : vector<1x64xf32> to vector<8x64xf32>
    %261 = arith.addf %258, %260 : vector<8x64xf32>
    %cst_82 = arith.constant 0.000000e+00 : f32
    %262 = vector.broadcast %cst_82 : f32 to vector<8x64xf32>
    %263 = arith.maximumf %261, %262 : vector<8x64xf32>
    %264 = arith.truncf %263 : vector<8x64xf32> to vector<8x64xbf16>
    %c1_83 = arith.constant 1 : index
    %c0_84 = arith.constant 0 : index
    %c0_85 = arith.constant 0 : index
    %265 = vector.load %arg7[%c1_83, %c0_84, %c0_85] : memref<2x64x32xbf16, #tpu.memory_space<vmem>>, vector<1x64x32xbf16>
    %266 = vector.shape_cast %265 : vector<1x64x32xbf16> to vector<64x32xbf16>
    %cst_86 = arith.constant dense<0.000000e+00> : vector<8x32xf32>
    %267 = tpu.matmul %264, %266, %cst_86 {dimension_numbers = #tpu.dot_dimension_numbers<[1], [0], [0], [1], [0, 0, 1, 1], [], []>} : vector<8x64xbf16>, vector<64x32xbf16>, vector<8x32xf32> -> vector<8x32xf32>
    %268 = vector.extract_strided_slice %0 {offsets = [14, 0], sizes = [1, 32], strides = [1, 1]} : vector<20x128xf32> to vector<1x32xf32>
    %269 = vector.broadcast %268 : vector<1x32xf32> to vector<8x32xf32>
    %270 = arith.addf %267, %269 : vector<8x32xf32>
    %271 = arith.addf %254, %270 : vector<8x32xf32>
    %272 = vector.extract_strided_slice %0 {offsets = [15, 0], sizes = [1, 32], strides = [1, 1]} : vector<20x128xf32> to vector<1x32xf32>
    %273 = vector.extract_strided_slice %0 {offsets = [16, 0], sizes = [1, 32], strides = [1, 1]} : vector<20x128xf32> to vector<1x32xf32>
    %cst_87 = arith.constant dense<0.000000e+00> : vector<8xf32>
    %274 = vector.multi_reduction <add>, %271, %cst_87 [1] : vector<8x32xf32> to vector<8xf32>
    %275 = vector.shape_cast %274 : vector<8xf32> to vector<8x1xf32>
    %cst_88 = arith.constant 3.200000e+01 : f32
    %276 = vector.broadcast %cst_88 : f32 to vector<8x1xf32>
    %277 = arith.divf %275, %276 : vector<8x1xf32>
    %278 = vector.broadcast %277 : vector<8x1xf32> to vector<8x32xf32>
    %279 = arith.subf %271, %278 : vector<8x32xf32>
    %280 = arith.mulf %279, %279 : vector<8x32xf32>
    %cst_89 = arith.constant dense<0.000000e+00> : vector<8xf32>
    %281 = vector.multi_reduction <add>, %280, %cst_89 [1] : vector<8x32xf32> to vector<8xf32>
    %282 = vector.shape_cast %281 : vector<8xf32> to vector<8x1xf32>
    %cst_90 = arith.constant 3.200000e+01 : f32
    %283 = vector.broadcast %cst_90 : f32 to vector<8x1xf32>
    %284 = arith.divf %282, %283 : vector<8x1xf32>
    %cst_91 = arith.constant 9.99999974E-6 : f32
    %285 = vector.broadcast %cst_91 : f32 to vector<8x1xf32>
    %286 = arith.addf %284, %285 : vector<8x1xf32>
    %287 = math.rsqrt %286 : vector<8x1xf32>
    %288 = vector.broadcast %287 : vector<8x1xf32> to vector<8x32xf32>
    %289 = arith.mulf %279, %288 : vector<8x32xf32>
    %290 = vector.broadcast %272 : vector<1x32xf32> to vector<8x32xf32>
    %291 = arith.mulf %289, %290 : vector<8x32xf32>
    %292 = vector.broadcast %273 : vector<1x32xf32> to vector<8x32xf32>
    %293 = arith.addf %291, %292 : vector<8x32xf32>
    %294 = arith.truncf %293 : vector<8x32xf32> to vector<8x32xbf16>
    %c0_92 = arith.constant 0 : index
    %c0_93 = arith.constant 0 : index
    %295 = vector.load %arg8[%c0_92, %c0_93] : memref<32x32xbf16, #tpu.memory_space<vmem>>, vector<32x32xbf16>
    %cst_94 = arith.constant dense<0.000000e+00> : vector<8x32xf32>
    %296 = tpu.matmul %294, %295, %cst_94 {dimension_numbers = #tpu.dot_dimension_numbers<[1], [0], [0], [1], [0, 0, 1, 1], [], []>} : vector<8x32xbf16>, vector<32x32xbf16>, vector<8x32xf32> -> vector<8x32xf32>
    %297 = vector.extract_strided_slice %0 {offsets = [17, 0], sizes = [1, 32], strides = [1, 1]} : vector<20x128xf32> to vector<1x32xf32>
    %298 = vector.broadcast %297 : vector<1x32xf32> to vector<8x32xf32>
    %299 = arith.addf %296, %298 : vector<8x32xf32>
    %cst_95 = arith.constant 0.000000e+00 : f32
    %300 = vector.broadcast %cst_95 : f32 to vector<8x32xf32>
    %301 = arith.maximumf %299, %300 : vector<8x32xf32>
    %302 = arith.truncf %301 : vector<8x32xf32> to vector<8x32xbf16>
    %c0_96 = arith.constant 0 : index
    %c0_97 = arith.constant 0 : index
    %303 = vector.load %arg9[%c0_96, %c0_97] : memref<32x16xbf16, #tpu.memory_space<vmem>>, vector<32x16xbf16>
    %cst_98 = arith.constant dense<0.000000e+00> : vector<8x16xf32>
    %304 = tpu.matmul %302, %303, %cst_98 {dimension_numbers = #tpu.dot_dimension_numbers<[1], [0], [0], [1], [0, 0, 1, 1], [], []>} : vector<8x32xbf16>, vector<32x16xbf16>, vector<8x16xf32> -> vector<8x16xf32>
    %305 = vector.extract_strided_slice %0 {offsets = [18, 0], sizes = [1, 16], strides = [1, 1]} : vector<20x128xf32> to vector<1x16xf32>
    %306 = vector.broadcast %305 : vector<1x16xf32> to vector<8x16xf32>
    %307 = arith.addf %304, %306 : vector<8x16xf32>
    %cst_99 = arith.constant 0.000000e+00 : f32
    %308 = vector.broadcast %cst_99 : f32 to vector<8x16xf32>
    %309 = arith.maximumf %307, %308 : vector<8x16xf32>
    %310 = arith.truncf %309 : vector<8x16xf32> to vector<8x16xbf16>
    %c0_100 = arith.constant 0 : index
    %c0_101 = arith.constant 0 : index
    %311 = vector.load %arg10[%c0_100, %c0_101] : memref<16x128xbf16, #tpu.memory_space<vmem>>, vector<16x128xbf16>
    %cst_102 = arith.constant dense<0.000000e+00> : vector<8x128xf32>
    %312 = tpu.matmul %310, %311, %cst_102 {dimension_numbers = #tpu.dot_dimension_numbers<[1], [0], [0], [1], [0, 0, 1, 1], [], []>} : vector<8x16xbf16>, vector<16x128xbf16>, vector<8x128xf32> -> vector<8x128xf32>
    %313 = vector.extract_strided_slice %0 {offsets = [19, 0], sizes = [1, 128], strides = [1, 1]} : vector<20x128xf32> to vector<1x128xf32>
    %314 = vector.broadcast %313 : vector<1x128xf32> to vector<8x128xf32>
    %315 = arith.addf %312, %314 : vector<8x128xf32>
    %316 = vector.shape_cast %315 : vector<8x128xf32> to vector<1x8x128xf32>
    %c0_103 = arith.constant 0 : index
    %c0_104 = arith.constant 0 : index
    %c0_105 = arith.constant 0 : index
    %317 = vector.load %arg11[%c0_103, %c0_104, %c0_105] : memref<1x8x128xf32, #tpu.memory_space<vmem>>, vector<1x8x128xf32>
    tpu.vector_store %arg11[%c0_103, %c0_104, %c0_105], %316 {strides = array<i32>} : memref<1x8x128xf32, #tpu.memory_space<vmem>>, vector<1x8x128xf32>,
    return
  }
  func.func @transform_0(%arg0: i32) -> (i32, i32, i32) {
    %c0_i32 = arith.constant 0 : i32
    %c0_i32_0 = arith.constant 0 : i32
    %c0_i32_1 = arith.constant 0 : i32
    return %arg0, %c0_i32, %c0_i32_0 : i32, i32, i32
  }
  func.func @transform_1(%arg0: i32) -> (i32, i32) {
    %c0_i32 = arith.constant 0 : i32
    %c0_i32_0 = arith.constant 0 : i32
    %c0_i32_1 = arith.constant 0 : i32
    return %c0_i32, %c0_i32_0 : i32, i32
  }
  func.func @transform_2(%arg0: i32) -> (i32, i32) {
    %c0_i32 = arith.constant 0 : i32
    %c0_i32_0 = arith.constant 0 : i32
    %c0_i32_1 = arith.constant 0 : i32
    return %c0_i32, %c0_i32_0 : i32, i32
  }
  func.func @transform_3(%arg0: i32) -> (i32, i32, i32) {
    %c0_i32 = arith.constant 0 : i32
    %c0_i32_0 = arith.constant 0 : i32
    %c0_i32_1 = arith.constant 0 : i32
    %c0_i32_2 = arith.constant 0 : i32
    return %c0_i32, %c0_i32_0, %c0_i32_1 : i32, i32, i32
  }
  func.func @transform_4(%arg0: i32) -> (i32, i32, i32) {
    %c0_i32 = arith.constant 0 : i32
    %c0_i32_0 = arith.constant 0 : i32
    %c0_i32_1 = arith.constant 0 : i32
    %c0_i32_2 = arith.constant 0 : i32
    return %c0_i32, %c0_i32_0, %c0_i32_1 : i32, i32, i32
  }
  func.func @transform_5(%arg0: i32) -> (i32, i32, i32) {
    %c0_i32 = arith.constant 0 : i32
    %c0_i32_0 = arith.constant 0 : i32
    %c0_i32_1 = arith.constant 0 : i32
    %c0_i32_2 = arith.constant 0 : i32
    return %c0_i32, %c0_i32_0, %c0_i32_1 : i32, i32, i32
  }
  func.func @transform_6(%arg0: i32) -> (i32, i32, i32) {
    %c0_i32 = arith.constant 0 : i32
    %c0_i32_0 = arith.constant 0 : i32
    %c0_i32_1 = arith.constant 0 : i32
    %c0_i32_2 = arith.constant 0 : i32
    return %c0_i32, %c0_i32_0, %c0_i32_1 : i32, i32, i32
  }
  func.func @transform_7(%arg0: i32) -> (i32, i32) {
    %c0_i32 = arith.constant 0 : i32
    %c0_i32_0 = arith.constant 0 : i32
    %c0_i32_1 = arith.constant 0 : i32
    return %c0_i32, %c0_i32_0 : i32, i32
  }
  func.func @transform_8(%arg0: i32) -> (i32, i32) {
    %c0_i32 = arith.constant 0 : i32
    %c0_i32_0 = arith.constant 0 : i32
    %c0_i32_1 = arith.constant 0 : i32
    return %c0_i32, %c0_i32_0 : i32, i32
  }
  func.func @transform_9(%arg0: i32) -> (i32, i32) {
    %c0_i32 = arith.constant 0 : i32
    %c0_i32_0 = arith.constant 0 : i32
    %c0_i32_1 = arith.constant 0 : i32
    return %c0_i32, %c0_i32_0 : i32, i32
  }
  func.func @transform_10(%arg0: i32) -> (i32, i32, i32) {
    %c0_i32 = arith.constant 0 : i32
    %c0_i32_0 = arith.constant 0 : i32
    %c0_i32_1 = arith.constant 0 : i32
    return %arg0, %c0_i32, %c0_i32_0 : i32, i32, i32
  }
}

</mosaic_0001>

<llo_original>
// kernel: tpu_custom_call.1
$region0: #{tpu_custom_call.1}
  #allocation0 [shape = 'u32[]', space=smem, size = 0x4, offset = 0x4, fixed_abs, tag = 'smem constant byte address 0x4 - core index']
  #allocation1 [shape = 'u32[144,128]{1,0:T(1,128)}', space=vmem, size = 0x12000, scoped, tag = 'internal scratch']
  %s0 = inlined_call_operand.hbm [shape: bf16[2,8,64], index: 0, kind: input, shape index: {}]
  %s1 = inlined_call_operand.vmem [shape: f32[20,128], index: 1, kind: input, shape index: {}]
  %s2 = inlined_call_operand.vmem [shape: bf16[64,32], index: 2, kind: input, shape index: {}]
  %s3 = inlined_call_operand.vmem [shape: bf16[2,32,96], index: 3, kind: input, shape index: {}]
  %s4 = inlined_call_operand.vmem [shape: bf16[2,32,32], index: 4, kind: input, shape index: {}]
  %s5 = inlined_call_operand.vmem [shape: bf16[2,32,64], index: 5, kind: input, shape index: {}]
  %s6 = inlined_call_operand.vmem [shape: bf16[2,64,32], index: 6, kind: input, shape index: {}]
  %s7 = inlined_call_operand.vmem [shape: bf16[32,32], index: 7, kind: input, shape index: {}]
  %s8 = inlined_call_operand.vmem [shape: bf16[32,16], index: 8, kind: input, shape index: {}]
  %s9 = inlined_call_operand.vmem [shape: bf16[16,128], index: 9, kind: input, shape index: {}]
  %s10 = inlined_call_operand.hbm [shape: f32[2,8,128], index: 10, kind: output, shape index: {}]
  %s11 = sld [smem:[#allocation0]]
  $region77: #{tpu_custom_call.1} parent=0
    _
  %s13 = ssub.s32 1, %s11
  %s14 = scalar_select 0, %s13, %s11
  $region1: #{tpu_custom_call.1} parent=0
    #allocation2 [shape = 'u8[4096]{0}', space=vmem, size = 0x1000, scoped, tag = 'input window, operand 0']
    #allocation3 [shape = 's32[2]{0}', space=sflag, size = 0x8, scoped, tag = 'scoped memory for tpu_custom_call.1']
    #allocation4 [shape = 's32[2]{0}', space=sflag, size = 0x8, scoped, tag = 'scoped memory for tpu_custom_call.1']
    #allocation5 [shape = 'u8[8192]{0}', space=vmem, size = 0x2000, scoped, tag = 'output window, operand 0']
    %15 = vsyncpa [#allocation3], 0
    %s16 = scalar_lea.sflag [#allocation3], 1
    %17 = vsyncpa %s16, 0
    %18 = vsyncpa [#allocation4], 0
    %s19 = scalar_lea.sflag [#allocation4], 1
    %20 = vsyncpa %s19, 0
    loop: start=0, step=1, limit=4
    $region2: #{tpu_custom_call.1} parent=1 // loop_pre_header
      _
    $region3: #{tpu_custom_call.1} parent=1 // loop_header
      %s22 = sphi 0, %s26
      %p23 = scmp.ge.s32.totalorder %s22, 4
      %s32 = sphi 0, %s34
      %s35 = sphi 0, %s32
      %s36 = sphi 0, %s35
      %s52 = sphi 0, %s36
      %s56 = sphi 0, %s56
      %s58 = sphi 0, %s56
      %s59 = sphi 0, %s58
      %s73 = sphi 0, %s59
      %s77 = sphi 0, %s77
      %s79 = sphi 0, %s77
      %s80 = sphi 0, %s79
      %s94 = sphi 0, %s80
      %s98 = sphi 0, %s98
      %s100 = sphi 0, %s98
      %s101 = sphi 0, %s100
      %s115 = sphi 0, %s101
      %s119 = sphi 0, %s119
      %s121 = sphi 0, %s119
      %s122 = sphi 0, %s121
      %s136 = sphi 0, %s122
      %s140 = sphi 0, %s140
      %s142 = sphi 0, %s140
      %s143 = sphi 0, %s142
      %s157 = sphi 0, %s143
      %s161 = sphi 0, %s161
      %s163 = sphi 0, %s161
      %s164 = sphi 0, %s163
      %s178 = sphi 0, %s164
      %s182 = sphi 0, %s182
      %s184 = sphi 0, %s182
      %s185 = sphi 0, %s184
      %s199 = sphi 0, %s185
      %s203 = sphi 0, %s203
      %s205 = sphi 0, %s203
      %s206 = sphi 0, %s205
      %s220 = sphi 0, %s206
      %s224 = sphi 0, %s224
      %s226 = sphi 0, %s224
      %s227 = sphi 0, %s226
      %s241 = sphi 0, %s227
      %s247 = sphi 0, %s249
      %s250 = sphi 0, %s247
      %s251 = sphi 0, %s250
      %s267 = sphi 0, %s251
    $region4: #{tpu_custom_call.1} parent=1 // loop_header_branch
      %25 = sbr.rel (%p23) target = $region8
    $region5: #{tpu_custom_call.1} parent=1 // loop_body
      %s27 = ssub.s32 %s22, 1
      %s28 = ssub.s32 %s22, 2
      %s29 = sadd.s32 %s22, 1
      %s30 = ssub.s32 %s22, %s29
      %p31 = scmp.eq.s32.totalorder %s30, 0
      %s33 = sadd.s32 %s32, 1
      %s34 = scalar_select %p31, %s32, %s33
      %p37 = pneg %p31
      %p38 = scmp.eq.s32.totalorder %s22, 1
      %p39 = por %p37, %p38
      %p40 = scmp.ne.s32.totalorder %s32, %s35
      %p41 = scmp.eq.s32.totalorder %s22, 0
      %p42 = por %p40, %p41
      %p43 = scmp.ne.s32.totalorder %s32, %s35
      %p44 = scmp.eq.s32.totalorder %s27, 1
      %p45 = por %p43, %p44
      %p46 = scmp.ne.s32.totalorder %s35, %s36
      %p47 = scmp.eq.s32.totalorder %s27, 0
      %p48 = por %p46, %p47
      %p49 = scmp.ne.s32.totalorder %s35, %s36
      %p50 = scmp.eq.s32.totalorder %s28, 1
      %p51 = por %p49, %p50
      %p53 = scmp.ne.s32.totalorder %s36, %s52
      %p54 = scmp.eq.s32.totalorder %s28, 0
      %p55 = por %p53, %p54
      %s57 = sadd.s32 %s56, 1
      %p60 = scmp.eq.s32.totalorder %s22, 1
      %p61 = scmp.ne.s32.totalorder %s56, %s58
      %p62 = scmp.eq.s32.totalorder %s22, 0
      %p63 = por %p61, %p62
      %p64 = scmp.ne.s32.totalorder %s56, %s58
      %p65 = scmp.eq.s32.totalorder %s27, 1
      %p66 = por %p64, %p65
      %p67 = scmp.ne.s32.totalorder %s58, %s59
      %p68 = scmp.eq.s32.totalorder %s27, 0
      %p69 = por %p67, %p68
      %p70 = scmp.ne.s32.totalorder %s58, %s59
      %p71 = scmp.eq.s32.totalorder %s28, 1
      %p72 = por %p70, %p71
      %p74 = scmp.ne.s32.totalorder %s59, %s73
      %p75 = scmp.eq.s32.totalorder %s28, 0
      %p76 = por %p74, %p75
      %s78 = sadd.s32 %s77, 1
      %p81 = scmp.eq.s32.totalorder %s22, 1
      %p82 = scmp.ne.s32.totalorder %s77, %s79
      %p83 = scmp.eq.s32.totalorder %s22, 0
      %p84 = por %p82, %p83
      %p85 = scmp.ne.s32.totalorder %s77, %s79
      %p86 = scmp.eq.s32.totalorder %s27, 1
      %p87 = por %p85, %p86
      %p88 = scmp.ne.s32.totalorder %s79, %s80
      %p89 = scmp.eq.s32.totalorder %s27, 0
      %p90 = por %p88, %p89
      %p91 = scmp.ne.s32.totalorder %s79, %s80
      %p92 = scmp.eq.s32.totalorder %s28, 1
      %p93 = por %p91, %p92
      %p95 = scmp.ne.s32.totalorder %s80, %s94
      %p96 = scmp.eq.s32.totalorder %s28, 0
      %p97 = por %p95, %p96
      %s99 = sadd.s32 %s98, 1
      %p102 = scmp.eq.s32.totalorder %s22, 1
      %p103 = scmp.ne.s32.totalorder %s98, %s100
      %p104 = scmp.eq.s32.totalorder %s22, 0
      %p105 = por %p103, %p104
      %p106 = scmp.ne.s32.totalorder %s98, %s100
      %p107 = scmp.eq.s32.totalorder %s27, 1
      %p108 = por %p106, %p107
      %p109 = scmp.ne.s32.totalorder %s100, %s101
      %p110 = scmp.eq.s32.totalorder %s27, 0
      %p111 = por %p109, %p110
      %p112 = scmp.ne.s32.totalorder %s100, %s101
      %p113 = scmp.eq.s32.totalorder %s28, 1
      %p114 = por %p112, %p113
      %p116 = scmp.ne.s32.totalorder %s101, %s115
      %p117 = scmp.eq.s32.totalorder %s28, 0
      %p118 = por %p116, %p117
      %s120 = sadd.s32 %s119, 1
      %p123 = scmp.eq.s32.totalorder %s22, 1
      %p124 = scmp.ne.s32.totalorder %s119, %s121
      %p125 = scmp.eq.s32.totalorder %s22, 0
      %p126 = por %p124, %p125
      %p127 = scmp.ne.s32.totalorder %s119, %s121
      %p128 = scmp.eq.s32.totalorder %s27, 1
      %p129 = por %p127, %p128
      %p130 = scmp.ne.s32.totalorder %s121, %s122
      %p131 = scmp.eq.s32.totalorder %s27, 0
      %p132 = por %p130, %p131
      %p133 = scmp.ne.s32.totalorder %s121, %s122
      %p134 = scmp.eq.s32.totalorder %s28, 1
      %p135 = por %p133, %p134
      %p137 = scmp.ne.s32.totalorder %s122, %s136
      %p138 = scmp.eq.s32.totalorder %s28, 0
      %p139 = por %p137, %p138
      %s141 = sadd.s32 %s140, 1
      %p144 = scmp.eq.s32.totalorder %s22, 1
      %p145 = scmp.ne.s32.totalorder %s140, %s142
      %p146 = scmp.eq.s32.totalorder %s22, 0
      %p147 = por %p145, %p146
      %p148 = scmp.ne.s32.totalorder %s140, %s142
      %p149 = scmp.eq.s32.totalorder %s27, 1
      %p150 = por %p148, %p149
      %p151 = scmp.ne.s32.totalorder %s142, %s143
      %p152 = scmp.eq.s32.totalorder %s27, 0
      %p153 = por %p151, %p152
      %p154 = scmp.ne.s32.totalorder %s142, %s143
      %p155 = scmp.eq.s32.totalorder %s28, 1
      %p156 = por %p154, %p155
      %p158 = scmp.ne.s32.totalorder %s143, %s157
      %p159 = scmp.eq.s32.totalorder %s28, 0
      %p160 = por %p158, %p159
      %s162 = sadd.s32 %s161, 1
      %p165 = scmp.eq.s32.totalorder %s22, 1
      %p166 = scmp.ne.s32.totalorder %s161, %s163
      %p167 = scmp.eq.s32.totalorder %s22, 0
      %p168 = por %p166, %p167
      %p169 = scmp.ne.s32.totalorder %s161, %s163
      %p170 = scmp.eq.s32.totalorder %s27, 1
      %p171 = por %p169, %p170
      %p172 = scmp.ne.s32.totalorder %s163, %s164
      %p173 = scmp.eq.s32.totalorder %s27, 0
      %p174 = por %p172, %p173
      %p175 = scmp.ne.s32.totalorder %s163, %s164
      %p176 = scmp.eq.s32.totalorder %s28, 1
      %p177 = por %p175, %p176
      %p179 = scmp.ne.s32.totalorder %s164, %s178
      %p180 = scmp.eq.s32.totalorder %s28, 0
      %p181 = por %p179, %p180
      %s183 = sadd.s32 %s182, 1
      %p186 = scmp.eq.s32.totalorder %s22, 1
      %p187 = scmp.ne.s32.totalorder %s182, %s184
      %p188 = scmp.eq.s32.totalorder %s22, 0
      %p189 = por %p187, %p188
      %p190 = scmp.ne.s32.totalorder %s182, %s184
      %p191 = scmp.eq.s32.totalorder %s27, 1
      %p192 = por %p190, %p191
      %p193 = scmp.ne.s32.totalorder %s184, %s185
      %p194 = scmp.eq.s32.totalorder %s27, 0
      %p195 = por %p193, %p194
      %p196 = scmp.ne.s32.totalorder %s184, %s185
      %p197 = scmp.eq.s32.totalorder %s28, 1
      %p198 = por %p196, %p197
      %p200 = scmp.ne.s32.totalorder %s185, %s199
      %p201 = scmp.eq.s32.totalorder %s28, 0
      %p202 = por %p200, %p201
      %s204 = sadd.s32 %s203, 1
      %p207 = scmp.eq.s32.totalorder %s22, 1
      %p208 = scmp.ne.s32.totalorder %s203, %s205
      %p209 = scmp.eq.s32.totalorder %s22, 0
      %p210 = por %p208, %p209
      %p211 = scmp.ne.s32.totalorder %s203, %s205
      %p212 = scmp.eq.s32.totalorder %s27, 1
      %p213 = por %p211, %p212
      %p214 = scmp.ne.s32.totalorder %s205, %s206
      %p215 = scmp.eq.s32.totalorder %s27, 0
      %p216 = por %p214, %p215
      %p217 = scmp.ne.s32.totalorder %s205, %s206
      %p218 = scmp.eq.s32.totalorder %s28, 1
      %p219 = por %p217, %p218
      %p221 = scmp.ne.s32.totalorder %s206, %s220
      %p222 = scmp.eq.s32.totalorder %s28, 0
      %p223 = por %p221, %p222
      %s225 = sadd.s32 %s224, 1
      %p228 = scmp.eq.s32.totalorder %s22, 1
      %p229 = scmp.ne.s32.totalorder %s224, %s226
      %p230 = scmp.eq.s32.totalorder %s22, 0
      %p231 = por %p229, %p230
      %p232 = scmp.ne.s32.totalorder %s224, %s226
      %p233 = scmp.eq.s32.totalorder %s27, 1
      %p234 = por %p232, %p233
      %p235 = scmp.ne.s32.totalorder %s226, %s227
      %p236 = scmp.eq.s32.totalorder %s27, 0
      %p237 = por %p235, %p236
      %p238 = scmp.ne.s32.totalorder %s226, %s227
      %p239 = scmp.eq.s32.totalorder %s28, 1
      %p240 = por %p238, %p239
      %p242 = scmp.ne.s32.totalorder %s227, %s241
      %p243 = scmp.eq.s32.totalorder %s28, 0
      %p244 = por %p242, %p243
      %s245 = ssub.s32 %s22, %s29
      %p246 = scmp.eq.s32.totalorder %s245, 0
      %s248 = sadd.s32 %s247, 1
      %s249 = scalar_select %p246, %s247, %s248
      %p252 = pneg %p246
      %p253 = scmp.eq.s32.totalorder %s22, 1
      %p254 = por %p252, %p253
      %p255 = scmp.ne.s32.totalorder %s247, %s250
      %p256 = scmp.eq.s32.totalorder %s22, 0
      %p257 = por %p255, %p256
      %p258 = scmp.ne.s32.totalorder %s247, %s250
      %p259 = scmp.eq.s32.totalorder %s27, 1
      %p260 = por %p258, %p259
      %p261 = scmp.ne.s32.totalorder %s250, %s251
      %p262 = scmp.eq.s32.totalorder %s27, 0
      %p263 = por %p261, %p262
      %p264 = scmp.ne.s32.totalorder %s250, %s251
      %p265 = scmp.eq.s32.totalorder %s28, 1
      %p266 = por %p264, %p265
      %p268 = scmp.ne.s32.totalorder %s251, %s267
      %p269 = scmp.eq.s32.totalorder %s28, 0
      %p270 = por %p268, %p269
      %p271 = scmp.le.s32.totalorder 1, %s22
      %p272 = scmp.lt.s32.totalorder %s22, 3
      %p273 = pnand %p271, %p272
      %p274 = pneg %p273
      // Predicated region
      $region9: #{tpu_custom_call.1} parent=5 // pred_check
        _
      $region10: #{tpu_custom_call.1} parent=5 // pred_check_branch
        %276 = sbr.rel (%p273) target = $region12
      $region11: #{tpu_custom_call.1} parent=5 // pred_region
        %s277 = ssub.s32 %s22, 1
        // Predicated region
        $region13: #{tpu_custom_call.1} parent=11 // pred_check
          %p278 = pneg %p69
        $region14: #{tpu_custom_call.1} parent=11 // pred_check_branch
          %280 = sbr.rel (%p278) target = $region16
        $region15: #{tpu_custom_call.1} parent=11 // pred_region
          _
        $region16: #{tpu_custom_call.1} parent=11 // pred_fallthru
          _
        // Predicated region
        $region17: #{tpu_custom_call.1} parent=11 // pred_check
          %p281 = pneg %p90
        $region18: #{tpu_custom_call.1} parent=11 // pred_check_branch
          %283 = sbr.rel (%p281) target = $region20
        $region19: #{tpu_custom_call.1} parent=11 // pred_region
          _
        $region20: #{tpu_custom_call.1} parent=11 // pred_fallthru
          _
        // Predicated region
        $region21: #{tpu_custom_call.1} parent=11 // pred_check
          %p284 = pneg %p111
        $region22: #{tpu_custom_call.1} parent=11 // pred_check_branch
          %286 = sbr.rel (%p284) target = $region24
        $region23: #{tpu_custom_call.1} parent=11 // pred_region
          _
        $region24: #{tpu_custom_call.1} parent=11 // pred_fallthru
          _
        // Predicated region
        $region25: #{tpu_custom_call.1} parent=11 // pred_check
          %p287 = pneg %p132
        $region26: #{tpu_custom_call.1} parent=11 // pred_check_branch
          %289 = sbr.rel (%p287) target = $region28
        $region27: #{tpu_custom_call.1} parent=11 // pred_region
          _
        $region28: #{tpu_custom_call.1} parent=11 // pred_fallthru
          _
        // Predicated region
        $region29: #{tpu_custom_call.1} parent=11 // pred_check
          %p290 = pneg %p153
        $region30: #{tpu_custom_call.1} parent=11 // pred_check_branch
          %292 = sbr.rel (%p290) target = $region32
        $region31: #{tpu_custom_call.1} parent=11 // pred_region
          _
        $region32: #{tpu_custom_call.1} parent=11 // pred_fallthru
          _
        // Predicated region
        $region33: #{tpu_custom_call.1} parent=11 // pred_check
          %p293 = pneg %p174
        $region34: #{tpu_custom_call.1} parent=11 // pred_check_branch
          %295 = sbr.rel (%p293) target = $region36
        $region35: #{tpu_custom_call.1} parent=11 // pred_region
          _
        $region36: #{tpu_custom_call.1} parent=11 // pred_fallthru
          _
        // Predicated region
        $region37: #{tpu_custom_call.1} parent=11 // pred_check
          %p296 = pneg %p195
        $region38: #{tpu_custom_call.1} parent=11 // pred_check_branch
          %298 = sbr.rel (%p296) target = $region40
        $region39: #{tpu_custom_call.1} parent=11 // pred_region
          _
        $region40: #{tpu_custom_call.1} parent=11 // pred_fallthru
          _
        // Predicated region
        $region41: #{tpu_custom_call.1} parent=11 // pred_check
          %p299 = pneg %p216
        $region42: #{tpu_custom_call.1} parent=11 // pred_check_branch
          %301 = sbr.rel (%p299) target = $region44
        $region43: #{tpu_custom_call.1} parent=11 // pred_region
          _
        $region44: #{tpu_custom_call.1} parent=11 // pred_fallthru
          _
        // Predicated region
        $region45: #{tpu_custom_call.1} parent=11 // pred_check
          %p302 = pneg %p237
        $region46: #{tpu_custom_call.1} parent=11 // pred_check_branch
          %304 = sbr.rel (%p302) target = $region48
        $region47: #{tpu_custom_call.1} parent=11 // pred_region
          _
        $region48: #{tpu_custom_call.1} parent=11 // pred_fallthru
          _
      $region12: #{tpu_custom_call.1} parent=5 // pred_fallthru
        _
      %p305 = scmp.lt.s32.totalorder %s22, 2
      // Predicated region
      $region49: #{tpu_custom_call.1} parent=5 // pred_check
        %p306 = pneg %p305
      $region50: #{tpu_custom_call.1} parent=5 // pred_check_branch
        %308 = sbr.rel (%p306) target = $region52
      $region51: #{tpu_custom_call.1} parent=5 // pred_region
        // Predicated region
        $region53: #{tpu_custom_call.1} parent=51 // pred_check
          %p309 = pneg %p42
        $region54: #{tpu_custom_call.1} parent=51 // pred_check_branch
          %311 = sbr.rel (%p309) target = $region56
        $region55: #{tpu_custom_call.1} parent=51 // pred_region
          %s312 = sand.u32 %s32, 1
          %s313 = scalar_lea.sflag [#allocation3], %s312
          %s314 = sand.u32 %s32, 1
          %s315 = smul.addr %s314, 4
          %s316 = scalar_lea.vmem [#allocation2], %s315
          %s318 = ssub.s32 64, 64
          %319 = vsyncadd %s313, %s318
          %s320 = smul.addr %s22, 64
          %s321 = scalar_lea.hbm %s0, %s320
          %s323 = sshll.u32 %s316, 4
          %s324 = int_to_ptr.vmem [resolvable:$true] %s323
          %326 = dma.hbm_to_vmem [thread:$0]  %s321, 64, %s324, %s313
        $region56: #{tpu_custom_call.1} parent=51 // pred_fallthru
          _
      $region52: #{tpu_custom_call.1} parent=5 // pred_fallthru
        _
      %p327 = scmp.le.s32.totalorder 1, %s22
      %p328 = scmp.lt.s32.totalorder %s22, 3
      %p329 = pnand %p327, %p328
      %p330 = pneg %p329
      // Predicated region
      $region57: #{tpu_custom_call.1} parent=5 // pred_check
        _
      $region58: #{tpu_custom_call.1} parent=5 // pred_check_branch
        %332 = sbr.rel (%p329) target = $region60
      $region59: #{tpu_custom_call.1} parent=5 // pred_region
        %s333 = ssub.s32 %s22, 1
        %s334 = sand.u32 %s35, 1
        %s335 = scalar_lea.sflag [#allocation3], %s334
        %s336 = sand.u32 %s35, 1
        %s337 = smul.addr %s336, 4
        %s338 = scalar_lea.vmem [#allocation2], %s337
        // Predicated region
        $region61: #{tpu_custom_call.1} parent=59 // pred_check
          %p339 = pneg %p48
        $region62: #{tpu_custom_call.1} parent=59 // pred_check_branch
          %341 = sbr.rel (%p339) target = $region64
        $region63: #{tpu_custom_call.1} parent=59 // pred_region
          %342 = dma.done %s335, 64
        $region64: #{tpu_custom_call.1} parent=59 // pred_fallthru
          _
        %s343 = sand.u32 %s35, 1
        %s344 = scalar_lea.sflag [#allocation3], %s343
        %s345 = sand.u32 %s35, 1
        %s346 = smul.addr %s345, 4
        %s347 = scalar_lea.vmem [#allocation2], %s346
        %p348 = pneg %p48
        %p349 = pneg %p45
        %p350 = pneg %p69
        %p351 = pneg %p66
        %p352 = pneg %p90
        %p353 = pneg %p87
        %p354 = pneg %p111
        %p355 = pneg %p108
        %p356 = pneg %p132
        %p357 = pneg %p129
        %p358 = pneg %p153
        %p359 = pneg %p150
        %p360 = pneg %p174
        %p361 = pneg %p171
        %p362 = pneg %p195
        %p363 = pneg %p192
        %p364 = pneg %p216
        %p365 = pneg %p213
        %p366 = pneg %p237
        %p367 = pneg %p234
        %p368 = pneg %p263
        %p369 = pneg %p260
        %s370 = sand.u32 %s250, 1
        %s371 = scalar_lea.sflag [#allocation4], %s370
        %s372 = sand.u32 %s250, 1
        %s373 = smul.addr %s372, 8
        %s374 = scalar_lea.vmem [#allocation5], %s373
        %v376 = vld [vmem:[%s1] sm:$0xff]
        %v377 = vld [vmem:[%s1 + $0x8] sm:$0xff]
        %v378 = vld [vmem:[%s1 + $0x10] sm:$0xf]
        %v379 = vld [vmem:[%s338] sm:$0xf]
        %v380 = vld [vmem:[%s2] sm:$0xf]
        %v381 = vld [vmem:[%s2 + $0x4] sm:$0xf]
        %v382 = vld [vmem:[%s2 + $0x8] sm:$0xf]
        %v383 = vld [vmem:[%s2 + $0xc] sm:$0xf]
        %v384 = vld [vmem:[%s2 + $0x10] sm:$0xf]
        %v385 = vld [vmem:[%s2 + $0x14] sm:$0xf]
        %v386 = vld [vmem:[%s2 + $0x18] sm:$0xf]
        %v387 = vld [vmem:[%s2 + $0x1c] sm:$0xf]
        %v388 = vlaneseq
        %v389 = vshrl.u32 %v388, 7
        %v390 = vsub.s32 0, %v389
        %v391 = vrot.slane %v376, %v390
        %v400 = vunpack.c.l.b16 %v380
        %v401 = vunpack.c.l.b16 %v381
        %v402 = vunpack.c.l.b16 %v382
        %v403 = vunpack.c.l.b16 %v383
        %v404 = vunpack.c.l.b16 %v384
        %v405 = vunpack.c.l.b16 %v385
        %v406 = vunpack.c.l.b16 %v386
        %v407 = vunpack.c.l.b16 %v387
        %v408 = vpack.c.b16 %v401, %v400
        %v409 = vpack.c.b16 %v403, %v402
        %v410 = vpack.c.b16 %v405, %v404
        %v411 = vpack.c.b16 %v407, %v406
        %vm416 = vcmask 523264
        %v418 = vsel %vm416, %v379, 0
        %420 = vmatprep.subr.bf16.mxu0 0
        %421 = vmatpush1.bf16.msra.mxu0 %v408
        %422 = vmatprep.subr.bf16.mxu0 0
        %423 = vmatpush1.bf16.msra.mxu0 %v409
        %424 = vmatprep.subr.bf16.mxu0 0
        %425 = vmatpush1.bf16.msra.mxu0 %v410
        %426 = vmatprep.subr.bf16.mxu0 0
        %427 = vmatpush1.bf16.msra.mxu0 %v411
        %428 = vmatprep.subr.bf16.mxu0 0
        %429 = vmatpush1.bf16.msra.mxu0 0
        %430 = vmatprep.subr.bf16.mxu0 0
        %431 = vmatpush1.bf16.msra.mxu0 0
        %432 = vmatprep.subr.bf16.mxu0 0
        %433 = vmatpush1.bf16.msra.mxu0 0
        %434 = vmatprep.subr.bf16.mxu0 0
        %435 = vmatpush1.bf16.msra.mxu0 0
        %436 = vmatprep.subr.bf16.mxu0 0
        %437 = vmatpush1.bf16.msra.mxu0 0
        %438 = vmatprep.subr.bf16.mxu0 0
        %439 = vmatpush1.bf16.msra.mxu0 0
        %440 = vmatprep.subr.bf16.mxu0 0
        %441 = vmatpush1.bf16.msra.mxu0 0
        %442 = vmatprep.subr.bf16.mxu0 0
        %443 = vmatpush1.bf16.msra.mxu0 0
        %444 = vmatprep.subr.bf16.mxu0 0
        %445 = vmatpush1.bf16.msra.mxu0 0
        %446 = vmatprep.subr.bf16.mxu0 0
        %447 = vmatpush1.bf16.msra.mxu0 0
        %448 = vmatprep.subr.bf16.mxu0 0
        %449 = vmatpush1.bf16.msra.mxu0 0
        %450 = vmatprep.subr.bf16.mxu0 0
        %451 = vmatpush1.bf16.msra.mxu0 0
        %452 = vmatprep.mubr.bf16.mxu0 0
        %453 = vmatmul.mubr.bf16.gmra.mrb[0].mxu0 %v418
        %v454 = vpop.f32.mrb[0].mxu0
        %v455 = vadd.f32 %v391, %v454
        %v456 = vpop.f32.mrb[0].mxu0
        %v457 = vpop.f32.mrb[0].mxu0
        %v458 = vpop.f32.mrb[0].mxu0
        %459 = vdwg.mxu0
        %v460 = vmax.f32 %v455, 0.0
        %v461 = vpack.c.bf16 %v460, %v460
        %v462 = vld [vmem:[%s3] sm:$0xf]
        %v463 = vld [vmem:[%s3 + $0x4] sm:$0xf]
        %v464 = vld [vmem:[%s3 + $0x8] sm:$0xf]
        %v465 = vld [vmem:[%s3 + $0xc] sm:$0xf]
        %v466 = vlaneseq
        %v467 = vshrl.u32 %v466, 7
        %v468 = vsub.s32 1, %v467
        %v469 = vrot.slane %v376, %v468
        %v474 = vunpack.c.l.b16 %v462
        %v475 = vunpack.c.l.b16 %v463
        %v476 = vunpack.c.l.b16 %v464
        %v477 = vunpack.c.l.b16 %v465
        %v478 = vpack.c.b16 %v475, %v474
        %v479 = vpack.c.b16 %v477, %v476
        %vm482 = vcmask 261120
        %v484 = vsel %vm482, %v461, 0
        %486 = vmatprep.subr.bf16.mxu0 0
        %487 = vmatpush1.bf16.msra.mxu0 %v478
        %488 = vmatprep.subr.bf16.mxu0 0
        %489 = vmatpush1.bf16.msra.mxu0 %v479
        %490 = vmatprep.subr.bf16.mxu0 0
        %491 = vmatpush1.bf16.msra.mxu0 0
        %492 = vmatprep.subr.bf16.mxu0 0
        %493 = vmatpush1.bf16.msra.mxu0 0
        %494 = vmatprep.subr.bf16.mxu0 0
        %495 = vmatpush1.bf16.msra.mxu0 0
        %496 = vmatprep.subr.bf16.mxu0 0
        %497 = vmatpush1.bf16.msra.mxu0 0
        %498 = vmatprep.subr.bf16.mxu0 0
        %499 = vmatpush1.bf16.msra.mxu0 0
        %500 = vmatprep.subr.bf16.mxu0 0
        %501 = vmatpush1.bf16.msra.mxu0 0
        %502 = vmatprep.subr.bf16.mxu0 0
        %503 = vmatpush1.bf16.msra.mxu0 0
        %504 = vmatprep.subr.bf16.mxu0 0
        %505 = vmatpush1.bf16.msra.mxu0 0
        %506 = vmatprep.subr.bf16.mxu0 0
        %507 = vmatpush1.bf16.msra.mxu0 0
        %508 = vmatprep.subr.bf16.mxu0 0
        %509 = vmatpush1.bf16.msra.mxu0 0
        %510 = vmatprep.subr.bf16.mxu0 0
        %511 = vmatpush1.bf16.msra.mxu0 0
        %512 = vmatprep.subr.bf16.mxu0 0
        %513 = vmatpush1.bf16.msra.mxu0 0
        %514 = vmatprep.subr.bf16.mxu0 0
        %515 = vmatpush1.bf16.msra.mxu0 0
        %516 = vmatprep.subr.bf16.mxu0 0
        %517 = vmatpush1.bf16.msra.mxu0 0
        %518 = vmatprep.mubr.bf16.mxu0 0
        %519 = vmatmul.mubr.bf16.gmra.mrb[0].mxu0 %v484
        %v520 = vpop.f32.mrb[0].mxu0
        %v521 = vadd.f32 %v469, %v520
        %v522 = vpop.f32.mrb[0].mxu0
        %v523 = vpop.f32.mrb[0].mxu0
        %v524 = vpop.f32.mrb[0].mxu0
        %525 = vdwg.mxu0
        %527 = vrot.lane.b32.xlu0 %v521, 96
        %v528 = vpop.permute.xlu0 %527
        %vm529 = vcmask 64512
        %v530 = vsel %vm529, %v521, 0
        %v532 = vsel %vm529, %v528, 0
        %534 = vmatprep.subr.mxu0 0.0
        %535 = vmatpush1.xpose.msra.mxu0 %v532
        %536 = vmatprep.subr.mxu0 0.0
        %537 = vmatpush1.xpose.msra.mxu0 0.0
        %538 = vmatprep.subr.mxu0 0.0
        %539 = vmatpush1.xpose.msra.mxu0 0.0
        %540 = vmatprep.subr.mxu0 0.0
        %541 = vmatpush1.xpose.msra.mxu0 0.0
        %542 = vmatprep.subr.mxu0 0.0
        %543 = vmatpush1.xpose.msra.mxu0 0.0
        %544 = vmatprep.subr.mxu0 0.0
        %545 = vmatpush1.xpose.msra.mxu0 0.0
        %546 = vmatprep.subr.mxu0 0.0
        %547 = vmatpush1.xpose.msra.mxu0 0.0
        %548 = vmatprep.subr.mxu0 0.0
        %549 = vmatpush1.xpose.msra.mxu0 0.0
        %550 = vmatprep.subr.mxu0 0.0
        %551 = vmatpush1.xpose.msra.mxu0 0.0
        %552 = vmatprep.subr.mxu0 0.0
        %553 = vmatpush1.xpose.msra.mxu0 0.0
        %554 = vmatprep.subr.mxu0 0.0
        %555 = vmatpush1.xpose.msra.mxu0 0.0
        %556 = vmatprep.subr.mxu0 0.0
        %557 = vmatpush1.xpose.msra.mxu0 0.0
        %558 = vmatprep.subr.mxu0 0.0
        %559 = vmatpush1.xpose.msra.mxu0 0.0
        %560 = vmatprep.subr.mxu0 0.0
        %561 = vmatpush1.xpose.msra.mxu0 0.0
        %562 = vmatprep.subr.mxu0 0.0
        %563 = vmatpush1.xpose.msra.mxu0 0.0
        %564 = vmatprep.subr.mxu0 0.0
        %565 = vmatpush1.xpose.msra.mxu0 0.0
        %566 = vmatprep.subr.mxu0 0.0
        %567 = vmatpush1.xpose.msra.mxu0 0.0
        %568 = vmatprep.subr.mxu0 0.0
        %569 = vmatpush1.xpose.msra.mxu0 0.0
        %570 = vmatprep.subr.mxu0 0.0
        %571 = vmatpush1.xpose.msra.mxu0 0.0
        %572 = vmatprep.subr.mxu0 0.0
        %573 = vmatpush1.xpose.msra.mxu0 0.0
        %574 = vmatprep.subr.mxu0 0.0
        %575 = vmatpush1.xpose.msra.mxu0 0.0
        %576 = vmatprep.subr.mxu0 0.0
        %577 = vmatpush1.xpose.msra.mxu0 0.0
        %578 = vmatprep.subr.mxu0 0.0
        %579 = vmatpush1.xpose.msra.mxu0 0.0
        %580 = vmatprep.subr.mxu0 0.0
        %581 = vmatpush1.xpose.msra.mxu0 0.0
        %582 = vmatprep.subr.mxu0 0.0
        %583 = vmatpush1.xpose.msra.mxu0 0.0
        %584 = vmatprep.subr.mxu0 0.0
        %585 = vmatpush1.xpose.msra.mxu0 0.0
        %586 = vmatprep.subr.mxu0 0.0
        %587 = vmatpush1.xpose.msra.mxu0 0.0
        %588 = vmatprep.subr.mxu0 0.0
        %589 = vmatpush1.xpose.msra.mxu0 0.0
        %590 = vmatprep.subr.mxu0 0.0
        %591 = vmatpush1.xpose.msra.mxu0 0.0
        %592 = vmatprep.subr.mxu0 0.0
        %593 = vmatpush1.xpose.msra.mxu0 0.0
        %594 = vmatprep.subr.mxu0 0.0
        %595 = vmatpush1.xpose.msra.mxu0 0.0
        %596 = vmatprep.subr.mxu0 0.0
        %597 = vmatpush1.xpose.msra.mxu0 0.0
        %598 = vmatprep.mubr.f32.mxu0 0.0
        %599 = vmatmul.mubr.f32.gmra.mrb[0].mxu0 %v530
        %v600 = vpop.f32.mrb[0].mxu0
        %v601 = vadd.f32 0.0, %v600
        %v602 = vpop.f32.mrb[0].mxu0
        %603 = vdwg.mxu0
        %v604 = vsel %vm529, %v601, -inf
        %605 = vmax.xlane.f32.xlu0 %v604
        %v606 = vpop.xlane.xlu0 %605
        %v607 = vsub.f32 %v601, %v606
        %v608 = vmul.f32 %v607, 1.442695
        %v609 = vpow.pop %v608
        %v610 = vsel %vm529, %v609, 0.0
        %611 = vadd.xlane.f32.xlu0 %v610
        %v612 = vpop.xlane.xlu0 %611
        %v613 = vrcp.pop %v612
        %v614 = vmul.f32 %v609, %v613
        %615 = vrot.lane.b32.xlu0 %v521, 64
        %v616 = vpop.permute.xlu0 %615
        %v619 = vsel %vm529, %v614, 0
        %621 = vmatprep.subr.mxu0 0.0
        %622 = vmatpush1.msra.mxu0 %v616
        %623 = vmatprep.subr.mxu0 0.0
        %624 = vmatpush1.msra.mxu0 0.0
        %625 = vmatprep.subr.mxu0 0.0
        %626 = vmatpush1.msra.mxu0 0.0
        %627 = vmatprep.subr.mxu0 0.0
        %628 = vmatpush1.msra.mxu0 0.0
        %629 = vmatprep.subr.mxu0 0.0
        %630 = vmatpush1.msra.mxu0 0.0
        %631 = vmatprep.subr.mxu0 0.0
        %632 = vmatpush1.msra.mxu0 0.0
        %633 = vmatprep.subr.mxu0 0.0
        %634 = vmatpush1.msra.mxu0 0.0
        %635 = vmatprep.subr.mxu0 0.0
        %636 = vmatpush1.msra.mxu0 0.0
        %637 = vmatprep.subr.mxu0 0.0
        %638 = vmatpush1.msra.mxu0 0.0
        %639 = vmatprep.subr.mxu0 0.0
        %640 = vmatpush1.msra.mxu0 0.0
        %641 = vmatprep.subr.mxu0 0.0
        %642 = vmatpush1.msra.mxu0 0.0
        %643 = vmatprep.subr.mxu0 0.0
        %644 = vmatpush1.msra.mxu0 0.0
        %645 = vmatprep.subr.mxu0 0.0
        %646 = vmatpush1.msra.mxu0 0.0
        %647 = vmatprep.subr.mxu0 0.0
        %648 = vmatpush1.msra.mxu0 0.0
        %649 = vmatprep.subr.mxu0 0.0
        %650 = vmatpush1.msra.mxu0 0.0
        %651 = vmatprep.subr.mxu0 0.0
        %652 = vmatpush1.msra.mxu0 0.0
        %653 = vmatprep.subr.mxu0 0.0
        %654 = vmatpush1.msra.mxu0 0.0
        %655 = vmatprep.subr.mxu0 0.0
        %656 = vmatpush1.msra.mxu0 0.0
        %657 = vmatprep.subr.mxu0 0.0
        %658 = vmatpush1.msra.mxu0 0.0
        %659 = vmatprep.subr.mxu0 0.0
        %660 = vmatpush1.msra.mxu0 0.0
        %661 = vmatprep.subr.mxu0 0.0
        %662 = vmatpush1.msra.mxu0 0.0
        %663 = vmatprep.subr.mxu0 0.0
        %664 = vmatpush1.msra.mxu0 0.0
        %665 = vmatprep.subr.mxu0 0.0
        %666 = vmatpush1.msra.mxu0 0.0
        %667 = vmatprep.subr.mxu0 0.0
        %668 = vmatpush1.msra.mxu0 0.0
        %669 = vmatprep.subr.mxu0 0.0
        %670 = vmatpush1.msra.mxu0 0.0
        %671 = vmatprep.subr.mxu0 0.0
        %672 = vmatpush1.msra.mxu0 0.0
        %673 = vmatprep.subr.mxu0 0.0
        %674 = vmatpush1.msra.mxu0 0.0
        %675 = vmatprep.subr.mxu0 0.0
        %676 = vmatpush1.msra.mxu0 0.0
        %677 = vmatprep.subr.mxu0 0.0
        %678 = vmatpush1.msra.mxu0 0.0
        %679 = vmatprep.subr.mxu0 0.0
        %680 = vmatpush1.msra.mxu0 0.0
        %681 = vmatprep.subr.mxu0 0.0
        %682 = vmatpush1.msra.mxu0 0.0
        %683 = vmatprep.subr.mxu0 0.0
        %684 = vmatpush1.msra.mxu0 0.0
        %685 = vmatprep.mubr.f32.mxu0 0.0
        %686 = vmatmul.mubr.f32.gmra.mrb[0].mxu0 %v619
        %v687 = vpop.f32.mrb[0].mxu0
        %v688 = vadd.f32 0.0, %v687
        %v689 = vpop.f32.mrb[0].mxu0
        %690 = vdwg.mxu0
        %691 = vrot.lane.b32.xlu0 %v521, 120
        %v692 = vpop.permute.xlu0 %691
        %693 = vrot.lane.b32.xlu0 %v521, 88
        %v694 = vpop.permute.xlu0 %693
        %v695 = vsel %vm529, %v692, 0
        %v697 = vsel %vm529, %v694, 0
        %699 = vmatprep.subr.mxu0 0.0
        %700 = vmatpush1.xpose.msra.mxu0 %v697
        %701 = vmatprep.subr.mxu0 0.0
        %702 = vmatpush1.xpose.msra.mxu0 0.0
        %703 = vmatprep.subr.mxu0 0.0
        %704 = vmatpush1.xpose.msra.mxu0 0.0
        %705 = vmatprep.subr.mxu0 0.0
        %706 = vmatpush1.xpose.msra.mxu0 0.0
        %707 = vmatprep.subr.mxu0 0.0
        %708 = vmatpush1.xpose.msra.mxu0 0.0
        %709 = vmatprep.subr.mxu0 0.0
        %710 = vmatpush1.xpose.msra.mxu0 0.0
        %711 = vmatprep.subr.mxu0 0.0
        %712 = vmatpush1.xpose.msra.mxu0 0.0
        %713 = vmatprep.subr.mxu0 0.0
        %714 = vmatpush1.xpose.msra.mxu0 0.0
        %715 = vmatprep.subr.mxu0 0.0
        %716 = vmatpush1.xpose.msra.mxu0 0.0
        %717 = vmatprep.subr.mxu0 0.0
        %718 = vmatpush1.xpose.msra.mxu0 0.0
        %719 = vmatprep.subr.mxu0 0.0
        %720 = vmatpush1.xpose.msra.mxu0 0.0
        %721 = vmatprep.subr.mxu0 0.0
        %722 = vmatpush1.xpose.msra.mxu0 0.0
        %723 = vmatprep.subr.mxu0 0.0
        %724 = vmatpush1.xpose.msra.mxu0 0.0
        %725 = vmatprep.subr.mxu0 0.0
        %726 = vmatpush1.xpose.msra.mxu0 0.0
        %727 = vmatprep.subr.mxu0 0.0
        %728 = vmatpush1.xpose.msra.mxu0 0.0
        %729 = vmatprep.subr.mxu0 0.0
        %730 = vmatpush1.xpose.msra.mxu0 0.0
        %731 = vmatprep.subr.mxu0 0.0
        %732 = vmatpush1.xpose.msra.mxu0 0.0
        %733 = vmatprep.subr.mxu0 0.0
        %734 = vmatpush1.xpose.msra.mxu0 0.0
        %735 = vmatprep.subr.mxu0 0.0
        %736 = vmatpush1.xpose.msra.mxu0 0.0
        %737 = vmatprep.subr.mxu0 0.0
        %738 = vmatpush1.xpose.msra.mxu0 0.0
        %739 = vmatprep.subr.mxu0 0.0
        %740 = vmatpush1.xpose.msra.mxu0 0.0
        %741 = vmatprep.subr.mxu0 0.0
        %742 = vmatpush1.xpose.msra.mxu0 0.0
        %743 = vmatprep.subr.mxu0 0.0
        %744 = vmatpush1.xpose.msra.mxu0 0.0
        %745 = vmatprep.subr.mxu0 0.0
        %746 = vmatpush1.xpose.msra.mxu0 0.0
        %747 = vmatprep.subr.mxu0 0.0
        %748 = vmatpush1.xpose.msra.mxu0 0.0
        %749 = vmatprep.subr.mxu0 0.0
        %750 = vmatpush1.xpose.msra.mxu0 0.0
        %751 = vmatprep.subr.mxu0 0.0
        %752 = vmatpush1.xpose.msra.mxu0 0.0
        %753 = vmatprep.subr.mxu0 0.0
        %754 = vmatpush1.xpose.msra.mxu0 0.0
        %755 = vmatprep.subr.mxu0 0.0
        %756 = vmatpush1.xpose.msra.mxu0 0.0
        %757 = vmatprep.subr.mxu0 0.0
        %758 = vmatpush1.xpose.msra.mxu0 0.0
        %759 = vmatprep.subr.mxu0 0.0
        %760 = vmatpush1.xpose.msra.mxu0 0.0
        %761 = vmatprep.subr.mxu0 0.0
        %762 = vmatpush1.xpose.msra.mxu0 0.0
        %763 = vmatprep.mubr.f32.mxu0 0.0
        %764 = vmatmul.mubr.f32.gmra.mrb[0].mxu0 %v695
        %v765 = vpop.f32.mrb[0].mxu0
        %v766 = vadd.f32 0.0, %v765
        %v767 = vpop.f32.mrb[0].mxu0
        %768 = vdwg.mxu0
        %v769 = vsel %vm529, %v766, -inf
        %770 = vmax.xlane.f32.xlu0 %v769
        %v771 = vpop.xlane.xlu0 %770
        %v772 = vsub.f32 %v766, %v771
        %v773 = vmul.f32 %v772, 1.442695
        %v774 = vpow.pop %v773
        %v775 = vsel %vm529, %v774, 0.0
        %776 = vadd.xlane.f32.xlu0 %v775
        %v777 = vpop.xlane.xlu0 %776
        %v778 = vrcp.pop %v777
        %v779 = vmul.f32 %v774, %v778
        %780 = vrot.lane.b32.xlu0 %v521, 56
        %v781 = vpop.permute.xlu0 %780
        %v784 = vsel %vm529, %v779, 0
        %786 = vmatprep.subr.mxu0 0.0
        %787 = vmatpush1.msra.mxu0 %v781
        %788 = vmatprep.subr.mxu0 0.0
        %789 = vmatpush1.msra.mxu0 0.0
        %790 = vmatprep.subr.mxu0 0.0
        %791 = vmatpush1.msra.mxu0 0.0
        %792 = vmatprep.subr.mxu0 0.0
        %793 = vmatpush1.msra.mxu0 0.0
        %794 = vmatprep.subr.mxu0 0.0
        %795 = vmatpush1.msra.mxu0 0.0
        %796 = vmatprep.subr.mxu0 0.0
        %797 = vmatpush1.msra.mxu0 0.0
        %798 = vmatprep.subr.mxu0 0.0
        %799 = vmatpush1.msra.mxu0 0.0
        %800 = vmatprep.subr.mxu0 0.0
        %801 = vmatpush1.msra.mxu0 0.0
        %802 = vmatprep.subr.mxu0 0.0
        %803 = vmatpush1.msra.mxu0 0.0
        %804 = vmatprep.subr.mxu0 0.0
        %805 = vmatpush1.msra.mxu0 0.0
        %806 = vmatprep.subr.mxu0 0.0
        %807 = vmatpush1.msra.mxu0 0.0
        %808 = vmatprep.subr.mxu0 0.0
        %809 = vmatpush1.msra.mxu0 0.0
        %810 = vmatprep.subr.mxu0 0.0
        %811 = vmatpush1.msra.mxu0 0.0
        %812 = vmatprep.subr.mxu0 0.0
        %813 = vmatpush1.msra.mxu0 0.0
        %814 = vmatprep.subr.mxu0 0.0
        %815 = vmatpush1.msra.mxu0 0.0
        %816 = vmatprep.subr.mxu0 0.0
        %817 = vmatpush1.msra.mxu0 0.0
        %818 = vmatprep.subr.mxu0 0.0
        %819 = vmatpush1.msra.mxu0 0.0
        %820 = vmatprep.subr.mxu0 0.0
        %821 = vmatpush1.msra.mxu0 0.0
        %822 = vmatprep.subr.mxu0 0.0
        %823 = vmatpush1.msra.mxu0 0.0
        %824 = vmatprep.subr.mxu0 0.0
        %825 = vmatpush1.msra.mxu0 0.0
        %826 = vmatprep.subr.mxu0 0.0
        %827 = vmatpush1.msra.mxu0 0.0
        %828 = vmatprep.subr.mxu0 0.0
        %829 = vmatpush1.msra.mxu0 0.0
        %830 = vmatprep.subr.mxu0 0.0
        %831 = vmatpush1.msra.mxu0 0.0
        %832 = vmatprep.subr.mxu0 0.0
        %833 = vmatpush1.msra.mxu0 0.0
        %834 = vmatprep.subr.mxu0 0.0
        %835 = vmatpush1.msra.mxu0 0.0
        %836 = vmatprep.subr.mxu0 0.0
        %837 = vmatpush1.msra.mxu0 0.0
        %838 = vmatprep.subr.mxu0 0.0
        %839 = vmatpush1.msra.mxu0 0.0
        %840 = vmatprep.subr.mxu0 0.0
        %841 = vmatpush1.msra.mxu0 0.0
        %842 = vmatprep.subr.mxu0 0.0
        %843 = vmatpush1.msra.mxu0 0.0
        %844 = vmatprep.subr.mxu0 0.0
        %845 = vmatpush1.msra.mxu0 0.0
        %846 = vmatprep.subr.mxu0 0.0
        %847 = vmatpush1.msra.mxu0 0.0
        %848 = vmatprep.subr.mxu0 0.0
        %849 = vmatpush1.msra.mxu0 0.0
        %850 = vmatprep.mubr.f32.mxu0 0.0
        %851 = vmatmul.mubr.f32.gmra.mrb[0].mxu0 %v784
        %v852 = vpop.f32.mrb[0].mxu0
        %v853 = vadd.f32 0.0, %v852
        %v854 = vpop.f32.mrb[0].mxu0
        %855 = vdwg.mxu0
        %856 = vrot.lane.b32.xlu0 %v521, 112
        %v857 = vpop.permute.xlu0 %856
        %858 = vrot.lane.b32.xlu0 %v521, 80
        %v859 = vpop.permute.xlu0 %858
        %v860 = vsel %vm529, %v857, 0
        %v862 = vsel %vm529, %v859, 0
        %864 = vmatprep.subr.mxu0 0.0
        %865 = vmatpush1.xpose.msra.mxu0 %v862
        %866 = vmatprep.subr.mxu0 0.0
        %867 = vmatpush1.xpose.msra.mxu0 0.0
        %868 = vmatprep.subr.mxu0 0.0
        %869 = vmatpush1.xpose.msra.mxu0 0.0
        %870 = vmatprep.subr.mxu0 0.0
        %871 = vmatpush1.xpose.msra.mxu0 0.0
        %872 = vmatprep.subr.mxu0 0.0
        %873 = vmatpush1.xpose.msra.mxu0 0.0
        %874 = vmatprep.subr.mxu0 0.0
        %875 = vmatpush1.xpose.msra.mxu0 0.0
        %876 = vmatprep.subr.mxu0 0.0
        %877 = vmatpush1.xpose.msra.mxu0 0.0
        %878 = vmatprep.subr.mxu0 0.0
        %879 = vmatpush1.xpose.msra.mxu0 0.0
        %880 = vmatprep.subr.mxu0 0.0
        %881 = vmatpush1.xpose.msra.mxu0 0.0
        %882 = vmatprep.subr.mxu0 0.0
        %883 = vmatpush1.xpose.msra.mxu0 0.0
        %884 = vmatprep.subr.mxu0 0.0
        %885 = vmatpush1.xpose.msra.mxu0 0.0
        %886 = vmatprep.subr.mxu0 0.0
        %887 = vmatpush1.xpose.msra.mxu0 0.0
        %888 = vmatprep.subr.mxu0 0.0
        %889 = vmatpush1.xpose.msra.mxu0 0.0
        %890 = vmatprep.subr.mxu0 0.0
        %891 = vmatpush1.xpose.msra.mxu0 0.0
        %892 = vmatprep.subr.mxu0 0.0
        %893 = vmatpush1.xpose.msra.mxu0 0.0
        %894 = vmatprep.subr.mxu0 0.0
        %895 = vmatpush1.xpose.msra.mxu0 0.0
        %896 = vmatprep.subr.mxu0 0.0
        %897 = vmatpush1.xpose.msra.mxu0 0.0
        %898 = vmatprep.subr.mxu0 0.0
        %899 = vmatpush1.xpose.msra.mxu0 0.0
        %900 = vmatprep.subr.mxu0 0.0
        %901 = vmatpush1.xpose.msra.mxu0 0.0
        %902 = vmatprep.subr.mxu0 0.0
        %903 = vmatpush1.xpose.msra.mxu0 0.0
        %904 = vmatprep.subr.mxu0 0.0
        %905 = vmatpush1.xpose.msra.mxu0 0.0
        %906 = vmatprep.subr.mxu0 0.0
        %907 = vmatpush1.xpose.msra.mxu0 0.0
        %908 = vmatprep.subr.mxu0 0.0
        %909 = vmatpush1.xpose.msra.mxu0 0.0
        %910 = vmatprep.subr.mxu0 0.0
        %911 = vmatpush1.xpose.msra.mxu0 0.0
        %912 = vmatprep.subr.mxu0 0.0
        %913 = vmatpush1.xpose.msra.mxu0 0.0
        %914 = vmatprep.subr.mxu0 0.0
        %915 = vmatpush1.xpose.msra.mxu0 0.0
        %916 = vmatprep.subr.mxu0 0.0
        %917 = vmatpush1.xpose.msra.mxu0 0.0
        %918 = vmatprep.subr.mxu0 0.0
        %919 = vmatpush1.xpose.msra.mxu0 0.0
        %920 = vmatprep.subr.mxu0 0.0
        %921 = vmatpush1.xpose.msra.mxu0 0.0
        %922 = vmatprep.subr.mxu0 0.0
        %923 = vmatpush1.xpose.msra.mxu0 0.0
        %924 = vmatprep.subr.mxu0 0.0
        %925 = vmatpush1.xpose.msra.mxu0 0.0
        %926 = vmatprep.subr.mxu0 0.0
        %927 = vmatpush1.xpose.msra.mxu0 0.0
        %928 = vmatprep.mubr.f32.mxu0 0.0
        %929 = vmatmul.mubr.f32.gmra.mrb[0].mxu0 %v860
        %v930 = vpop.f32.mrb[0].mxu0
        %v931 = vadd.f32 0.0, %v930
        %v932 = vpop.f32.mrb[0].mxu0
        %933 = vdwg.mxu0
        %v934 = vsel %vm529, %v931, -inf
        %935 = vmax.xlane.f32.xlu0 %v934
        %v936 = vpop.xlane.xlu0 %935
        %v937 = vsub.f32 %v931, %v936
        %v938 = vmul.f32 %v937, 1.442695
        %v939 = vpow.pop %v938
        %v940 = vsel %vm529, %v939, 0.0
        %941 = vadd.xlane.f32.xlu0 %v940
        %v942 = vpop.xlane.xlu0 %941
        %v943 = vrcp.pop %v942
        %v944 = vmul.f32 %v939, %v943
        %945 = vrot.lane.b32.xlu0 %v521, 48
        %v946 = vpop.permute.xlu0 %945
        %v949 = vsel %vm529, %v944, 0
        %951 = vmatprep.subr.mxu0 0.0
        %952 = vmatpush1.msra.mxu0 %v946
        %953 = vmatprep.subr.mxu0 0.0
        %954 = vmatpush1.msra.mxu0 0.0
        %955 = vmatprep.subr.mxu0 0.0
        %956 = vmatpush1.msra.mxu0 0.0
        %957 = vmatprep.subr.mxu0 0.0
        %958 = vmatpush1.msra.mxu0 0.0
        %959 = vmatprep.subr.mxu0 0.0
        %960 = vmatpush1.msra.mxu0 0.0
        %961 = vmatprep.subr.mxu0 0.0
        %962 = vmatpush1.msra.mxu0 0.0
        %963 = vmatprep.subr.mxu0 0.0
        %964 = vmatpush1.msra.mxu0 0.0
        %965 = vmatprep.subr.mxu0 0.0
        %966 = vmatpush1.msra.mxu0 0.0
        %967 = vmatprep.subr.mxu0 0.0
        %968 = vmatpush1.msra.mxu0 0.0
        %969 = vmatprep.subr.mxu0 0.0
        %970 = vmatpush1.msra.mxu0 0.0
        %971 = vmatprep.subr.mxu0 0.0
        %972 = vmatpush1.msra.mxu0 0.0
        %973 = vmatprep.subr.mxu0 0.0
        %974 = vmatpush1.msra.mxu0 0.0
        %975 = vmatprep.subr.mxu0 0.0
        %976 = vmatpush1.msra.mxu0 0.0
        %977 = vmatprep.subr.mxu0 0.0
        %978 = vmatpush1.msra.mxu0 0.0
        %979 = vmatprep.subr.mxu0 0.0
        %980 = vmatpush1.msra.mxu0 0.0
        %981 = vmatprep.subr.mxu0 0.0
        %982 = vmatpush1.msra.mxu0 0.0
        %983 = vmatprep.subr.mxu0 0.0
        %984 = vmatpush1.msra.mxu0 0.0
        %985 = vmatprep.subr.mxu0 0.0
        %986 = vmatpush1.msra.mxu0 0.0
        %987 = vmatprep.subr.mxu0 0.0
        %988 = vmatpush1.msra.mxu0 0.0
        %989 = vmatprep.subr.mxu0 0.0
        %990 = vmatpush1.msra.mxu0 0.0
        %991 = vmatprep.subr.mxu0 0.0
        %992 = vmatpush1.msra.mxu0 0.0
        %993 = vmatprep.subr.mxu0 0.0
        %994 = vmatpush1.msra.mxu0 0.0
        %995 = vmatprep.subr.mxu0 0.0
        %996 = vmatpush1.msra.mxu0 0.0
        %997 = vmatprep.subr.mxu0 0.0
        %998 = vmatpush1.msra.mxu0 0.0
        %999 = vmatprep.subr.mxu0 0.0
        %1000 = vmatpush1.msra.mxu0 0.0
        %1001 = vmatprep.subr.mxu0 0.0
        %1002 = vmatpush1.msra.mxu0 0.0
        %1003 = vmatprep.subr.mxu0 0.0
        %1004 = vmatpush1.msra.mxu0 0.0
        %1005 = vmatprep.subr.mxu0 0.0
        %1006 = vmatpush1.msra.mxu0 0.0
        %1007 = vmatprep.subr.mxu0 0.0
        %1008 = vmatpush1.msra.mxu0 0.0
        %1009 = vmatprep.subr.mxu0 0.0
        %1010 = vmatpush1.msra.mxu0 0.0
        %1011 = vmatprep.subr.mxu0 0.0
        %1012 = vmatpush1.msra.mxu0 0.0
        %1013 = vmatprep.subr.mxu0 0.0
        %1014 = vmatpush1.msra.mxu0 0.0
        %1015 = vmatprep.mubr.f32.mxu0 0.0
        %1016 = vmatmul.mubr.f32.gmra.mrb[0].mxu0 %v949
        %v1017 = vpop.f32.mrb[0].mxu0
        %v1018 = vadd.f32 0.0, %v1017
        %v1019 = vpop.f32.mrb[0].mxu0
        %1020 = vdwg.mxu0
        %1021 = vrot.lane.b32.xlu0 %v521, 104
        %v1022 = vpop.permute.xlu0 %1021
        %1023 = vrot.lane.b32.xlu0 %v521, 72
        %v1024 = vpop.permute.xlu0 %1023
        %v1025 = vsel %vm529, %v1022, 0
        %v1027 = vsel %vm529, %v1024, 0
        %1029 = vmatprep.subr.mxu0 0.0
        %1030 = vmatpush1.xpose.msra.mxu0 %v1027
        %1031 = vmatprep.subr.mxu0 0.0
        %1032 = vmatpush1.xpose.msra.mxu0 0.0
        %1033 = vmatprep.subr.mxu0 0.0
        %1034 = vmatpush1.xpose.msra.mxu0 0.0
        %1035 = vmatprep.subr.mxu0 0.0
        %1036 = vmatpush1.xpose.msra.mxu0 0.0
        %1037 = vmatprep.subr.mxu0 0.0
        %1038 = vmatpush1.xpose.msra.mxu0 0.0
        %1039 = vmatprep.subr.mxu0 0.0
        %1040 = vmatpush1.xpose.msra.mxu0 0.0
        %1041 = vmatprep.subr.mxu0 0.0
        %1042 = vmatpush1.xpose.msra.mxu0 0.0
        %1043 = vmatprep.subr.mxu0 0.0
        %1044 = vmatpush1.xpose.msra.mxu0 0.0
        %1045 = vmatprep.subr.mxu0 0.0
        %1046 = vmatpush1.xpose.msra.mxu0 0.0
        %1047 = vmatprep.subr.mxu0 0.0
        %1048 = vmatpush1.xpose.msra.mxu0 0.0
        %1049 = vmatprep.subr.mxu0 0.0
        %1050 = vmatpush1.xpose.msra.mxu0 0.0
        %1051 = vmatprep.subr.mxu0 0.0
        %1052 = vmatpush1.xpose.msra.mxu0 0.0
        %1053 = vmatprep.subr.mxu0 0.0
        %1054 = vmatpush1.xpose.msra.mxu0 0.0
        %1055 = vmatprep.subr.mxu0 0.0
        %1056 = vmatpush1.xpose.msra.mxu0 0.0
        %1057 = vmatprep.subr.mxu0 0.0
        %1058 = vmatpush1.xpose.msra.mxu0 0.0
        %1059 = vmatprep.subr.mxu0 0.0
        %1060 = vmatpush1.xpose.msra.mxu0 0.0
        %1061 = vmatprep.subr.mxu0 0.0
        %1062 = vmatpush1.xpose.msra.mxu0 0.0
        %1063 = vmatprep.subr.mxu0 0.0
        %1064 = vmatpush1.xpose.msra.mxu0 0.0
        %1065 = vmatprep.subr.mxu0 0.0
        %1066 = vmatpush1.xpose.msra.mxu0 0.0
        %1067 = vmatprep.subr.mxu0 0.0
        %1068 = vmatpush1.xpose.msra.mxu0 0.0
        %1069 = vmatprep.subr.mxu0 0.0
        %1070 = vmatpush1.xpose.msra.mxu0 0.0
        %1071 = vmatprep.subr.mxu0 0.0
        %1072 = vmatpush1.xpose.msra.mxu0 0.0
        %1073 = vmatprep.subr.mxu0 0.0
        %1074 = vmatpush1.xpose.msra.mxu0 0.0
        %1075 = vmatprep.subr.mxu0 0.0
        %1076 = vmatpush1.xpose.msra.mxu0 0.0
        %1077 = vmatprep.subr.mxu0 0.0
        %1078 = vmatpush1.xpose.msra.mxu0 0.0
        %1079 = vmatprep.subr.mxu0 0.0
        %1080 = vmatpush1.xpose.msra.mxu0 0.0
        %1081 = vmatprep.subr.mxu0 0.0
        %1082 = vmatpush1.xpose.msra.mxu0 0.0
        %1083 = vmatprep.subr.mxu0 0.0
        %1084 = vmatpush1.xpose.msra.mxu0 0.0
        %1085 = vmatprep.subr.mxu0 0.0
        %1086 = vmatpush1.xpose.msra.mxu0 0.0
        %1087 = vmatprep.subr.mxu0 0.0
        %1088 = vmatpush1.xpose.msra.mxu0 0.0
        %1089 = vmatprep.subr.mxu0 0.0
        %1090 = vmatpush1.xpose.msra.mxu0 0.0
        %1091 = vmatprep.subr.mxu0 0.0
        %1092 = vmatpush1.xpose.msra.mxu0 0.0
        %1093 = vmatprep.mubr.f32.mxu0 0.0
        %1094 = vmatmul.mubr.f32.gmra.mrb[0].mxu0 %v1025
        %v1095 = vpop.f32.mrb[0].mxu0
        %v1096 = vadd.f32 0.0, %v1095
        %v1097 = vpop.f32.mrb[0].mxu0
        %1098 = vdwg.mxu0
        %v1099 = vsel %vm529, %v1096, -inf
        %1100 = vmax.xlane.f32.xlu0 %v1099
        %v1101 = vpop.xlane.xlu0 %1100
        %v1102 = vsub.f32 %v1096, %v1101
        %v1103 = vmul.f32 %v1102, 1.442695
        %v1104 = vpow.pop %v1103
        %v1105 = vsel %vm529, %v1104, 0.0
        %1106 = vadd.xlane.f32.xlu0 %v1105
        %v1107 = vpop.xlane.xlu0 %1106
        %v1108 = vrcp.pop %v1107
        %v1109 = vmul.f32 %v1104, %v1108
        %1110 = vrot.lane.b32.xlu0 %v521, 40
        %v1111 = vpop.permute.xlu0 %1110
        %v1114 = vsel %vm529, %v1109, 0
        %1116 = vmatprep.subr.mxu0 0.0
        %1117 = vmatpush1.msra.mxu0 %v1111
        %1118 = vmatprep.subr.mxu0 0.0
        %1119 = vmatpush1.msra.mxu0 0.0
        %1120 = vmatprep.subr.mxu0 0.0
        %1121 = vmatpush1.msra.mxu0 0.0
        %1122 = vmatprep.subr.mxu0 0.0
        %1123 = vmatpush1.msra.mxu0 0.0
        %1124 = vmatprep.subr.mxu0 0.0
        %1125 = vmatpush1.msra.mxu0 0.0
        %1126 = vmatprep.subr.mxu0 0.0
        %1127 = vmatpush1.msra.mxu0 0.0
        %1128 = vmatprep.subr.mxu0 0.0
        %1129 = vmatpush1.msra.mxu0 0.0
        %1130 = vmatprep.subr.mxu0 0.0
        %1131 = vmatpush1.msra.mxu0 0.0
        %1132 = vmatprep.subr.mxu0 0.0
        %1133 = vmatpush1.msra.mxu0 0.0
        %1134 = vmatprep.subr.mxu0 0.0
        %1135 = vmatpush1.msra.mxu0 0.0
        %1136 = vmatprep.subr.mxu0 0.0
        %1137 = vmatpush1.msra.mxu0 0.0
        %1138 = vmatprep.subr.mxu0 0.0
        %1139 = vmatpush1.msra.mxu0 0.0
        %1140 = vmatprep.subr.mxu0 0.0
        %1141 = vmatpush1.msra.mxu0 0.0
        %1142 = vmatprep.subr.mxu0 0.0
        %1143 = vmatpush1.msra.mxu0 0.0
        %1144 = vmatprep.subr.mxu0 0.0
        %1145 = vmatpush1.msra.mxu0 0.0
        %1146 = vmatprep.subr.mxu0 0.0
        %1147 = vmatpush1.msra.mxu0 0.0
        %1148 = vmatprep.subr.mxu0 0.0
        %1149 = vmatpush1.msra.mxu0 0.0
        %1150 = vmatprep.subr.mxu0 0.0
        %1151 = vmatpush1.msra.mxu0 0.0
        %1152 = vmatprep.subr.mxu0 0.0
        %1153 = vmatpush1.msra.mxu0 0.0
        %1154 = vmatprep.subr.mxu0 0.0
        %1155 = vmatpush1.msra.mxu0 0.0
        %1156 = vmatprep.subr.mxu0 0.0
        %1157 = vmatpush1.msra.mxu0 0.0
        %1158 = vmatprep.subr.mxu0 0.0
        %1159 = vmatpush1.msra.mxu0 0.0
        %1160 = vmatprep.subr.mxu0 0.0
        %1161 = vmatpush1.msra.mxu0 0.0
        %1162 = vmatprep.subr.mxu0 0.0
        %1163 = vmatpush1.msra.mxu0 0.0
        %1164 = vmatprep.subr.mxu0 0.0
        %1165 = vmatpush1.msra.mxu0 0.0
        %1166 = vmatprep.subr.mxu0 0.0
        %1167 = vmatpush1.msra.mxu0 0.0
        %1168 = vmatprep.subr.mxu0 0.0
        %1169 = vmatpush1.msra.mxu0 0.0
        %1170 = vmatprep.subr.mxu0 0.0
        %1171 = vmatpush1.msra.mxu0 0.0
        %1172 = vmatprep.subr.mxu0 0.0
        %1173 = vmatpush1.msra.mxu0 0.0
        %1174 = vmatprep.subr.mxu0 0.0
        %1175 = vmatpush1.msra.mxu0 0.0
        %1176 = vmatprep.subr.mxu0 0.0
        %1177 = vmatpush1.msra.mxu0 0.0
        %1178 = vmatprep.subr.mxu0 0.0
        %1179 = vmatpush1.msra.mxu0 0.0
        %1180 = vmatprep.mubr.f32.mxu0 0.0
        %1181 = vmatmul.mubr.f32.gmra.mrb[0].mxu0 %v1114
        %v1182 = vpop.f32.mrb[0].mxu0
        %v1183 = vadd.f32 0.0, %v1182
        %v1184 = vpop.f32.mrb[0].mxu0
        %1185 = vdwg.mxu0
        %1187 = vrot.lane.b32.xlu0 %v853, 8
        %v1188 = vpop.permute.xlu0 %1187
        %1191 = vrot.lane.b32.xlu0 %v1018, 16
        %v1192 = vpop.permute.xlu0 %1191
        %1195 = vrot.lane.b32.xlu0 %v1183, 24
        %v1196 = vpop.permute.xlu0 %1195
        %v1198 = vsel %vm529, %v688, %v1188
        %vm1199 = vcmask 130048
        %v1200 = vsel %vm1199, %v1198, %v1192
        %vm1201 = vcmask 195584
        %v1202 = vsel %vm1201, %v1200, %v1196
        %v1203 = vpack.c.bf16 %v1202, %v1202
        %v1204 = vld [vmem:[%s4] sm:$0xf]
        %v1205 = vld [vmem:[%s4 + $0x4] sm:$0xf]
        %v1206 = vld [vmem:[%s4 + $0x8] sm:$0xf]
        %v1207 = vld [vmem:[%s4 + $0xc] sm:$0xf]
        %v1208 = vlaneseq
        %v1209 = vshrl.u32 %v1208, 7
        %v1210 = vsub.s32 2, %v1209
        %v1211 = vrot.slane %v376, %v1210
        %v1216 = vunpack.c.l.b16 %v1204
        %v1217 = vunpack.c.l.b16 %v1205
        %v1218 = vunpack.c.l.b16 %v1206
        %v1219 = vunpack.c.l.b16 %v1207
        %v1220 = vpack.c.b16 %v1217, %v1216
        %v1221 = vpack.c.b16 %v1219, %v1218
        %v1225 = vsel %vm482, %v1203, 0
        %1227 = vmatprep.subr.bf16.mxu0 0
        %1228 = vmatpush1.bf16.msra.mxu0 %v1220
        %1229 = vmatprep.subr.bf16.mxu0 0
        %1230 = vmatpush1.bf16.msra.mxu0 %v1221
        %1231 = vmatprep.subr.bf16.mxu0 0
        %1232 = vmatpush1.bf16.msra.mxu0 0
        %1233 = vmatprep.subr.bf16.mxu0 0
        %1234 = vmatpush1.bf16.msra.mxu0 0
        %1235 = vmatprep.subr.bf16.mxu0 0
        %1236 = vmatpush1.bf16.msra.mxu0 0
        %1237 = vmatprep.subr.bf16.mxu0 0
        %1238 = vmatpush1.bf16.msra.mxu0 0
        %1239 = vmatprep.subr.bf16.mxu0 0
        %1240 = vmatpush1.bf16.msra.mxu0 0
        %1241 = vmatprep.subr.bf16.mxu0 0
        %1242 = vmatpush1.bf16.msra.mxu0 0
        %1243 = vmatprep.subr.bf16.mxu0 0
        %1244 = vmatpush1.bf16.msra.mxu0 0
        %1245 = vmatprep.subr.bf16.mxu0 0
        %1246 = vmatpush1.bf16.msra.mxu0 0
        %1247 = vmatprep.subr.bf16.mxu0 0
        %1248 = vmatpush1.bf16.msra.mxu0 0
        %1249 = vmatprep.subr.bf16.mxu0 0
        %1250 = vmatpush1.bf16.msra.mxu0 0
        %1251 = vmatprep.subr.bf16.mxu0 0
        %1252 = vmatpush1.bf16.msra.mxu0 0
        %1253 = vmatprep.subr.bf16.mxu0 0
        %1254 = vmatpush1.bf16.msra.mxu0 0
        %1255 = vmatprep.subr.bf16.mxu0 0
        %1256 = vmatpush1.bf16.msra.mxu0 0
        %1257 = vmatprep.subr.bf16.mxu0 0
        %1258 = vmatpush1.bf16.msra.mxu0 0
        %1259 = vmatprep.mubr.bf16.mxu0 0
        %1260 = vmatmul.mubr.bf16.gmra.mrb[0].mxu0 %v1225
        %v1261 = vpop.f32.mrb[0].mxu0
        %v1262 = vadd.f32 %v1211, %v1261
        %v1263 = vpop.f32.mrb[0].mxu0
        %v1264 = vpop.f32.mrb[0].mxu0
        %v1265 = vpop.f32.mrb[0].mxu0
        %1266 = vdwg.mxu0
        %v1267 = vadd.f32 %v460, %v1262
        %v1268 = vsel %vm482, %v1267, 0.0
        %1269 = vadd.xlane.f32.xlu0 %v1268
        %v1270 = vpop.xlane.xlu0 %1269
        %v1271 = vrcp.pop 32.0
        %v1272 = vmul.f32 %v1270, %v1271
        %v1273 = vsub.f32 %v1267, %v1272
        %v1274 = vmul.f32 %v1273, %v1273
        %v1275 = vsel %vm482, %v1274, 0.0
        %1276 = vadd.xlane.f32.xlu0 %v1275
        %v1277 = vpop.xlane.xlu0 %1276
        %v1278 = vmul.f32 %v1277, %v1271
        %v1279 = vadd.f32 %v1278, 1e-05
        %v1280 = vrsqrt.pop %v1279
        %v1281 = vmul.f32 %v1273, %v1280
        %v1282 = vlaneseq
        %v1283 = vshrl.u32 %v1282, 7
        %v1284 = vsub.s32 3, %v1283
        %v1285 = vrot.slane %v376, %v1284
        %v1286 = vmul.f32 %v1281, %v1285
        %v1287 = vlaneseq
        %v1288 = vshrl.u32 %v1287, 7
        %v1289 = vsub.s32 4, %v1288
        %v1290 = vrot.slane %v376, %v1289
        %v1291 = vadd.f32 %v1286, %v1290
        %v1292 = vpack.c.bf16 %v1291, %v1291
        %v1293 = vld [vmem:[%s5] sm:$0xf]
        %v1294 = vld [vmem:[%s5 + $0x4] sm:$0xf]
        %v1295 = vld [vmem:[%s5 + $0x8] sm:$0xf]
        %v1296 = vld [vmem:[%s5 + $0xc] sm:$0xf]
        %v1297 = vlaneseq
        %v1298 = vshrl.u32 %v1297, 7
        %v1299 = vsub.s32 5, %v1298
        %v1300 = vrot.slane %v376, %v1299
        %v1305 = vunpack.c.l.b16 %v1293
        %v1306 = vunpack.c.l.b16 %v1294
        %v1307 = vunpack.c.l.b16 %v1295
        %v1308 = vunpack.c.l.b16 %v1296
        %v1309 = vpack.c.b16 %v1306, %v1305
        %v1310 = vpack.c.b16 %v1308, %v1307
        %v1314 = vsel %vm482, %v1292, 0
        %1316 = vmatprep.subr.bf16.mxu0 0
        %1317 = vmatpush1.bf16.msra.mxu0 %v1309
        %1318 = vmatprep.subr.bf16.mxu0 0
        %1319 = vmatpush1.bf16.msra.mxu0 %v1310
        %1320 = vmatprep.subr.bf16.mxu0 0
        %1321 = vmatpush1.bf16.msra.mxu0 0
        %1322 = vmatprep.subr.bf16.mxu0 0
        %1323 = vmatpush1.bf16.msra.mxu0 0
        %1324 = vmatprep.subr.bf16.mxu0 0
        %1325 = vmatpush1.bf16.msra.mxu0 0
        %1326 = vmatprep.subr.bf16.mxu0 0
        %1327 = vmatpush1.bf16.msra.mxu0 0
        %1328 = vmatprep.subr.bf16.mxu0 0
        %1329 = vmatpush1.bf16.msra.mxu0 0
        %1330 = vmatprep.subr.bf16.mxu0 0
        %1331 = vmatpush1.bf16.msra.mxu0 0
        %1332 = vmatprep.subr.bf16.mxu0 0
        %1333 = vmatpush1.bf16.msra.mxu0 0
        %1334 = vmatprep.subr.bf16.mxu0 0
        %1335 = vmatpush1.bf16.msra.mxu0 0
        %1336 = vmatprep.subr.bf16.mxu0 0
        %1337 = vmatpush1.bf16.msra.mxu0 0
        %1338 = vmatprep.subr.bf16.mxu0 0
        %1339 = vmatpush1.bf16.msra.mxu0 0
        %1340 = vmatprep.subr.bf16.mxu0 0
        %1341 = vmatpush1.bf16.msra.mxu0 0
        %1342 = vmatprep.subr.bf16.mxu0 0
        %1343 = vmatpush1.bf16.msra.mxu0 0
        %1344 = vmatprep.subr.bf16.mxu0 0
        %1345 = vmatpush1.bf16.msra.mxu0 0
        %1346 = vmatprep.subr.bf16.mxu0 0
        %1347 = vmatpush1.bf16.msra.mxu0 0
        %1348 = vmatprep.mubr.bf16.mxu0 0
        %1349 = vmatmul.mubr.bf16.gmra.mrb[0].mxu0 %v1314
        %v1350 = vpop.f32.mrb[0].mxu0
        %v1351 = vadd.f32 %v1300, %v1350
        %v1352 = vpop.f32.mrb[0].mxu0
        %v1353 = vpop.f32.mrb[0].mxu0
        %v1354 = vpop.f32.mrb[0].mxu0
        %1355 = vdwg.mxu0
        %v1356 = vmax.f32 %v1351, 0.0
        %v1357 = vpack.c.bf16 %v1356, %v1356
        %v1358 = vld [vmem:[%s6] sm:$0xf]
        %v1359 = vld [vmem:[%s6 + $0x4] sm:$0xf]
        %v1360 = vld [vmem:[%s6 + $0x8] sm:$0xf]
        %v1361 = vld [vmem:[%s6 + $0xc] sm:$0xf]
        %v1362 = vld [vmem:[%s6 + $0x10] sm:$0xf]
        %v1363 = vld [vmem:[%s6 + $0x14] sm:$0xf]
        %v1364 = vld [vmem:[%s6 + $0x18] sm:$0xf]
        %v1365 = vld [vmem:[%s6 + $0x1c] sm:$0xf]
        %v1366 = vlaneseq
        %v1367 = vshrl.u32 %v1366, 7
        %v1368 = vsub.s32 6, %v1367
        %v1369 = vrot.slane %v376, %v1368
        %v1378 = vunpack.c.l.b16 %v1358
        %v1379 = vunpack.c.l.b16 %v1359
        %v1380 = vunpack.c.l.b16 %v1360
        %v1381 = vunpack.c.l.b16 %v1361
        %v1382 = vunpack.c.l.b16 %v1362
        %v1383 = vunpack.c.l.b16 %v1363
        %v1384 = vunpack.c.l.b16 %v1364
        %v1385 = vunpack.c.l.b16 %v1365
        %v1386 = vpack.c.b16 %v1379, %v1378
        %v1387 = vpack.c.b16 %v1381, %v1380
        %v1388 = vpack.c.b16 %v1383, %v1382
        %v1389 = vpack.c.b16 %v1385, %v1384
        %v1395 = vsel %vm416, %v1357, 0
        %1397 = vmatprep.subr.bf16.mxu0 0
        %1398 = vmatpush1.bf16.msra.mxu0 %v1386
        %1399 = vmatprep.subr.bf16.mxu0 0
        %1400 = vmatpush1.bf16.msra.mxu0 %v1387
        %1401 = vmatprep.subr.bf16.mxu0 0
        %1402 = vmatpush1.bf16.msra.mxu0 %v1388
        %1403 = vmatprep.subr.bf16.mxu0 0
        %1404 = vmatpush1.bf16.msra.mxu0 %v1389
        %1405 = vmatprep.subr.bf16.mxu0 0
        %1406 = vmatpush1.bf16.msra.mxu0 0
        %1407 = vmatprep.subr.bf16.mxu0 0
        %1408 = vmatpush1.bf16.msra.mxu0 0
        %1409 = vmatprep.subr.bf16.mxu0 0
        %1410 = vmatpush1.bf16.msra.mxu0 0
        %1411 = vmatprep.subr.bf16.mxu0 0
        %1412 = vmatpush1.bf16.msra.mxu0 0
        %1413 = vmatprep.subr.bf16.mxu0 0
        %1414 = vmatpush1.bf16.msra.mxu0 0
        %1415 = vmatprep.subr.bf16.mxu0 0
        %1416 = vmatpush1.bf16.msra.mxu0 0
        %1417 = vmatprep.subr.bf16.mxu0 0
        %1418 = vmatpush1.bf16.msra.mxu0 0
        %1419 = vmatprep.subr.bf16.mxu0 0
        %1420 = vmatpush1.bf16.msra.mxu0 0
        %1421 = vmatprep.subr.bf16.mxu0 0
        %1422 = vmatpush1.bf16.msra.mxu0 0
        %1423 = vmatprep.subr.bf16.mxu0 0
        %1424 = vmatpush1.bf16.msra.mxu0 0
        %1425 = vmatprep.subr.bf16.mxu0 0
        %1426 = vmatpush1.bf16.msra.mxu0 0
        %1427 = vmatprep.subr.bf16.mxu0 0
        %1428 = vmatpush1.bf16.msra.mxu0 0
        %1429 = vmatprep.mubr.bf16.mxu0 0
        %1430 = vmatmul.mubr.bf16.gmra.mrb[0].mxu0 %v1395
        %v1431 = vpop.f32.mrb[0].mxu0
        %v1432 = vadd.f32 %v1369, %v1431
        %v1433 = vpop.f32.mrb[0].mxu0
        %v1434 = vpop.f32.mrb[0].mxu0
        %v1435 = vpop.f32.mrb[0].mxu0
        %1436 = vdwg.mxu0
        %v1437 = vadd.f32 %v1291, %v1432
        %v1438 = vsel %vm482, %v1437, 0.0
        %1439 = vadd.xlane.f32.xlu0 %v1438
        %v1440 = vpop.xlane.xlu0 %1439
        %v1441 = vmul.f32 %v1440, %v1271
        %v1442 = vsub.f32 %v1437, %v1441
        %v1443 = vmul.f32 %v1442, %v1442
        %v1444 = vsel %vm482, %v1443, 0.0
        %1445 = vadd.xlane.f32.xlu0 %v1444
        %v1446 = vpop.xlane.xlu0 %1445
        %v1447 = vmul.f32 %v1446, %v1271
        %v1448 = vadd.f32 %v1447, 1e-05
        %v1449 = vrsqrt.pop %v1448
        %v1450 = vmul.f32 %v1442, %v1449
        %v1451 = vlaneseq
        %v1452 = vshrl.u32 %v1451, 7
        %v1453 = vsub.s32 7, %v1452
        %v1454 = vrot.slane %v376, %v1453
        %v1455 = vmul.f32 %v1450, %v1454
        %v1456 = vlaneseq
        %v1457 = vshrl.u32 %v1456, 7
        %v1458 = vsub.s32 0, %v1457
        %v1459 = vrot.slane %v377, %v1458
        %v1460 = vadd.f32 %v1455, %v1459
        %v1461 = vpack.c.bf16 %v1460, %v1460
        %s1462 = scalar_lea.vmem %s3, 16
        %v1463 = vld [vmem:[%s1462] sm:$0xf]
        %v1464 = vld [vmem:[%s1462 + $0x4] sm:$0xf]
        %v1465 = vld [vmem:[%s1462 + $0x8] sm:$0xf]
        %v1466 = vld [vmem:[%s1462 + $0xc] sm:$0xf]
        %v1467 = vlaneseq
        %v1468 = vshrl.u32 %v1467, 7
        %v1469 = vsub.s32 1, %v1468
        %v1470 = vrot.slane %v377, %v1469
        %v1475 = vunpack.c.l.b16 %v1463
        %v1476 = vunpack.c.l.b16 %v1464
        %v1477 = vunpack.c.l.b16 %v1465
        %v1478 = vunpack.c.l.b16 %v1466
        %v1479 = vpack.c.b16 %v1476, %v1475
        %v1480 = vpack.c.b16 %v1478, %v1477
        %v1484 = vsel %vm482, %v1461, 0
        %1486 = vmatprep.subr.bf16.mxu0 0
        %1487 = vmatpush1.bf16.msra.mxu0 %v1479
        %1488 = vmatprep.subr.bf16.mxu0 0
        %1489 = vmatpush1.bf16.msra.mxu0 %v1480
        %1490 = vmatprep.subr.bf16.mxu0 0
        %1491 = vmatpush1.bf16.msra.mxu0 0
        %1492 = vmatprep.subr.bf16.mxu0 0
        %1493 = vmatpush1.bf16.msra.mxu0 0
        %1494 = vmatprep.subr.bf16.mxu0 0
        %1495 = vmatpush1.bf16.msra.mxu0 0
        %1496 = vmatprep.subr.bf16.mxu0 0
        %1497 = vmatpush1.bf16.msra.mxu0 0
        %1498 = vmatprep.subr.bf16.mxu0 0
        %1499 = vmatpush1.bf16.msra.mxu0 0
        %1500 = vmatprep.subr.bf16.mxu0 0
        %1501 = vmatpush1.bf16.msra.mxu0 0
        %1502 = vmatprep.subr.bf16.mxu0 0
        %1503 = vmatpush1.bf16.msra.mxu0 0
        %1504 = vmatprep.subr.bf16.mxu0 0
        %1505 = vmatpush1.bf16.msra.mxu0 0
        %1506 = vmatprep.subr.bf16.mxu0 0
        %1507 = vmatpush1.bf16.msra.mxu0 0
        %1508 = vmatprep.subr.bf16.mxu0 0
        %1509 = vmatpush1.bf16.msra.mxu0 0
        %1510 = vmatprep.subr.bf16.mxu0 0
        %1511 = vmatpush1.bf16.msra.mxu0 0
        %1512 = vmatprep.subr.bf16.mxu0 0
        %1513 = vmatpush1.bf16.msra.mxu0 0
        %1514 = vmatprep.subr.bf16.mxu0 0
        %1515 = vmatpush1.bf16.msra.mxu0 0
        %1516 = vmatprep.subr.bf16.mxu0 0
        %1517 = vmatpush1.bf16.msra.mxu0 0
        %1518 = vmatprep.mubr.bf16.mxu0 0
        %1519 = vmatmul.mubr.bf16.gmra.mrb[0].mxu0 %v1484
        %v1520 = vpop.f32.mrb[0].mxu0
        %v1521 = vadd.f32 %v1470, %v1520
        %v1522 = vpop.f32.mrb[0].mxu0
        %v1523 = vpop.f32.mrb[0].mxu0
        %v1524 = vpop.f32.mrb[0].mxu0
        %1525 = vdwg.mxu0
        %1527 = vrot.lane.b32.xlu0 %v1521, 96
        %v1528 = vpop.permute.xlu0 %1527
        %v1529 = vsel %vm529, %v1521, 0
        %v1531 = vsel %vm529, %v1528, 0
        %1533 = vmatprep.subr.mxu0 0.0
        %1534 = vmatpush1.xpose.msra.mxu0 %v1531
        %1535 = vmatprep.subr.mxu0 0.0
        %1536 = vmatpush1.xpose.msra.mxu0 0.0
        %1537 = vmatprep.subr.mxu0 0.0
        %1538 = vmatpush1.xpose.msra.mxu0 0.0
        %1539 = vmatprep.subr.mxu0 0.0
        %1540 = vmatpush1.xpose.msra.mxu0 0.0
        %1541 = vmatprep.subr.mxu0 0.0
        %1542 = vmatpush1.xpose.msra.mxu0 0.0
        %1543 = vmatprep.subr.mxu0 0.0
        %1544 = vmatpush1.xpose.msra.mxu0 0.0
        %1545 = vmatprep.subr.mxu0 0.0
        %1546 = vmatpush1.xpose.msra.mxu0 0.0
        %1547 = vmatprep.subr.mxu0 0.0
        %1548 = vmatpush1.xpose.msra.mxu0 0.0
        %1549 = vmatprep.subr.mxu0 0.0
        %1550 = vmatpush1.xpose.msra.mxu0 0.0
        %1551 = vmatprep.subr.mxu0 0.0
        %1552 = vmatpush1.xpose.msra.mxu0 0.0
        %1553 = vmatprep.subr.mxu0 0.0
        %1554 = vmatpush1.xpose.msra.mxu0 0.0
        %1555 = vmatprep.subr.mxu0 0.0
        %1556 = vmatpush1.xpose.msra.mxu0 0.0
        %1557 = vmatprep.subr.mxu0 0.0
        %1558 = vmatpush1.xpose.msra.mxu0 0.0
        %1559 = vmatprep.subr.mxu0 0.0
        %1560 = vmatpush1.xpose.msra.mxu0 0.0
        %1561 = vmatprep.subr.mxu0 0.0
        %1562 = vmatpush1.xpose.msra.mxu0 0.0
        %1563 = vmatprep.subr.mxu0 0.0
        %1564 = vmatpush1.xpose.msra.mxu0 0.0
        %1565 = vmatprep.subr.mxu0 0.0
        %1566 = vmatpush1.xpose.msra.mxu0 0.0
        %1567 = vmatprep.subr.mxu0 0.0
        %1568 = vmatpush1.xpose.msra.mxu0 0.0
        %1569 = vmatprep.subr.mxu0 0.0
        %1570 = vmatpush1.xpose.msra.mxu0 0.0
        %1571 = vmatprep.subr.mxu0 0.0
        %1572 = vmatpush1.xpose.msra.mxu0 0.0
        %1573 = vmatprep.subr.mxu0 0.0
        %1574 = vmatpush1.xpose.msra.mxu0 0.0
        %1575 = vmatprep.subr.mxu0 0.0
        %1576 = vmatpush1.xpose.msra.mxu0 0.0
        %1577 = vmatprep.subr.mxu0 0.0
        %1578 = vmatpush1.xpose.msra.mxu0 0.0
        %1579 = vmatprep.subr.mxu0 0.0
        %1580 = vmatpush1.xpose.msra.mxu0 0.0
        %1581 = vmatprep.subr.mxu0 0.0
        %1582 = vmatpush1.xpose.msra.mxu0 0.0
        %1583 = vmatprep.subr.mxu0 0.0
        %1584 = vmatpush1.xpose.msra.mxu0 0.0
        %1585 = vmatprep.subr.mxu0 0.0
        %1586 = vmatpush1.xpose.msra.mxu0 0.0
        %1587 = vmatprep.subr.mxu0 0.0
        %1588 = vmatpush1.xpose.msra.mxu0 0.0
        %1589 = vmatprep.subr.mxu0 0.0
        %1590 = vmatpush1.xpose.msra.mxu0 0.0
        %1591 = vmatprep.subr.mxu0 0.0
        %1592 = vmatpush1.xpose.msra.mxu0 0.0
        %1593 = vmatprep.subr.mxu0 0.0
        %1594 = vmatpush1.xpose.msra.mxu0 0.0
        %1595 = vmatprep.subr.mxu0 0.0
        %1596 = vmatpush1.xpose.msra.mxu0 0.0
        %1597 = vmatprep.mubr.f32.mxu0 0.0
        %1598 = vmatmul.mubr.f32.gmra.mrb[0].mxu0 %v1529
        %v1599 = vpop.f32.mrb[0].mxu0
        %v1600 = vadd.f32 0.0, %v1599
        %v1601 = vpop.f32.mrb[0].mxu0
        %1602 = vdwg.mxu0
        %v1603 = vsel %vm529, %v1600, -inf
        %1604 = vmax.xlane.f32.xlu0 %v1603
        %v1605 = vpop.xlane.xlu0 %1604
        %v1606 = vsub.f32 %v1600, %v1605
        %v1607 = vmul.f32 %v1606, 1.442695
        %v1608 = vpow.pop %v1607
        %v1609 = vsel %vm529, %v1608, 0.0
        %1610 = vadd.xlane.f32.xlu0 %v1609
        %v1611 = vpop.xlane.xlu0 %1610
        %v1612 = vrcp.pop %v1611
        %v1613 = vmul.f32 %v1608, %v1612
        %1614 = vrot.lane.b32.xlu0 %v1521, 64
        %v1615 = vpop.permute.xlu0 %1614
        %v1618 = vsel %vm529, %v1613, 0
        %1620 = vmatprep.subr.mxu0 0.0
        %1621 = vmatpush1.msra.mxu0 %v1615
        %1622 = vmatprep.subr.mxu0 0.0
        %1623 = vmatpush1.msra.mxu0 0.0
        %1624 = vmatprep.subr.mxu0 0.0
        %1625 = vmatpush1.msra.mxu0 0.0
        %1626 = vmatprep.subr.mxu0 0.0
        %1627 = vmatpush1.msra.mxu0 0.0
        %1628 = vmatprep.subr.mxu0 0.0
        %1629 = vmatpush1.msra.mxu0 0.0
        %1630 = vmatprep.subr.mxu0 0.0
        %1631 = vmatpush1.msra.mxu0 0.0
        %1632 = vmatprep.subr.mxu0 0.0
        %1633 = vmatpush1.msra.mxu0 0.0
        %1634 = vmatprep.subr.mxu0 0.0
        %1635 = vmatpush1.msra.mxu0 0.0
        %1636 = vmatprep.subr.mxu0 0.0
        %1637 = vmatpush1.msra.mxu0 0.0
        %1638 = vmatprep.subr.mxu0 0.0
        %1639 = vmatpush1.msra.mxu0 0.0
        %1640 = vmatprep.subr.mxu0 0.0
        %1641 = vmatpush1.msra.mxu0 0.0
        %1642 = vmatprep.subr.mxu0 0.0
        %1643 = vmatpush1.msra.mxu0 0.0
        %1644 = vmatprep.subr.mxu0 0.0
        %1645 = vmatpush1.msra.mxu0 0.0
        %1646 = vmatprep.subr.mxu0 0.0
        %1647 = vmatpush1.msra.mxu0 0.0
        %1648 = vmatprep.subr.mxu0 0.0
        %1649 = vmatpush1.msra.mxu0 0.0
        %1650 = vmatprep.subr.mxu0 0.0
        %1651 = vmatpush1.msra.mxu0 0.0
        %1652 = vmatprep.subr.mxu0 0.0
        %1653 = vmatpush1.msra.mxu0 0.0
        %1654 = vmatprep.subr.mxu0 0.0
        %1655 = vmatpush1.msra.mxu0 0.0
        %1656 = vmatprep.subr.mxu0 0.0
        %1657 = vmatpush1.msra.mxu0 0.0
        %1658 = vmatprep.subr.mxu0 0.0
        %1659 = vmatpush1.msra.mxu0 0.0
        %1660 = vmatprep.subr.mxu0 0.0
        %1661 = vmatpush1.msra.mxu0 0.0
        %1662 = vmatprep.subr.mxu0 0.0
        %1663 = vmatpush1.msra.mxu0 0.0
        %1664 = vmatprep.subr.mxu0 0.0
        %1665 = vmatpush1.msra.mxu0 0.0
        %1666 = vmatprep.subr.mxu0 0.0
        %1667 = vmatpush1.msra.mxu0 0.0
        %1668 = vmatprep.subr.mxu0 0.0
        %1669 = vmatpush1.msra.mxu0 0.0
        %1670 = vmatprep.subr.mxu0 0.0
        %1671 = vmatpush1.msra.mxu0 0.0
        %1672 = vmatprep.subr.mxu0 0.0
        %1673 = vmatpush1.msra.mxu0 0.0
        %1674 = vmatprep.subr.mxu0 0.0
        %1675 = vmatpush1.msra.mxu0 0.0
        %1676 = vmatprep.subr.mxu0 0.0
        %1677 = vmatpush1.msra.mxu0 0.0
        %1678 = vmatprep.subr.mxu0 0.0
        %1679 = vmatpush1.msra.mxu0 0.0
        %1680 = vmatprep.subr.mxu0 0.0
        %1681 = vmatpush1.msra.mxu0 0.0
        %1682 = vmatprep.subr.mxu0 0.0
        %1683 = vmatpush1.msra.mxu0 0.0
        %1684 = vmatprep.mubr.f32.mxu0 0.0
        %1685 = vmatmul.mubr.f32.gmra.mrb[0].mxu0 %v1618
        %v1686 = vpop.f32.mrb[0].mxu0
        %v1687 = vadd.f32 0.0, %v1686
        %v1688 = vpop.f32.mrb[0].mxu0
        %1689 = vdwg.mxu0
        %1690 = vrot.lane.b32.xlu0 %v1521, 120
        %v1691 = vpop.permute.xlu0 %1690
        %1692 = vrot.lane.b32.xlu0 %v1521, 88
        %v1693 = vpop.permute.xlu0 %1692
        %v1694 = vsel %vm529, %v1691, 0
        %v1696 = vsel %vm529, %v1693, 0
        %1698 = vmatprep.subr.mxu0 0.0
        %1699 = vmatpush1.xpose.msra.mxu0 %v1696
        %1700 = vmatprep.subr.mxu0 0.0
        %1701 = vmatpush1.xpose.msra.mxu0 0.0
        %1702 = vmatprep.subr.mxu0 0.0
        %1703 = vmatpush1.xpose.msra.mxu0 0.0
        %1704 = vmatprep.subr.mxu0 0.0
        %1705 = vmatpush1.xpose.msra.mxu0 0.0
        %1706 = vmatprep.subr.mxu0 0.0
        %1707 = vmatpush1.xpose.msra.mxu0 0.0
        %1708 = vmatprep.subr.mxu0 0.0
        %1709 = vmatpush1.xpose.msra.mxu0 0.0
        %1710 = vmatprep.subr.mxu0 0.0
        %1711 = vmatpush1.xpose.msra.mxu0 0.0
        %1712 = vmatprep.subr.mxu0 0.0
        %1713 = vmatpush1.xpose.msra.mxu0 0.0
        %1714 = vmatprep.subr.mxu0 0.0
        %1715 = vmatpush1.xpose.msra.mxu0 0.0
        %1716 = vmatprep.subr.mxu0 0.0
        %1717 = vmatpush1.xpose.msra.mxu0 0.0
        %1718 = vmatprep.subr.mxu0 0.0
        %1719 = vmatpush1.xpose.msra.mxu0 0.0
        %1720 = vmatprep.subr.mxu0 0.0
        %1721 = vmatpush1.xpose.msra.mxu0 0.0
        %1722 = vmatprep.subr.mxu0 0.0
        %1723 = vmatpush1.xpose.msra.mxu0 0.0
        %1724 = vmatprep.subr.mxu0 0.0
        %1725 = vmatpush1.xpose.msra.mxu0 0.0
        %1726 = vmatprep.subr.mxu0 0.0
        %1727 = vmatpush1.xpose.msra.mxu0 0.0
        %1728 = vmatprep.subr.mxu0 0.0
        %1729 = vmatpush1.xpose.msra.mxu0 0.0
        %1730 = vmatprep.subr.mxu0 0.0
        %1731 = vmatpush1.xpose.msra.mxu0 0.0
        %1732 = vmatprep.subr.mxu0 0.0
        %1733 = vmatpush1.xpose.msra.mxu0 0.0
        %1734 = vmatprep.subr.mxu0 0.0
        %1735 = vmatpush1.xpose.msra.mxu0 0.0
        %1736 = vmatprep.subr.mxu0 0.0
        %1737 = vmatpush1.xpose.msra.mxu0 0.0
        %1738 = vmatprep.subr.mxu0 0.0
        %1739 = vmatpush1.xpose.msra.mxu0 0.0
        %1740 = vmatprep.subr.mxu0 0.0
        %1741 = vmatpush1.xpose.msra.mxu0 0.0
        %1742 = vmatprep.subr.mxu0 0.0
        %1743 = vmatpush1.xpose.msra.mxu0 0.0
        %1744 = vmatprep.subr.mxu0 0.0
        %1745 = vmatpush1.xpose.msra.mxu0 0.0
        %1746 = vmatprep.subr.mxu0 0.0
        %1747 = vmatpush1.xpose.msra.mxu0 0.0
        %1748 = vmatprep.subr.mxu0 0.0
        %1749 = vmatpush1.xpose.msra.mxu0 0.0
        %1750 = vmatprep.subr.mxu0 0.0
        %1751 = vmatpush1.xpose.msra.mxu0 0.0
        %1752 = vmatprep.subr.mxu0 0.0
        %1753 = vmatpush1.xpose.msra.mxu0 0.0
        %1754 = vmatprep.subr.mxu0 0.0
        %1755 = vmatpush1.xpose.msra.mxu0 0.0
        %1756 = vmatprep.subr.mxu0 0.0
        %1757 = vmatpush1.xpose.msra.mxu0 0.0
        %1758 = vmatprep.subr.mxu0 0.0
        %1759 = vmatpush1.xpose.msra.mxu0 0.0
        %1760 = vmatprep.subr.mxu0 0.0
        %1761 = vmatpush1.xpose.msra.mxu0 0.0
        %1762 = vmatprep.mubr.f32.mxu0 0.0
        %1763 = vmatmul.mubr.f32.gmra.mrb[0].mxu0 %v1694
        %v1764 = vpop.f32.mrb[0].mxu0
        %v1765 = vadd.f32 0.0, %v1764
        %v1766 = vpop.f32.mrb[0].mxu0
        %1767 = vdwg.mxu0
        %v1768 = vsel %vm529, %v1765, -inf
        %1769 = vmax.xlane.f32.xlu0 %v1768
        %v1770 = vpop.xlane.xlu0 %1769
        %v1771 = vsub.f32 %v1765, %v1770
        %v1772 = vmul.f32 %v1771, 1.442695
        %v1773 = vpow.pop %v1772
        %v1774 = vsel %vm529, %v1773, 0.0
        %1775 = vadd.xlane.f32.xlu0 %v1774
        %v1776 = vpop.xlane.xlu0 %1775
        %v1777 = vrcp.pop %v1776
        %v1778 = vmul.f32 %v1773, %v1777
        %1779 = vrot.lane.b32.xlu0 %v1521, 56
        %v1780 = vpop.permute.xlu0 %1779
        %v1783 = vsel %vm529, %v1778, 0
        %1785 = vmatprep.subr.mxu0 0.0
        %1786 = vmatpush1.msra.mxu0 %v1780
        %1787 = vmatprep.subr.mxu0 0.0
        %1788 = vmatpush1.msra.mxu0 0.0
        %1789 = vmatprep.subr.mxu0 0.0
        %1790 = vmatpush1.msra.mxu0 0.0
        %1791 = vmatprep.subr.mxu0 0.0
        %1792 = vmatpush1.msra.mxu0 0.0
        %1793 = vmatprep.subr.mxu0 0.0
        %1794 = vmatpush1.msra.mxu0 0.0
        %1795 = vmatprep.subr.mxu0 0.0
        %1796 = vmatpush1.msra.mxu0 0.0
        %1797 = vmatprep.subr.mxu0 0.0
        %1798 = vmatpush1.msra.mxu0 0.0
        %1799 = vmatprep.subr.mxu0 0.0
        %1800 = vmatpush1.msra.mxu0 0.0
        %1801 = vmatprep.subr.mxu0 0.0
        %1802 = vmatpush1.msra.mxu0 0.0
        %1803 = vmatprep.subr.mxu0 0.0
        %1804 = vmatpush1.msra.mxu0 0.0
        %1805 = vmatprep.subr.mxu0 0.0
        %1806 = vmatpush1.msra.mxu0 0.0
        %1807 = vmatprep.subr.mxu0 0.0
        %1808 = vmatpush1.msra.mxu0 0.0
        %1809 = vmatprep.subr.mxu0 0.0
        %1810 = vmatpush1.msra.mxu0 0.0
        %1811 = vmatprep.subr.mxu0 0.0
        %1812 = vmatpush1.msra.mxu0 0.0
        %1813 = vmatprep.subr.mxu0 0.0
        %1814 = vmatpush1.msra.mxu0 0.0
        %1815 = vmatprep.subr.mxu0 0.0
        %1816 = vmatpush1.msra.mxu0 0.0
        %1817 = vmatprep.subr.mxu0 0.0
        %1818 = vmatpush1.msra.mxu0 0.0
        %1819 = vmatprep.subr.mxu0 0.0
        %1820 = vmatpush1.msra.mxu0 0.0
        %1821 = vmatprep.subr.mxu0 0.0
        %1822 = vmatpush1.msra.mxu0 0.0
        %1823 = vmatprep.subr.mxu0 0.0
        %1824 = vmatpush1.msra.mxu0 0.0
        %1825 = vmatprep.subr.mxu0 0.0
        %1826 = vmatpush1.msra.mxu0 0.0
        %1827 = vmatprep.subr.mxu0 0.0
        %1828 = vmatpush1.msra.mxu0 0.0
        %1829 = vmatprep.subr.mxu0 0.0
        %1830 = vmatpush1.msra.mxu0 0.0
        %1831 = vmatprep.subr.mxu0 0.0
        %1832 = vmatpush1.msra.mxu0 0.0
        %1833 = vmatprep.subr.mxu0 0.0
        %1834 = vmatpush1.msra.mxu0 0.0
        %1835 = vmatprep.subr.mxu0 0.0
        %1836 = vmatpush1.msra.mxu0 0.0
        %1837 = vmatprep.subr.mxu0 0.0
        %1838 = vmatpush1.msra.mxu0 0.0
        %1839 = vmatprep.subr.mxu0 0.0
        %1840 = vmatpush1.msra.mxu0 0.0
        %1841 = vmatprep.subr.mxu0 0.0
        %1842 = vmatpush1.msra.mxu0 0.0
        %1843 = vmatprep.subr.mxu0 0.0
        %1844 = vmatpush1.msra.mxu0 0.0
        %1845 = vmatprep.subr.mxu0 0.0
        %1846 = vmatpush1.msra.mxu0 0.0
        %1847 = vmatprep.subr.mxu0 0.0
        %1848 = vmatpush1.msra.mxu0 0.0
        %1849 = vmatprep.mubr.f32.mxu0 0.0
        %1850 = vmatmul.mubr.f32.gmra.mrb[0].mxu0 %v1783
        %v1851 = vpop.f32.mrb[0].mxu0
        %v1852 = vadd.f32 0.0, %v1851
        %v1853 = vpop.f32.mrb[0].mxu0
        %1854 = vdwg.mxu0
        %1855 = vrot.lane.b32.xlu0 %v1521, 112
        %v1856 = vpop.permute.xlu0 %1855
        %1857 = vrot.lane.b32.xlu0 %v1521, 80
        %v1858 = vpop.permute.xlu0 %1857
        %v1859 = vsel %vm529, %v1856, 0
        %v1861 = vsel %vm529, %v1858, 0
        %1863 = vmatprep.subr.mxu0 0.0
        %1864 = vmatpush1.xpose.msra.mxu0 %v1861
        %1865 = vmatprep.subr.mxu0 0.0
        %1866 = vmatpush1.xpose.msra.mxu0 0.0
        %1867 = vmatprep.subr.mxu0 0.0
        %1868 = vmatpush1.xpose.msra.mxu0 0.0
        %1869 = vmatprep.subr.mxu0 0.0
        %1870 = vmatpush1.xpose.msra.mxu0 0.0
        %1871 = vmatprep.subr.mxu0 0.0
        %1872 = vmatpush1.xpose.msra.mxu0 0.0
        %1873 = vmatprep.subr.mxu0 0.0
        %1874 = vmatpush1.xpose.msra.mxu0 0.0
        %1875 = vmatprep.subr.mxu0 0.0
        %1876 = vmatpush1.xpose.msra.mxu0 0.0
        %1877 = vmatprep.subr.mxu0 0.0
        %1878 = vmatpush1.xpose.msra.mxu0 0.0
        %1879 = vmatprep.subr.mxu0 0.0
        %1880 = vmatpush1.xpose.msra.mxu0 0.0
        %1881 = vmatprep.subr.mxu0 0.0
        %1882 = vmatpush1.xpose.msra.mxu0 0.0
        %1883 = vmatprep.subr.mxu0 0.0
        %1884 = vmatpush1.xpose.msra.mxu0 0.0
        %1885 = vmatprep.subr.mxu0 0.0
        %1886 = vmatpush1.xpose.msra.mxu0 0.0
        %1887 = vmatprep.subr.mxu0 0.0
        %1888 = vmatpush1.xpose.msra.mxu0 0.0
        %1889 = vmatprep.subr.mxu0 0.0
        %1890 = vmatpush1.xpose.msra.mxu0 0.0
        %1891 = vmatprep.subr.mxu0 0.0
        %1892 = vmatpush1.xpose.msra.mxu0 0.0
        %1893 = vmatprep.subr.mxu0 0.0
        %1894 = vmatpush1.xpose.msra.mxu0 0.0
        %1895 = vmatprep.subr.mxu0 0.0
        %1896 = vmatpush1.xpose.msra.mxu0 0.0
        %1897 = vmatprep.subr.mxu0 0.0
        %1898 = vmatpush1.xpose.msra.mxu0 0.0
        %1899 = vmatprep.subr.mxu0 0.0
        %1900 = vmatpush1.xpose.msra.mxu0 0.0
        %1901 = vmatprep.subr.mxu0 0.0
        %1902 = vmatpush1.xpose.msra.mxu0 0.0
        %1903 = vmatprep.subr.mxu0 0.0
        %1904 = vmatpush1.xpose.msra.mxu0 0.0
        %1905 = vmatprep.subr.mxu0 0.0
        %1906 = vmatpush1.xpose.msra.mxu0 0.0
        %1907 = vmatprep.subr.mxu0 0.0
        %1908 = vmatpush1.xpose.msra.mxu0 0.0
        %1909 = vmatprep.subr.mxu0 0.0
        %1910 = vmatpush1.xpose.msra.mxu0 0.0
        %1911 = vmatprep.subr.mxu0 0.0
        %1912 = vmatpush1.xpose.msra.mxu0 0.0
        %1913 = vmatprep.subr.mxu0 0.0
        %1914 = vmatpush1.xpose.msra.mxu0 0.0
        %1915 = vmatprep.subr.mxu0 0.0
        %1916 = vmatpush1.xpose.msra.mxu0 0.0
        %1917 = vmatprep.subr.mxu0 0.0
        %1918 = vmatpush1.xpose.msra.mxu0 0.0
        %1919 = vmatprep.subr.mxu0 0.0
        %1920 = vmatpush1.xpose.msra.mxu0 0.0
        %1921 = vmatprep.subr.mxu0 0.0
        %1922 = vmatpush1.xpose.msra.mxu0 0.0
        %1923 = vmatprep.subr.mxu0 0.0
        %1924 = vmatpush1.xpose.msra.mxu0 0.0
        %1925 = vmatprep.subr.mxu0 0.0
        %1926 = vmatpush1.xpose.msra.mxu0 0.0
        %1927 = vmatprep.mubr.f32.mxu0 0.0
        %1928 = vmatmul.mubr.f32.gmra.mrb[0].mxu0 %v1859
        %v1929 = vpop.f32.mrb[0].mxu0
        %v1930 = vadd.f32 0.0, %v1929
        %v1931 = vpop.f32.mrb[0].mxu0
        %1932 = vdwg.mxu0
        %v1933 = vsel %vm529, %v1930, -inf
        %1934 = vmax.xlane.f32.xlu0 %v1933
        %v1935 = vpop.xlane.xlu0 %1934
        %v1936 = vsub.f32 %v1930, %v1935
        %v1937 = vmul.f32 %v1936, 1.442695
        %v1938 = vpow.pop %v1937
        %v1939 = vsel %vm529, %v1938, 0.0
        %1940 = vadd.xlane.f32.xlu0 %v1939
        %v1941 = vpop.xlane.xlu0 %1940
        %v1942 = vrcp.pop %v1941
        %v1943 = vmul.f32 %v1938, %v1942
        %1944 = vrot.lane.b32.xlu0 %v1521, 48
        %v1945 = vpop.permute.xlu0 %1944
        %v1948 = vsel %vm529, %v1943, 0
        %1950 = vmatprep.subr.mxu0 0.0
        %1951 = vmatpush1.msra.mxu0 %v1945
        %1952 = vmatprep.subr.mxu0 0.0
        %1953 = vmatpush1.msra.mxu0 0.0
        %1954 = vmatprep.subr.mxu0 0.0
        %1955 = vmatpush1.msra.mxu0 0.0
        %1956 = vmatprep.subr.mxu0 0.0
        %1957 = vmatpush1.msra.mxu0 0.0
        %1958 = vmatprep.subr.mxu0 0.0
        %1959 = vmatpush1.msra.mxu0 0.0
        %1960 = vmatprep.subr.mxu0 0.0
        %1961 = vmatpush1.msra.mxu0 0.0
        %1962 = vmatprep.subr.mxu0 0.0
        %1963 = vmatpush1.msra.mxu0 0.0
        %1964 = vmatprep.subr.mxu0 0.0
        %1965 = vmatpush1.msra.mxu0 0.0
        %1966 = vmatprep.subr.mxu0 0.0
        %1967 = vmatpush1.msra.mxu0 0.0
        %1968 = vmatprep.subr.mxu0 0.0
        %1969 = vmatpush1.msra.mxu0 0.0
        %1970 = vmatprep.subr.mxu0 0.0
        %1971 = vmatpush1.msra.mxu0 0.0
        %1972 = vmatprep.subr.mxu0 0.0
        %1973 = vmatpush1.msra.mxu0 0.0
        %1974 = vmatprep.subr.mxu0 0.0
        %1975 = vmatpush1.msra.mxu0 0.0
        %1976 = vmatprep.subr.mxu0 0.0
        %1977 = vmatpush1.msra.mxu0 0.0
        %1978 = vmatprep.subr.mxu0 0.0
        %1979 = vmatpush1.msra.mxu0 0.0
        %1980 = vmatprep.subr.mxu0 0.0
        %1981 = vmatpush1.msra.mxu0 0.0
        %1982 = vmatprep.subr.mxu0 0.0
        %1983 = vmatpush1.msra.mxu0 0.0
        %1984 = vmatprep.subr.mxu0 0.0
        %1985 = vmatpush1.msra.mxu0 0.0
        %1986 = vmatprep.subr.mxu0 0.0
        %1987 = vmatpush1.msra.mxu0 0.0
        %1988 = vmatprep.subr.mxu0 0.0
        %1989 = vmatpush1.msra.mxu0 0.0
        %1990 = vmatprep.subr.mxu0 0.0
        %1991 = vmatpush1.msra.mxu0 0.0
        %1992 = vmatprep.subr.mxu0 0.0
        %1993 = vmatpush1.msra.mxu0 0.0
        %1994 = vmatprep.subr.mxu0 0.0
        %1995 = vmatpush1.msra.mxu0 0.0
        %1996 = vmatprep.subr.mxu0 0.0
        %1997 = vmatpush1.msra.mxu0 0.0
        %1998 = vmatprep.subr.mxu0 0.0
        %1999 = vmatpush1.msra.mxu0 0.0
        %2000 = vmatprep.subr.mxu0 0.0
        %2001 = vmatpush1.msra.mxu0 0.0
        %2002 = vmatprep.subr.mxu0 0.0
        %2003 = vmatpush1.msra.mxu0 0.0
        %2004 = vmatprep.subr.mxu0 0.0
        %2005 = vmatpush1.msra.mxu0 0.0
        %2006 = vmatprep.subr.mxu0 0.0
        %2007 = vmatpush1.msra.mxu0 0.0
        %2008 = vmatprep.subr.mxu0 0.0
        %2009 = vmatpush1.msra.mxu0 0.0
        %2010 = vmatprep.subr.mxu0 0.0
        %2011 = vmatpush1.msra.mxu0 0.0
        %2012 = vmatprep.subr.mxu0 0.0
        %2013 = vmatpush1.msra.mxu0 0.0
        %2014 = vmatprep.mubr.f32.mxu0 0.0
        %2015 = vmatmul.mubr.f32.gmra.mrb[0].mxu0 %v1948
        %v2016 = vpop.f32.mrb[0].mxu0
        %v2017 = vadd.f32 0.0, %v2016
        %v2018 = vpop.f32.mrb[0].mxu0
        %2019 = vdwg.mxu0
        %2020 = vrot.lane.b32.xlu0 %v1521, 104
        %v2021 = vpop.permute.xlu0 %2020
        %2022 = vrot.lane.b32.xlu0 %v1521, 72
        %v2023 = vpop.permute.xlu0 %2022
        %v2024 = vsel %vm529, %v2021, 0
        %v2026 = vsel %vm529, %v2023, 0
        %2028 = vmatprep.subr.mxu0 0.0
        %2029 = vmatpush1.xpose.msra.mxu0 %v2026
        %2030 = vmatprep.subr.mxu0 0.0
        %2031 = vmatpush1.xpose.msra.mxu0 0.0
        %2032 = vmatprep.subr.mxu0 0.0
        %2033 = vmatpush1.xpose.msra.mxu0 0.0
        %2034 = vmatprep.subr.mxu0 0.0
        %2035 = vmatpush1.xpose.msra.mxu0 0.0
        %2036 = vmatprep.subr.mxu0 0.0
        %2037 = vmatpush1.xpose.msra.mxu0 0.0
        %2038 = vmatprep.subr.mxu0 0.0
        %2039 = vmatpush1.xpose.msra.mxu0 0.0
        %2040 = vmatprep.subr.mxu0 0.0
        %2041 = vmatpush1.xpose.msra.mxu0 0.0
        %2042 = vmatprep.subr.mxu0 0.0
        %2043 = vmatpush1.xpose.msra.mxu0 0.0
        %2044 = vmatprep.subr.mxu0 0.0
        %2045 = vmatpush1.xpose.msra.mxu0 0.0
        %2046 = vmatprep.subr.mxu0 0.0
        %2047 = vmatpush1.xpose.msra.mxu0 0.0
        %2048 = vmatprep.subr.mxu0 0.0
        %2049 = vmatpush1.xpose.msra.mxu0 0.0
        %2050 = vmatprep.subr.mxu0 0.0
        %2051 = vmatpush1.xpose.msra.mxu0 0.0
        %2052 = vmatprep.subr.mxu0 0.0
        %2053 = vmatpush1.xpose.msra.mxu0 0.0
        %2054 = vmatprep.subr.mxu0 0.0
        %2055 = vmatpush1.xpose.msra.mxu0 0.0
        %2056 = vmatprep.subr.mxu0 0.0
        %2057 = vmatpush1.xpose.msra.mxu0 0.0
        %2058 = vmatprep.subr.mxu0 0.0
        %2059 = vmatpush1.xpose.msra.mxu0 0.0
        %2060 = vmatprep.subr.mxu0 0.0
        %2061 = vmatpush1.xpose.msra.mxu0 0.0
        %2062 = vmatprep.subr.mxu0 0.0
        %2063 = vmatpush1.xpose.msra.mxu0 0.0
        %2064 = vmatprep.subr.mxu0 0.0
        %2065 = vmatpush1.xpose.msra.mxu0 0.0
        %2066 = vmatprep.subr.mxu0 0.0
        %2067 = vmatpush1.xpose.msra.mxu0 0.0
        %2068 = vmatprep.subr.mxu0 0.0
        %2069 = vmatpush1.xpose.msra.mxu0 0.0
        %2070 = vmatprep.subr.mxu0 0.0
        %2071 = vmatpush1.xpose.msra.mxu0 0.0
        %2072 = vmatprep.subr.mxu0 0.0
        %2073 = vmatpush1.xpose.msra.mxu0 0.0
        %2074 = vmatprep.subr.mxu0 0.0
        %2075 = vmatpush1.xpose.msra.mxu0 0.0
        %2076 = vmatprep.subr.mxu0 0.0
        %2077 = vmatpush1.xpose.msra.mxu0 0.0
        %2078 = vmatprep.subr.mxu0 0.0
        %2079 = vmatpush1.xpose.msra.mxu0 0.0
        %2080 = vmatprep.subr.mxu0 0.0
        %2081 = vmatpush1.xpose.msra.mxu0 0.0
        %2082 = vmatprep.subr.mxu0 0.0
        %2083 = vmatpush1.xpose.msra.mxu0 0.0
        %2084 = vmatprep.subr.mxu0 0.0
        %2085 = vmatpush1.xpose.msra.mxu0 0.0
        %2086 = vmatprep.subr.mxu0 0.0
        %2087 = vmatpush1.xpose.msra.mxu0 0.0
        %2088 = vmatprep.subr.mxu0 0.0
        %2089 = vmatpush1.xpose.msra.mxu0 0.0
        %2090 = vmatprep.subr.mxu0 0.0
        %2091 = vmatpush1.xpose.msra.mxu0 0.0
        %2092 = vmatprep.mubr.f32.mxu0 0.0
        %2093 = vmatmul.mubr.f32.gmra.mrb[0].mxu0 %v2024
        %v2094 = vpop.f32.mrb[0].mxu0
        %v2095 = vadd.f32 0.0, %v2094
        %v2096 = vpop.f32.mrb[0].mxu0
        %2097 = vdwg.mxu0
        %v2098 = vsel %vm529, %v2095, -inf
        %2099 = vmax.xlane.f32.xlu0 %v2098
        %v2100 = vpop.xlane.xlu0 %2099
        %v2101 = vsub.f32 %v2095, %v2100
        %v2102 = vmul.f32 %v2101, 1.442695
        %v2103 = vpow.pop %v2102
        %v2104 = vsel %vm529, %v2103, 0.0
        %2105 = vadd.xlane.f32.xlu0 %v2104
        %v2106 = vpop.xlane.xlu0 %2105
        %v2107 = vrcp.pop %v2106
        %v2108 = vmul.f32 %v2103, %v2107
        %2109 = vrot.lane.b32.xlu0 %v1521, 40
        %v2110 = vpop.permute.xlu0 %2109
        %v2113 = vsel %vm529, %v2108, 0
        %2115 = vmatprep.subr.mxu0 0.0
        %2116 = vmatpush1.msra.mxu0 %v2110
        %2117 = vmatprep.subr.mxu0 0.0
        %2118 = vmatpush1.msra.mxu0 0.0
        %2119 = vmatprep.subr.mxu0 0.0
        %2120 = vmatpush1.msra.mxu0 0.0
        %2121 = vmatprep.subr.mxu0 0.0
        %2122 = vmatpush1.msra.mxu0 0.0
        %2123 = vmatprep.subr.mxu0 0.0
        %2124 = vmatpush1.msra.mxu0 0.0
        %2125 = vmatprep.subr.mxu0 0.0
        %2126 = vmatpush1.msra.mxu0 0.0
        %2127 = vmatprep.subr.mxu0 0.0
        %2128 = vmatpush1.msra.mxu0 0.0
        %2129 = vmatprep.subr.mxu0 0.0
        %2130 = vmatpush1.msra.mxu0 0.0
        %2131 = vmatprep.subr.mxu0 0.0
        %2132 = vmatpush1.msra.mxu0 0.0
        %2133 = vmatprep.subr.mxu0 0.0
        %2134 = vmatpush1.msra.mxu0 0.0
        %2135 = vmatprep.subr.mxu0 0.0
        %2136 = vmatpush1.msra.mxu0 0.0
        %2137 = vmatprep.subr.mxu0 0.0
        %2138 = vmatpush1.msra.mxu0 0.0
        %2139 = vmatprep.subr.mxu0 0.0
        %2140 = vmatpush1.msra.mxu0 0.0
        %2141 = vmatprep.subr.mxu0 0.0
        %2142 = vmatpush1.msra.mxu0 0.0
        %2143 = vmatprep.subr.mxu0 0.0
        %2144 = vmatpush1.msra.mxu0 0.0
        %2145 = vmatprep.subr.mxu0 0.0
        %2146 = vmatpush1.msra.mxu0 0.0
        %2147 = vmatprep.subr.mxu0 0.0
        %2148 = vmatpush1.msra.mxu0 0.0
        %2149 = vmatprep.subr.mxu0 0.0
        %2150 = vmatpush1.msra.mxu0 0.0
        %2151 = vmatprep.subr.mxu0 0.0
        %2152 = vmatpush1.msra.mxu0 0.0
        %2153 = vmatprep.subr.mxu0 0.0
        %2154 = vmatpush1.msra.mxu0 0.0
        %2155 = vmatprep.subr.mxu0 0.0
        %2156 = vmatpush1.msra.mxu0 0.0
        %2157 = vmatprep.subr.mxu0 0.0
        %2158 = vmatpush1.msra.mxu0 0.0
        %2159 = vmatprep.subr.mxu0 0.0
        %2160 = vmatpush1.msra.mxu0 0.0
        %2161 = vmatprep.subr.mxu0 0.0
        %2162 = vmatpush1.msra.mxu0 0.0
        %2163 = vmatprep.subr.mxu0 0.0
        %2164 = vmatpush1.msra.mxu0 0.0
        %2165 = vmatprep.subr.mxu0 0.0
        %2166 = vmatpush1.msra.mxu0 0.0
        %2167 = vmatprep.subr.mxu0 0.0
        %2168 = vmatpush1.msra.mxu0 0.0
        %2169 = vmatprep.subr.mxu0 0.0
        %2170 = vmatpush1.msra.mxu0 0.0
        %2171 = vmatprep.subr.mxu0 0.0
        %2172 = vmatpush1.msra.mxu0 0.0
        %2173 = vmatprep.subr.mxu0 0.0
        %2174 = vmatpush1.msra.mxu0 0.0
        %2175 = vmatprep.subr.mxu0 0.0
        %2176 = vmatpush1.msra.mxu0 0.0
        %2177 = vmatprep.subr.mxu0 0.0
        %2178 = vmatpush1.msra.mxu0 0.0
        %2179 = vmatprep.mubr.f32.mxu0 0.0
        %2180 = vmatmul.mubr.f32.gmra.mrb[0].mxu0 %v2113
        %v2181 = vpop.f32.mrb[0].mxu0
        %v2182 = vadd.f32 0.0, %v2181
        %v2183 = vpop.f32.mrb[0].mxu0
        %2184 = vdwg.mxu0
        %2186 = vrot.lane.b32.xlu0 %v1852, 8
        %v2187 = vpop.permute.xlu0 %2186
        %2190 = vrot.lane.b32.xlu0 %v2017, 16
        %v2191 = vpop.permute.xlu0 %2190
        %2194 = vrot.lane.b32.xlu0 %v2182, 24
        %v2195 = vpop.permute.xlu0 %2194
        %v2197 = vsel %vm529, %v1687, %v2187
        %v2198 = vsel %vm1199, %v2197, %v2191
        %v2199 = vsel %vm1201, %v2198, %v2195
        %v2200 = vpack.c.bf16 %v2199, %v2199
        %s2201 = scalar_lea.vmem %s4, 16
        %v2202 = vld [vmem:[%s2201] sm:$0xf]
        %v2203 = vld [vmem:[%s2201 + $0x4] sm:$0xf]
        %v2204 = vld [vmem:[%s2201 + $0x8] sm:$0xf]
        %v2205 = vld [vmem:[%s2201 + $0xc] sm:$0xf]
        %v2206 = vlaneseq
        %v2207 = vshrl.u32 %v2206, 7
        %v2208 = vsub.s32 2, %v2207
        %v2209 = vrot.slane %v377, %v2208
        %v2214 = vunpack.c.l.b16 %v2202
        %v2215 = vunpack.c.l.b16 %v2203
        %v2216 = vunpack.c.l.b16 %v2204
        %v2217 = vunpack.c.l.b16 %v2205
        %v2218 = vpack.c.b16 %v2215, %v2214
        %v2219 = vpack.c.b16 %v2217, %v2216
        %v2223 = vsel %vm482, %v2200, 0
        %2225 = vmatprep.subr.bf16.mxu0 0
        %2226 = vmatpush1.bf16.msra.mxu0 %v2218
        %2227 = vmatprep.subr.bf16.mxu0 0
        %2228 = vmatpush1.bf16.msra.mxu0 %v2219
        %2229 = vmatprep.subr.bf16.mxu0 0
        %2230 = vmatpush1.bf16.msra.mxu0 0
        %2231 = vmatprep.subr.bf16.mxu0 0
        %2232 = vmatpush1.bf16.msra.mxu0 0
        %2233 = vmatprep.subr.bf16.mxu0 0
        %2234 = vmatpush1.bf16.msra.mxu0 0
        %2235 = vmatprep.subr.bf16.mxu0 0
        %2236 = vmatpush1.bf16.msra.mxu0 0
        %2237 = vmatprep.subr.bf16.mxu0 0
        %2238 = vmatpush1.bf16.msra.mxu0 0
        %2239 = vmatprep.subr.bf16.mxu0 0
        %2240 = vmatpush1.bf16.msra.mxu0 0
        %2241 = vmatprep.subr.bf16.mxu0 0
        %2242 = vmatpush1.bf16.msra.mxu0 0
        %2243 = vmatprep.subr.bf16.mxu0 0
        %2244 = vmatpush1.bf16.msra.mxu0 0
        %2245 = vmatprep.subr.bf16.mxu0 0
        %2246 = vmatpush1.bf16.msra.mxu0 0
        %2247 = vmatprep.subr.bf16.mxu0 0
        %2248 = vmatpush1.bf16.msra.mxu0 0
        %2249 = vmatprep.subr.bf16.mxu0 0
        %2250 = vmatpush1.bf16.msra.mxu0 0
        %2251 = vmatprep.subr.bf16.mxu0 0
        %2252 = vmatpush1.bf16.msra.mxu0 0
        %2253 = vmatprep.subr.bf16.mxu0 0
        %2254 = vmatpush1.bf16.msra.mxu0 0
        %2255 = vmatprep.subr.bf16.mxu0 0
        %2256 = vmatpush1.bf16.msra.mxu0 0
        %2257 = vmatprep.mubr.bf16.mxu0 0
        %2258 = vmatmul.mubr.bf16.gmra.mrb[0].mxu0 %v2223
        %v2259 = vpop.f32.mrb[0].mxu0
        %v2260 = vadd.f32 %v2209, %v2259
        %v2261 = vpop.f32.mrb[0].mxu0
        %v2262 = vpop.f32.mrb[0].mxu0
        %v2263 = vpop.f32.mrb[0].mxu0
        %2264 = vdwg.mxu0
        %v2265 = vadd.f32 %v1460, %v2260
        %v2266 = vsel %vm482, %v2265, 0.0
        %2267 = vadd.xlane.f32.xlu0 %v2266
        %v2268 = vpop.xlane.xlu0 %2267
        %v2269 = vmul.f32 %v2268, %v1271
        %v2270 = vsub.f32 %v2265, %v2269
        %v2271 = vmul.f32 %v2270, %v2270
        %v2272 = vsel %vm482, %v2271, 0.0
        %2273 = vadd.xlane.f32.xlu0 %v2272
        %v2274 = vpop.xlane.xlu0 %2273
        %v2275 = vmul.f32 %v2274, %v1271
        %v2276 = vadd.f32 %v2275, 1e-05
        %v2277 = vrsqrt.pop %v2276
        %v2278 = vmul.f32 %v2270, %v2277
        %v2279 = vlaneseq
        %v2280 = vshrl.u32 %v2279, 7
        %v2281 = vsub.s32 3, %v2280
        %v2282 = vrot.slane %v377, %v2281
        %v2283 = vmul.f32 %v2278, %v2282
        %v2284 = vlaneseq
        %v2285 = vshrl.u32 %v2284, 7
        %v2286 = vsub.s32 4, %v2285
        %v2287 = vrot.slane %v377, %v2286
        %v2288 = vadd.f32 %v2283, %v2287
        %v2289 = vpack.c.bf16 %v2288, %v2288
        %s2290 = scalar_lea.vmem %s5, 16
        %v2291 = vld [vmem:[%s2290] sm:$0xf]
        %v2292 = vld [vmem:[%s2290 + $0x4] sm:$0xf]
        %v2293 = vld [vmem:[%s2290 + $0x8] sm:$0xf]
        %v2294 = vld [vmem:[%s2290 + $0xc] sm:$0xf]
        %v2295 = vlaneseq
        %v2296 = vshrl.u32 %v2295, 7
        %v2297 = vsub.s32 5, %v2296
        %v2298 = vrot.slane %v377, %v2297
        %v2303 = vunpack.c.l.b16 %v2291
        %v2304 = vunpack.c.l.b16 %v2292
        %v2305 = vunpack.c.l.b16 %v2293
        %v2306 = vunpack.c.l.b16 %v2294
        %v2307 = vpack.c.b16 %v2304, %v2303
        %v2308 = vpack.c.b16 %v2306, %v2305
        %v2312 = vsel %vm482, %v2289, 0
        %2314 = vmatprep.subr.bf16.mxu0 0
        %2315 = vmatpush1.bf16.msra.mxu0 %v2307
        %2316 = vmatprep.subr.bf16.mxu0 0
        %2317 = vmatpush1.bf16.msra.mxu0 %v2308
        %2318 = vmatprep.subr.bf16.mxu0 0
        %2319 = vmatpush1.bf16.msra.mxu0 0
        %2320 = vmatprep.subr.bf16.mxu0 0
        %2321 = vmatpush1.bf16.msra.mxu0 0
        %2322 = vmatprep.subr.bf16.mxu0 0
        %2323 = vmatpush1.bf16.msra.mxu0 0
        %2324 = vmatprep.subr.bf16.mxu0 0
        %2325 = vmatpush1.bf16.msra.mxu0 0
        %2326 = vmatprep.subr.bf16.mxu0 0
        %2327 = vmatpush1.bf16.msra.mxu0 0
        %2328 = vmatprep.subr.bf16.mxu0 0
        %2329 = vmatpush1.bf16.msra.mxu0 0
        %2330 = vmatprep.subr.bf16.mxu0 0
        %2331 = vmatpush1.bf16.msra.mxu0 0
        %2332 = vmatprep.subr.bf16.mxu0 0
        %2333 = vmatpush1.bf16.msra.mxu0 0
        %2334 = vmatprep.subr.bf16.mxu0 0
        %2335 = vmatpush1.bf16.msra.mxu0 0
        %2336 = vmatprep.subr.bf16.mxu0 0
        %2337 = vmatpush1.bf16.msra.mxu0 0
        %2338 = vmatprep.subr.bf16.mxu0 0
        %2339 = vmatpush1.bf16.msra.mxu0 0
        %2340 = vmatprep.subr.bf16.mxu0 0
        %2341 = vmatpush1.bf16.msra.mxu0 0
        %2342 = vmatprep.subr.bf16.mxu0 0
        %2343 = vmatpush1.bf16.msra.mxu0 0
        %2344 = vmatprep.subr.bf16.mxu0 0
        %2345 = vmatpush1.bf16.msra.mxu0 0
        %2346 = vmatprep.mubr.bf16.mxu0 0
        %2347 = vmatmul.mubr.bf16.gmra.mrb[0].mxu0 %v2312
        %v2348 = vpop.f32.mrb[0].mxu0
        %v2349 = vadd.f32 %v2298, %v2348
        %v2350 = vpop.f32.mrb[0].mxu0
        %v2351 = vpop.f32.mrb[0].mxu0
        %v2352 = vpop.f32.mrb[0].mxu0
        %2353 = vdwg.mxu0
        %v2354 = vmax.f32 %v2349, 0.0
        %v2355 = vpack.c.bf16 %v2354, %v2354
        %s2356 = scalar_lea.vmem %s6, 32
        %v2357 = vld [vmem:[%s2356] sm:$0xf]
        %v2358 = vld [vmem:[%s2356 + $0x4] sm:$0xf]
        %v2359 = vld [vmem:[%s2356 + $0x8] sm:$0xf]
        %v2360 = vld [vmem:[%s2356 + $0xc] sm:$0xf]
        %v2361 = vld [vmem:[%s2356 + $0x10] sm:$0xf]
        %v2362 = vld [vmem:[%s2356 + $0x14] sm:$0xf]
        %v2363 = vld [vmem:[%s2356 + $0x18] sm:$0xf]
        %v2364 = vld [vmem:[%s2356 + $0x1c] sm:$0xf]
        %v2365 = vlaneseq
        %v2366 = vshrl.u32 %v2365, 7
        %v2367 = vsub.s32 6, %v2366
        %v2368 = vrot.slane %v377, %v2367
        %v2377 = vunpack.c.l.b16 %v2357
        %v2378 = vunpack.c.l.b16 %v2358
        %v2379 = vunpack.c.l.b16 %v2359
        %v2380 = vunpack.c.l.b16 %v2360
        %v2381 = vunpack.c.l.b16 %v2361
        %v2382 = vunpack.c.l.b16 %v2362
        %v2383 = vunpack.c.l.b16 %v2363
        %v2384 = vunpack.c.l.b16 %v2364
        %v2385 = vpack.c.b16 %v2378, %v2377
        %v2386 = vpack.c.b16 %v2380, %v2379
        %v2387 = vpack.c.b16 %v2382, %v2381
        %v2388 = vpack.c.b16 %v2384, %v2383
        %v2394 = vsel %vm416, %v2355, 0
        %2396 = vmatprep.subr.bf16.mxu0 0
        %2397 = vmatpush1.bf16.msra.mxu0 %v2385
        %2398 = vmatprep.subr.bf16.mxu0 0
        %2399 = vmatpush1.bf16.msra.mxu0 %v2386
        %2400 = vmatprep.subr.bf16.mxu0 0
        %2401 = vmatpush1.bf16.msra.mxu0 %v2387
        %2402 = vmatprep.subr.bf16.mxu0 0
        %2403 = vmatpush1.bf16.msra.mxu0 %v2388
        %2404 = vmatprep.subr.bf16.mxu0 0
        %2405 = vmatpush1.bf16.msra.mxu0 0
        %2406 = vmatprep.subr.bf16.mxu0 0
        %2407 = vmatpush1.bf16.msra.mxu0 0
        %2408 = vmatprep.subr.bf16.mxu0 0
        %2409 = vmatpush1.bf16.msra.mxu0 0
        %2410 = vmatprep.subr.bf16.mxu0 0
        %2411 = vmatpush1.bf16.msra.mxu0 0
        %2412 = vmatprep.subr.bf16.mxu0 0
        %2413 = vmatpush1.bf16.msra.mxu0 0
        %2414 = vmatprep.subr.bf16.mxu0 0
        %2415 = vmatpush1.bf16.msra.mxu0 0
        %2416 = vmatprep.subr.bf16.mxu0 0
        %2417 = vmatpush1.bf16.msra.mxu0 0
        %2418 = vmatprep.subr.bf16.mxu0 0
        %2419 = vmatpush1.bf16.msra.mxu0 0
        %2420 = vmatprep.subr.bf16.mxu0 0
        %2421 = vmatpush1.bf16.msra.mxu0 0
        %2422 = vmatprep.subr.bf16.mxu0 0
        %2423 = vmatpush1.bf16.msra.mxu0 0
        %2424 = vmatprep.subr.bf16.mxu0 0
        %2425 = vmatpush1.bf16.msra.mxu0 0
        %2426 = vmatprep.subr.bf16.mxu0 0
        %2427 = vmatpush1.bf16.msra.mxu0 0
        %2428 = vmatprep.mubr.bf16.mxu0 0
        %2429 = vmatmul.mubr.bf16.gmra.mrb[0].mxu0 %v2394
        %v2430 = vpop.f32.mrb[0].mxu0
        %v2431 = vadd.f32 %v2368, %v2430
        %v2432 = vpop.f32.mrb[0].mxu0
        %v2433 = vpop.f32.mrb[0].mxu0
        %v2434 = vpop.f32.mrb[0].mxu0
        %2435 = vdwg.mxu0
        %v2436 = vadd.f32 %v2288, %v2431
        %v2437 = vsel %vm482, %v2436, 0.0
        %2438 = vadd.xlane.f32.xlu0 %v2437
        %v2439 = vpop.xlane.xlu0 %2438
        %v2440 = vmul.f32 %v2439, %v1271
        %v2441 = vsub.f32 %v2436, %v2440
        %v2442 = vmul.f32 %v2441, %v2441
        %v2443 = vsel %vm482, %v2442, 0.0
        %2444 = vadd.xlane.f32.xlu0 %v2443
        %v2445 = vpop.xlane.xlu0 %2444
        %v2446 = vmul.f32 %v2445, %v1271
        %v2447 = vadd.f32 %v2446, 1e-05
        %v2448 = vrsqrt.pop %v2447
        %v2449 = vmul.f32 %v2441, %v2448
        %v2450 = vlaneseq
        %v2451 = vshrl.u32 %v2450, 7
        %v2452 = vsub.s32 7, %v2451
        %v2453 = vrot.slane %v377, %v2452
        %v2454 = vmul.f32 %v2449, %v2453
        %v2455 = vlaneseq
        %v2456 = vshrl.u32 %v2455, 7
        %v2457 = vsub.s32 0, %v2456
        %v2458 = vrot.slane %v378, %v2457
        %v2459 = vadd.f32 %v2454, %v2458
        %v2460 = vpack.c.bf16 %v2459, %v2459
        %v2461 = vld [vmem:[%s7] sm:$0xf]
        %v2462 = vld [vmem:[%s7 + $0x4] sm:$0xf]
        %v2463 = vld [vmem:[%s7 + $0x8] sm:$0xf]
        %v2464 = vld [vmem:[%s7 + $0xc] sm:$0xf]
        %v2465 = vlaneseq
        %v2466 = vshrl.u32 %v2465, 7
        %v2467 = vsub.s32 1, %v2466
        %v2468 = vrot.slane %v378, %v2467
        %v2473 = vunpack.c.l.b16 %v2461
        %v2474 = vunpack.c.l.b16 %v2462
        %v2475 = vunpack.c.l.b16 %v2463
        %v2476 = vunpack.c.l.b16 %v2464
        %v2477 = vpack.c.b16 %v2474, %v2473
        %v2478 = vpack.c.b16 %v2476, %v2475
        %v2482 = vsel %vm482, %v2460, 0
        %2484 = vmatprep.subr.bf16.mxu0 0
        %2485 = vmatpush1.bf16.msra.mxu0 %v2477
        %2486 = vmatprep.subr.bf16.mxu0 0
        %2487 = vmatpush1.bf16.msra.mxu0 %v2478
        %2488 = vmatprep.subr.bf16.mxu0 0
        %2489 = vmatpush1.bf16.msra.mxu0 0
        %2490 = vmatprep.subr.bf16.mxu0 0
        %2491 = vmatpush1.bf16.msra.mxu0 0
        %2492 = vmatprep.subr.bf16.mxu0 0
        %2493 = vmatpush1.bf16.msra.mxu0 0
        %2494 = vmatprep.subr.bf16.mxu0 0
        %2495 = vmatpush1.bf16.msra.mxu0 0
        %2496 = vmatprep.subr.bf16.mxu0 0
        %2497 = vmatpush1.bf16.msra.mxu0 0
        %2498 = vmatprep.subr.bf16.mxu0 0
        %2499 = vmatpush1.bf16.msra.mxu0 0
        %2500 = vmatprep.subr.bf16.mxu0 0
        %2501 = vmatpush1.bf16.msra.mxu0 0
        %2502 = vmatprep.subr.bf16.mxu0 0
        %2503 = vmatpush1.bf16.msra.mxu0 0
        %2504 = vmatprep.subr.bf16.mxu0 0
        %2505 = vmatpush1.bf16.msra.mxu0 0
        %2506 = vmatprep.subr.bf16.mxu0 0
        %2507 = vmatpush1.bf16.msra.mxu0 0
        %2508 = vmatprep.subr.bf16.mxu0 0
        %2509 = vmatpush1.bf16.msra.mxu0 0
        %2510 = vmatprep.subr.bf16.mxu0 0
        %2511 = vmatpush1.bf16.msra.mxu0 0
        %2512 = vmatprep.subr.bf16.mxu0 0
        %2513 = vmatpush1.bf16.msra.mxu0 0
        %2514 = vmatprep.subr.bf16.mxu0 0
        %2515 = vmatpush1.bf16.msra.mxu0 0
        %2516 = vmatprep.mubr.bf16.mxu0 0
        %2517 = vmatmul.mubr.bf16.gmra.mrb[0].mxu0 %v2482
        %v2518 = vpop.f32.mrb[0].mxu0
        %v2519 = vadd.f32 %v2468, %v2518
        %v2520 = vpop.f32.mrb[0].mxu0
        %v2521 = vpop.f32.mrb[0].mxu0
        %v2522 = vpop.f32.mrb[0].mxu0
        %2523 = vdwg.mxu0
        %v2524 = vmax.f32 %v2519, 0.0
        %v2525 = vpack.c.bf16 %v2524, %v2524
        %v2526 = vld [vmem:[%s8] sm:$0xf]
        %v2527 = vld [vmem:[%s8 + $0x4] sm:$0xf]
        %v2528 = vld [vmem:[%s8 + $0x8] sm:$0xf]
        %v2529 = vld [vmem:[%s8 + $0xc] sm:$0xf]
        %v2530 = vlaneseq
        %v2531 = vshrl.u32 %v2530, 7
        %v2532 = vsub.s32 2, %v2531
        %v2533 = vrot.slane %v378, %v2532
        %v2538 = vunpack.c.l.b16 %v2526
        %v2539 = vunpack.c.l.b16 %v2527
        %v2540 = vunpack.c.l.b16 %v2528
        %v2541 = vunpack.c.l.b16 %v2529
        %v2542 = vpack.c.b16 %v2539, %v2538
        %v2543 = vpack.c.b16 %v2541, %v2540
        %v2547 = vsel %vm482, %v2525, 0
        %2549 = vmatprep.subr.bf16.mxu0 0
        %2550 = vmatpush1.bf16.msra.mxu0 %v2542
        %2551 = vmatprep.subr.bf16.mxu0 0
        %2552 = vmatpush1.bf16.msra.mxu0 %v2543
        %2553 = vmatprep.subr.bf16.mxu0 0
        %2554 = vmatpush1.bf16.msra.mxu0 0
        %2555 = vmatprep.subr.bf16.mxu0 0
        %2556 = vmatpush1.bf16.msra.mxu0 0
        %2557 = vmatprep.subr.bf16.mxu0 0
        %2558 = vmatpush1.bf16.msra.mxu0 0
        %2559 = vmatprep.subr.bf16.mxu0 0
        %2560 = vmatpush1.bf16.msra.mxu0 0
        %2561 = vmatprep.subr.bf16.mxu0 0
        %2562 = vmatpush1.bf16.msra.mxu0 0
        %2563 = vmatprep.subr.bf16.mxu0 0
        %2564 = vmatpush1.bf16.msra.mxu0 0
        %2565 = vmatprep.subr.bf16.mxu0 0
        %2566 = vmatpush1.bf16.msra.mxu0 0
        %2567 = vmatprep.subr.bf16.mxu0 0
        %2568 = vmatpush1.bf16.msra.mxu0 0
        %2569 = vmatprep.subr.bf16.mxu0 0
        %2570 = vmatpush1.bf16.msra.mxu0 0
        %2571 = vmatprep.subr.bf16.mxu0 0
        %2572 = vmatpush1.bf16.msra.mxu0 0
        %2573 = vmatprep.subr.bf16.mxu0 0
        %2574 = vmatpush1.bf16.msra.mxu0 0
        %2575 = vmatprep.subr.bf16.mxu0 0
        %2576 = vmatpush1.bf16.msra.mxu0 0
        %2577 = vmatprep.subr.bf16.mxu0 0
        %2578 = vmatpush1.bf16.msra.mxu0 0
        %2579 = vmatprep.subr.bf16.mxu0 0
        %2580 = vmatpush1.bf16.msra.mxu0 0
        %2581 = vmatprep.mubr.bf16.mxu0 0
        %2582 = vmatmul.mubr.bf16.gmra.mrb[0].mxu0 %v2547
        %v2583 = vpop.f32.mrb[0].mxu0
        %v2584 = vadd.f32 %v2533, %v2583
        %v2585 = vpop.f32.mrb[0].mxu0
        %v2586 = vpop.f32.mrb[0].mxu0
        %v2587 = vpop.f32.mrb[0].mxu0
        %2588 = vdwg.mxu0
        %v2589 = vmax.f32 %v2584, 0.0
        %v2590 = vpack.c.bf16 %v2589, %v2589
        %v2591 = vld [vmem:[%s9] sm:$0xf]
        %v2592 = vld [vmem:[%s9 + $0x4] sm:$0xf]
        %v2593 = vlaneseq
        %v2594 = vshrl.u32 %v2593, 7
        %v2595 = vsub.s32 3, %v2594
        %v2596 = vrot.slane %v378, %v2595
        %v2599 = vunpack.c.l.b16 %v2591
        %v2600 = vunpack.c.l.b16 %v2592
        %v2601 = vpack.c.b16 %v2600, %v2599
        %v2604 = vsel %vm1199, %v2590, 0
        %2606 = vmatprep.subr.bf16.mxu0 0
        %2607 = vmatpush1.bf16.msra.mxu0 %v2601
        %2608 = vmatprep.subr.bf16.mxu0 0
        %2609 = vmatpush1.bf16.msra.mxu0 0
        %2610 = vmatprep.subr.bf16.mxu0 0
        %2611 = vmatpush1.bf16.msra.mxu0 0
        %2612 = vmatprep.subr.bf16.mxu0 0
        %2613 = vmatpush1.bf16.msra.mxu0 0
        %2614 = vmatprep.subr.bf16.mxu0 0
        %2615 = vmatpush1.bf16.msra.mxu0 0
        %2616 = vmatprep.subr.bf16.mxu0 0
        %2617 = vmatpush1.bf16.msra.mxu0 0
        %2618 = vmatprep.subr.bf16.mxu0 0
        %2619 = vmatpush1.bf16.msra.mxu0 0
        %2620 = vmatprep.subr.bf16.mxu0 0
        %2621 = vmatpush1.bf16.msra.mxu0 0
        %2622 = vmatprep.subr.bf16.mxu0 0
        %2623 = vmatpush1.bf16.msra.mxu0 0
        %2624 = vmatprep.subr.bf16.mxu0 0
        %2625 = vmatpush1.bf16.msra.mxu0 0
        %2626 = vmatprep.subr.bf16.mxu0 0
        %2627 = vmatpush1.bf16.msra.mxu0 0
        %2628 = vmatprep.subr.bf16.mxu0 0
        %2629 = vmatpush1.bf16.msra.mxu0 0
        %2630 = vmatprep.subr.bf16.mxu0 0
        %2631 = vmatpush1.bf16.msra.mxu0 0
        %2632 = vmatprep.subr.bf16.mxu0 0
        %2633 = vmatpush1.bf16.msra.mxu0 0
        %2634 = vmatprep.subr.bf16.mxu0 0
        %2635 = vmatpush1.bf16.msra.mxu0 0
        %2636 = vmatprep.subr.bf16.mxu0 0
        %2637 = vmatpush1.bf16.msra.mxu0 0
        %2638 = vmatprep.mubr.bf16.mxu0 0
        %2639 = vmatmul.mubr.bf16.gmra.mrb[0].mxu0 %v2604
        %v2640 = vpop.f32.mrb[0].mxu0
        %v2641 = vadd.f32 %v2596, %v2640
        %v2642 = vpop.f32.mrb[0].mxu0
        %v2643 = vpop.f32.mrb[0].mxu0
        %v2644 = vpop.f32.mrb[0].mxu0
        %2645 = vdwg.mxu0
        %2646 = vst [vmem:[%s374] sm:$0xff] %v2641
        %s2647 = sand.u32 %s250, 1
        %s2648 = scalar_lea.sflag [#allocation4], %s2647
        %s2649 = sand.u32 %s250, 1
        %s2650 = smul.addr %s2649, 8
        %s2651 = scalar_lea.vmem [#allocation5], %s2650
        // Predicated region
        $region65: #{tpu_custom_call.1} parent=59 // pred_check
          %p2652 = pneg %p260
        $region66: #{tpu_custom_call.1} parent=59 // pred_check_branch
          %2654 = sbr.rel (%p2652) target = $region68
        $region67: #{tpu_custom_call.1} parent=59 // pred_region
          %s2656 = ssub.s32 128, 128
          %2657 = vsyncadd %s2648, %s2656
          %s2658 = smul.addr %s27, 128
          %s2659 = scalar_lea.hbm %s10, %s2658
          %s2661 = sshll.u32 %s2651, 4
          %s2662 = int_to_ptr.vmem [resolvable:$true] %s2661
          %2664 = dma.vmem_to_hbm [thread:$0]  %s2662, 128, %s2659, %s2648
        $region68: #{tpu_custom_call.1} parent=59 // pred_fallthru
          _
      $region60: #{tpu_custom_call.1} parent=5 // pred_fallthru
        _
      %p2665 = scmp.le.s32.totalorder 2, %s22
      // Predicated region
      $region69: #{tpu_custom_call.1} parent=5 // pred_check
        %p2666 = pneg %p2665
      $region70: #{tpu_custom_call.1} parent=5 // pred_check_branch
        %2668 = sbr.rel (%p2666) target = $region72
      $region71: #{tpu_custom_call.1} parent=5 // pred_region
        %s2669 = ssub.s32 %s22, 2
        // Predicated region
        $region73: #{tpu_custom_call.1} parent=71 // pred_check
          %p2670 = pneg %p266
        $region74: #{tpu_custom_call.1} parent=71 // pred_check_branch
          %2672 = sbr.rel (%p2670) target = $region76
        $region75: #{tpu_custom_call.1} parent=71 // pred_region
          %s2673 = sand.u32 %s251, 1
          %s2674 = scalar_lea.sflag [#allocation4], %s2673
          %s2675 = sand.u32 %s251, 1
          %s2676 = smul.addr %s2675, 8
          %s2677 = scalar_lea.vmem [#allocation5], %s2676
          %2678 = dma.done %s2674, 128
        $region76: #{tpu_custom_call.1} parent=71 // pred_fallthru
          _
      $region72: #{tpu_custom_call.1} parent=5 // pred_fallthru
        _
    $region6: #{tpu_custom_call.1} parent=1 // loop_footer
      %s26 = sadd.s32 1, %s22
    $region7: #{tpu_custom_call.1} parent=1 // loop_footer_branch
      %21 = sbr.rel target = $region3
    $region8: #{tpu_custom_call.1} parent=1 // loop_exit
      _
    %2679 = vsyncpa [#allocation3], 1
    %s2680 = scalar_lea.sflag [#allocation3], 1
    %2681 = vsyncpa %s2680, 1
    %2682 = vsyncpa [#allocation4], 1
    %s2683 = scalar_lea.sflag [#allocation4], 1
    %2684 = vsyncpa %s2683, 1

// kernel: tpu_custom_call.1
$region0: #{tpu_custom_call.1}
  #allocation0 [shape = 'u32[]', space=smem, size = 0x4, offset = 0x4, fixed_abs, tag = 'smem constant byte address 0x4 - core index']
  #allocation1 [shape = 'u32[144,128]{1,0:T(1,128)}', space=vmem, size = 0x12000, scoped, tag = 'internal scratch']
  %s0 = inlined_call_operand.hbm [shape: bf16[2,8,64], index: 0, kind: input, shape index: {}]
  %s1 = inlined_call_operand.vmem [shape: f32[20,128], index: 1, kind: input, shape index: {}]
  %s2 = inlined_call_operand.vmem [shape: bf16[64,32], index: 2, kind: input, shape index: {}]
  %s3 = inlined_call_operand.vmem [shape: bf16[2,32,96], index: 3, kind: input, shape index: {}]
  %s4 = inlined_call_operand.vmem [shape: bf16[2,32,32], index: 4, kind: input, shape index: {}]
  %s5 = inlined_call_operand.vmem [shape: bf16[2,32,64], index: 5, kind: input, shape index: {}]
  %s6 = inlined_call_operand.vmem [shape: bf16[2,64,32], index: 6, kind: input, shape index: {}]
  %s7 = inlined_call_operand.vmem [shape: bf16[32,32], index: 7, kind: input, shape index: {}]
  %s8 = inlined_call_operand.vmem [shape: bf16[32,16], index: 8, kind: input, shape index: {}]
  %s9 = inlined_call_operand.vmem [shape: bf16[16,128], index: 9, kind: input, shape index: {}]
  %s10 = inlined_call_operand.hbm [shape: f32[2,8,128], index: 10, kind: output, shape index: {}]
  %s11 = sld [smem:[#allocation0]]
  $region77: #{tpu_custom_call.1} parent=0
    _
  %s13 = ssub.s32 1, %s11
  %s14 = scalar_select 0, %s13, %s11
  $region1: #{tpu_custom_call.1} parent=0
    #allocation2 [shape = 'u8[4096]{0}', space=vmem, size = 0x1000, scoped, tag = 'input window, operand 0']
    #allocation3 [shape = 's32[2]{0}', space=sflag, size = 0x8, scoped, tag = 'scoped memory for tpu_custom_call.1']
    #allocation4 [shape = 's32[2]{0}', space=sflag, size = 0x8, scoped, tag = 'scoped memory for tpu_custom_call.1']
    #allocation5 [shape = 'u8[8192]{0}', space=vmem, size = 0x2000, scoped, tag = 'output window, operand 0']
    %15 = vsyncpa [#allocation3], 0
    %s16 = scalar_lea.sflag [#allocation3], 1
    %17 = vsyncpa %s16, 0
    %18 = vsyncpa [#allocation4], 0
    %s19 = scalar_lea.sflag [#allocation4], 1
    %20 = vsyncpa %s19, 0
    loop: start=0, step=1, limit=4
    $region2: #{tpu_custom_call.1} parent=1 // loop_pre_header
      _
    $region3: #{tpu_custom_call.1} parent=1 // loop_header
      %s22 = sphi 0, %s26
      %p23 = scmp.ge.s32.totalorder %s22, 4
      %s32 = sphi 0, %s34
      %s35 = sphi 0, %s32
      %s36 = sphi 0, %s35
      %s52 = sphi 0, %s36
      %s56 = sphi 0, %s56
      %s58 = sphi 0, %s56
      %s59 = sphi 0, %s58
      %s73 = sphi 0, %s59
      %s77 = sphi 0, %s77
      %s79 = sphi 0, %s77
      %s80 = sphi 0, %s79
      %s94 = sphi 0, %s80
      %s98 = sphi 0, %s98
      %s100 = sphi 0, %s98
      %s101 = sphi 0, %s100
      %s115 = sphi 0, %s101
      %s119 = sphi 0, %s119
      %s121 = sphi 0, %s119
      %s122 = sphi 0, %s121
      %s136 = sphi 0, %s122
      %s140 = sphi 0, %s140
      %s142 = sphi 0, %s140
      %s143 = sphi 0, %s142
      %s157 = sphi 0, %s143
      %s161 = sphi 0, %s161
      %s163 = sphi 0, %s161
      %s164 = sphi 0, %s163
      %s178 = sphi 0, %s164
      %s182 = sphi 0, %s182
      %s184 = sphi 0, %s182
      %s185 = sphi 0, %s184
      %s199 = sphi 0, %s185
      %s203 = sphi 0, %s203
      %s205 = sphi 0, %s203
      %s206 = sphi 0, %s205
      %s220 = sphi 0, %s206
      %s224 = sphi 0, %s224
      %s226 = sphi 0, %s224
      %s227 = sphi 0, %s226
      %s241 = sphi 0, %s227
      %s247 = sphi 0, %s249
      %s250 = sphi 0, %s247
      %s251 = sphi 0, %s250
      %s267 = sphi 0, %s251
    $region4: #{tpu_custom_call.1} parent=1 // loop_header_branch
      %25 = sbr.rel (%p23) target = $region8
    $region5: #{tpu_custom_call.1} parent=1 // loop_body
      %s27 = ssub.s32 %s22, 1
      %s28 = ssub.s32 %s22, 2
      %s29 = sadd.s32 %s22, 1
      %s30 = ssub.s32 %s22, %s29
      %p31 = scmp.eq.s32.totalorder %s30, 0
      %s33 = sadd.s32 %s32, 1
      %s34 = scalar_select %p31, %s32, %s33
      %p37 = pneg %p31
      %p38 = scmp.eq.s32.totalorder %s22, 1
      %p39 = por %p37, %p38
      %p40 = scmp.ne.s32.totalorder %s32, %s35
      %p41 = scmp.eq.s32.totalorder %s22, 0
      %p42 = por %p40, %p41
      %p43 = scmp.ne.s32.totalorder %s32, %s35
      %p44 = scmp.eq.s32.totalorder %s27, 1
      %p45 = por %p43, %p44
      %p46 = scmp.ne.s32.totalorder %s35, %s36
      %p47 = scmp.eq.s32.totalorder %s27, 0
      %p48 = por %p46, %p47
      %p49 = scmp.ne.s32.totalorder %s35, %s36
      %p50 = scmp.eq.s32.totalorder %s28, 1
      %p51 = por %p49, %p50
      %p53 = scmp.ne.s32.totalorder %s36, %s52
      %p54 = scmp.eq.s32.totalorder %s28, 0
      %p55 = por %p53, %p54
      %s57 = sadd.s32 %s56, 1
      %p60 = scmp.eq.s32.totalorder %s22, 1
      %p61 = scmp.ne.s32.totalorder %s56, %s58
      %p62 = scmp.eq.s32.totalorder %s22, 0
      %p63 = por %p61, %p62
      %p64 = scmp.ne.s32.totalorder %s56, %s58
      %p65 = scmp.eq.s32.totalorder %s27, 1
      %p66 = por %p64, %p65
      %p67 = scmp.ne.s32.totalorder %s58, %s59
      %p68 = scmp.eq.s32.totalorder %s27, 0
      %p69 = por %p67, %p68
      %p70 = scmp.ne.s32.totalorder %s58, %s59
      %p71 = scmp.eq.s32.totalorder %s28, 1
      %p72 = por %p70, %p71
      %p74 = scmp.ne.s32.totalorder %s59, %s73
      %p75 = scmp.eq.s32.totalorder %s28, 0
      %p76 = por %p74, %p75
      %s78 = sadd.s32 %s77, 1
      %p81 = scmp.eq.s32.totalorder %s22, 1
      %p82 = scmp.ne.s32.totalorder %s77, %s79
      %p83 = scmp.eq.s32.totalorder %s22, 0
      %p84 = por %p82, %p83
      %p85 = scmp.ne.s32.totalorder %s77, %s79
      %p86 = scmp.eq.s32.totalorder %s27, 1
      %p87 = por %p85, %p86
      %p88 = scmp.ne.s32.totalorder %s79, %s80
      %p89 = scmp.eq.s32.totalorder %s27, 0
      %p90 = por %p88, %p89
      %p91 = scmp.ne.s32.totalorder %s79, %s80
      %p92 = scmp.eq.s32.totalorder %s28, 1
      %p93 = por %p91, %p92
      %p95 = scmp.ne.s32.totalorder %s80, %s94
      %p96 = scmp.eq.s32.totalorder %s28, 0
      %p97 = por %p95, %p96
      %s99 = sadd.s32 %s98, 1
      %p102 = scmp.eq.s32.totalorder %s22, 1
      %p103 = scmp.ne.s32.totalorder %s98, %s100
      %p104 = scmp.eq.s32.totalorder %s22, 0
      %p105 = por %p103, %p104
      %p106 = scmp.ne.s32.totalorder %s98, %s100
      %p107 = scmp.eq.s32.totalorder %s27, 1
      %p108 = por %p106, %p107
      %p109 = scmp.ne.s32.totalorder %s100, %s101
      %p110 = scmp.eq.s32.totalorder %s27, 0
      %p111 = por %p109, %p110
      %p112 = scmp.ne.s32.totalorder %s100, %s101
      %p113 = scmp.eq.s32.totalorder %s28, 1
      %p114 = por %p112, %p113
      %p116 = scmp.ne.s32.totalorder %s101, %s115
      %p117 = scmp.eq.s32.totalorder %s28, 0
      %p118 = por %p116, %p117
      %s120 = sadd.s32 %s119, 1
      %p123 = scmp.eq.s32.totalorder %s22, 1
      %p124 = scmp.ne.s32.totalorder %s119, %s121
      %p125 = scmp.eq.s32.totalorder %s22, 0
      %p126 = por %p124, %p125
      %p127 = scmp.ne.s32.totalorder %s119, %s121
      %p128 = scmp.eq.s32.totalorder %s27, 1
      %p129 = por %p127, %p128
      %p130 = scmp.ne.s32.totalorder %s121, %s122
      %p131 = scmp.eq.s32.totalorder %s27, 0
      %p132 = por %p130, %p131
      %p133 = scmp.ne.s32.totalorder %s121, %s122
      %p134 = scmp.eq.s32.totalorder %s28, 1
      %p135 = por %p133, %p134
      %p137 = scmp.ne.s32.totalorder %s122, %s136
      %p138 = scmp.eq.s32.totalorder %s28, 0
      %p139 = por %p137, %p138
      %s141 = sadd.s32 %s140, 1
      %p144 = scmp.eq.s32.totalorder %s22, 1
      %p145 = scmp.ne.s32.totalorder %s140, %s142
      %p146 = scmp.eq.s32.totalorder %s22, 0
      %p147 = por %p145, %p146
      %p148 = scmp.ne.s32.totalorder %s140, %s142
      %p149 = scmp.eq.s32.totalorder %s27, 1
      %p150 = por %p148, %p149
      %p151 = scmp.ne.s32.totalorder %s142, %s143
      %p152 = scmp.eq.s32.totalorder %s27, 0
      %p153 = por %p151, %p152
      %p154 = scmp.ne.s32.totalorder %s142, %s143
      %p155 = scmp.eq.s32.totalorder %s28, 1
      %p156 = por %p154, %p155
      %p158 = scmp.ne.s32.totalorder %s143, %s157
      %p159 = scmp.eq.s32.totalorder %s28, 0
      %p160 = por %p158, %p159
      %s162 = sadd.s32 %s161, 1
      %p165 = scmp.eq.s32.totalorder %s22, 1
      %p166 = scmp.ne.s32.totalorder %s161, %s163
      %p167 = scmp.eq.s32.totalorder %s22, 0
      %p168 = por %p166, %p167
      %p169 = scmp.ne.s32.totalorder %s161, %s163
      %p170 = scmp.eq.s32.totalorder %s27, 1
      %p171 = por %p169, %p170
      %p172 = scmp.ne.s32.totalorder %s163, %s164
      %p173 = scmp.eq.s32.totalorder %s27, 0
      %p174 = por %p172, %p173
      %p175 = scmp.ne.s32.totalorder %s163, %s164
      %p176 = scmp.eq.s32.totalorder %s28, 1
      %p177 = por %p175, %p176
      %p179 = scmp.ne.s32.totalorder %s164, %s178
      %p180 = scmp.eq.s32.totalorder %s28, 0
      %p181 = por %p179, %p180
      %s183 = sadd.s32 %s182, 1
      %p186 = scmp.eq.s32.totalorder %s22, 1
      %p187 = scmp.ne.s32.totalorder %s182, %s184
      %p188 = scmp.eq.s32.totalorder %s22, 0
      %p189 = por %p187, %p188
      %p190 = scmp.ne.s32.totalorder %s182, %s184
      %p191 = scmp.eq.s32.totalorder %s27, 1
      %p192 = por %p190, %p191
      %p193 = scmp.ne.s32.totalorder %s184, %s185
      %p194 = scmp.eq.s32.totalorder %s27, 0
      %p195 = por %p193, %p194
      %p196 = scmp.ne.s32.totalorder %s184, %s185
      %p197 = scmp.eq.s32.totalorder %s28, 1
      %p198 = por %p196, %p197
      %p200 = scmp.ne.s32.totalorder %s185, %s199
      %p201 = scmp.eq.s32.totalorder %s28, 0
      %p202 = por %p200, %p201
      %s204 = sadd.s32 %s203, 1
      %p207 = scmp.eq.s32.totalorder %s22, 1
      %p208 = scmp.ne.s32.totalorder %s203, %s205
      %p209 = scmp.eq.s32.totalorder %s22, 0
      %p210 = por %p208, %p209
      %p211 = scmp.ne.s32.totalorder %s203, %s205
      %p212 = scmp.eq.s32.totalorder %s27, 1
      %p213 = por %p211, %p212
      %p214 = scmp.ne.s32.totalorder %s205, %s206
      %p215 = scmp.eq.s32.totalorder %s27, 0
      %p216 = por %p214, %p215
      %p217 = scmp.ne.s32.totalorder %s205, %s206
      %p218 = scmp.eq.s32.totalorder %s28, 1
      %p219 = por %p217, %p218
      %p221 = scmp.ne.s32.totalorder %s206, %s220
      %p222 = scmp.eq.s32.totalorder %s28, 0
      %p223 = por %p221, %p222
      %s225 = sadd.s32 %s224, 1
      %p228 = scmp.eq.s32.totalorder %s22, 1
      %p229 = scmp.ne.s32.totalorder %s224, %s226
      %p230 = scmp.eq.s32.totalorder %s22, 0
      %p231 = por %p229, %p230
      %p232 = scmp.ne.s32.totalorder %s224, %s226
      %p233 = scmp.eq.s32.totalorder %s27, 1
      %p234 = por %p232, %p233
      %p235 = scmp.ne.s32.totalorder %s226, %s227
      %p236 = scmp.eq.s32.totalorder %s27, 0
      %p237 = por %p235, %p236
      %p238 = scmp.ne.s32.totalorder %s226, %s227
      %p239 = scmp.eq.s32.totalorder %s28, 1
      %p240 = por %p238, %p239
      %p242 = scmp.ne.s32.totalorder %s227, %s241
      %p243 = scmp.eq.s32.totalorder %s28, 0
      %p244 = por %p242, %p243
      %s245 = ssub.s32 %s22, %s29
      %p246 = scmp.eq.s32.totalorder %s245, 0
      %s248 = sadd.s32 %s247, 1
      %s249 = scalar_select %p246, %s247, %s248
      %p252 = pneg %p246
      %p253 = scmp.eq.s32.totalorder %s22, 1
      %p254 = por %p252, %p253
      %p255 = scmp.ne.s32.totalorder %s247, %s250
      %p256 = scmp.eq.s32.totalorder %s22, 0
      %p257 = por %p255, %p256
      %p258 = scmp.ne.s32.totalorder %s247, %s250
      %p259 = scmp.eq.s32.totalorder %s27, 1
      %p260 = por %p258, %p259
      %p261 = scmp.ne.s32.totalorder %s250, %s251
      %p262 = scmp.eq.s32.totalorder %s27, 0
      %p263 = por %p261, %p262
      %p264 = scmp.ne.s32.totalorder %s250, %s251
      %p265 = scmp.eq.s32.totalorder %s28, 1
      %p266 = por %p264, %p265
      %p268 = scmp.ne.s32.totalorder %s251, %s267
      %p269 = scmp.eq.s32.totalorder %s28, 0
      %p270 = por %p268, %p269
      %p271 = scmp.le.s32.totalorder 1, %s22
      %p272 = scmp.lt.s32.totalorder %s22, 3
      %p273 = pnand %p271, %p272
      %p274 = pneg %p273
      // Predicated region
      $region9: #{tpu_custom_call.1} parent=5 // pred_check
        _
      $region10: #{tpu_custom_call.1} parent=5 // pred_check_branch
        %276 = sbr.rel (%p273) target = $region12
      $region11: #{tpu_custom_call.1} parent=5 // pred_region
        %s277 = ssub.s32 %s22, 1
        // Predicated region
        $region13: #{tpu_custom_call.1} parent=11 // pred_check
          %p278 = pneg %p69
        $region14: #{tpu_custom_call.1} parent=11 // pred_check_branch
          %280 = sbr.rel (%p278) target = $region16
        $region15: #{tpu_custom_call.1} parent=11 // pred_region
          _
        $region16: #{tpu_custom_call.1} parent=11 // pred_fallthru
          _
        // Predicated region
        $region17: #{tpu_custom_call.1} parent=11 // pred_check
          %p281 = pneg %p90
        $region18: #{tpu_custom_call.1} parent=11 // pred_check_branch
          %283 = sbr.rel (%p281) target = $region20
        $region19: #{tpu_custom_call.1} parent=11 // pred_region
          _
        $region20: #{tpu_custom_call.1} parent=11 // pred_fallthru
          _
        // Predicated region
        $region21: #{tpu_custom_call.1} parent=11 // pred_check
          %p284 = pneg %p111
        $region22: #{tpu_custom_call.1} parent=11 // pred_check_branch
          %286 = sbr.rel (%p284) target = $region24
        $region23: #{tpu_custom_call.1} parent=11 // pred_region
          _
        $region24: #{tpu_custom_call.1} parent=11 // pred_fallthru
          _
        // Predicated region
        $region25: #{tpu_custom_call.1} parent=11 // pred_check
          %p287 = pneg %p132
        $region26: #{tpu_custom_call.1} parent=11 // pred_check_branch
          %289 = sbr.rel (%p287) target = $region28
        $region27: #{tpu_custom_call.1} parent=11 // pred_region
          _
        $region28: #{tpu_custom_call.1} parent=11 // pred_fallthru
          _
        // Predicated region
        $region29: #{tpu_custom_call.1} parent=11 // pred_check
          %p290 = pneg %p153
        $region30: #{tpu_custom_call.1} parent=11 // pred_check_branch
          %292 = sbr.rel (%p290) target = $region32
        $region31: #{tpu_custom_call.1} parent=11 // pred_region
          _
        $region32: #{tpu_custom_call.1} parent=11 // pred_fallthru
          _
        // Predicated region
        $region33: #{tpu_custom_call.1} parent=11 // pred_check
          %p293 = pneg %p174
        $region34: #{tpu_custom_call.1} parent=11 // pred_check_branch
          %295 = sbr.rel (%p293) target = $region36
        $region35: #{tpu_custom_call.1} parent=11 // pred_region
          _
        $region36: #{tpu_custom_call.1} parent=11 // pred_fallthru
          _
        // Predicated region
        $region37: #{tpu_custom_call.1} parent=11 // pred_check
          %p296 = pneg %p195
        $region38: #{tpu_custom_call.1} parent=11 // pred_check_branch
          %298 = sbr.rel (%p296) target = $region40
        $region39: #{tpu_custom_call.1} parent=11 // pred_region
          _
        $region40: #{tpu_custom_call.1} parent=11 // pred_fallthru
          _
        // Predicated region
        $region41: #{tpu_custom_call.1} parent=11 // pred_check
          %p299 = pneg %p216
        $region42: #{tpu_custom_call.1} parent=11 // pred_check_branch
          %301 = sbr.rel (%p299) target = $region44
        $region43: #{tpu_custom_call.1} parent=11 // pred_region
          _
        $region44: #{tpu_custom_call.1} parent=11 // pred_fallthru
          _
        // Predicated region
        $region45: #{tpu_custom_call.1} parent=11 // pred_check
          %p302 = pneg %p237
        $region46: #{tpu_custom_call.1} parent=11 // pred_check_branch
          %304 = sbr.rel (%p302) target = $region48
        $region47: #{tpu_custom_call.1} parent=11 // pred_region
          _
        $region48: #{tpu_custom_call.1} parent=11 // pred_fallthru
          _
      $region12: #{tpu_custom_call.1} parent=5 // pred_fallthru
        _
      %p305 = scmp.lt.s32.totalorder %s22, 2
      // Predicated region
      $region49: #{tpu_custom_call.1} parent=5 // pred_check
        %p306 = pneg %p305
      $region50: #{tpu_custom_call.1} parent=5 // pred_check_branch
        %308 = sbr.rel (%p306) target = $region52
      $region51: #{tpu_custom_call.1} parent=5 // pred_region
        // Predicated region
        $region53: #{tpu_custom_call.1} parent=51 // pred_check
          %p309 = pneg %p42
        $region54: #{tpu_custom_call.1} parent=51 // pred_check_branch
          %311 = sbr.rel (%p309) target = $region56
        $region55: #{tpu_custom_call.1} parent=51 // pred_region
          %s312 = sand.u32 %s32, 1
          %s313 = scalar_lea.sflag [#allocation3], %s312
          %s314 = sand.u32 %s32, 1
          %s315 = smul.addr %s314, 4
          %s316 = scalar_lea.vmem [#allocation2], %s315
          %s318 = ssub.s32 64, 64
          %319 = vsyncadd %s313, %s318
          %s320 = smul.addr %s22, 64
          %s321 = scalar_lea.hbm %s0, %s320
          %s323 = sshll.u32 %s316, 4
          %s324 = int_to_ptr.vmem [resolvable:$true] %s323
          %326 = dma.hbm_to_vmem [thread:$0]  %s321, 64, %s324, %s313
        $region56: #{tpu_custom_call.1} parent=51 // pred_fallthru
          _
      $region52: #{tpu_custom_call.1} parent=5 // pred_fallthru
        _
      %p327 = scmp.le.s32.totalorder 1, %s22
      %p328 = scmp.lt.s32.totalorder %s22, 3
      %p329 = pnand %p327, %p328
      %p330 = pneg %p329
      // Predicated region
      $region57: #{tpu_custom_call.1} parent=5 // pred_check
        _
      $region58: #{tpu_custom_call.1} parent=5 // pred_check_branch
        %332 = sbr.rel (%p329) target = $region60
      $region59: #{tpu_custom_call.1} parent=5 // pred_region
        %s333 = ssub.s32 %s22, 1
        %s334 = sand.u32 %s35, 1
        %s335 = scalar_lea.sflag [#allocation3], %s334
        %s336 = sand.u32 %s35, 1
        %s337 = smul.addr %s336, 4
        %s338 = scalar_lea.vmem [#allocation2], %s337
        // Predicated region
        $region61: #{tpu_custom_call.1} parent=59 // pred_check
          %p339 = pneg %p48
        $region62: #{tpu_custom_call.1} parent=59 // pred_check_branch
          %341 = sbr.rel (%p339) target = $region64
        $region63: #{tpu_custom_call.1} parent=59 // pred_region
          %342 = dma.done %s335, 64
        $region64: #{tpu_custom_call.1} parent=59 // pred_fallthru
          _
        %s343 = sand.u32 %s35, 1
        %s344 = scalar_lea.sflag [#allocation3], %s343
        %s345 = sand.u32 %s35, 1
        %s346 = smul.addr %s345, 4
        %s347 = scalar_lea.vmem [#allocation2], %s346
        %p348 = pneg %p48
        %p349 = pneg %p45
        %p350 = pneg %p69
        %p351 = pneg %p66
        %p352 = pneg %p90
        %p353 = pneg %p87
        %p354 = pneg %p111
        %p355 = pneg %p108
        %p356 = pneg %p132
        %p357 = pneg %p129
        %p358 = pneg %p153
        %p359 = pneg %p150
        %p360 = pneg %p174
        %p361 = pneg %p171
        %p362 = pneg %p195
        %p363 = pneg %p192
        %p364 = pneg %p216
        %p365 = pneg %p213
        %p366 = pneg %p237
        %p367 = pneg %p234
        %p368 = pneg %p263
        %p369 = pneg %p260
        %s370 = sand.u32 %s250, 1
        %s371 = scalar_lea.sflag [#allocation4], %s370
        %s372 = sand.u32 %s250, 1
        %s373 = smul.addr %s372, 8
        %s374 = scalar_lea.vmem [#allocation5], %s373
        %v376 = vld [vmem:[%s1] sm:$0xff]
        %v377 = vld [vmem:[%s1 + $0x8] sm:$0xff]
        %v378 = vld [vmem:[%s1 + $0x10] sm:$0xf]
        %v379 = vld [vmem:[%s338] sm:$0xf]
        %v380 = vld [vmem:[%s2] sm:$0xf]
        %v381 = vld [vmem:[%s2 + $0x4] sm:$0xf]
        %v382 = vld [vmem:[%s2 + $0x8] sm:$0xf]
        %v383 = vld [vmem:[%s2 + $0xc] sm:$0xf]
        %v384 = vld [vmem:[%s2 + $0x10] sm:$0xf]
        %v385 = vld [vmem:[%s2 + $0x14] sm:$0xf]
        %v386 = vld [vmem:[%s2 + $0x18] sm:$0xf]
        %v387 = vld [vmem:[%s2 + $0x1c] sm:$0xf]
        %v388 = vlaneseq
        %v389 = vshrl.u32 %v388, 7
        %v390 = vsub.s32 0, %v389
        %v391 = vrot.slane %v376, %v390
        %v400 = vunpack.c.l.b16 %v380
        %v401 = vunpack.c.l.b16 %v381
        %v402 = vunpack.c.l.b16 %v382
        %v403 = vunpack.c.l.b16 %v383
        %v404 = vunpack.c.l.b16 %v384
        %v405 = vunpack.c.l.b16 %v385
        %v406 = vunpack.c.l.b16 %v386
        %v407 = vunpack.c.l.b16 %v387
        %v408 = vpack.c.b16 %v401, %v400
        %v409 = vpack.c.b16 %v403, %v402
        %v410 = vpack.c.b16 %v405, %v404
        %v411 = vpack.c.b16 %v407, %v406
        %vm416 = vcmask 523264
        %v418 = vsel %vm416, %v379, 0
        %420 = vmatprep.subr.bf16.mxu0 0
        %421 = vmatpush1.bf16.msra.mxu0 %v408
        %422 = vmatprep.subr.bf16.mxu0 0
        %423 = vmatpush1.bf16.msra.mxu0 %v409
        %424 = vmatprep.subr.bf16.mxu0 0
        %425 = vmatpush1.bf16.msra.mxu0 %v410
        %426 = vmatprep.subr.bf16.mxu0 0
        %427 = vmatpush1.bf16.msra.mxu0 %v411
        %428 = vmatprep.subr.bf16.mxu0 0
        %429 = vmatpush1.bf16.msra.mxu0 0
        %430 = vmatprep.subr.bf16.mxu0 0
        %431 = vmatpush1.bf16.msra.mxu0 0
        %432 = vmatprep.subr.bf16.mxu0 0
        %433 = vmatpush1.bf16.msra.mxu0 0
        %434 = vmatprep.subr.bf16.mxu0 0
        %435 = vmatpush1.bf16.msra.mxu0 0
        %436 = vmatprep.subr.bf16.mxu0 0
        %437 = vmatpush1.bf16.msra.mxu0 0
        %438 = vmatprep.subr.bf16.mxu0 0
        %439 = vmatpush1.bf16.msra.mxu0 0
        %440 = vmatprep.subr.bf16.mxu0 0
        %441 = vmatpush1.bf16.msra.mxu0 0
        %442 = vmatprep.subr.bf16.mxu0 0
        %443 = vmatpush1.bf16.msra.mxu0 0
        %444 = vmatprep.subr.bf16.mxu0 0
        %445 = vmatpush1.bf16.msra.mxu0 0
        %446 = vmatprep.subr.bf16.mxu0 0
        %447 = vmatpush1.bf16.msra.mxu0 0
        %448 = vmatprep.subr.bf16.mxu0 0
        %449 = vmatpush1.bf16.msra.mxu0 0
        %450 = vmatprep.subr.bf16.mxu0 0
        %451 = vmatpush1.bf16.msra.mxu0 0
        %452 = vmatprep.mubr.bf16.mxu0 0
        %453 = vmatmul.mubr.bf16.gmra.mrb[0].mxu0 %v418
        %v454 = vpop.f32.mrb[0].mxu0
        %v455 = vadd.f32 %v391, %v454
        %v456 = vpop.f32.mrb[0].mxu0
        %v457 = vpop.f32.mrb[0].mxu0
        %v458 = vpop.f32.mrb[0].mxu0
        %459 = vdwg.mxu0
        %v460 = vmax.f32 %v455, 0.0
        %v461 = vpack.c.bf16 %v460, %v460
        %v462 = vld [vmem:[%s3] sm:$0xf]
        %v463 = vld [vmem:[%s3 + $0x4] sm:$0xf]
        %v464 = vld [vmem:[%s3 + $0x8] sm:$0xf]
        %v465 = vld [vmem:[%s3 + $0xc] sm:$0xf]
        %v466 = vlaneseq
        %v467 = vshrl.u32 %v466, 7
        %v468 = vsub.s32 1, %v467
        %v469 = vrot.slane %v376, %v468
        %v474 = vunpack.c.l.b16 %v462
        %v475 = vunpack.c.l.b16 %v463
        %v476 = vunpack.c.l.b16 %v464
        %v477 = vunpack.c.l.b16 %v465
        %v478 = vpack.c.b16 %v475, %v474
        %v479 = vpack.c.b16 %v477, %v476
        %vm482 = vcmask 261120
        %v484 = vsel %vm482, %v461, 0
        %486 = vmatprep.subr.bf16.mxu0 0
        %487 = vmatpush1.bf16.msra.mxu0 %v478
        %488 = vmatprep.subr.bf16.mxu0 0
        %489 = vmatpush1.bf16.msra.mxu0 %v479
        %490 = vmatprep.subr.bf16.mxu0 0
        %491 = vmatpush1.bf16.msra.mxu0 0
        %492 = vmatprep.subr.bf16.mxu0 0
        %493 = vmatpush1.bf16.msra.mxu0 0
        %494 = vmatprep.subr.bf16.mxu0 0
        %495 = vmatpush1.bf16.msra.mxu0 0
        %496 = vmatprep.subr.bf16.mxu0 0
        %497 = vmatpush1.bf16.msra.mxu0 0
        %498 = vmatprep.subr.bf16.mxu0 0
        %499 = vmatpush1.bf16.msra.mxu0 0
        %500 = vmatprep.subr.bf16.mxu0 0
        %501 = vmatpush1.bf16.msra.mxu0 0
        %502 = vmatprep.subr.bf16.mxu0 0
        %503 = vmatpush1.bf16.msra.mxu0 0
        %504 = vmatprep.subr.bf16.mxu0 0
        %505 = vmatpush1.bf16.msra.mxu0 0
        %506 = vmatprep.subr.bf16.mxu0 0
        %507 = vmatpush1.bf16.msra.mxu0 0
        %508 = vmatprep.subr.bf16.mxu0 0
        %509 = vmatpush1.bf16.msra.mxu0 0
        %510 = vmatprep.subr.bf16.mxu0 0
        %511 = vmatpush1.bf16.msra.mxu0 0
        %512 = vmatprep.subr.bf16.mxu0 0
        %513 = vmatpush1.bf16.msra.mxu0 0
        %514 = vmatprep.subr.bf16.mxu0 0
        %515 = vmatpush1.bf16.msra.mxu0 0
        %516 = vmatprep.subr.bf16.mxu0 0
        %517 = vmatpush1.bf16.msra.mxu0 0
        %518 = vmatprep.mubr.bf16.mxu0 0
        %519 = vmatmul.mubr.bf16.gmra.mrb[0].mxu0 %v484
        %v520 = vpop.f32.mrb[0].mxu0
        %v521 = vadd.f32 %v469, %v520
        %v522 = vpop.f32.mrb[0].mxu0
        %v523 = vpop.f32.mrb[0].mxu0
        %v524 = vpop.f32.mrb[0].mxu0
        %525 = vdwg.mxu0
        %527 = vrot.lane.b32.xlu0 %v521, 96
        %v528 = vpop.permute.xlu0 %527
        %vm529 = vcmask 64512
        %v530 = vsel %vm529, %v521, 0
        %v532 = vsel %vm529, %v528, 0
        %534 = vmatprep.subr.mxu0 0.0
        %535 = vmatpush1.xpose.msra.mxu0 %v532
        %536 = vmatprep.subr.mxu0 0.0
        %537 = vmatpush1.xpose.msra.mxu0 0.0
        %538 = vmatprep.subr.mxu0 0.0
        %539 = vmatpush1.xpose.msra.mxu0 0.0
        %540 = vmatprep.subr.mxu0 0.0
        %541 = vmatpush1.xpose.msra.mxu0 0.0
        %542 = vmatprep.subr.mxu0 0.0
        %543 = vmatpush1.xpose.msra.mxu0 0.0
        %544 = vmatprep.subr.mxu0 0.0
        %545 = vmatpush1.xpose.msra.mxu0 0.0
        %546 = vmatprep.subr.mxu0 0.0
        %547 = vmatpush1.xpose.msra.mxu0 0.0
        %548 = vmatprep.subr.mxu0 0.0
        %549 = vmatpush1.xpose.msra.mxu0 0.0
        %550 = vmatprep.subr.mxu0 0.0
        %551 = vmatpush1.xpose.msra.mxu0 0.0
        %552 = vmatprep.subr.mxu0 0.0
        %553 = vmatpush1.xpose.msra.mxu0 0.0
        %554 = vmatprep.subr.mxu0 0.0
        %555 = vmatpush1.xpose.msra.mxu0 0.0
        %556 = vmatprep.subr.mxu0 0.0
        %557 = vmatpush1.xpose.msra.mxu0 0.0
        %558 = vmatprep.subr.mxu0 0.0
        %559 = vmatpush1.xpose.msra.mxu0 0.0
        %560 = vmatprep.subr.mxu0 0.0
        %561 = vmatpush1.xpose.msra.mxu0 0.0
        %562 = vmatprep.subr.mxu0 0.0
        %563 = vmatpush1.xpose.msra.mxu0 0.0
        %564 = vmatprep.subr.mxu0 0.0
        %565 = vmatpush1.xpose.msra.mxu0 0.0
        %566 = vmatprep.subr.mxu0 0.0
        %567 = vmatpush1.xpose.msra.mxu0 0.0
        %568 = vmatprep.subr.mxu0 0.0
        %569 = vmatpush1.xpose.msra.mxu0 0.0
        %570 = vmatprep.subr.mxu0 0.0
        %571 = vmatpush1.xpose.msra.mxu0 0.0
        %572 = vmatprep.subr.mxu0 0.0
        %573 = vmatpush1.xpose.msra.mxu0 0.0
        %574 = vmatprep.subr.mxu0 0.0
        %575 = vmatpush1.xpose.msra.mxu0 0.0
        %576 = vmatprep.subr.mxu0 0.0
        %577 = vmatpush1.xpose.msra.mxu0 0.0
        %578 = vmatprep.subr.mxu0 0.0
        %579 = vmatpush1.xpose.msra.mxu0 0.0
        %580 = vmatprep.subr.mxu0 0.0
        %581 = vmatpush1.xpose.msra.mxu0 0.0
        %582 = vmatprep.subr.mxu0 0.0
        %583 = vmatpush1.xpose.msra.mxu0 0.0
        %584 = vmatprep.subr.mxu0 0.0
        %585 = vmatpush1.xpose.msra.mxu0 0.0
        %586 = vmatprep.subr.mxu0 0.0
        %587 = vmatpush1.xpose.msra.mxu0 0.0
        %588 = vmatprep.subr.mxu0 0.0
        %589 = vmatpush1.xpose.msra.mxu0 0.0
        %590 = vmatprep.subr.mxu0 0.0
        %591 = vmatpush1.xpose.msra.mxu0 0.0
        %592 = vmatprep.subr.mxu0 0.0
        %593 = vmatpush1.xpose.msra.mxu0 0.0
        %594 = vmatprep.subr.mxu0 0.0
        %595 = vmatpush1.xpose.msra.mxu0 0.0
        %596 = vmatprep.subr.mxu0 0.0
        %597 = vmatpush1.xpose.msra.mxu0 0.0
        %598 = vmatprep.mubr.f32.mxu0 0.0
        %599 = vmatmul.mubr.f32.gmra.mrb[0].mxu0 %v530
        %v600 = vpop.f32.mrb[0].mxu0
        %v601 = vadd.f32 0.0, %v600
        %v602 = vpop.f32.mrb[0].mxu0
        %603 = vdwg.mxu0
        %v604 = vsel %vm529, %v601, -inf
        %605 = vmax.xlane.f32.xlu0 %v604
        %v606 = vpop.xlane.xlu0 %605
        %v607 = vsub.f32 %v601, %v606
        %v608 = vmul.f32 %v607, 1.442695
        %v609 = vpow.pop %v608
        %v610 = vsel %vm529, %v609, 0.0
        %611 = vadd.xlane.f32.xlu0 %v610
        %v612 = vpop.xlane.xlu0 %611
        %v613 = vrcp.pop %v612
        %v614 = vmul.f32 %v609, %v613
        %615 = vrot.lane.b32.xlu0 %v521, 64
        %v616 = vpop.permute.xlu0 %615
        %v619 = vsel %vm529, %v614, 0
        %621 = vmatprep.subr.mxu0 0.0
        %622 = vmatpush1.msra.mxu0 %v616
        %623 = vmatprep.subr.mxu0 0.0
        %624 = vmatpush1.msra.mxu0 0.0
        %625 = vmatprep.subr.mxu0 0.0
        %626 = vmatpush1.msra.mxu0 0.0
        %627 = vmatprep.subr.mxu0 0.0
        %628 = vmatpush1.msra.mxu0 0.0
        %629 = vmatprep.subr.mxu0 0.0
        %630 = vmatpush1.msra.mxu0 0.0
        %631 = vmatprep.subr.mxu0 0.0
        %632 = vmatpush1.msra.mxu0 0.0
        %633 = vmatprep.subr.mxu0 0.0
        %634 = vmatpush1.msra.mxu0 0.0
        %635 = vmatprep.subr.mxu0 0.0
        %636 = vmatpush1.msra.mxu0 0.0
        %637 = vmatprep.subr.mxu0 0.0
        %638 = vmatpush1.msra.mxu0 0.0
        %639 = vmatprep.subr.mxu0 0.0
        %640 = vmatpush1.msra.mxu0 0.0
        %641 = vmatprep.subr.mxu0 0.0
        %642 = vmatpush1.msra.mxu0 0.0
        %643 = vmatprep.subr.mxu0 0.0
        %644 = vmatpush1.msra.mxu0 0.0
        %645 = vmatprep.subr.mxu0 0.0
        %646 = vmatpush1.msra.mxu0 0.0
        %647 = vmatprep.subr.mxu0 0.0
        %648 = vmatpush1.msra.mxu0 0.0
        %649 = vmatprep.subr.mxu0 0.0
        %650 = vmatpush1.msra.mxu0 0.0
        %651 = vmatprep.subr.mxu0 0.0
        %652 = vmatpush1.msra.mxu0 0.0
        %653 = vmatprep.subr.mxu0 0.0
        %654 = vmatpush1.msra.mxu0 0.0
        %655 = vmatprep.subr.mxu0 0.0
        %656 = vmatpush1.msra.mxu0 0.0
        %657 = vmatprep.subr.mxu0 0.0
        %658 = vmatpush1.msra.mxu0 0.0
        %659 = vmatprep.subr.mxu0 0.0
        %660 = vmatpush1.msra.mxu0 0.0
        %661 = vmatprep.subr.mxu0 0.0
        %662 = vmatpush1.msra.mxu0 0.0
        %663 = vmatprep.subr.mxu0 0.0
        %664 = vmatpush1.msra.mxu0 0.0
        %665 = vmatprep.subr.mxu0 0.0
        %666 = vmatpush1.msra.mxu0 0.0
        %667 = vmatprep.subr.mxu0 0.0
        %668 = vmatpush1.msra.mxu0 0.0
        %669 = vmatprep.subr.mxu0 0.0
        %670 = vmatpush1.msra.mxu0 0.0
        %671 = vmatprep.subr.mxu0 0.0
        %672 = vmatpush1.msra.mxu0 0.0
        %673 = vmatprep.subr.mxu0 0.0
        %674 = vmatpush1.msra.mxu0 0.0
        %675 = vmatprep.subr.mxu0 0.0
        %676 = vmatpush1.msra.mxu0 0.0
        %677 = vmatprep.subr.mxu0 0.0
        %678 = vmatpush1.msra.mxu0 0.0
        %679 = vmatprep.subr.mxu0 0.0
        %680 = vmatpush1.msra.mxu0 0.0
        %681 = vmatprep.subr.mxu0 0.0
        %682 = vmatpush1.msra.mxu0 0.0
        %683 = vmatprep.subr.mxu0 0.0
        %684 = vmatpush1.msra.mxu0 0.0
        %685 = vmatprep.mubr.f32.mxu0 0.0
        %686 = vmatmul.mubr.f32.gmra.mrb[0].mxu0 %v619
        %v687 = vpop.f32.mrb[0].mxu0
        %v688 = vadd.f32 0.0, %v687
        %v689 = vpop.f32.mrb[0].mxu0
        %690 = vdwg.mxu0
        %691 = vrot.lane.b32.xlu0 %v521, 120
        %v692 = vpop.permute.xlu0 %691
        %693 = vrot.lane.b32.xlu0 %v521, 88
        %v694 = vpop.permute.xlu0 %693
        %v695 = vsel %vm529, %v692, 0
        %v697 = vsel %vm529, %v694, 0
        %699 = vmatprep.subr.mxu0 0.0
        %700 = vmatpush1.xpose.msra.mxu0 %v697
        %701 = vmatprep.subr.mxu0 0.0
        %702 = vmatpush1.xpose.msra.mxu0 0.0
        %703 = vmatprep.subr.mxu0 0.0
        %704 = vmatpush1.xpose.msra.mxu0 0.0
        %705 = vmatprep.subr.mxu0 0.0
        %706 = vmatpush1.xpose.msra.mxu0 0.0
        %707 = vmatprep.subr.mxu0 0.0
        %708 = vmatpush1.xpose.msra.mxu0 0.0
        %709 = vmatprep.subr.mxu0 0.0
        %710 = vmatpush1.xpose.msra.mxu0 0.0
        %711 = vmatprep.subr.mxu0 0.0
        %712 = vmatpush1.xpose.msra.mxu0 0.0
        %713 = vmatprep.subr.mxu0 0.0
        %714 = vmatpush1.xpose.msra.mxu0 0.0
        %715 = vmatprep.subr.mxu0 0.0
        %716 = vmatpush1.xpose.msra.mxu0 0.0
        %717 = vmatprep.subr.mxu0 0.0
        %718 = vmatpush1.xpose.msra.mxu0 0.0
        %719 = vmatprep.subr.mxu0 0.0
        %720 = vmatpush1.xpose.msra.mxu0 0.0
        %721 = vmatprep.subr.mxu0 0.0
        %722 = vmatpush1.xpose.msra.mxu0 0.0
        %723 = vmatprep.subr.mxu0 0.0
        %724 = vmatpush1.xpose.msra.mxu0 0.0
        %725 = vmatprep.subr.mxu0 0.0
        %726 = vmatpush1.xpose.msra.mxu0 0.0
        %727 = vmatprep.subr.mxu0 0.0
        %728 = vmatpush1.xpose.msra.mxu0 0.0
        %729 = vmatprep.subr.mxu0 0.0
        %730 = vmatpush1.xpose.msra.mxu0 0.0
        %731 = vmatprep.subr.mxu0 0.0
        %732 = vmatpush1.xpose.msra.mxu0 0.0
        %733 = vmatprep.subr.mxu0 0.0
        %734 = vmatpush1.xpose.msra.mxu0 0.0
        %735 = vmatprep.subr.mxu0 0.0
        %736 = vmatpush1.xpose.msra.mxu0 0.0
        %737 = vmatprep.subr.mxu0 0.0
        %738 = vmatpush1.xpose.msra.mxu0 0.0
        %739 = vmatprep.subr.mxu0 0.0
        %740 = vmatpush1.xpose.msra.mxu0 0.0
        %741 = vmatprep.subr.mxu0 0.0
        %742 = vmatpush1.xpose.msra.mxu0 0.0
        %743 = vmatprep.subr.mxu0 0.0
        %744 = vmatpush1.xpose.msra.mxu0 0.0
        %745 = vmatprep.subr.mxu0 0.0
        %746 = vmatpush1.xpose.msra.mxu0 0.0
        %747 = vmatprep.subr.mxu0 0.0
        %748 = vmatpush1.xpose.msra.mxu0 0.0
        %749 = vmatprep.subr.mxu0 0.0
        %750 = vmatpush1.xpose.msra.mxu0 0.0
        %751 = vmatprep.subr.mxu0 0.0
        %752 = vmatpush1.xpose.msra.mxu0 0.0
        %753 = vmatprep.subr.mxu0 0.0
        %754 = vmatpush1.xpose.msra.mxu0 0.0
        %755 = vmatprep.subr.mxu0 0.0
        %756 = vmatpush1.xpose.msra.mxu0 0.0
        %757 = vmatprep.subr.mxu0 0.0
        %758 = vmatpush1.xpose.msra.mxu0 0.0
        %759 = vmatprep.subr.mxu0 0.0
        %760 = vmatpush1.xpose.msra.mxu0 0.0
        %761 = vmatprep.subr.mxu0 0.0
        %762 = vmatpush1.xpose.msra.mxu0 0.0
        %763 = vmatprep.mubr.f32.mxu0 0.0
        %764 = vmatmul.mubr.f32.gmra.mrb[0].mxu0 %v695
        %v765 = vpop.f32.mrb[0].mxu0
        %v766 = vadd.f32 0.0, %v765
        %v767 = vpop.f32.mrb[0].mxu0
        %768 = vdwg.mxu0
        %v769 = vsel %vm529, %v766, -inf
        %770 = vmax.xlane.f32.xlu0 %v769
        %v771 = vpop.xlane.xlu0 %770
        %v772 = vsub.f32 %v766, %v771
        %v773 = vmul.f32 %v772, 1.442695
        %v774 = vpow.pop %v773
        %v775 = vsel %vm529, %v774, 0.0
        %776 = vadd.xlane.f32.xlu0 %v775
        %v777 = vpop.xlane.xlu0 %776
        %v778 = vrcp.pop %v777
        %v779 = vmul.f32 %v774, %v778
        %780 = vrot.lane.b32.xlu0 %v521, 56
        %v781 = vpop.permute.xlu0 %780
        %v784 = vsel %vm529, %v779, 0
        %786 = vmatprep.subr.mxu0 0.0
        %787 = vmatpush1.msra.mxu0 %v781
        %788 = vmatprep.subr.mxu0 0.0
        %789 = vmatpush1.msra.mxu0 0.0
        %790 = vmatprep.subr.mxu0 0.0
        %791 = vmatpush1.msra.mxu0 0.0
        %792 = vmatprep.subr.mxu0 0.0
        %793 = vmatpush1.msra.mxu0 0.0
        %794 = vmatprep.subr.mxu0 0.0
        %795 = vmatpush1.msra.mxu0 0.0
        %796 = vmatprep.subr.mxu0 0.0
        %797 = vmatpush1.msra.mxu0 0.0
        %798 = vmatprep.subr.mxu0 0.0
        %799 = vmatpush1.msra.mxu0 0.0
        %800 = vmatprep.subr.mxu0 0.0
        %801 = vmatpush1.msra.mxu0 0.0
        %802 = vmatprep.subr.mxu0 0.0
        %803 = vmatpush1.msra.mxu0 0.0
        %804 = vmatprep.subr.mxu0 0.0
        %805 = vmatpush1.msra.mxu0 0.0
        %806 = vmatprep.subr.mxu0 0.0
        %807 = vmatpush1.msra.mxu0 0.0
        %808 = vmatprep.subr.mxu0 0.0
        %809 = vmatpush1.msra.mxu0 0.0
        %810 = vmatprep.subr.mxu0 0.0
        %811 = vmatpush1.msra.mxu0 0.0
        %812 = vmatprep.subr.mxu0 0.0
        %813 = vmatpush1.msra.mxu0 0.0
        %814 = vmatprep.subr.mxu0 0.0
        %815 = vmatpush1.msra.mxu0 0.0
        %816 = vmatprep.subr.mxu0 0.0
        %817 = vmatpush1.msra.mxu0 0.0
        %818 = vmatprep.subr.mxu0 0.0
        %819 = vmatpush1.msra.mxu0 0.0
        %820 = vmatprep.subr.mxu0 0.0
        %821 = vmatpush1.msra.mxu0 0.0
        %822 = vmatprep.subr.mxu0 0.0
        %823 = vmatpush1.msra.mxu0 0.0
        %824 = vmatprep.subr.mxu0 0.0
        %825 = vmatpush1.msra.mxu0 0.0
        %826 = vmatprep.subr.mxu0 0.0
        %827 = vmatpush1.msra.mxu0 0.0
        %828 = vmatprep.subr.mxu0 0.0
        %829 = vmatpush1.msra.mxu0 0.0
        %830 = vmatprep.subr.mxu0 0.0
        %831 = vmatpush1.msra.mxu0 0.0
        %832 = vmatprep.subr.mxu0 0.0
        %833 = vmatpush1.msra.mxu0 0.0
        %834 = vmatprep.subr.mxu0 0.0
        %835 = vmatpush1.msra.mxu0 0.0
        %836 = vmatprep.subr.mxu0 0.0
        %837 = vmatpush1.msra.mxu0 0.0
        %838 = vmatprep.subr.mxu0 0.0
        %839 = vmatpush1.msra.mxu0 0.0
        %840 = vmatprep.subr.mxu0 0.0
        %841 = vmatpush1.msra.mxu0 0.0
        %842 = vmatprep.subr.mxu0 0.0
        %843 = vmatpush1.msra.mxu0 0.0
        %844 = vmatprep.subr.mxu0 0.0
        %845 = vmatpush1.msra.mxu0 0.0
        %846 = vmatprep.subr.mxu0 0.0
        %847 = vmatpush1.msra.mxu0 0.0
        %848 = vmatprep.subr.mxu0 0.0
        %849 = vmatpush1.msra.mxu0 0.0
        %850 = vmatprep.mubr.f32.mxu0 0.0
        %851 = vmatmul.mubr.f32.gmra.mrb[0].mxu0 %v784
        %v852 = vpop.f32.mrb[0].mxu0
        %v853 = vadd.f32 0.0, %v852
        %v854 = vpop.f32.mrb[0].mxu0
        %855 = vdwg.mxu0
        %856 = vrot.lane.b32.xlu0 %v521, 112
        %v857 = vpop.permute.xlu0 %856
        %858 = vrot.lane.b32.xlu0 %v521, 80
        %v859 = vpop.permute.xlu0 %858
        %v860 = vsel %vm529, %v857, 0
        %v862 = vsel %vm529, %v859, 0
        %864 = vmatprep.subr.mxu0 0.0
        %865 = vmatpush1.xpose.msra.mxu0 %v862
        %866 = vmatprep.subr.mxu0 0.0
        %867 = vmatpush1.xpose.msra.mxu0 0.0
        %868 = vmatprep.subr.mxu0 0.0
        %869 = vmatpush1.xpose.msra.mxu0 0.0
        %870 = vmatprep.subr.mxu0 0.0
        %871 = vmatpush1.xpose.msra.mxu0 0.0
        %872 = vmatprep.subr.mxu0 0.0
        %873 = vmatpush1.xpose.msra.mxu0 0.0
        %874 = vmatprep.subr.mxu0 0.0
        %875 = vmatpush1.xpose.msra.mxu0 0.0
        %876 = vmatprep.subr.mxu0 0.0
        %877 = vmatpush1.xpose.msra.mxu0 0.0
        %878 = vmatprep.subr.mxu0 0.0
        %879 = vmatpush1.xpose.msra.mxu0 0.0
        %880 = vmatprep.subr.mxu0 0.0
        %881 = vmatpush1.xpose.msra.mxu0 0.0
        %882 = vmatprep.subr.mxu0 0.0
        %883 = vmatpush1.xpose.msra.mxu0 0.0
        %884 = vmatprep.subr.mxu0 0.0
        %885 = vmatpush1.xpose.msra.mxu0 0.0
        %886 = vmatprep.subr.mxu0 0.0
        %887 = vmatpush1.xpose.msra.mxu0 0.0
        %888 = vmatprep.subr.mxu0 0.0
        %889 = vmatpush1.xpose.msra.mxu0 0.0
        %890 = vmatprep.subr.mxu0 0.0
        %891 = vmatpush1.xpose.msra.mxu0 0.0
        %892 = vmatprep.subr.mxu0 0.0
        %893 = vmatpush1.xpose.msra.mxu0 0.0
        %894 = vmatprep.subr.mxu0 0.0
        %895 = vmatpush1.xpose.msra.mxu0 0.0
        %896 = vmatprep.subr.mxu0 0.0
        %897 = vmatpush1.xpose.msra.mxu0 0.0
        %898 = vmatprep.subr.mxu0 0.0
        %899 = vmatpush1.xpose.msra.mxu0 0.0
        %900 = vmatprep.subr.mxu0 0.0
        %901 = vmatpush1.xpose.msra.mxu0 0.0
        %902 = vmatprep.subr.mxu0 0.0
        %903 = vmatpush1.xpose.msra.mxu0 0.0
        %904 = vmatprep.subr.mxu0 0.0
        %905 = vmatpush1.xpose.msra.mxu0 0.0
        %906 = vmatprep.subr.mxu0 0.0
        %907 = vmatpush1.xpose.msra.mxu0 0.0
        %908 = vmatprep.subr.mxu0 0.0
        %909 = vmatpush1.xpose.msra.mxu0 0.0
        %910 = vmatprep.subr.mxu0 0.0
        %911 = vmatpush1.xpose.msra.mxu0 0.0
        %912 = vmatprep.subr.mxu0 0.0
        %913 = vmatpush1.xpose.msra.mxu0 0.0
        %914 = vmatprep.subr.mxu0 0.0
        %915 = vmatpush1.xpose.msra.mxu0 0.0
        %916 = vmatprep.subr.mxu0 0.0
        %917 = vmatpush1.xpose.msra.mxu0 0.0
        %918 = vmatprep.subr.mxu0 0.0
        %919 = vmatpush1.xpose.msra.mxu0 0.0
        %920 = vmatprep.subr.mxu0 0.0
        %921 = vmatpush1.xpose.msra.mxu0 0.0
        %922 = vmatprep.subr.mxu0 0.0
        %923 = vmatpush1.xpose.msra.mxu0 0.0
        %924 = vmatprep.subr.mxu0 0.0
        %925 = vmatpush1.xpose.msra.mxu0 0.0
        %926 = vmatprep.subr.mxu0 0.0
        %927 = vmatpush1.xpose.msra.mxu0 0.0
        %928 = vmatprep.mubr.f32.mxu0 0.0
        %929 = vmatmul.mubr.f32.gmra.mrb[0].mxu0 %v860
        %v930 = vpop.f32.mrb[0].mxu0
        %v931 = vadd.f32 0.0, %v930
        %v932 = vpop.f32.mrb[0].mxu0
        %933 = vdwg.mxu0
        %v934 = vsel %vm529, %v931, -inf
        %935 = vmax.xlane.f32.xlu0 %v934
        %v936 = vpop.xlane.xlu0 %935
        %v937 = vsub.f32 %v931, %v936
        %v938 = vmul.f32 %v937, 1.442695
        %v939 = vpow.pop %v938
        %v940 = vsel %vm529, %v939, 0.0
        %941 = vadd.xlane.f32.xlu0 %v940
        %v942 = vpop.xlane.xlu0 %941
        %v943 = vrcp.pop %v942
        %v944 = vmul.f32 %v939, %v943
        %945 = vrot.lane.b32.xlu0 %v521, 48
        %v946 = vpop.permute.xlu0 %945
        %v949 = vsel %vm529, %v944, 0
        %951 = vmatprep.subr.mxu0 0.0
        %952 = vmatpush1.msra.mxu0 %v946
        %953 = vmatprep.subr.mxu0 0.0
        %954 = vmatpush1.msra.mxu0 0.0
        %955 = vmatprep.subr.mxu0 0.0
        %956 = vmatpush1.msra.mxu0 0.0
        %957 = vmatprep.subr.mxu0 0.0
        %958 = vmatpush1.msra.mxu0 0.0
        %959 = vmatprep.subr.mxu0 0.0
        %960 = vmatpush1.msra.mxu0 0.0
        %961 = vmatprep.subr.mxu0 0.0
        %962 = vmatpush1.msra.mxu0 0.0
        %963 = vmatprep.subr.mxu0 0.0
        %964 = vmatpush1.msra.mxu0 0.0
        %965 = vmatprep.subr.mxu0 0.0
        %966 = vmatpush1.msra.mxu0 0.0
        %967 = vmatprep.subr.mxu0 0.0
        %968 = vmatpush1.msra.mxu0 0.0
        %969 = vmatprep.subr.mxu0 0.0
        %970 = vmatpush1.msra.mxu0 0.0
        %971 = vmatprep.subr.mxu0 0.0
        %972 = vmatpush1.msra.mxu0 0.0
        %973 = vmatprep.subr.mxu0 0.0
        %974 = vmatpush1.msra.mxu0 0.0
        %975 = vmatprep.subr.mxu0 0.0
        %976 = vmatpush1.msra.mxu0 0.0
        %977 = vmatprep.subr.mxu0 0.0
        %978 = vmatpush1.msra.mxu0 0.0
        %979 = vmatprep.subr.mxu0 0.0
        %980 = vmatpush1.msra.mxu0 0.0
        %981 = vmatprep.subr.mxu0 0.0
        %982 = vmatpush1.msra.mxu0 0.0
        %983 = vmatprep.subr.mxu0 0.0
        %984 = vmatpush1.msra.mxu0 0.0
        %985 = vmatprep.subr.mxu0 0.0
        %986 = vmatpush1.msra.mxu0 0.0
        %987 = vmatprep.subr.mxu0 0.0
        %988 = vmatpush1.msra.mxu0 0.0
        %989 = vmatprep.subr.mxu0 0.0
        %990 = vmatpush1.msra.mxu0 0.0
        %991 = vmatprep.subr.mxu0 0.0
        %992 = vmatpush1.msra.mxu0 0.0
        %993 = vmatprep.subr.mxu0 0.0
        %994 = vmatpush1.msra.mxu0 0.0
        %995 = vmatprep.subr.mxu0 0.0
        %996 = vmatpush1.msra.mxu0 0.0
        %997 = vmatprep.subr.mxu0 0.0
        %998 = vmatpush1.msra.mxu0 0.0
        %999 = vmatprep.subr.mxu0 0.0
        %1000 = vmatpush1.msra.mxu0 0.0
        %1001 = vmatprep.subr.mxu0 0.0
        %1002 = vmatpush1.msra.mxu0 0.0
        %1003 = vmatprep.subr.mxu0 0.0
        %1004 = vmatpush1.msra.mxu0 0.0
        %1005 = vmatprep.subr.mxu0 0.0
        %1006 = vmatpush1.msra.mxu0 0.0
        %1007 = vmatprep.subr.mxu0 0.0
        %1008 = vmatpush1.msra.mxu0 0.0
        %1009 = vmatprep.subr.mxu0 0.0
        %1010 = vmatpush1.msra.mxu0 0.0
        %1011 = vmatprep.subr.mxu0 0.0
        %1012 = vmatpush1.msra.mxu0 0.0
        %1013 = vmatprep.subr.mxu0 0.0
        %1014 = vmatpush1.msra.mxu0 0.0
        %1015 = vmatprep.mubr.f32.mxu0 0.0
        %1016 = vmatmul.mubr.f32.gmra.mrb[0].mxu0 %v949
        %v1017 = vpop.f32.mrb[0].mxu0
        %v1018 = vadd.f32 0.0, %v1017
        %v1019 = vpop.f32.mrb[0].mxu0
        %1020 = vdwg.mxu0
        %1021 = vrot.lane.b32.xlu0 %v521, 104
        %v1022 = vpop.permute.xlu0 %1021
        %1023 = vrot.lane.b32.xlu0 %v521, 72
        %v1024 = vpop.permute.xlu0 %1023
        %v1025 = vsel %vm529, %v1022, 0
        %v1027 = vsel %vm529, %v1024, 0
        %1029 = vmatprep.subr.mxu0 0.0
        %1030 = vmatpush1.xpose.msra.mxu0 %v1027
        %1031 = vmatprep.subr.mxu0 0.0
        %1032 = vmatpush1.xpose.msra.mxu0 0.0
        %1033 = vmatprep.subr.mxu0 0.0
        %1034 = vmatpush1.xpose.msra.mxu0 0.0
        %1035 = vmatprep.subr.mxu0 0.0
        %1036 = vmatpush1.xpose.msra.mxu0 0.0
        %1037 = vmatprep.subr.mxu0 0.0
        %1038 = vmatpush1.xpose.msra.mxu0 0.0
        %1039 = vmatprep.subr.mxu0 0.0
        %1040 = vmatpush1.xpose.msra.mxu0 0.0
        %1041 = vmatprep.subr.mxu0 0.0
        %1042 = vmatpush1.xpose.msra.mxu0 0.0
        %1043 = vmatprep.subr.mxu0 0.0
        %1044 = vmatpush1.xpose.msra.mxu0 0.0
        %1045 = vmatprep.subr.mxu0 0.0
        %1046 = vmatpush1.xpose.msra.mxu0 0.0
        %1047 = vmatprep.subr.mxu0 0.0
        %1048 = vmatpush1.xpose.msra.mxu0 0.0
        %1049 = vmatprep.subr.mxu0 0.0
        %1050 = vmatpush1.xpose.msra.mxu0 0.0
        %1051 = vmatprep.subr.mxu0 0.0
        %1052 = vmatpush1.xpose.msra.mxu0 0.0
        %1053 = vmatprep.subr.mxu0 0.0
        %1054 = vmatpush1.xpose.msra.mxu0 0.0
        %1055 = vmatprep.subr.mxu0 0.0
        %1056 = vmatpush1.xpose.msra.mxu0 0.0
        %1057 = vmatprep.subr.mxu0 0.0
        %1058 = vmatpush1.xpose.msra.mxu0 0.0
        %1059 = vmatprep.subr.mxu0 0.0
        %1060 = vmatpush1.xpose.msra.mxu0 0.0
        %1061 = vmatprep.subr.mxu0 0.0
        %1062 = vmatpush1.xpose.msra.mxu0 0.0
        %1063 = vmatprep.subr.mxu0 0.0
        %1064 = vmatpush1.xpose.msra.mxu0 0.0
        %1065 = vmatprep.subr.mxu0 0.0
        %1066 = vmatpush1.xpose.msra.mxu0 0.0
        %1067 = vmatprep.subr.mxu0 0.0
        %1068 = vmatpush1.xpose.msra.mxu0 0.0
        %1069 = vmatprep.subr.mxu0 0.0
        %1070 = vmatpush1.xpose.msra.mxu0 0.0
        %1071 = vmatprep.subr.mxu0 0.0
        %1072 = vmatpush1.xpose.msra.mxu0 0.0
        %1073 = vmatprep.subr.mxu0 0.0
        %1074 = vmatpush1.xpose.msra.mxu0 0.0
        %1075 = vmatprep.subr.mxu0 0.0
        %1076 = vmatpush1.xpose.msra.mxu0 0.0
        %1077 = vmatprep.subr.mxu0 0.0
        %1078 = vmatpush1.xpose.msra.mxu0 0.0
        %1079 = vmatprep.subr.mxu0 0.0
        %1080 = vmatpush1.xpose.msra.mxu0 0.0
        %1081 = vmatprep.subr.mxu0 0.0
        %1082 = vmatpush1.xpose.msra.mxu0 0.0
        %1083 = vmatprep.subr.mxu0 0.0
        %1084 = vmatpush1.xpose.msra.mxu0 0.0
        %1085 = vmatprep.subr.mxu0 0.0
        %1086 = vmatpush1.xpose.msra.mxu0 0.0
        %1087 = vmatprep.subr.mxu0 0.0
        %1088 = vmatpush1.xpose.msra.mxu0 0.0
        %1089 = vmatprep.subr.mxu0 0.0
        %1090 = vmatpush1.xpose.msra.mxu0 0.0
        %1091 = vmatprep.subr.mxu0 0.0
        %1092 = vmatpush1.xpose.msra.mxu0 0.0
        %1093 = vmatprep.mubr.f32.mxu0 0.0
        %1094 = vmatmul.mubr.f32.gmra.mrb[0].mxu0 %v1025
        %v1095 = vpop.f32.mrb[0].mxu0
        %v1096 = vadd.f32 0.0, %v1095
        %v1097 = vpop.f32.mrb[0].mxu0
        %1098 = vdwg.mxu0
        %v1099 = vsel %vm529, %v1096, -inf
        %1100 = vmax.xlane.f32.xlu0 %v1099
        %v1101 = vpop.xlane.xlu0 %1100
        %v1102 = vsub.f32 %v1096, %v1101
        %v1103 = vmul.f32 %v1102, 1.442695
        %v1104 = vpow.pop %v1103
        %v1105 = vsel %vm529, %v1104, 0.0
        %1106 = vadd.xlane.f32.xlu0 %v1105
        %v1107 = vpop.xlane.xlu0 %1106
        %v1108 = vrcp.pop %v1107
        %v1109 = vmul.f32 %v1104, %v1108
        %1110 = vrot.lane.b32.xlu0 %v521, 40
        %v1111 = vpop.permute.xlu0 %1110
        %v1114 = vsel %vm529, %v1109, 0
        %1116 = vmatprep.subr.mxu0 0.0
        %1117 = vmatpush1.msra.mxu0 %v1111
        %1118 = vmatprep.subr.mxu0 0.0
        %1119 = vmatpush1.msra.mxu0 0.0
        %1120 = vmatprep.subr.mxu0 0.0
        %1121 = vmatpush1.msra.mxu0 0.0
        %1122 = vmatprep.subr.mxu0 0.0
        %1123 = vmatpush1.msra.mxu0 0.0
        %1124 = vmatprep.subr.mxu0 0.0
        %1125 = vmatpush1.msra.mxu0 0.0
        %1126 = vmatprep.subr.mxu0 0.0
        %1127 = vmatpush1.msra.mxu0 0.0
        %1128 = vmatprep.subr.mxu0 0.0
        %1129 = vmatpush1.msra.mxu0 0.0
        %1130 = vmatprep.subr.mxu0 0.0
        %1131 = vmatpush1.msra.mxu0 0.0
        %1132 = vmatprep.subr.mxu0 0.0
        %1133 = vmatpush1.msra.mxu0 0.0
        %1134 = vmatprep.subr.mxu0 0.0
        %1135 = vmatpush1.msra.mxu0 0.0
        %1136 = vmatprep.subr.mxu0 0.0
        %1137 = vmatpush1.msra.mxu0 0.0
        %1138 = vmatprep.subr.mxu0 0.0
        %1139 = vmatpush1.msra.mxu0 0.0
        %1140 = vmatprep.subr.mxu0 0.0
        %1141 = vmatpush1.msra.mxu0 0.0
        %1142 = vmatprep.subr.mxu0 0.0
        %1143 = vmatpush1.msra.mxu0 0.0
        %1144 = vmatprep.subr.mxu0 0.0
        %1145 = vmatpush1.msra.mxu0 0.0
        %1146 = vmatprep.subr.mxu0 0.0
        %1147 = vmatpush1.msra.mxu0 0.0
        %1148 = vmatprep.subr.mxu0 0.0
        %1149 = vmatpush1.msra.mxu0 0.0
        %1150 = vmatprep.subr.mxu0 0.0
        %1151 = vmatpush1.msra.mxu0 0.0
        %1152 = vmatprep.subr.mxu0 0.0
        %1153 = vmatpush1.msra.mxu0 0.0
        %1154 = vmatprep.subr.mxu0 0.0
        %1155 = vmatpush1.msra.mxu0 0.0
        %1156 = vmatprep.subr.mxu0 0.0
        %1157 = vmatpush1.msra.mxu0 0.0
        %1158 = vmatprep.subr.mxu0 0.0
        %1159 = vmatpush1.msra.mxu0 0.0
        %1160 = vmatprep.subr.mxu0 0.0
        %1161 = vmatpush1.msra.mxu0 0.0
        %1162 = vmatprep.subr.mxu0 0.0
        %1163 = vmatpush1.msra.mxu0 0.0
        %1164 = vmatprep.subr.mxu0 0.0
        %1165 = vmatpush1.msra.mxu0 0.0
        %1166 = vmatprep.subr.mxu0 0.0
        %1167 = vmatpush1.msra.mxu0 0.0
        %1168 = vmatprep.subr.mxu0 0.0
        %1169 = vmatpush1.msra.mxu0 0.0
        %1170 = vmatprep.subr.mxu0 0.0
        %1171 = vmatpush1.msra.mxu0 0.0
        %1172 = vmatprep.subr.mxu0 0.0
        %1173 = vmatpush1.msra.mxu0 0.0
        %1174 = vmatprep.subr.mxu0 0.0
        %1175 = vmatpush1.msra.mxu0 0.0
        %1176 = vmatprep.subr.mxu0 0.0
        %1177 = vmatpush1.msra.mxu0 0.0
        %1178 = vmatprep.subr.mxu0 0.0
        %1179 = vmatpush1.msra.mxu0 0.0
        %1180 = vmatprep.mubr.f32.mxu0 0.0
        %1181 = vmatmul.mubr.f32.gmra.mrb[0].mxu0 %v1114
        %v1182 = vpop.f32.mrb[0].mxu0
        %v1183 = vadd.f32 0.0, %v1182
        %v1184 = vpop.f32.mrb[0].mxu0
        %1185 = vdwg.mxu0
        %1187 = vrot.lane.b32.xlu0 %v853, 8
        %v1188 = vpop.permute.xlu0 %1187
        %1191 = vrot.lane.b32.xlu0 %v1018, 16
        %v1192 = vpop.permute.xlu0 %1191
        %1195 = vrot.lane.b32.xlu0 %v1183, 24
        %v1196 = vpop.permute.xlu0 %1195
        %v1198 = vsel %vm529, %v688, %v1188
        %vm1199 = vcmask 130048
        %v1200 = vsel %vm1199, %v1198, %v1192
        %vm1201 = vcmask 195584
        %v1202 = vsel %vm1201, %v1200, %v1196
        %v1203 = vpack.c.bf16 %v1202, %v1202
        %v1204 = vld [vmem:[%s4] sm:$0xf]
        %v1205 = vld [vmem:[%s4 + $0x4] sm:$0xf]
        %v1206 = vld [vmem:[%s4 + $0x8] sm:$0xf]
        %v1207 = vld [vmem:[%s4 + $0xc] sm:$0xf]
        %v1208 = vlaneseq
        %v1209 = vshrl.u32 %v1208, 7
        %v1210 = vsub.s32 2, %v1209
        %v1211 = vrot.slane %v376, %v1210
        %v1216 = vunpack.c.l.b16 %v1204
        %v1217 = vunpack.c.l.b16 %v1205
        %v1218 = vunpack.c.l.b16 %v1206
        %v1219 = vunpack.c.l.b16 %v1207
        %v1220 = vpack.c.b16 %v1217, %v1216
        %v1221 = vpack.c.b16 %v1219, %v1218
        %v1225 = vsel %vm482, %v1203, 0
        %1227 = vmatprep.subr.bf16.mxu0 0
        %1228 = vmatpush1.bf16.msra.mxu0 %v1220
        %1229 = vmatprep.subr.bf16.mxu0 0
        %1230 = vmatpush1.bf16.msra.mxu0 %v1221
        %1231 = vmatprep.subr.bf16.mxu0 0
        %1232 = vmatpush1.bf16.msra.mxu0 0
        %1233 = vmatprep.subr.bf16.mxu0 0
        %1234 = vmatpush1.bf16.msra.mxu0 0
        %1235 = vmatprep.subr.bf16.mxu0 0
        %1236 = vmatpush1.bf16.msra.mxu0 0
        %1237 = vmatprep.subr.bf16.mxu0 0
        %1238 = vmatpush1.bf16.msra.mxu0 0
        %1239 = vmatprep.subr.bf16.mxu0 0
        %1240 = vmatpush1.bf16.msra.mxu0 0
        %1241 = vmatprep.subr.bf16.mxu0 0
        %1242 = vmatpush1.bf16.msra.mxu0 0
        %1243 = vmatprep.subr.bf16.mxu0 0
        %1244 = vmatpush1.bf16.msra.mxu0 0
        %1245 = vmatprep.subr.bf16.mxu0 0
        %1246 = vmatpush1.bf16.msra.mxu0 0
        %1247 = vmatprep.subr.bf16.mxu0 0
        %1248 = vmatpush1.bf16.msra.mxu0 0
        %1249 = vmatprep.subr.bf16.mxu0 0
        %1250 = vmatpush1.bf16.msra.mxu0 0
        %1251 = vmatprep.subr.bf16.mxu0 0
        %1252 = vmatpush1.bf16.msra.mxu0 0
        %1253 = vmatprep.subr.bf16.mxu0 0
        %1254 = vmatpush1.bf16.msra.mxu0 0
        %1255 = vmatprep.subr.bf16.mxu0 0
        %1256 = vmatpush1.bf16.msra.mxu0 0
        %1257 = vmatprep.subr.bf16.mxu0 0
        %1258 = vmatpush1.bf16.msra.mxu0 0
        %1259 = vmatprep.mubr.bf16.mxu0 0
        %1260 = vmatmul.mubr.bf16.gmra.mrb[0].mxu0 %v1225
        %v1261 = vpop.f32.mrb[0].mxu0
        %v1262 = vadd.f32 %v1211, %v1261
        %v1263 = vpop.f32.mrb[0].mxu0
        %v1264 = vpop.f32.mrb[0].mxu0
        %v1265 = vpop.f32.mrb[0].mxu0
        %1266 = vdwg.mxu0
        %v1267 = vadd.f32 %v460, %v1262
        %v1268 = vsel %vm482, %v1267, 0.0
        %1269 = vadd.xlane.f32.xlu0 %v1268
        %v1270 = vpop.xlane.xlu0 %1269
        %v1271 = vrcp.pop 32.0
        %v1272 = vmul.f32 %v1270, %v1271
        %v1273 = vsub.f32 %v1267, %v1272
        %v1274 = vmul.f32 %v1273, %v1273
        %v1275 = vsel %vm482, %v1274, 0.0
        %1276 = vadd.xlane.f32.xlu0 %v1275
        %v1277 = vpop.xlane.xlu0 %1276
        %v1278 = vmul.f32 %v1277, %v1271
        %v1279 = vadd.f32 %v1278, 1e-05
        %v1280 = vrsqrt.pop %v1279
        %v1281 = vmul.f32 %v1273, %v1280
        %v1282 = vlaneseq
        %v1283 = vshrl.u32 %v1282, 7
        %v1284 = vsub.s32 3, %v1283
        %v1285 = vrot.slane %v376, %v1284
        %v1286 = vmul.f32 %v1281, %v1285
        %v1287 = vlaneseq
        %v1288 = vshrl.u32 %v1287, 7
        %v1289 = vsub.s32 4, %v1288
        %v1290 = vrot.slane %v376, %v1289
        %v1291 = vadd.f32 %v1286, %v1290
        %v1292 = vpack.c.bf16 %v1291, %v1291
        %v1293 = vld [vmem:[%s5] sm:$0xf]
        %v1294 = vld [vmem:[%s5 + $0x4] sm:$0xf]
        %v1295 = vld [vmem:[%s5 + $0x8] sm:$0xf]
        %v1296 = vld [vmem:[%s5 + $0xc] sm:$0xf]
        %v1297 = vlaneseq
        %v1298 = vshrl.u32 %v1297, 7
        %v1299 = vsub.s32 5, %v1298
        %v1300 = vrot.slane %v376, %v1299
        %v1305 = vunpack.c.l.b16 %v1293
        %v1306 = vunpack.c.l.b16 %v1294
        %v1307 = vunpack.c.l.b16 %v1295
        %v1308 = vunpack.c.l.b16 %v1296
        %v1309 = vpack.c.b16 %v1306, %v1305
        %v1310 = vpack.c.b16 %v1308, %v1307
        %v1314 = vsel %vm482, %v1292, 0
        %1316 = vmatprep.subr.bf16.mxu0 0
        %1317 = vmatpush1.bf16.msra.mxu0 %v1309
        %1318 = vmatprep.subr.bf16.mxu0 0
        %1319 = vmatpush1.bf16.msra.mxu0 %v1310
        %1320 = vmatprep.subr.bf16.mxu0 0
        %1321 = vmatpush1.bf16.msra.mxu0 0
        %1322 = vmatprep.subr.bf16.mxu0 0
        %1323 = vmatpush1.bf16.msra.mxu0 0
        %1324 = vmatprep.subr.bf16.mxu0 0
        %1325 = vmatpush1.bf16.msra.mxu0 0
        %1326 = vmatprep.subr.bf16.mxu0 0
        %1327 = vmatpush1.bf16.msra.mxu0 0
        %1328 = vmatprep.subr.bf16.mxu0 0
        %1329 = vmatpush1.bf16.msra.mxu0 0
        %1330 = vmatprep.subr.bf16.mxu0 0
        %1331 = vmatpush1.bf16.msra.mxu0 0
        %1332 = vmatprep.subr.bf16.mxu0 0
        %1333 = vmatpush1.bf16.msra.mxu0 0
        %1334 = vmatprep.subr.bf16.mxu0 0
        %1335 = vmatpush1.bf16.msra.mxu0 0
        %1336 = vmatprep.subr.bf16.mxu0 0
        %1337 = vmatpush1.bf16.msra.mxu0 0
        %1338 = vmatprep.subr.bf16.mxu0 0
        %1339 = vmatpush1.bf16.msra.mxu0 0
        %1340 = vmatprep.subr.bf16.mxu0 0
        %1341 = vmatpush1.bf16.msra.mxu0 0
        %1342 = vmatprep.subr.bf16.mxu0 0
        %1343 = vmatpush1.bf16.msra.mxu0 0
        %1344 = vmatprep.subr.bf16.mxu0 0
        %1345 = vmatpush1.bf16.msra.mxu0 0
        %1346 = vmatprep.subr.bf16.mxu0 0
        %1347 = vmatpush1.bf16.msra.mxu0 0
        %1348 = vmatprep.mubr.bf16.mxu0 0
        %1349 = vmatmul.mubr.bf16.gmra.mrb[0].mxu0 %v1314
        %v1350 = vpop.f32.mrb[0].mxu0
        %v1351 = vadd.f32 %v1300, %v1350
        %v1352 = vpop.f32.mrb[0].mxu0
        %v1353 = vpop.f32.mrb[0].mxu0
        %v1354 = vpop.f32.mrb[0].mxu0
        %1355 = vdwg.mxu0
        %v1356 = vmax.f32 %v1351, 0.0
        %v1357 = vpack.c.bf16 %v1356, %v1356
        %v1358 = vld [vmem:[%s6] sm:$0xf]
        %v1359 = vld [vmem:[%s6 + $0x4] sm:$0xf]
        %v1360 = vld [vmem:[%s6 + $0x8] sm:$0xf]
        %v1361 = vld [vmem:[%s6 + $0xc] sm:$0xf]
        %v1362 = vld [vmem:[%s6 + $0x10] sm:$0xf]
        %v1363 = vld [vmem:[%s6 + $0x14] sm:$0xf]
        %v1364 = vld [vmem:[%s6 + $0x18] sm:$0xf]
        %v1365 = vld [vmem:[%s6 + $0x1c] sm:$0xf]
        %v1366 = vlaneseq
        %v1367 = vshrl.u32 %v1366, 7
        %v1368 = vsub.s32 6, %v1367
        %v1369 = vrot.slane %v376, %v1368
        %v1378 = vunpack.c.l.b16 %v1358
        %v1379 = vunpack.c.l.b16 %v1359
        %v1380 = vunpack.c.l.b16 %v1360
        %v1381 = vunpack.c.l.b16 %v1361
        %v1382 = vunpack.c.l.b16 %v1362
        %v1383 = vunpack.c.l.b16 %v1363
        %v1384 = vunpack.c.l.b16 %v1364
        %v1385 = vunpack.c.l.b16 %v1365
        %v1386 = vpack.c.b16 %v1379, %v1378
        %v1387 = vpack.c.b16 %v1381, %v1380
        %v1388 = vpack.c.b16 %v1383, %v1382
        %v1389 = vpack.c.b16 %v1385, %v1384
        %v1395 = vsel %vm416, %v1357, 0
        %1397 = vmatprep.subr.bf16.mxu0 0
        %1398 = vmatpush1.bf16.msra.mxu0 %v1386
        %1399 = vmatprep.subr.bf16.mxu0 0
        %1400 = vmatpush1.bf16.msra.mxu0 %v1387
        %1401 = vmatprep.subr.bf16.mxu0 0
        %1402 = vmatpush1.bf16.msra.mxu0 %v1388
        %1403 = vmatprep.subr.bf16.mxu0 0
        %1404 = vmatpush1.bf16.msra.mxu0 %v1389
        %1405 = vmatprep.subr.bf16.mxu0 0
        %1406 = vmatpush1.bf16.msra.mxu0 0
        %1407 = vmatprep.subr.bf16.mxu0 0
        %1408 = vmatpush1.bf16.msra.mxu0 0
        %1409 = vmatprep.subr.bf16.mxu0 0
        %1410 = vmatpush1.bf16.msra.mxu0 0
        %1411 = vmatprep.subr.bf16.mxu0 0
        %1412 = vmatpush1.bf16.msra.mxu0 0
        %1413 = vmatprep.subr.bf16.mxu0 0
        %1414 = vmatpush1.bf16.msra.mxu0 0
        %1415 = vmatprep.subr.bf16.mxu0 0
        %1416 = vmatpush1.bf16.msra.mxu0 0
        %1417 = vmatprep.subr.bf16.mxu0 0
        %1418 = vmatpush1.bf16.msra.mxu0 0
        %1419 = vmatprep.subr.bf16.mxu0 0
        %1420 = vmatpush1.bf16.msra.mxu0 0
        %1421 = vmatprep.subr.bf16.mxu0 0
        %1422 = vmatpush1.bf16.msra.mxu0 0
        %1423 = vmatprep.subr.bf16.mxu0 0
        %1424 = vmatpush1.bf16.msra.mxu0 0
        %1425 = vmatprep.subr.bf16.mxu0 0
        %1426 = vmatpush1.bf16.msra.mxu0 0
        %1427 = vmatprep.subr.bf16.mxu0 0
        %1428 = vmatpush1.bf16.msra.mxu0 0
        %1429 = vmatprep.mubr.bf16.mxu0 0
        %1430 = vmatmul.mubr.bf16.gmra.mrb[0].mxu0 %v1395
        %v1431 = vpop.f32.mrb[0].mxu0
        %v1432 = vadd.f32 %v1369, %v1431
        %v1433 = vpop.f32.mrb[0].mxu0
        %v1434 = vpop.f32.mrb[0].mxu0
        %v1435 = vpop.f32.mrb[0].mxu0
        %1436 = vdwg.mxu0
        %v1437 = vadd.f32 %v1291, %v1432
        %v1438 = vsel %vm482, %v1437, 0.0
        %1439 = vadd.xlane.f32.xlu0 %v1438
        %v1440 = vpop.xlane.xlu0 %1439
        %v1441 = vmul.f32 %v1440, %v1271
        %v1442 = vsub.f32 %v1437, %v1441
        %v1443 = vmul.f32 %v1442, %v1442
        %v1444 = vsel %vm482, %v1443, 0.0
        %1445 = vadd.xlane.f32.xlu0 %v1444
        %v1446 = vpop.xlane.xlu0 %1445
        %v1447 = vmul.f32 %v1446, %v1271
        %v1448 = vadd.f32 %v1447, 1e-05
        %v1449 = vrsqrt.pop %v1448
        %v1450 = vmul.f32 %v1442, %v1449
        %v1451 = vlaneseq
        %v1452 = vshrl.u32 %v1451, 7
        %v1453 = vsub.s32 7, %v1452
        %v1454 = vrot.slane %v376, %v1453
        %v1455 = vmul.f32 %v1450, %v1454
        %v1456 = vlaneseq
        %v1457 = vshrl.u32 %v1456, 7
        %v1458 = vsub.s32 0, %v1457
        %v1459 = vrot.slane %v377, %v1458
        %v1460 = vadd.f32 %v1455, %v1459
        %v1461 = vpack.c.bf16 %v1460, %v1460
        %s1462 = scalar_lea.vmem %s3, 16
        %v1463 = vld [vmem:[%s1462] sm:$0xf]
        %v1464 = vld [vmem:[%s1462 + $0x4] sm:$0xf]
        %v1465 = vld [vmem:[%s1462 + $0x8] sm:$0xf]
        %v1466 = vld [vmem:[%s1462 + $0xc] sm:$0xf]
        %v1467 = vlaneseq
        %v1468 = vshrl.u32 %v1467, 7
        %v1469 = vsub.s32 1, %v1468
        %v1470 = vrot.slane %v377, %v1469
        %v1475 = vunpack.c.l.b16 %v1463
        %v1476 = vunpack.c.l.b16 %v1464
        %v1477 = vunpack.c.l.b16 %v1465
        %v1478 = vunpack.c.l.b16 %v1466
        %v1479 = vpack.c.b16 %v1476, %v1475
        %v1480 = vpack.c.b16 %v1478, %v1477
        %v1484 = vsel %vm482, %v1461, 0
        %1486 = vmatprep.subr.bf16.mxu0 0
        %1487 = vmatpush1.bf16.msra.mxu0 %v1479
        %1488 = vmatprep.subr.bf16.mxu0 0
        %1489 = vmatpush1.bf16.msra.mxu0 %v1480
        %1490 = vmatprep.subr.bf16.mxu0 0
        %1491 = vmatpush1.bf16.msra.mxu0 0
        %1492 = vmatprep.subr.bf16.mxu0 0
        %1493 = vmatpush1.bf16.msra.mxu0 0
        %1494 = vmatprep.subr.bf16.mxu0 0
        %1495 = vmatpush1.bf16.msra.mxu0 0
        %1496 = vmatprep.subr.bf16.mxu0 0
        %1497 = vmatpush1.bf16.msra.mxu0 0
        %1498 = vmatprep.subr.bf16.mxu0 0
        %1499 = vmatpush1.bf16.msra.mxu0 0
        %1500 = vmatprep.subr.bf16.mxu0 0
        %1501 = vmatpush1.bf16.msra.mxu0 0
        %1502 = vmatprep.subr.bf16.mxu0 0
        %1503 = vmatpush1.bf16.msra.mxu0 0
        %1504 = vmatprep.subr.bf16.mxu0 0
        %1505 = vmatpush1.bf16.msra.mxu0 0
        %1506 = vmatprep.subr.bf16.mxu0 0
        %1507 = vmatpush1.bf16.msra.mxu0 0
        %1508 = vmatprep.subr.bf16.mxu0 0
        %1509 = vmatpush1.bf16.msra.mxu0 0
        %1510 = vmatprep.subr.bf16.mxu0 0
        %1511 = vmatpush1.bf16.msra.mxu0 0
        %1512 = vmatprep.subr.bf16.mxu0 0
        %1513 = vmatpush1.bf16.msra.mxu0 0
        %1514 = vmatprep.subr.bf16.mxu0 0
        %1515 = vmatpush1.bf16.msra.mxu0 0
        %1516 = vmatprep.subr.bf16.mxu0 0
        %1517 = vmatpush1.bf16.msra.mxu0 0
        %1518 = vmatprep.mubr.bf16.mxu0 0
        %1519 = vmatmul.mubr.bf16.gmra.mrb[0].mxu0 %v1484
        %v1520 = vpop.f32.mrb[0].mxu0
        %v1521 = vadd.f32 %v1470, %v1520
        %v1522 = vpop.f32.mrb[0].mxu0
        %v1523 = vpop.f32.mrb[0].mxu0
        %v1524 = vpop.f32.mrb[0].mxu0
        %1525 = vdwg.mxu0
        %1527 = vrot.lane.b32.xlu0 %v1521, 96
        %v1528 = vpop.permute.xlu0 %1527
        %v1529 = vsel %vm529, %v1521, 0
        %v1531 = vsel %vm529, %v1528, 0
        %1533 = vmatprep.subr.mxu0 0.0
        %1534 = vmatpush1.xpose.msra.mxu0 %v1531
        %1535 = vmatprep.subr.mxu0 0.0
        %1536 = vmatpush1.xpose.msra.mxu0 0.0
        %1537 = vmatprep.subr.mxu0 0.0
        %1538 = vmatpush1.xpose.msra.mxu0 0.0
        %1539 = vmatprep.subr.mxu0 0.0
        %1540 = vmatpush1.xpose.msra.mxu0 0.0
        %1541 = vmatprep.subr.mxu0 0.0
        %1542 = vmatpush1.xpose.msra.mxu0 0.0
        %1543 = vmatprep.subr.mxu0 0.0
        %1544 = vmatpush1.xpose.msra.mxu0 0.0
        %1545 = vmatprep.subr.mxu0 0.0
        %1546 = vmatpush1.xpose.msra.mxu0 0.0
        %1547 = vmatprep.subr.mxu0 0.0
        %1548 = vmatpush1.xpose.msra.mxu0 0.0
        %1549 = vmatprep.subr.mxu0 0.0
        %1550 = vmatpush1.xpose.msra.mxu0 0.0
        %1551 = vmatprep.subr.mxu0 0.0
        %1552 = vmatpush1.xpose.msra.mxu0 0.0
        %1553 = vmatprep.subr.mxu0 0.0
        %1554 = vmatpush1.xpose.msra.mxu0 0.0
        %1555 = vmatprep.subr.mxu0 0.0
        %1556 = vmatpush1.xpose.msra.mxu0 0.0
        %1557 = vmatprep.subr.mxu0 0.0
        %1558 = vmatpush1.xpose.msra.mxu0 0.0
        %1559 = vmatprep.subr.mxu0 0.0
        %1560 = vmatpush1.xpose.msra.mxu0 0.0
        %1561 = vmatprep.subr.mxu0 0.0
        %1562 = vmatpush1.xpose.msra.mxu0 0.0
        %1563 = vmatprep.subr.mxu0 0.0
        %1564 = vmatpush1.xpose.msra.mxu0 0.0
        %1565 = vmatprep.subr.mxu0 0.0
        %1566 = vmatpush1.xpose.msra.mxu0 0.0
        %1567 = vmatprep.subr.mxu0 0.0
        %1568 = vmatpush1.xpose.msra.mxu0 0.0
        %1569 = vmatprep.subr.mxu0 0.0
        %1570 = vmatpush1.xpose.msra.mxu0 0.0
        %1571 = vmatprep.subr.mxu0 0.0
        %1572 = vmatpush1.xpose.msra.mxu0 0.0
        %1573 = vmatprep.subr.mxu0 0.0
        %1574 = vmatpush1.xpose.msra.mxu0 0.0
        %1575 = vmatprep.subr.mxu0 0.0
        %1576 = vmatpush1.xpose.msra.mxu0 0.0
        %1577 = vmatprep.subr.mxu0 0.0
        %1578 = vmatpush1.xpose.msra.mxu0 0.0
        %1579 = vmatprep.subr.mxu0 0.0
        %1580 = vmatpush1.xpose.msra.mxu0 0.0
        %1581 = vmatprep.subr.mxu0 0.0
        %1582 = vmatpush1.xpose.msra.mxu0 0.0
        %1583 = vmatprep.subr.mxu0 0.0
        %1584 = vmatpush1.xpose.msra.mxu0 0.0
        %1585 = vmatprep.subr.mxu0 0.0
        %1586 = vmatpush1.xpose.msra.mxu0 0.0
        %1587 = vmatprep.subr.mxu0 0.0
        %1588 = vmatpush1.xpose.msra.mxu0 0.0
        %1589 = vmatprep.subr.mxu0 0.0
        %1590 = vmatpush1.xpose.msra.mxu0 0.0
        %1591 = vmatprep.subr.mxu0 0.0
        %1592 = vmatpush1.xpose.msra.mxu0 0.0
        %1593 = vmatprep.subr.mxu0 0.0
        %1594 = vmatpush1.xpose.msra.mxu0 0.0
        %1595 = vmatprep.subr.mxu0 0.0
        %1596 = vmatpush1.xpose.msra.mxu0 0.0
        %1597 = vmatprep.mubr.f32.mxu0 0.0
        %1598 = vmatmul.mubr.f32.gmra.mrb[0].mxu0 %v1529
        %v1599 = vpop.f32.mrb[0].mxu0
        %v1600 = vadd.f32 0.0, %v1599
        %v1601 = vpop.f32.mrb[0].mxu0
        %1602 = vdwg.mxu0
        %v1603 = vsel %vm529, %v1600, -inf
        %1604 = vmax.xlane.f32.xlu0 %v1603
        %v1605 = vpop.xlane.xlu0 %1604
        %v1606 = vsub.f32 %v1600, %v1605
        %v1607 = vmul.f32 %v1606, 1.442695
        %v1608 = vpow.pop %v1607
        %v1609 = vsel %vm529, %v1608, 0.0
        %1610 = vadd.xlane.f32.xlu0 %v1609
        %v1611 = vpop.xlane.xlu0 %1610
        %v1612 = vrcp.pop %v1611
        %v1613 = vmul.f32 %v1608, %v1612
        %1614 = vrot.lane.b32.xlu0 %v1521, 64
        %v1615 = vpop.permute.xlu0 %1614
        %v1618 = vsel %vm529, %v1613, 0
        %1620 = vmatprep.subr.mxu0 0.0
        %1621 = vmatpush1.msra.mxu0 %v1615
        %1622 = vmatprep.subr.mxu0 0.0
        %1623 = vmatpush1.msra.mxu0 0.0
        %1624 = vmatprep.subr.mxu0 0.0
        %1625 = vmatpush1.msra.mxu0 0.0
        %1626 = vmatprep.subr.mxu0 0.0
        %1627 = vmatpush1.msra.mxu0 0.0
        %1628 = vmatprep.subr.mxu0 0.0
        %1629 = vmatpush1.msra.mxu0 0.0
        %1630 = vmatprep.subr.mxu0 0.0
        %1631 = vmatpush1.msra.mxu0 0.0
        %1632 = vmatprep.subr.mxu0 0.0
        %1633 = vmatpush1.msra.mxu0 0.0
        %1634 = vmatprep.subr.mxu0 0.0
        %1635 = vmatpush1.msra.mxu0 0.0
        %1636 = vmatprep.subr.mxu0 0.0
        %1637 = vmatpush1.msra.mxu0 0.0
        %1638 = vmatprep.subr.mxu0 0.0
        %1639 = vmatpush1.msra.mxu0 0.0
        %1640 = vmatprep.subr.mxu0 0.0
        %1641 = vmatpush1.msra.mxu0 0.0
        %1642 = vmatprep.subr.mxu0 0.0
        %1643 = vmatpush1.msra.mxu0 0.0
        %1644 = vmatprep.subr.mxu0 0.0
        %1645 = vmatpush1.msra.mxu0 0.0
        %1646 = vmatprep.subr.mxu0 0.0
        %1647 = vmatpush1.msra.mxu0 0.0
        %1648 = vmatprep.subr.mxu0 0.0
        %1649 = vmatpush1.msra.mxu0 0.0
        %1650 = vmatprep.subr.mxu0 0.0
        %1651 = vmatpush1.msra.mxu0 0.0
        %1652 = vmatprep.subr.mxu0 0.0
        %1653 = vmatpush1.msra.mxu0 0.0
        %1654 = vmatprep.subr.mxu0 0.0
        %1655 = vmatpush1.msra.mxu0 0.0
        %1656 = vmatprep.subr.mxu0 0.0
        %1657 = vmatpush1.msra.mxu0 0.0
        %1658 = vmatprep.subr.mxu0 0.0
        %1659 = vmatpush1.msra.mxu0 0.0
        %1660 = vmatprep.subr.mxu0 0.0
        %1661 = vmatpush1.msra.mxu0 0.0
        %1662 = vmatprep.subr.mxu0 0.0
        %1663 = vmatpush1.msra.mxu0 0.0
        %1664 = vmatprep.subr.mxu0 0.0
        %1665 = vmatpush1.msra.mxu0 0.0
        %1666 = vmatprep.subr.mxu0 0.0
        %1667 = vmatpush1.msra.mxu0 0.0
        %1668 = vmatprep.subr.mxu0 0.0
        %1669 = vmatpush1.msra.mxu0 0.0
        %1670 = vmatprep.subr.mxu0 0.0
        %1671 = vmatpush1.msra.mxu0 0.0
        %1672 = vmatprep.subr.mxu0 0.0
        %1673 = vmatpush1.msra.mxu0 0.0
        %1674 = vmatprep.subr.mxu0 0.0
        %1675 = vmatpush1.msra.mxu0 0.0
        %1676 = vmatprep.subr.mxu0 0.0
        %1677 = vmatpush1.msra.mxu0 0.0
        %1678 = vmatprep.subr.mxu0 0.0
        %1679 = vmatpush1.msra.mxu0 0.0
        %1680 = vmatprep.subr.mxu0 0.0
        %1681 = vmatpush1.msra.mxu0 0.0
        %1682 = vmatprep.subr.mxu0 0.0
        %1683 = vmatpush1.msra.mxu0 0.0
        %1684 = vmatprep.mubr.f32.mxu0 0.0
        %1685 = vmatmul.mubr.f32.gmra.mrb[0].mxu0 %v1618
        %v1686 = vpop.f32.mrb[0].mxu0
        %v1687 = vadd.f32 0.0, %v1686
        %v1688 = vpop.f32.mrb[0].mxu0
        %1689 = vdwg.mxu0
        %1690 = vrot.lane.b32.xlu0 %v1521, 120
        %v1691 = vpop.permute.xlu0 %1690
        %1692 = vrot.lane.b32.xlu0 %v1521, 88
        %v1693 = vpop.permute.xlu0 %1692
        %v1694 = vsel %vm529, %v1691, 0
        %v1696 = vsel %vm529, %v1693, 0
        %1698 = vmatprep.subr.mxu0 0.0
        %1699 = vmatpush1.xpose.msra.mxu0 %v1696
        %1700 = vmatprep.subr.mxu0 0.0
        %1701 = vmatpush1.xpose.msra.mxu0 0.0
        %1702 = vmatprep.subr.mxu0 0.0
        %1703 = vmatpush1.xpose.msra.mxu0 0.0
        %1704 = vmatprep.subr.mxu0 0.0
        %1705 = vmatpush1.xpose.msra.mxu0 0.0
        %1706 = vmatprep.subr.mxu0 0.0
        %1707 = vmatpush1.xpose.msra.mxu0 0.0
        %1708 = vmatprep.subr.mxu0 0.0
        %1709 = vmatpush1.xpose.msra.mxu0 0.0
        %1710 = vmatprep.subr.mxu0 0.0
        %1711 = vmatpush1.xpose.msra.mxu0 0.0
        %1712 = vmatprep.subr.mxu0 0.0
        %1713 = vmatpush1.xpose.msra.mxu0 0.0
        %1714 = vmatprep.subr.mxu0 0.0
        %1715 = vmatpush1.xpose.msra.mxu0 0.0
        %1716 = vmatprep.subr.mxu0 0.0
        %1717 = vmatpush1.xpose.msra.mxu0 0.0
        %1718 = vmatprep.subr.mxu0 0.0
        %1719 = vmatpush1.xpose.msra.mxu0 0.0
        %1720 = vmatprep.subr.mxu0 0.0
        %1721 = vmatpush1.xpose.msra.mxu0 0.0
        %1722 = vmatprep.subr.mxu0 0.0
        %1723 = vmatpush1.xpose.msra.mxu0 0.0
        %1724 = vmatprep.subr.mxu0 0.0
        %1725 = vmatpush1.xpose.msra.mxu0 0.0
        %1726 = vmatprep.subr.mxu0 0.0
        %1727 = vmatpush1.xpose.msra.mxu0 0.0
        %1728 = vmatprep.subr.mxu0 0.0
        %1729 = vmatpush1.xpose.msra.mxu0 0.0
        %1730 = vmatprep.subr.mxu0 0.0
        %1731 = vmatpush1.xpose.msra.mxu0 0.0
        %1732 = vmatprep.subr.mxu0 0.0
        %1733 = vmatpush1.xpose.msra.mxu0 0.0
        %1734 = vmatprep.subr.mxu0 0.0
        %1735 = vmatpush1.xpose.msra.mxu0 0.0
        %1736 = vmatprep.subr.mxu0 0.0
        %1737 = vmatpush1.xpose.msra.mxu0 0.0
        %1738 = vmatprep.subr.mxu0 0.0
        %1739 = vmatpush1.xpose.msra.mxu0 0.0
        %1740 = vmatprep.subr.mxu0 0.0
        %1741 = vmatpush1.xpose.msra.mxu0 0.0
        %1742 = vmatprep.subr.mxu0 0.0
        %1743 = vmatpush1.xpose.msra.mxu0 0.0
        %1744 = vmatprep.subr.mxu0 0.0
        %1745 = vmatpush1.xpose.msra.mxu0 0.0
        %1746 = vmatprep.subr.mxu0 0.0
        %1747 = vmatpush1.xpose.msra.mxu0 0.0
        %1748 = vmatprep.subr.mxu0 0.0
        %1749 = vmatpush1.xpose.msra.mxu0 0.0
        %1750 = vmatprep.subr.mxu0 0.0
        %1751 = vmatpush1.xpose.msra.mxu0 0.0
        %1752 = vmatprep.subr.mxu0 0.0
        %1753 = vmatpush1.xpose.msra.mxu0 0.0
        %1754 = vmatprep.subr.mxu0 0.0
        %1755 = vmatpush1.xpose.msra.mxu0 0.0
        %1756 = vmatprep.subr.mxu0 0.0
        %1757 = vmatpush1.xpose.msra.mxu0 0.0
        %1758 = vmatprep.subr.mxu0 0.0
        %1759 = vmatpush1.xpose.msra.mxu0 0.0
        %1760 = vmatprep.subr.mxu0 0.0
        %1761 = vmatpush1.xpose.msra.mxu0 0.0
        %1762 = vmatprep.mubr.f32.mxu0 0.0
        %1763 = vmatmul.mubr.f32.gmra.mrb[0].mxu0 %v1694
        %v1764 = vpop.f32.mrb[0].mxu0
        %v1765 = vadd.f32 0.0, %v1764
        %v1766 = vpop.f32.mrb[0].mxu0
        %1767 = vdwg.mxu0
        %v1768 = vsel %vm529, %v1765, -inf
        %1769 = vmax.xlane.f32.xlu0 %v1768
        %v1770 = vpop.xlane.xlu0 %1769
        %v1771 = vsub.f32 %v1765, %v1770
        %v1772 = vmul.f32 %v1771, 1.442695
        %v1773 = vpow.pop %v1772
        %v1774 = vsel %vm529, %v1773, 0.0
        %1775 = vadd.xlane.f32.xlu0 %v1774
        %v1776 = vpop.xlane.xlu0 %1775
        %v1777 = vrcp.pop %v1776
        %v1778 = vmul.f32 %v1773, %v1777
        %1779 = vrot.lane.b32.xlu0 %v1521, 56
        %v1780 = vpop.permute.xlu0 %1779
        %v1783 = vsel %vm529, %v1778, 0
        %1785 = vmatprep.subr.mxu0 0.0
        %1786 = vmatpush1.msra.mxu0 %v1780
        %1787 = vmatprep.subr.mxu0 0.0
        %1788 = vmatpush1.msra.mxu0 0.0
        %1789 = vmatprep.subr.mxu0 0.0
        %1790 = vmatpush1.msra.mxu0 0.0
        %1791 = vmatprep.subr.mxu0 0.0
        %1792 = vmatpush1.msra.mxu0 0.0
        %1793 = vmatprep.subr.mxu0 0.0
        %1794 = vmatpush1.msra.mxu0 0.0
        %1795 = vmatprep.subr.mxu0 0.0
        %1796 = vmatpush1.msra.mxu0 0.0
        %1797 = vmatprep.subr.mxu0 0.0
        %1798 = vmatpush1.msra.mxu0 0.0
        %1799 = vmatprep.subr.mxu0 0.0
        %1800 = vmatpush1.msra.mxu0 0.0
        %1801 = vmatprep.subr.mxu0 0.0
        %1802 = vmatpush1.msra.mxu0 0.0
        %1803 = vmatprep.subr.mxu0 0.0
        %1804 = vmatpush1.msra.mxu0 0.0
        %1805 = vmatprep.subr.mxu0 0.0
        %1806 = vmatpush1.msra.mxu0 0.0
        %1807 = vmatprep.subr.mxu0 0.0
        %1808 = vmatpush1.msra.mxu0 0.0
        %1809 = vmatprep.subr.mxu0 0.0
        %1810 = vmatpush1.msra.mxu0 0.0
        %1811 = vmatprep.subr.mxu0 0.0
        %1812 = vmatpush1.msra.mxu0 0.0
        %1813 = vmatprep.subr.mxu0 0.0
        %1814 = vmatpush1.msra.mxu0 0.0
        %1815 = vmatprep.subr.mxu0 0.0
        %1816 = vmatpush1.msra.mxu0 0.0
        %1817 = vmatprep.subr.mxu0 0.0
        %1818 = vmatpush1.msra.mxu0 0.0
        %1819 = vmatprep.subr.mxu0 0.0
        %1820 = vmatpush1.msra.mxu0 0.0
        %1821 = vmatprep.subr.mxu0 0.0
        %1822 = vmatpush1.msra.mxu0 0.0
        %1823 = vmatprep.subr.mxu0 0.0
        %1824 = vmatpush1.msra.mxu0 0.0
        %1825 = vmatprep.subr.mxu0 0.0
        %1826 = vmatpush1.msra.mxu0 0.0
        %1827 = vmatprep.subr.mxu0 0.0
        %1828 = vmatpush1.msra.mxu0 0.0
        %1829 = vmatprep.subr.mxu0 0.0
        %1830 = vmatpush1.msra.mxu0 0.0
        %1831 = vmatprep.subr.mxu0 0.0
        %1832 = vmatpush1.msra.mxu0 0.0
        %1833 = vmatprep.subr.mxu0 0.0
        %1834 = vmatpush1.msra.mxu0 0.0
        %1835 = vmatprep.subr.mxu0 0.0
        %1836 = vmatpush1.msra.mxu0 0.0
        %1837 = vmatprep.subr.mxu0 0.0
        %1838 = vmatpush1.msra.mxu0 0.0
        %1839 = vmatprep.subr.mxu0 0.0
        %1840 = vmatpush1.msra.mxu0 0.0
        %1841 = vmatprep.subr.mxu0 0.0
        %1842 = vmatpush1.msra.mxu0 0.0
        %1843 = vmatprep.subr.mxu0 0.0
        %1844 = vmatpush1.msra.mxu0 0.0
        %1845 = vmatprep.subr.mxu0 0.0
        %1846 = vmatpush1.msra.mxu0 0.0
        %1847 = vmatprep.subr.mxu0 0.0
        %1848 = vmatpush1.msra.mxu0 0.0
        %1849 = vmatprep.mubr.f32.mxu0 0.0
        %1850 = vmatmul.mubr.f32.gmra.mrb[0].mxu0 %v1783
        %v1851 = vpop.f32.mrb[0].mxu0
        %v1852 = vadd.f32 0.0, %v1851
        %v1853 = vpop.f32.mrb[0].mxu0
        %1854 = vdwg.mxu0
        %1855 = vrot.lane.b32.xlu0 %v1521, 112
        %v1856 = vpop.permute.xlu0 %1855
        %1857 = vrot.lane.b32.xlu0 %v1521, 80
        %v1858 = vpop.permute.xlu0 %1857
        %v1859 = vsel %vm529, %v1856, 0
        %v1861 = vsel %vm529, %v1858, 0
        %1863 = vmatprep.subr.mxu0 0.0
        %1864 = vmatpush1.xpose.msra.mxu0 %v1861
        %1865 = vmatprep.subr.mxu0 0.0
        %1866 = vmatpush1.xpose.msra.mxu0 0.0
        %1867 = vmatprep.subr.mxu0 0.0
        %1868 = vmatpush1.xpose.msra.mxu0 0.0
        %1869 = vmatprep.subr.mxu0 0.0
        %1870 = vmatpush1.xpose.msra.mxu0 0.0
        %1871 = vmatprep.subr.mxu0 0.0
        %1872 = vmatpush1.xpose.msra.mxu0 0.0
        %1873 = vmatprep.subr.mxu0 0.0
        %1874 = vmatpush1.xpose.msra.mxu0 0.0
        %1875 = vmatprep.subr.mxu0 0.0
        %1876 = vmatpush1.xpose.msra.mxu0 0.0
        %1877 = vmatprep.subr.mxu0 0.0
        %1878 = vmatpush1.xpose.msra.mxu0 0.0
        %1879 = vmatprep.subr.mxu0 0.0
        %1880 = vmatpush1.xpose.msra.mxu0 0.0
        %1881 = vmatprep.subr.mxu0 0.0
        %1882 = vmatpush1.xpose.msra.mxu0 0.0
        %1883 = vmatprep.subr.mxu0 0.0
        %1884 = vmatpush1.xpose.msra.mxu0 0.0
        %1885 = vmatprep.subr.mxu0 0.0
        %1886 = vmatpush1.xpose.msra.mxu0 0.0
        %1887 = vmatprep.subr.mxu0 0.0
        %1888 = vmatpush1.xpose.msra.mxu0 0.0
        %1889 = vmatprep.subr.mxu0 0.0
        %1890 = vmatpush1.xpose.msra.mxu0 0.0
        %1891 = vmatprep.subr.mxu0 0.0
        %1892 = vmatpush1.xpose.msra.mxu0 0.0
        %1893 = vmatprep.subr.mxu0 0.0
        %1894 = vmatpush1.xpose.msra.mxu0 0.0
        %1895 = vmatprep.subr.mxu0 0.0
        %1896 = vmatpush1.xpose.msra.mxu0 0.0
        %1897 = vmatprep.subr.mxu0 0.0
        %1898 = vmatpush1.xpose.msra.mxu0 0.0
        %1899 = vmatprep.subr.mxu0 0.0
        %1900 = vmatpush1.xpose.msra.mxu0 0.0
        %1901 = vmatprep.subr.mxu0 0.0
        %1902 = vmatpush1.xpose.msra.mxu0 0.0
        %1903 = vmatprep.subr.mxu0 0.0
        %1904 = vmatpush1.xpose.msra.mxu0 0.0
        %1905 = vmatprep.subr.mxu0 0.0
        %1906 = vmatpush1.xpose.msra.mxu0 0.0
        %1907 = vmatprep.subr.mxu0 0.0
        %1908 = vmatpush1.xpose.msra.mxu0 0.0
        %1909 = vmatprep.subr.mxu0 0.0
        %1910 = vmatpush1.xpose.msra.mxu0 0.0
        %1911 = vmatprep.subr.mxu0 0.0
        %1912 = vmatpush1.xpose.msra.mxu0 0.0
        %1913 = vmatprep.subr.mxu0 0.0
        %1914 = vmatpush1.xpose.msra.mxu0 0.0
        %1915 = vmatprep.subr.mxu0 0.0
        %1916 = vmatpush1.xpose.msra.mxu0 0.0
        %1917 = vmatprep.subr.mxu0 0.0
        %1918 = vmatpush1.xpose.msra.mxu0 0.0
        %1919 = vmatprep.subr.mxu0 0.0
        %1920 = vmatpush1.xpose.msra.mxu0 0.0
        %1921 = vmatprep.subr.mxu0 0.0
        %1922 = vmatpush1.xpose.msra.mxu0 0.0
        %1923 = vmatprep.subr.mxu0 0.0
        %1924 = vmatpush1.xpose.msra.mxu0 0.0
        %1925 = vmatprep.subr.mxu0 0.0
        %1926 = vmatpush1.xpose.msra.mxu0 0.0
        %1927 = vmatprep.mubr.f32.mxu0 0.0
        %1928 = vmatmul.mubr.f32.gmra.mrb[0].mxu0 %v1859
        %v1929 = vpop.f32.mrb[0].mxu0
        %v1930 = vadd.f32 0.0, %v1929
        %v1931 = vpop.f32.mrb[0].mxu0
        %1932 = vdwg.mxu0
        %v1933 = vsel %vm529, %v1930, -inf
        %1934 = vmax.xlane.f32.xlu0 %v1933
        %v1935 = vpop.xlane.xlu0 %1934
        %v1936 = vsub.f32 %v1930, %v1935
        %v1937 = vmul.f32 %v1936, 1.442695
        %v1938 = vpow.pop %v1937
        %v1939 = vsel %vm529, %v1938, 0.0
        %1940 = vadd.xlane.f32.xlu0 %v1939
        %v1941 = vpop.xlane.xlu0 %1940
        %v1942 = vrcp.pop %v1941
        %v1943 = vmul.f32 %v1938, %v1942
        %1944 = vrot.lane.b32.xlu0 %v1521, 48
        %v1945 = vpop.permute.xlu0 %1944
        %v1948 = vsel %vm529, %v1943, 0
        %1950 = vmatprep.subr.mxu0 0.0
        %1951 = vmatpush1.msra.mxu0 %v1945
        %1952 = vmatprep.subr.mxu0 0.0
        %1953 = vmatpush1.msra.mxu0 0.0
        %1954 = vmatprep.subr.mxu0 0.0
        %1955 = vmatpush1.msra.mxu0 0.0
        %1956 = vmatprep.subr.mxu0 0.0
        %1957 = vmatpush1.msra.mxu0 0.0
        %1958 = vmatprep.subr.mxu0 0.0
        %1959 = vmatpush1.msra.mxu0 0.0
        %1960 = vmatprep.subr.mxu0 0.0
        %1961 = vmatpush1.msra.mxu0 0.0
        %1962 = vmatprep.subr.mxu0 0.0
        %1963 = vmatpush1.msra.mxu0 0.0
        %1964 = vmatprep.subr.mxu0 0.0
        %1965 = vmatpush1.msra.mxu0 0.0
        %1966 = vmatprep.subr.mxu0 0.0
        %1967 = vmatpush1.msra.mxu0 0.0
        %1968 = vmatprep.subr.mxu0 0.0
        %1969 = vmatpush1.msra.mxu0 0.0
        %1970 = vmatprep.subr.mxu0 0.0
        %1971 = vmatpush1.msra.mxu0 0.0
        %1972 = vmatprep.subr.mxu0 0.0
        %1973 = vmatpush1.msra.mxu0 0.0
        %1974 = vmatprep.subr.mxu0 0.0
        %1975 = vmatpush1.msra.mxu0 0.0
        %1976 = vmatprep.subr.mxu0 0.0
        %1977 = vmatpush1.msra.mxu0 0.0
        %1978 = vmatprep.subr.mxu0 0.0
        %1979 = vmatpush1.msra.mxu0 0.0
        %1980 = vmatprep.subr.mxu0 0.0
        %1981 = vmatpush1.msra.mxu0 0.0
        %1982 = vmatprep.subr.mxu0 0.0
        %1983 = vmatpush1.msra.mxu0 0.0
        %1984 = vmatprep.subr.mxu0 0.0
        %1985 = vmatpush1.msra.mxu0 0.0
        %1986 = vmatprep.subr.mxu0 0.0
        %1987 = vmatpush1.msra.mxu0 0.0
        %1988 = vmatprep.subr.mxu0 0.0
        %1989 = vmatpush1.msra.mxu0 0.0
        %1990 = vmatprep.subr.mxu0 0.0
        %1991 = vmatpush1.msra.mxu0 0.0
        %1992 = vmatprep.subr.mxu0 0.0
        %1993 = vmatpush1.msra.mxu0 0.0
        %1994 = vmatprep.subr.mxu0 0.0
        %1995 = vmatpush1.msra.mxu0 0.0
        %1996 = vmatprep.subr.mxu0 0.0
        %1997 = vmatpush1.msra.mxu0 0.0
        %1998 = vmatprep.subr.mxu0 0.0
        %1999 = vmatpush1.msra.mxu0 0.0
        %2000 = vmatprep.subr.mxu0 0.0
        %2001 = vmatpush1.msra.mxu0 0.0
        %2002 = vmatprep.subr.mxu0 0.0
        %2003 = vmatpush1.msra.mxu0 0.0
        %2004 = vmatprep.subr.mxu0 0.0
        %2005 = vmatpush1.msra.mxu0 0.0
        %2006 = vmatprep.subr.mxu0 0.0
        %2007 = vmatpush1.msra.mxu0 0.0
        %2008 = vmatprep.subr.mxu0 0.0
        %2009 = vmatpush1.msra.mxu0 0.0
        %2010 = vmatprep.subr.mxu0 0.0
        %2011 = vmatpush1.msra.mxu0 0.0
        %2012 = vmatprep.subr.mxu0 0.0
        %2013 = vmatpush1.msra.mxu0 0.0
        %2014 = vmatprep.mubr.f32.mxu0 0.0
        %2015 = vmatmul.mubr.f32.gmra.mrb[0].mxu0 %v1948
        %v2016 = vpop.f32.mrb[0].mxu0
        %v2017 = vadd.f32 0.0, %v2016
        %v2018 = vpop.f32.mrb[0].mxu0
        %2019 = vdwg.mxu0
        %2020 = vrot.lane.b32.xlu0 %v1521, 104
        %v2021 = vpop.permute.xlu0 %2020
        %2022 = vrot.lane.b32.xlu0 %v1521, 72
        %v2023 = vpop.permute.xlu0 %2022
        %v2024 = vsel %vm529, %v2021, 0
        %v2026 = vsel %vm529, %v2023, 0
        %2028 = vmatprep.subr.mxu0 0.0
        %2029 = vmatpush1.xpose.msra.mxu0 %v2026
        %2030 = vmatprep.subr.mxu0 0.0
        %2031 = vmatpush1.xpose.msra.mxu0 0.0
        %2032 = vmatprep.subr.mxu0 0.0
        %2033 = vmatpush1.xpose.msra.mxu0 0.0
        %2034 = vmatprep.subr.mxu0 0.0
        %2035 = vmatpush1.xpose.msra.mxu0 0.0
        %2036 = vmatprep.subr.mxu0 0.0
        %2037 = vmatpush1.xpose.msra.mxu0 0.0
        %2038 = vmatprep.subr.mxu0 0.0
        %2039 = vmatpush1.xpose.msra.mxu0 0.0
        %2040 = vmatprep.subr.mxu0 0.0
        %2041 = vmatpush1.xpose.msra.mxu0 0.0
        %2042 = vmatprep.subr.mxu0 0.0
        %2043 = vmatpush1.xpose.msra.mxu0 0.0
        %2044 = vmatprep.subr.mxu0 0.0
        %2045 = vmatpush1.xpose.msra.mxu0 0.0
        %2046 = vmatprep.subr.mxu0 0.0
        %2047 = vmatpush1.xpose.msra.mxu0 0.0
        %2048 = vmatprep.subr.mxu0 0.0
        %2049 = vmatpush1.xpose.msra.mxu0 0.0
        %2050 = vmatprep.subr.mxu0 0.0
        %2051 = vmatpush1.xpose.msra.mxu0 0.0
        %2052 = vmatprep.subr.mxu0 0.0
        %2053 = vmatpush1.xpose.msra.mxu0 0.0
        %2054 = vmatprep.subr.mxu0 0.0
        %2055 = vmatpush1.xpose.msra.mxu0 0.0
        %2056 = vmatprep.subr.mxu0 0.0
        %2057 = vmatpush1.xpose.msra.mxu0 0.0
        %2058 = vmatprep.subr.mxu0 0.0
        %2059 = vmatpush1.xpose.msra.mxu0 0.0
        %2060 = vmatprep.subr.mxu0 0.0
        %2061 = vmatpush1.xpose.msra.mxu0 0.0
        %2062 = vmatprep.subr.mxu0 0.0
        %2063 = vmatpush1.xpose.msra.mxu0 0.0
        %2064 = vmatprep.subr.mxu0 0.0
        %2065 = vmatpush1.xpose.msra.mxu0 0.0
        %2066 = vmatprep.subr.mxu0 0.0
        %2067 = vmatpush1.xpose.msra.mxu0 0.0
        %2068 = vmatprep.subr.mxu0 0.0
        %2069 = vmatpush1.xpose.msra.mxu0 0.0
        %2070 = vmatprep.subr.mxu0 0.0
        %2071 = vmatpush1.xpose.msra.mxu0 0.0
        %2072 = vmatprep.subr.mxu0 0.0
        %2073 = vmatpush1.xpose.msra.mxu0 0.0
        %2074 = vmatprep.subr.mxu0 0.0
        %2075 = vmatpush1.xpose.msra.mxu0 0.0
        %2076 = vmatprep.subr.mxu0 0.0
        %2077 = vmatpush1.xpose.msra.mxu0 0.0
        %2078 = vmatprep.subr.mxu0 0.0
        %2079 = vmatpush1.xpose.msra.mxu0 0.0
        %2080 = vmatprep.subr.mxu0 0.0
        %2081 = vmatpush1.xpose.msra.mxu0 0.0
        %2082 = vmatprep.subr.mxu0 0.0
        %2083 = vmatpush1.xpose.msra.mxu0 0.0
        %2084 = vmatprep.subr.mxu0 0.0
        %2085 = vmatpush1.xpose.msra.mxu0 0.0
        %2086 = vmatprep.subr.mxu0 0.0
        %2087 = vmatpush1.xpose.msra.mxu0 0.0
        %2088 = vmatprep.subr.mxu0 0.0
        %2089 = vmatpush1.xpose.msra.mxu0 0.0
        %2090 = vmatprep.subr.mxu0 0.0
        %2091 = vmatpush1.xpose.msra.mxu0 0.0
        %2092 = vmatprep.mubr.f32.mxu0 0.0
        %2093 = vmatmul.mubr.f32.gmra.mrb[0].mxu0 %v2024
        %v2094 = vpop.f32.mrb[0].mxu0
        %v2095 = vadd.f32 0.0, %v2094
        %v2096 = vpop.f32.mrb[0].mxu0
        %2097 = vdwg.mxu0
        %v2098 = vsel %vm529, %v2095, -inf
        %2099 = vmax.xlane.f32.xlu0 %v2098
        %v2100 = vpop.xlane.xlu0 %2099
        %v2101 = vsub.f32 %v2095, %v2100
        %v2102 = vmul.f32 %v2101, 1.442695
        %v2103 = vpow.pop %v2102
        %v2104 = vsel %vm529, %v2103, 0.0
        %2105 = vadd.xlane.f32.xlu0 %v2104
        %v2106 = vpop.xlane.xlu0 %2105
        %v2107 = vrcp.pop %v2106
        %v2108 = vmul.f32 %v2103, %v2107
        %2109 = vrot.lane.b32.xlu0 %v1521, 40
        %v2110 = vpop.permute.xlu0 %2109
        %v2113 = vsel %vm529, %v2108, 0
        %2115 = vmatprep.subr.mxu0 0.0
        %2116 = vmatpush1.msra.mxu0 %v2110
        %2117 = vmatprep.subr.mxu0 0.0
        %2118 = vmatpush1.msra.mxu0 0.0
        %2119 = vmatprep.subr.mxu0 0.0
        %2120 = vmatpush1.msra.mxu0 0.0
        %2121 = vmatprep.subr.mxu0 0.0
        %2122 = vmatpush1.msra.mxu0 0.0
        %2123 = vmatprep.subr.mxu0 0.0
        %2124 = vmatpush1.msra.mxu0 0.0
        %2125 = vmatprep.subr.mxu0 0.0
        %2126 = vmatpush1.msra.mxu0 0.0
        %2127 = vmatprep.subr.mxu0 0.0
        %2128 = vmatpush1.msra.mxu0 0.0
        %2129 = vmatprep.subr.mxu0 0.0
        %2130 = vmatpush1.msra.mxu0 0.0
        %2131 = vmatprep.subr.mxu0 0.0
        %2132 = vmatpush1.msra.mxu0 0.0
        %2133 = vmatprep.subr.mxu0 0.0
        %2134 = vmatpush1.msra.mxu0 0.0
        %2135 = vmatprep.subr.mxu0 0.0
        %2136 = vmatpush1.msra.mxu0 0.0
        %2137 = vmatprep.subr.mxu0 0.0
        %2138 = vmatpush1.msra.mxu0 0.0
        %2139 = vmatprep.subr.mxu0 0.0
        %2140 = vmatpush1.msra.mxu0 0.0
        %2141 = vmatprep.subr.mxu0 0.0
        %2142 = vmatpush1.msra.mxu0 0.0
        %2143 = vmatprep.subr.mxu0 0.0
        %2144 = vmatpush1.msra.mxu0 0.0
        %2145 = vmatprep.subr.mxu0 0.0
        %2146 = vmatpush1.msra.mxu0 0.0
        %2147 = vmatprep.subr.mxu0 0.0
        %2148 = vmatpush1.msra.mxu0 0.0
        %2149 = vmatprep.subr.mxu0 0.0
        %2150 = vmatpush1.msra.mxu0 0.0
        %2151 = vmatprep.subr.mxu0 0.0
        %2152 = vmatpush1.msra.mxu0 0.0
        %2153 = vmatprep.subr.mxu0 0.0
        %2154 = vmatpush1.msra.mxu0 0.0
        %2155 = vmatprep.subr.mxu0 0.0
        %2156 = vmatpush1.msra.mxu0 0.0
        %2157 = vmatprep.subr.mxu0 0.0
        %2158 = vmatpush1.msra.mxu0 0.0
        %2159 = vmatprep.subr.mxu0 0.0
        %2160 = vmatpush1.msra.mxu0 0.0
        %2161 = vmatprep.subr.mxu0 0.0
        %2162 = vmatpush1.msra.mxu0 0.0
        %2163 = vmatprep.subr.mxu0 0.0
        %2164 = vmatpush1.msra.mxu0 0.0
        %2165 = vmatprep.subr.mxu0 0.0
        %2166 = vmatpush1.msra.mxu0 0.0
        %2167 = vmatprep.subr.mxu0 0.0
        %2168 = vmatpush1.msra.mxu0 0.0
        %2169 = vmatprep.subr.mxu0 0.0
        %2170 = vmatpush1.msra.mxu0 0.0
        %2171 = vmatprep.subr.mxu0 0.0
        %2172 = vmatpush1.msra.mxu0 0.0
        %2173 = vmatprep.subr.mxu0 0.0
        %2174 = vmatpush1.msra.mxu0 0.0
        %2175 = vmatprep.subr.mxu0 0.0
        %2176 = vmatpush1.msra.mxu0 0.0
        %2177 = vmatprep.subr.mxu0 0.0
        %2178 = vmatpush1.msra.mxu0 0.0
        %2179 = vmatprep.mubr.f32.mxu0 0.0
        %2180 = vmatmul.mubr.f32.gmra.mrb[0].mxu0 %v2113
        %v2181 = vpop.f32.mrb[0].mxu0
        %v2182 = vadd.f32 0.0, %v2181
        %v2183 = vpop.f32.mrb[0].mxu0
        %2184 = vdwg.mxu0
        %2186 = vrot.lane.b32.xlu0 %v1852, 8
        %v2187 = vpop.permute.xlu0 %2186
        %2190 = vrot.lane.b32.xlu0 %v2017, 16
        %v2191 = vpop.permute.xlu0 %2190
        %2194 = vrot.lane.b32.xlu0 %v2182, 24
        %v2195 = vpop.permute.xlu0 %2194
        %v2197 = vsel %vm529, %v1687, %v2187
        %v2198 = vsel %vm1199, %v2197, %v2191
        %v2199 = vsel %vm1201, %v2198, %v2195
        %v2200 = vpack.c.bf16 %v2199, %v2199
        %s2201 = scalar_lea.vmem %s4, 16
        %v2202 = vld [vmem:[%s2201] sm:$0xf]
        %v2203 = vld [vmem:[%s2201 + $0x4] sm:$0xf]
        %v2204 = vld [vmem:[%s2201 + $0x8] sm:$0xf]
        %v2205 = vld [vmem:[%s2201 + $0xc] sm:$0xf]
        %v2206 = vlaneseq
        %v2207 = vshrl.u32 %v2206, 7
        %v2208 = vsub.s32 2, %v2207
        %v2209 = vrot.slane %v377, %v2208
        %v2214 = vunpack.c.l.b16 %v2202
        %v2215 = vunpack.c.l.b16 %v2203
        %v2216 = vunpack.c.l.b16 %v2204
        %v2217 = vunpack.c.l.b16 %v2205
        %v2218 = vpack.c.b16 %v2215, %v2214
        %v2219 = vpack.c.b16 %v2217, %v2216
        %v2223 = vsel %vm482, %v2200, 0
        %2225 = vmatprep.subr.bf16.mxu0 0
        %2226 = vmatpush1.bf16.msra.mxu0 %v2218
        %2227 = vmatprep.subr.bf16.mxu0 0
        %2228 = vmatpush1.bf16.msra.mxu0 %v2219
        %2229 = vmatprep.subr.bf16.mxu0 0
        %2230 = vmatpush1.bf16.msra.mxu0 0
        %2231 = vmatprep.subr.bf16.mxu0 0
        %2232 = vmatpush1.bf16.msra.mxu0 0
        %2233 = vmatprep.subr.bf16.mxu0 0
        %2234 = vmatpush1.bf16.msra.mxu0 0
        %2235 = vmatprep.subr.bf16.mxu0 0
        %2236 = vmatpush1.bf16.msra.mxu0 0
        %2237 = vmatprep.subr.bf16.mxu0 0
        %2238 = vmatpush1.bf16.msra.mxu0 0
        %2239 = vmatprep.subr.bf16.mxu0 0
        %2240 = vmatpush1.bf16.msra.mxu0 0
        %2241 = vmatprep.subr.bf16.mxu0 0
        %2242 = vmatpush1.bf16.msra.mxu0 0
        %2243 = vmatprep.subr.bf16.mxu0 0
        %2244 = vmatpush1.bf16.msra.mxu0 0
        %2245 = vmatprep.subr.bf16.mxu0 0
        %2246 = vmatpush1.bf16.msra.mxu0 0
        %2247 = vmatprep.subr.bf16.mxu0 0
        %2248 = vmatpush1.bf16.msra.mxu0 0
        %2249 = vmatprep.subr.bf16.mxu0 0
        %2250 = vmatpush1.bf16.msra.mxu0 0
        %2251 = vmatprep.subr.bf16.mxu0 0
        %2252 = vmatpush1.bf16.msra.mxu0 0
        %2253 = vmatprep.subr.bf16.mxu0 0
        %2254 = vmatpush1.bf16.msra.mxu0 0
        %2255 = vmatprep.subr.bf16.mxu0 0
        %2256 = vmatpush1.bf16.msra.mxu0 0
        %2257 = vmatprep.mubr.bf16.mxu0 0
        %2258 = vmatmul.mubr.bf16.gmra.mrb[0].mxu0 %v2223
        %v2259 = vpop.f32.mrb[0].mxu0
        %v2260 = vadd.f32 %v2209, %v2259
        %v2261 = vpop.f32.mrb[0].mxu0
        %v2262 = vpop.f32.mrb[0].mxu0
        %v2263 = vpop.f32.mrb[0].mxu0
        %2264 = vdwg.mxu0
        %v2265 = vadd.f32 %v1460, %v2260
        %v2266 = vsel %vm482, %v2265, 0.0
        %2267 = vadd.xlane.f32.xlu0 %v2266
        %v2268 = vpop.xlane.xlu0 %2267
        %v2269 = vmul.f32 %v2268, %v1271
        %v2270 = vsub.f32 %v2265, %v2269
        %v2271 = vmul.f32 %v2270, %v2270
        %v2272 = vsel %vm482, %v2271, 0.0
        %2273 = vadd.xlane.f32.xlu0 %v2272
        %v2274 = vpop.xlane.xlu0 %2273
        %v2275 = vmul.f32 %v2274, %v1271
        %v2276 = vadd.f32 %v2275, 1e-05
        %v2277 = vrsqrt.pop %v2276
        %v2278 = vmul.f32 %v2270, %v2277
        %v2279 = vlaneseq
        %v2280 = vshrl.u32 %v2279, 7
        %v2281 = vsub.s32 3, %v2280
        %v2282 = vrot.slane %v377, %v2281
        %v2283 = vmul.f32 %v2278, %v2282
        %v2284 = vlaneseq
        %v2285 = vshrl.u32 %v2284, 7
        %v2286 = vsub.s32 4, %v2285
        %v2287 = vrot.slane %v377, %v2286
        %v2288 = vadd.f32 %v2283, %v2287
        %v2289 = vpack.c.bf16 %v2288, %v2288
        %s2290 = scalar_lea.vmem %s5, 16
        %v2291 = vld [vmem:[%s2290] sm:$0xf]
        %v2292 = vld [vmem:[%s2290 + $0x4] sm:$0xf]
        %v2293 = vld [vmem:[%s2290 + $0x8] sm:$0xf]
        %v2294 = vld [vmem:[%s2290 + $0xc] sm:$0xf]
        %v2295 = vlaneseq
        %v2296 = vshrl.u32 %v2295, 7
        %v2297 = vsub.s32 5, %v2296
        %v2298 = vrot.slane %v377, %v2297
        %v2303 = vunpack.c.l.b16 %v2291
        %v2304 = vunpack.c.l.b16 %v2292
        %v2305 = vunpack.c.l.b16 %v2293
        %v2306 = vunpack.c.l.b16 %v2294
        %v2307 = vpack.c.b16 %v2304, %v2303
        %v2308 = vpack.c.b16 %v2306, %v2305
        %v2312 = vsel %vm482, %v2289, 0
        %2314 = vmatprep.subr.bf16.mxu0 0
        %2315 = vmatpush1.bf16.msra.mxu0 %v2307
        %2316 = vmatprep.subr.bf16.mxu0 0
        %2317 = vmatpush1.bf16.msra.mxu0 %v2308
        %2318 = vmatprep.subr.bf16.mxu0 0
        %2319 = vmatpush1.bf16.msra.mxu0 0
        %2320 = vmatprep.subr.bf16.mxu0 0
        %2321 = vmatpush1.bf16.msra.mxu0 0
        %2322 = vmatprep.subr.bf16.mxu0 0
        %2323 = vmatpush1.bf16.msra.mxu0 0
        %2324 = vmatprep.subr.bf16.mxu0 0
        %2325 = vmatpush1.bf16.msra.mxu0 0
        %2326 = vmatprep.subr.bf16.mxu0 0
        %2327 = vmatpush1.bf16.msra.mxu0 0
        %2328 = vmatprep.subr.bf16.mxu0 0
        %2329 = vmatpush1.bf16.msra.mxu0 0
        %2330 = vmatprep.subr.bf16.mxu0 0
        %2331 = vmatpush1.bf16.msra.mxu0 0
        %2332 = vmatprep.subr.bf16.mxu0 0
        %2333 = vmatpush1.bf16.msra.mxu0 0
        %2334 = vmatprep.subr.bf16.mxu0 0
        %2335 = vmatpush1.bf16.msra.mxu0 0
        %2336 = vmatprep.subr.bf16.mxu0 0
        %2337 = vmatpush1.bf16.msra.mxu0 0
        %2338 = vmatprep.subr.bf16.mxu0 0
        %2339 = vmatpush1.bf16.msra.mxu0 0
        %2340 = vmatprep.subr.bf16.mxu0 0
        %2341 = vmatpush1.bf16.msra.mxu0 0
        %2342 = vmatprep.subr.bf16.mxu0 0
        %2343 = vmatpush1.bf16.msra.mxu0 0
        %2344 = vmatprep.subr.bf16.mxu0 0
        %2345 = vmatpush1.bf16.msra.mxu0 0
        %2346 = vmatprep.mubr.bf16.mxu0 0
        %2347 = vmatmul.mubr.bf16.gmra.mrb[0].mxu0 %v2312
        %v2348 = vpop.f32.mrb[0].mxu0
        %v2349 = vadd.f32 %v2298, %v2348
        %v2350 = vpop.f32.mrb[0].mxu0
        %v2351 = vpop.f32.mrb[0].mxu0
        %v2352 = vpop.f32.mrb[0].mxu0
        %2353 = vdwg.mxu0
        %v2354 = vmax.f32 %v2349, 0.0
        %v2355 = vpack.c.bf16 %v2354, %v2354
        %s2356 = scalar_lea.vmem %s6, 32
        %v2357 = vld [vmem:[%s2356] sm:$0xf]
        %v2358 = vld [vmem:[%s2356 + $0x4] sm:$0xf]
        %v2359 = vld [vmem:[%s2356 + $0x8] sm:$0xf]
        %v2360 = vld [vmem:[%s2356 + $0xc] sm:$0xf]
        %v2361 = vld [vmem:[%s2356 + $0x10] sm:$0xf]
        %v2362 = vld [vmem:[%s2356 + $0x14] sm:$0xf]
        %v2363 = vld [vmem:[%s2356 + $0x18] sm:$0xf]
        %v2364 = vld [vmem:[%s2356 + $0x1c] sm:$0xf]
        %v2365 = vlaneseq
        %v2366 = vshrl.u32 %v2365, 7
        %v2367 = vsub.s32 6, %v2366
        %v2368 = vrot.slane %v377, %v2367
        %v2377 = vunpack.c.l.b16 %v2357
        %v2378 = vunpack.c.l.b16 %v2358
        %v2379 = vunpack.c.l.b16 %v2359
        %v2380 = vunpack.c.l.b16 %v2360
        %v2381 = vunpack.c.l.b16 %v2361
        %v2382 = vunpack.c.l.b16 %v2362
        %v2383 = vunpack.c.l.b16 %v2363
        %v2384 = vunpack.c.l.b16 %v2364
        %v2385 = vpack.c.b16 %v2378, %v2377
        %v2386 = vpack.c.b16 %v2380, %v2379
        %v2387 = vpack.c.b16 %v2382, %v2381
        %v2388 = vpack.c.b16 %v2384, %v2383
        %v2394 = vsel %vm416, %v2355, 0
        %2396 = vmatprep.subr.bf16.mxu0 0
        %2397 = vmatpush1.bf16.msra.mxu0 %v2385
        %2398 = vmatprep.subr.bf16.mxu0 0
        %2399 = vmatpush1.bf16.msra.mxu0 %v2386
        %2400 = vmatprep.subr.bf16.mxu0 0
        %2401 = vmatpush1.bf16.msra.mxu0 %v2387
        %2402 = vmatprep.subr.bf16.mxu0 0
        %2403 = vmatpush1.bf16.msra.mxu0 %v2388
        %2404 = vmatprep.subr.bf16.mxu0 0
        %2405 = vmatpush1.bf16.msra.mxu0 0
        %2406 = vmatprep.subr.bf16.mxu0 0
        %2407 = vmatpush1.bf16.msra.mxu0 0
        %2408 = vmatprep.subr.bf16.mxu0 0
        %2409 = vmatpush1.bf16.msra.mxu0 0
        %2410 = vmatprep.subr.bf16.mxu0 0
        %2411 = vmatpush1.bf16.msra.mxu0 0
        %2412 = vmatprep.subr.bf16.mxu0 0
        %2413 = vmatpush1.bf16.msra.mxu0 0
        %2414 = vmatprep.subr.bf16.mxu0 0
        %2415 = vmatpush1.bf16.msra.mxu0 0
        %2416 = vmatprep.subr.bf16.mxu0 0
        %2417 = vmatpush1.bf16.msra.mxu0 0
        %2418 = vmatprep.subr.bf16.mxu0 0
        %2419 = vmatpush1.bf16.msra.mxu0 0
        %2420 = vmatprep.subr.bf16.mxu0 0
        %2421 = vmatpush1.bf16.msra.mxu0 0
        %2422 = vmatprep.subr.bf16.mxu0 0
        %2423 = vmatpush1.bf16.msra.mxu0 0
        %2424 = vmatprep.subr.bf16.mxu0 0
        %2425 = vmatpush1.bf16.msra.mxu0 0
        %2426 = vmatprep.subr.bf16.mxu0 0
        %2427 = vmatpush1.bf16.msra.mxu0 0
        %2428 = vmatprep.mubr.bf16.mxu0 0
        %2429 = vmatmul.mubr.bf16.gmra.mrb[0].mxu0 %v2394
        %v2430 = vpop.f32.mrb[0].mxu0
        %v2431 = vadd.f32 %v2368, %v2430
        %v2432 = vpop.f32.mrb[0].mxu0
        %v2433 = vpop.f32.mrb[0].mxu0
        %v2434 = vpop.f32.mrb[0].mxu0
        %2435 = vdwg.mxu0
        %v2436 = vadd.f32 %v2288, %v2431
        %v2437 = vsel %vm482, %v2436, 0.0
        %2438 = vadd.xlane.f32.xlu0 %v2437
        %v2439 = vpop.xlane.xlu0 %2438
        %v2440 = vmul.f32 %v2439, %v1271
        %v2441 = vsub.f32 %v2436, %v2440
        %v2442 = vmul.f32 %v2441, %v2441
        %v2443 = vsel %vm482, %v2442, 0.0
        %2444 = vadd.xlane.f32.xlu0 %v2443
        %v2445 = vpop.xlane.xlu0 %2444
        %v2446 = vmul.f32 %v2445, %v1271
        %v2447 = vadd.f32 %v2446, 1e-05
        %v2448 = vrsqrt.pop %v2447
        %v2449 = vmul.f32 %v2441, %v2448
        %v2450 = vlaneseq
        %v2451 = vshrl.u32 %v2450, 7
        %v2452 = vsub.s32 7, %v2451
        %v2453 = vrot.slane %v377, %v2452
        %v2454 = vmul.f32 %v2449, %v2453
        %v2455 = vlaneseq
        %v2456 = vshrl.u32 %v2455, 7
        %v2457 = vsub.s32 0, %v2456
        %v2458 = vrot.slane %v378, %v2457
        %v2459 = vadd.f32 %v2454, %v2458
        %v2460 = vpack.c.bf16 %v2459, %v2459
        %v2461 = vld [vmem:[%s7] sm:$0xf]
        %v2462 = vld [vmem:[%s7 + $0x4] sm:$0xf]
        %v2463 = vld [vmem:[%s7 + $0x8] sm:$0xf]
        %v2464 = vld [vmem:[%s7 + $0xc] sm:$0xf]
        %v2465 = vlaneseq
        %v2466 = vshrl.u32 %v2465, 7
        %v2467 = vsub.s32 1, %v2466
        %v2468 = vrot.slane %v378, %v2467
        %v2473 = vunpack.c.l.b16 %v2461
        %v2474 = vunpack.c.l.b16 %v2462
        %v2475 = vunpack.c.l.b16 %v2463
        %v2476 = vunpack.c.l.b16 %v2464
        %v2477 = vpack.c.b16 %v2474, %v2473
        %v2478 = vpack.c.b16 %v2476, %v2475
        %v2482 = vsel %vm482, %v2460, 0
        %2484 = vmatprep.subr.bf16.mxu0 0
        %2485 = vmatpush1.bf16.msra.mxu0 %v2477
        %2486 = vmatprep.subr.bf16.mxu0 0
        %2487 = vmatpush1.bf16.msra.mxu0 %v2478
        %2488 = vmatprep.subr.bf16.mxu0 0
        %2489 = vmatpush1.bf16.msra.mxu0 0
        %2490 = vmatprep.subr.bf16.mxu0 0
        %2491 = vmatpush1.bf16.msra.mxu0 0
        %2492 = vmatprep.subr.bf16.mxu0 0
        %2493 = vmatpush1.bf16.msra.mxu0 0
        %2494 = vmatprep.subr.bf16.mxu0 0
        %2495 = vmatpush1.bf16.msra.mxu0 0
        %2496 = vmatprep.subr.bf16.mxu0 0
        %2497 = vmatpush1.bf16.msra.mxu0 0
        %2498 = vmatprep.subr.bf16.mxu0 0
        %2499 = vmatpush1.bf16.msra.mxu0 0
        %2500 = vmatprep.subr.bf16.mxu0 0
        %2501 = vmatpush1.bf16.msra.mxu0 0
        %2502 = vmatprep.subr.bf16.mxu0 0
        %2503 = vmatpush1.bf16.msra.mxu0 0
        %2504 = vmatprep.subr.bf16.mxu0 0
        %2505 = vmatpush1.bf16.msra.mxu0 0
        %2506 = vmatprep.subr.bf16.mxu0 0
        %2507 = vmatpush1.bf16.msra.mxu0 0
        %2508 = vmatprep.subr.bf16.mxu0 0
        %2509 = vmatpush1.bf16.msra.mxu0 0
        %2510 = vmatprep.subr.bf16.mxu0 0
        %2511 = vmatpush1.bf16.msra.mxu0 0
        %2512 = vmatprep.subr.bf16.mxu0 0
        %2513 = vmatpush1.bf16.msra.mxu0 0
        %2514 = vmatprep.subr.bf16.mxu0 0
        %2515 = vmatpush1.bf16.msra.mxu0 0
        %2516 = vmatprep.mubr.bf16.mxu0 0
        %2517 = vmatmul.mubr.bf16.gmra.mrb[0].mxu0 %v2482
        %v2518 = vpop.f32.mrb[0].mxu0
        %v2519 = vadd.f32 %v2468, %v2518
        %v2520 = vpop.f32.mrb[0].mxu0
        %v2521 = vpop.f32.mrb[0].mxu0
        %v2522 = vpop.f32.mrb[0].mxu0
        %2523 = vdwg.mxu0
        %v2524 = vmax.f32 %v2519, 0.0
        %v2525 = vpack.c.bf16 %v2524, %v2524
        %v2526 = vld [vmem:[%s8] sm:$0xf]
        %v2527 = vld [vmem:[%s8 + $0x4] sm:$0xf]
        %v2528 = vld [vmem:[%s8 + $0x8] sm:$0xf]
        %v2529 = vld [vmem:[%s8 + $0xc] sm:$0xf]
        %v2530 = vlaneseq
        %v2531 = vshrl.u32 %v2530, 7
        %v2532 = vsub.s32 2, %v2531
        %v2533 = vrot.slane %v378, %v2532
        %v2538 = vunpack.c.l.b16 %v2526
        %v2539 = vunpack.c.l.b16 %v2527
        %v2540 = vunpack.c.l.b16 %v2528
        %v2541 = vunpack.c.l.b16 %v2529
        %v2542 = vpack.c.b16 %v2539, %v2538
        %v2543 = vpack.c.b16 %v2541, %v2540
        %v2547 = vsel %vm482, %v2525, 0
        %2549 = vmatprep.subr.bf16.mxu0 0
        %2550 = vmatpush1.bf16.msra.mxu0 %v2542
        %2551 = vmatprep.subr.bf16.mxu0 0
        %2552 = vmatpush1.bf16.msra.mxu0 %v2543
        %2553 = vmatprep.subr.bf16.mxu0 0
        %2554 = vmatpush1.bf16.msra.mxu0 0
        %2555 = vmatprep.subr.bf16.mxu0 0
        %2556 = vmatpush1.bf16.msra.mxu0 0
        %2557 = vmatprep.subr.bf16.mxu0 0
        %2558 = vmatpush1.bf16.msra.mxu0 0
        %2559 = vmatprep.subr.bf16.mxu0 0
        %2560 = vmatpush1.bf16.msra.mxu0 0
        %2561 = vmatprep.subr.bf16.mxu0 0
        %2562 = vmatpush1.bf16.msra.mxu0 0
        %2563 = vmatprep.subr.bf16.mxu0 0
        %2564 = vmatpush1.bf16.msra.mxu0 0
        %2565 = vmatprep.subr.bf16.mxu0 0
        %2566 = vmatpush1.bf16.msra.mxu0 0
        %2567 = vmatprep.subr.bf16.mxu0 0
        %2568 = vmatpush1.bf16.msra.mxu0 0
        %2569 = vmatprep.subr.bf16.mxu0 0
        %2570 = vmatpush1.bf16.msra.mxu0 0
        %2571 = vmatprep.subr.bf16.mxu0 0
        %2572 = vmatpush1.bf16.msra.mxu0 0
        %2573 = vmatprep.subr.bf16.mxu0 0
        %2574 = vmatpush1.bf16.msra.mxu0 0
        %2575 = vmatprep.subr.bf16.mxu0 0
        %2576 = vmatpush1.bf16.msra.mxu0 0
        %2577 = vmatprep.subr.bf16.mxu0 0
        %2578 = vmatpush1.bf16.msra.mxu0 0
        %2579 = vmatprep.subr.bf16.mxu0 0
        %2580 = vmatpush1.bf16.msra.mxu0 0
        %2581 = vmatprep.mubr.bf16.mxu0 0
        %2582 = vmatmul.mubr.bf16.gmra.mrb[0].mxu0 %v2547
        %v2583 = vpop.f32.mrb[0].mxu0
        %v2584 = vadd.f32 %v2533, %v2583
        %v2585 = vpop.f32.mrb[0].mxu0
        %v2586 = vpop.f32.mrb[0].mxu0
        %v2587 = vpop.f32.mrb[0].mxu0
        %2588 = vdwg.mxu0
        %v2589 = vmax.f32 %v2584, 0.0
        %v2590 = vpack.c.bf16 %v2589, %v2589
        %v2591 = vld [vmem:[%s9] sm:$0xf]
        %v2592 = vld [vmem:[%s9 + $0x4] sm:$0xf]
        %v2593 = vlaneseq
        %v2594 = vshrl.u32 %v2593, 7
        %v2595 = vsub.s32 3, %v2594
        %v2596 = vrot.slane %v378, %v2595
        %v2599 = vunpack.c.l.b16 %v2591
        %v2600 = vunpack.c.l.b16 %v2592
        %v2601 = vpack.c.b16 %v2600, %v2599
        %v2604 = vsel %vm1199, %v2590, 0
        %2606 = vmatprep.subr.bf16.mxu0 0
        %2607 = vmatpush1.bf16.msra.mxu0 %v2601
        %2608 = vmatprep.subr.bf16.mxu0 0
        %2609 = vmatpush1.bf16.msra.mxu0 0
        %2610 = vmatprep.subr.bf16.mxu0 0
        %2611 = vmatpush1.bf16.msra.mxu0 0
        %2612 = vmatprep.subr.bf16.mxu0 0
        %2613 = vmatpush1.bf16.msra.mxu0 0
        %2614 = vmatprep.subr.bf16.mxu0 0
        %2615 = vmatpush1.bf16.msra.mxu0 0
        %2616 = vmatprep.subr.bf16.mxu0 0
        %2617 = vmatpush1.bf16.msra.mxu0 0
        %2618 = vmatprep.subr.bf16.mxu0 0
        %2619 = vmatpush1.bf16.msra.mxu0 0
        %2620 = vmatprep.subr.bf16.mxu0 0
        %2621 = vmatpush1.bf16.msra.mxu0 0
        %2622 = vmatprep.subr.bf16.mxu0 0
        %2623 = vmatpush1.bf16.msra.mxu0 0
        %2624 = vmatprep.subr.bf16.mxu0 0
        %2625 = vmatpush1.bf16.msra.mxu0 0
        %2626 = vmatprep.subr.bf16.mxu0 0
        %2627 = vmatpush1.bf16.msra.mxu0 0
        %2628 = vmatprep.subr.bf16.mxu0 0
        %2629 = vmatpush1.bf16.msra.mxu0 0
        %2630 = vmatprep.subr.bf16.mxu0 0
        %2631 = vmatpush1.bf16.msra.mxu0 0
        %2632 = vmatprep.subr.bf16.mxu0 0
        %2633 = vmatpush1.bf16.msra.mxu0 0
        %2634 = vmatprep.subr.bf16.mxu0 0
        %2635 = vmatpush1.bf16.msra.mxu0 0
        %2636 = vmatprep.subr.bf16.mxu0 0
        %2637 = vmatpush1.bf16.msra.mxu0 0
        %2638 = vmatprep.mubr.bf16.mxu0 0
        %2639 = vmatmul.mubr.bf16.gmra.mrb[0].mxu0 %v2604
        %v2640 = vpop.f32.mrb[0].mxu0
        %v2641 = vadd.f32 %v2596, %v2640
        %v2642 = vpop.f32.mrb[0].mxu0
        %v2643 = vpop.f32.mrb[0].mxu0
        %v2644 = vpop.f32.mrb[0].mxu0
        %2645 = vdwg.mxu0
        %2646 = vst [vmem:[%s374] sm:$0xff] %v2641
        %s2647 = sand.u32 %s250, 1
        %s2648 = scalar_lea.sflag [#allocation4], %s2647
        %s2649 = sand.u32 %s250, 1
        %s2650 = smul.addr %s2649, 8
        %s2651 = scalar_lea.vmem [#allocation5], %s2650
        // Predicated region
        $region65: #{tpu_custom_call.1} parent=59 // pred_check
          %p2652 = pneg %p260
        $region66: #{tpu_custom_call.1} parent=59 // pred_check_branch
          %2654 = sbr.rel (%p2652) target = $region68
        $region67: #{tpu_custom_call.1} parent=59 // pred_region
          %s2656 = ssub.s32 128, 128
          %2657 = vsyncadd %s2648, %s2656
          %s2658 = smul.addr %s27, 128
          %s2659 = scalar_lea.hbm %s10, %s2658
          %s2661 = sshll.u32 %s2651, 4
          %s2662 = int_to_ptr.vmem [resolvable:$true] %s2661
          %2664 = dma.vmem_to_hbm [thread:$0]  %s2662, 128, %s2659, %s2648
        $region68: #{tpu_custom_call.1} parent=59 // pred_fallthru
          _
      $region60: #{tpu_custom_call.1} parent=5 // pred_fallthru
        _
      %p2665 = scmp.le.s32.totalorder 2, %s22
      // Predicated region
      $region69: #{tpu_custom_call.1} parent=5 // pred_check
        %p2666 = pneg %p2665
      $region70: #{tpu_custom_call.1} parent=5 // pred_check_branch
        %2668 = sbr.rel (%p2666) target = $region72
      $region71: #{tpu_custom_call.1} parent=5 // pred_region
        %s2669 = ssub.s32 %s22, 2
        // Predicated region
        $region73: #{tpu_custom_call.1} parent=71 // pred_check
          %p2670 = pneg %p266
        $region74: #{tpu_custom_call.1} parent=71 // pred_check_branch
          %2672 = sbr.rel (%p2670) target = $region76
        $region75: #{tpu_custom_call.1} parent=71 // pred_region
          %s2673 = sand.u32 %s251, 1
          %s2674 = scalar_lea.sflag [#allocation4], %s2673
          %s2675 = sand.u32 %s251, 1
          %s2676 = smul.addr %s2675, 8
          %s2677 = scalar_lea.vmem [#allocation5], %s2676
          %2678 = dma.done %s2674, 128
        $region76: #{tpu_custom_call.1} parent=71 // pred_fallthru
          _
      $region72: #{tpu_custom_call.1} parent=5 // pred_fallthru
        _
    $region6: #{tpu_custom_call.1} parent=1 // loop_footer
      %s26 = sadd.s32 1, %s22
    $region7: #{tpu_custom_call.1} parent=1 // loop_footer_branch
      %21 = sbr.rel target = $region3
    $region8: #{tpu_custom_call.1} parent=1 // loop_exit
      _
    %2679 = vsyncpa [#allocation3], 1
    %s2680 = scalar_lea.sflag [#allocation3], 1
    %2681 = vsyncpa %s2680, 1
    %2682 = vsyncpa [#allocation4], 1
    %s2683 = scalar_lea.sflag [#allocation4], 1
    %2684 = vsyncpa %s2683, 1

</llo_original>
